<compile_context>
chip_gen: v6e
topology: v6e:2x2x1
jax: 0.10.0
libtpu: 0.0.40
codegen_flags: <defaults>
</compile_context>

<pallas_src>
import functools

import jax
import jax.numpy as jnp
import numpy as np
from jax import lax
from jax.experimental import pallas as pl
from jax.experimental.pallas import tpu as pltpu

_LANE = 128


def _round_up(x, m):
    return (x + m - 1) // m * m


def _pick_row_tile(n_rows, cap=128):
    """Largest multiple of 8 that divides n_rows and is <= cap."""
    best = 8
    for cand in range(8, min(cap, n_rows) + 1, 8):
        if n_rows % cand == 0:
            best = cand
    return best


def _phys_vmem_bytes(shape, dtype):
    """VMEM bytes of one buffer, including (sublane, lane) tiling padding."""
    itemsize = jnp.dtype(dtype).itemsize
    dims = list(shape)
    if not dims:
        return itemsize
    dims[-1] = _round_up(dims[-1], _LANE)
    if len(dims) >= 2:
        dims[-2] = _round_up(dims[-2], 8 * max(1, 4 // itemsize))
    n = 1
    for d in dims:
        n *= d
    return n * itemsize


def _mask_branch_kernel(*args, H, W, Wp, Cin, num_convs, tm, org):
    """Fused MaskBranch forward for one batch element.

    args = (x, mask, [w_l, b_l] * num_convs, w_proj, b_proj, out, buf_a, buf_b)

      x      : (1, H, W, Cin)      bf16 raw NHWC image block
      mask   : (L, 1)              bf16 {0,1}; 0 on wrap-around cols (w >= W)
      w_l    : (9, Cin_l, Cmid_p)  bf16 3x3 conv weights (tap-major)
      b_l    : (1, Cmid_p)         f32 bias
      w_proj : (Cmid_p, Kout_p)    bf16 1x1 projection weight
      b_proj : (1, Kout_p)         f32 bias
      out    : (1, L, Kout_p)      bf16 (wrap cols / lane pad sliced by wrapper)
      buf_a/b: (NB, C)             bf16 ping-pong activation buffers in the
                                   zero-padded flat layout; image/output pixel
                                   (h, w) lives at flat row org + h*Wp + w.
    """
    n_in = 2 + 2 * num_convs + 2
    x_ref, mask_ref = args[0], args[1]
    conv_refs = [(args[2 + 2 * i], args[3 + 2 * i]) for i in range(num_convs)]
    wproj_ref, bproj_ref = args[n_in - 2], args[n_in - 1]
    o_ref = args[n_in]
    bufs = (args[n_in + 1], args[n_in + 2])
    buf_a, buf_b = bufs

    L = H * Wp
    num_tiles = L // tm
    lead = org - Wp - 8            # 8-aligned row just below the (dy=0,dx=0) taps
    soff = (org - Wp - 1) - lead   # static sub-offset of the dx=0 tap (== 7)

    # ---- stage 0: pad maintenance + raw-input repack (VMEM only) ----------
    # buf_a gets the raw image in the padded layout; buf_b only needs its
    # head/tail pad rows zeroed (its interior is fully overwritten by layer 0
    # with already-masked values). All zero/store offsets are 8-aligned.
    zs_a = jnp.zeros((Wp, buf_a.shape[1]), buf_a.dtype)
    for ofs in (0, org - Wp, org + H * Wp, org + (H + 1) * Wp):
        buf_a[pl.ds(ofs, Wp), :] = zs_a
    if num_convs > 1:
        zs_b = jnp.zeros((Wp, buf_b.shape[1]), buf_b.dtype)
        for ofs in (0, org - Wp, org + H * Wp, org + (H + 1) * Wp):
            buf_b[pl.ds(ofs, Wp), :] = zs_b

    def repack_row(h, carry):
        base = pl.multiple_of(h * Wp + org, 8)
        buf_a[pl.ds(base, Wp), :] = zs_a            # zero pad cols + pad lanes
        buf_a[pl.ds(base, W), 0:Cin] = x_ref[0, h]  # aligned interior store
        return carry

    lax.fori_loop(0, H, repack_row, 0)

    # ---- conv stack + fused 1x1 projection ---------------------------------
    src = buf_a
    for layer in range(num_convs):
        w_ref, b_ref = conv_refs[layer]
        cin_l = w_ref.shape[1]
        cout_l = w_ref.shape[2]
        is_last = layer == num_convs - 1
        dst = None if is_last else bufs[(layer + 1) % 2]

        # Hoisted per-layer invariants (JAX does not CSE broadcast_in_dim):
        # build the (tm, C) bias tile once and use it as the accumulator init.
        bias_tile = jnp.broadcast_to(b_ref[...], (tm, cout_l))
        if is_last:
            w_proj = wproj_ref[...]
            b_proj = bproj_ref[...]

        def tile_body(t, carry, src=src, dst=dst, w_ref=w_ref,
                      bias_tile=bias_tile, cin_l=cin_l, cout_l=cout_l,
                      is_last=is_last):
            start = pl.multiple_of(t * tm, 8)
            acc = bias_tile                          # bias folded into init
            for dy in range(3):
                base = pl.multiple_of(start + dy * Wp + lead, 8)
                # One aligned extended load per dy; the three dx taps are
                # static in-register row slices, so the sublane relayout
                # overlaps the MXU matmuls instead of running as a separate
                # serial copy pass.
                ext = src[pl.ds(base, tm + 16), 0:cin_l]
                for dx in range(3):
                    a = ext[soff + dx:soff + dx + tm, :]
                    acc = acc + jnp.dot(a, w_ref[3 * dy + dx],
                                        preferred_element_type=jnp.float32)
            z = jnp.maximum(acc, 0.0)                # ReLU in f32
            if is_last:
                # 1x1 projection epilogue on the in-register activation.
                # NOTE: wrap-around columns and kout lane padding are written
                # un-masked; the wrapper slices them off (documented contract).
                proj = jnp.dot(z.astype(jnp.bfloat16), w_proj,
                               preferred_element_type=jnp.float32) + b_proj
                o_ref[0, pl.ds(start, tm), :] = proj.astype(o_ref.dtype)
            else:
                # Precomputed {0,1} mask zeroes wrap-around cols so the stored
                # buffer is exactly the zero-padded layout the next layer
                # expects (no per-tile iota / modulo / select).
                m = mask_ref[pl.ds(start, tm), :]
                dst[pl.ds(org + start, tm), 0:cout_l] = (
                    z.astype(jnp.bfloat16) * m)
            return carry

        lax.fori_loop(0, num_tiles, tile_body, 0)
        src = bufs[(layer + 1) % 2]


def mask_branch_forward(x_nchw, params):
    """MaskBranch.forward: NCHW in, NCHW out (matches PyTorch)."""
    B, Cin, H, W = x_nchw.shape
    conv_params = params["mask_convs"]
    num_convs = len(conv_params)
    dim = conv_params[0][0].shape[-1]
    w_proj, b_proj = params["projection"]
    kernel_dim = w_proj.shape[-1]

    cin_p = _round_up(Cin, _LANE)
    cmid_p = _round_up(dim, _LANE)
    kout_p = _round_up(kernel_dim, _LANE)
    cmax_p = max(cin_p, cmid_p)

    Wp = _round_up(W + 2, 8)        # padded row width, multiple of 8
    org = Wp + 8                    # flat row of image pixel (0, 0): 8-aligned
    L = H * Wp                      # output positions computed per layer
    nb = (H + 4) * Wp               # rows per padded activation buffer

    kind = ""
    try:
        kind = jax.devices()[0].device_kind.lower()
    except Exception:
        pass
    # v5e: keep 128-row tiles (tight ld/st budget); v6e/v7x: 256 feeds the
    # 256-deep MXU with longer M streams while the f32 accumulator still fits.
    cap = 128 if ("v5" in kind or max(cmid_p, kout_p) > _LANE) else 256
    tm = _pick_row_tile(L, cap=cap)

    # Static layout invariants (review: make the implicit assumptions explicit).
    assert Wp % 8 == 0 and Wp >= 8
    assert org % 8 == 0 and org >= Wp + 8
    assert L % tm == 0 and tm % 8 == 0
    lead = org - Wp - 8
    soff = (org - Wp - 1) - lead
    assert lead >= 0 and lead % 8 == 0
    assert 0 <= soff and soff + 2 + tm <= tm + 16
    assert org + (H + 2) * Wp <= nb                   # tail zero slabs in bounds
    assert (H + 2) * Wp + lead + 16 <= nb             # extended tap loads in bounds

    # ---- pack inputs (no padded HBM copy of the image is made) -------------
    # TODO(synk): in a real pipeline keep activations NHWC end-to-end so this
    # transpose (one HBM pass) also disappears.
    x = jnp.transpose(x_nchw, (0, 2, 3, 1)).astype(jnp.bfloat16)
    mask = ((jnp.arange(L, dtype=jnp.int32) % Wp) < W)
    mask = mask.astype(jnp.bfloat16).reshape(L, 1)
    # TODO(synk): for very large H*W the (L, 1) mask lane-pads to L*256 B of
    # VMEM; switch to a periodic (k*Wp, 1) mask + per-tile offset if needed.

    inputs = [x, mask]
    in_specs = [
        pl.BlockSpec((1, H, W, Cin), lambda b: (b, 0, 0, 0)),
        pl.BlockSpec((L, 1), lambda b: (0, 0)),
    ]
    cin_l = cin_p
    for (w, bvec) in conv_params:
        w_p = jnp.pad(w, ((0, 0), (0, 0),
                          (0, cin_l - w.shape[2]), (0, cmid_p - w.shape[3])))
        w_p = w_p.reshape(9, cin_l, cmid_p).astype(jnp.bfloat16)
        b_p = jnp.pad(bvec, (0, cmid_p - bvec.shape[0])).reshape(1, cmid_p)
        b_p = b_p.astype(jnp.float32)
        inputs += [w_p, b_p]
        in_specs += [pl.BlockSpec((9, cin_l, cmid_p), lambda b: (0, 0, 0)),
                     pl.BlockSpec((1, cmid_p), lambda b: (0, 0))]
        cin_l = cmid_p

    wpj = jnp.pad(w_proj, ((0, cmid_p - w_proj.shape[0]),
                           (0, kout_p - kernel_dim))).astype(jnp.bfloat16)
    bpj = jnp.pad(b_proj, (0, kout_p - kernel_dim)).reshape(1, kout_p)
    bpj = bpj.astype(jnp.float32)
    inputs += [wpj, bpj]
    in_specs += [pl.BlockSpec((cmid_p, kout_p), lambda b: (0, 0)),
                 pl.BlockSpec((1, kout_p), lambda b: (0, 0))]

    out_shape = jax.ShapeDtypeStruct((B, L, kout_p), jnp.bfloat16)
    out_spec = pl.BlockSpec((1, L, kout_p), lambda b: (b, 0, 0))
    scratch_shapes = [
        pltpu.VMEM((nb, cmax_p), jnp.bfloat16),    # ping (also layer-0 input)
        pltpu.VMEM((nb, cmid_p), jnp.bfloat16),    # pong
    ]

    # VMEM budget from the actual shapes (double-buffered pipeline blocks +
    # single-buffered scratch), with headroom, clamped per generation.
    need = 2 * _phys_vmem_bytes((1, H, W, Cin), jnp.bfloat16)
    need += 2 * _phys_vmem_bytes((L, 1), jnp.bfloat16)
    cin_l2 = cin_p
    for _ in range(num_convs):
        need += 2 * (_phys_vmem_bytes((9, cin_l2, cmid_p), jnp.bfloat16)
                     + _phys_vmem_bytes((1, cmid_p), jnp.float32))
        cin_l2 = cmid_p
    need += 2 * (_phys_vmem_bytes((cmid_p, kout_p), jnp.bfloat16)
                 + _phys_vmem_bytes((1, kout_p), jnp.float32))
    need += 2 * _phys_vmem_bytes((1, L, kout_p), jnp.bfloat16)
    need += _phys_vmem_bytes((nb, cmax_p), jnp.bfloat16)
    need += _phys_vmem_bytes((nb, cmid_p), jnp.bfloat16)
    cap_bytes = (100 << 20) if ("v5" in kind or "v6" in kind) else (56 << 20)
    vmem_limit = max(16 << 20, min(int(need * 1.25) + (1 << 20), cap_bytes))
    # TODO(synk): configs whose working set exceeds the cap need the
    # row-blocked (halo-recompute) variant; SparseInst-sized inputs fit.

    out = pl.pallas_call(
        functools.partial(_mask_branch_kernel, H=H, W=W, Wp=Wp, Cin=Cin,
                          num_convs=num_convs, tm=tm, org=org),
        out_shape=out_shape,
        grid_spec=pltpu.PrefetchScalarGridSpec(
            num_scalar_prefetch=0,
            grid=(B,),
            in_specs=in_specs,
            out_specs=out_spec,
            scratch_shapes=scratch_shapes),
        compiler_params=pltpu.CompilerParams(
            dimension_semantics=("parallel",),
            vmem_limit_bytes=vmem_limit),
    )(*inputs)

    # drop the wrap-around columns and the kernel_dim lane padding
    out = out.reshape(B, H, Wp, kout_p)[:, :, :W, :kernel_dim]
    return jnp.transpose(out, (0, 3, 1, 2)).astype(x_nchw.dtype)


def init_params(key, in_channels, dim, num_convs, kernel_dim):
    """Synthetic init matching c2_msra_fill shapes (kaiming fan_out, zero bias)."""
    params = {"mask_convs": [], "projection": None}
    cin = in_channels
    for _ in range(num_convs):
        key, k = jax.random.split(key)
        fan_out = dim * 3 * 3
        std = (2.0 / fan_out) ** 0.5
        w = jax.random.normal(k, (3, 3, cin, dim), jnp.float32) * std
        b = jnp.zeros((dim,), jnp.float32)
        params["mask_convs"].append((w, b))
        cin = dim
    key, k = jax.random.split(key)
    std = (2.0 / kernel_dim) ** 0.5
    w_proj = jax.random.normal(k, (cin, kernel_dim), jnp.float32) * std
    b_proj = jnp.zeros((kernel_dim,), jnp.float32)
    params["projection"] = (w_proj, b_proj)
    return params


def reference_forward(x_nchw, params):
    """Pure-JAX reference (XLA convs) with the same bf16 operand rounding."""
    x = jnp.transpose(x_nchw, (0, 2, 3, 1)).astype(jnp.bfloat16)
    for w, b in params["mask_convs"]:
        y = jax.lax.conv_general_dilated(
            x, w.astype(jnp.bfloat16), (1, 1), "SAME",
            dimension_numbers=("NHWC", "HWIO", "NHWC"),
            preferred_element_type=jnp.float32)
        x = jax.nn.relu(y + b).astype(jnp.bfloat16)
    w_proj, b_proj = params["projection"]
    y = jnp.einsum("bhwc,ck->bhwk", x, w_proj.astype(jnp.bfloat16),
                   preferred_element_type=jnp.float32) + b_proj
    return jnp.transpose(y, (0, 3, 1, 2))


if __name__ == "__main__":
    # Small config consistent with the module's __init__:
    #   in_channels=8, MASK.DIM=32, MASK.CONVS=2, KERNEL_DIM=16
    B, C, H, W = 2, 8, 16, 16
    dim, num_convs, kernel_dim = 32, 2, 16

    key = jax.random.PRNGKey(0)
    key, kx = jax.random.split(key)
    x = jax.random.normal(kx, (B, C, H, W), jnp.float32)
    params = init_params(key, C, dim, num_convs, kernel_dim)

    fwd = jax.jit(mask_branch_forward)
    out = jax.block_until_ready(fwd(x, params))
    assert out.shape == (B, kernel_dim, H, W), out.shape

    ref = jax.block_until_ready(reference_forward(x, params))
    np.testing.assert_allclose(np.asarray(out), np.asarray(ref),
                               rtol=2e-2, atol=2e-2)
    print("KERNEL_OK")
</pallas_src>

<mosaic_0001>
module attributes {stable_mosaic.version = 11 : i64} {
  func.func @_mask_branch_kernel(%arg0: i32, %arg1: memref<1x16x16x8xbf16, #tpu.memory_space<vmem>>, %arg2: memref<384x1xbf16, #tpu.memory_space<vmem>>, %arg3: memref<9x128x128xbf16, #tpu.memory_space<vmem>>, %arg4: memref<1x128xf32, #tpu.memory_space<vmem>>, %arg5: memref<9x128x128xbf16, #tpu.memory_space<vmem>>, %arg6: memref<1x128xf32, #tpu.memory_space<vmem>>, %arg7: memref<128x128xbf16, #tpu.memory_space<vmem>>, %arg8: memref<1x128xf32, #tpu.memory_space<vmem>>, %arg9: memref<1x384x128xbf16, #tpu.memory_space<vmem>>, %arg10: memref<480x128xbf16, #tpu.memory_space<vmem>>, %arg11: memref<480x128xbf16, #tpu.memory_space<vmem>>) attributes {dimension_semantics = [#tpu.dimension_semantics<parallel>], iteration_bounds = array<i64: 2>, scalar_prefetch = 0 : i64, scratch_operands = 2 : i64, tpu.core_type = #tpu.core_type<tc>, window_params = [{transform_indices = @transform_0, window_bounds = array<i64: 1, 16, 16, 8>}, {pipeline_mode = #tpu.pipeline_mode<synchronous>, transform_indices = @transform_1, window_bounds = array<i64: 384, 1>}, {pipeline_mode = #tpu.pipeline_mode<synchronous>, transform_indices = @transform_2, window_bounds = array<i64: 9, 128, 128>}, {pipeline_mode = #tpu.pipeline_mode<synchronous>, transform_indices = @transform_3, window_bounds = array<i64: 1, 128>}, {pipeline_mode = #tpu.pipeline_mode<synchronous>, transform_indices = @transform_4, window_bounds = array<i64: 9, 128, 128>}, {pipeline_mode = #tpu.pipeline_mode<synchronous>, transform_indices = @transform_5, window_bounds = array<i64: 1, 128>}, {pipeline_mode = #tpu.pipeline_mode<synchronous>, transform_indices = @transform_6, window_bounds = array<i64: 128, 128>}, {pipeline_mode = #tpu.pipeline_mode<synchronous>, transform_indices = @transform_7, window_bounds = array<i64: 1, 128>}, {transform_indices = @transform_8, window_bounds = array<i64: 1, 384, 128>}]} {
    %cst = arith.constant 0.000000e+00 : bf16
    %0 = vector.broadcast %cst : bf16 to vector<24x128xbf16>
    %c0 = arith.constant 0 : index
    %c0_0 = arith.constant 0 : index
    %1 = vector.load %arg10[%c0, %c0_0] : memref<480x128xbf16, #tpu.memory_space<vmem>>, vector<24x128xbf16>
    tpu.vector_store %arg10[%c0, %c0_0], %0 {strides = array<i32>} : memref<480x128xbf16, #tpu.memory_space<vmem>>, vector<24x128xbf16>,
    %c8 = arith.constant 8 : index
    %c0_1 = arith.constant 0 : index
    %2 = vector.load %arg10[%c8, %c0_1] : memref<480x128xbf16, #tpu.memory_space<vmem>>, vector<24x128xbf16>
    tpu.vector_store %arg10[%c8, %c0_1], %0 {strides = array<i32>} : memref<480x128xbf16, #tpu.memory_space<vmem>>, vector<24x128xbf16>,
    %c416 = arith.constant 416 : index
    %c0_2 = arith.constant 0 : index
    %3 = vector.load %arg10[%c416, %c0_2] : memref<480x128xbf16, #tpu.memory_space<vmem>>, vector<24x128xbf16>
    tpu.vector_store %arg10[%c416, %c0_2], %0 {strides = array<i32>} : memref<480x128xbf16, #tpu.memory_space<vmem>>, vector<24x128xbf16>,
    %c440 = arith.constant 440 : index
    %c0_3 = arith.constant 0 : index
    %4 = vector.load %arg10[%c440, %c0_3] : memref<480x128xbf16, #tpu.memory_space<vmem>>, vector<24x128xbf16>
    tpu.vector_store %arg10[%c440, %c0_3], %0 {strides = array<i32>} : memref<480x128xbf16, #tpu.memory_space<vmem>>, vector<24x128xbf16>,
    %cst_4 = arith.constant 0.000000e+00 : bf16
    %5 = vector.broadcast %cst_4 : bf16 to vector<24x128xbf16>
    %c0_5 = arith.constant 0 : index
    %c0_6 = arith.constant 0 : index
    %6 = vector.load %arg11[%c0_5, %c0_6] : memref<480x128xbf16, #tpu.memory_space<vmem>>, vector<24x128xbf16>
    tpu.vector_store %arg11[%c0_5, %c0_6], %5 {strides = array<i32>} : memref<480x128xbf16, #tpu.memory_space<vmem>>, vector<24x128xbf16>,
    %c8_7 = arith.constant 8 : index
    %c0_8 = arith.constant 0 : index
    %7 = vector.load %arg11[%c8_7, %c0_8] : memref<480x128xbf16, #tpu.memory_space<vmem>>, vector<24x128xbf16>
    tpu.vector_store %arg11[%c8_7, %c0_8], %5 {strides = array<i32>} : memref<480x128xbf16, #tpu.memory_space<vmem>>, vector<24x128xbf16>,
    %c416_9 = arith.constant 416 : index
    %c0_10 = arith.constant 0 : index
    %8 = vector.load %arg11[%c416_9, %c0_10] : memref<480x128xbf16, #tpu.memory_space<vmem>>, vector<24x128xbf16>
    tpu.vector_store %arg11[%c416_9, %c0_10], %5 {strides = array<i32>} : memref<480x128xbf16, #tpu.memory_space<vmem>>, vector<24x128xbf16>,
    %c440_11 = arith.constant 440 : index
    %c0_12 = arith.constant 0 : index
    %9 = vector.load %arg11[%c440_11, %c0_12] : memref<480x128xbf16, #tpu.memory_space<vmem>>, vector<24x128xbf16>
    tpu.vector_store %arg11[%c440_11, %c0_12], %5 {strides = array<i32>} : memref<480x128xbf16, #tpu.memory_space<vmem>>, vector<24x128xbf16>,
    %c0_i32 = arith.constant 0 : i32
    %c16_i32 = arith.constant 16 : i32
    %10 = arith.addi %c0_i32, %c16_i32 : i32
    %c1_i32 = arith.constant 1 : i32
    scf.for %arg12 = %c0_i32 to %10 step %c1_i32  : i32 {
      %c24_i32 = arith.constant 24 : i32
      %21 = arith.muli %arg12, %c24_i32 : i32
      %c32_i32 = arith.constant 32 : i32
      %22 = arith.addi %21, %c32_i32 : i32
      %23 = tpu.assume_multiple %22, 8 : i32
      %24 = arith.index_cast %23 : i32 to index
      %c0_29 = arith.constant 0 : index
      %25 = vector.load %arg10[%24, %c0_29] : memref<480x128xbf16, #tpu.memory_space<vmem>>, vector<24x128xbf16>
      tpu.vector_store %arg10[%24, %c0_29], %0 {strides = array<i32>} : memref<480x128xbf16, #tpu.memory_space<vmem>>, vector<24x128xbf16>,
      %c0_30 = arith.constant 0 : index
      %26 = arith.index_cast %arg12 : i32 to index
      %c0_31 = arith.constant 0 : index
      %c0_32 = arith.constant 0 : index
      %27 = vector.load %arg1[%c0_30, %26, %c0_31, %c0_32] : memref<1x16x16x8xbf16, #tpu.memory_space<vmem>>, vector<1x1x16x8xbf16>
      %28 = vector.shape_cast %27 : vector<1x1x16x8xbf16> to vector<16x8xbf16>
      %29 = arith.index_cast %23 : i32 to index
      %c0_33 = arith.constant 0 : index
      %30 = vector.load %arg10[%29, %c0_33] : memref<480x128xbf16, #tpu.memory_space<vmem>>, vector<16x8xbf16>
      tpu.vector_store %arg10[%29, %c0_33], %28 {strides = array<i32>} : memref<480x128xbf16, #tpu.memory_space<vmem>>, vector<16x8xbf16>,
    }
    %c16_i32_13 = arith.constant 16 : i32
    %c0_14 = arith.constant 0 : index
    %c0_15 = arith.constant 0 : index
    %11 = vector.load %arg4[%c0_14, %c0_15] : memref<1x128xf32, #tpu.memory_space<vmem>>, vector<1x128xf32>
    %12 = vector.shape_cast %11 : vector<1x128xf32> to vector<1x128xf32>
    %13 = vector.broadcast %12 : vector<1x128xf32> to vector<192x128xf32>
    %c0_i32_16 = arith.constant 0 : i32
    %c2_i32 = arith.constant 2 : i32
    %14 = arith.addi %c0_i32_16, %c2_i32 : i32
    %c1_i32_17 = arith.constant 1 : i32
    scf.for %arg12 = %c0_i32_16 to %14 step %c1_i32_17  : i32 {
      %c192_i32 = arith.constant 192 : i32
      %21 = arith.muli %arg12, %c192_i32 : i32
      %22 = tpu.assume_multiple %21, 8 : i32
      %c0_i32_29 = arith.constant 0 : i32
      %23 = arith.addi %22, %c0_i32_29 : i32
      %c0_i32_30 = arith.constant 0 : i32
      %24 = arith.addi %23, %c0_i32_30 : i32
      %25 = tpu.assume_multiple %24, 8 : i32
      %26 = arith.index_cast %25 : i32 to index
      %c0_31 = arith.constant 0 : index
      %27 = vector.load %arg10[%26, %c0_31] : memref<480x128xbf16, #tpu.memory_space<vmem>>, vector<208x128xbf16>
      %28 = vector.extract_strided_slice %27 {offsets = [7, 0], sizes = [192, 128], strides = [1, 1]} : vector<208x128xbf16> to vector<192x128xbf16>
      %c0_32 = arith.constant 0 : index
      %c0_33 = arith.constant 0 : index
      %c0_34 = arith.constant 0 : index
      %29 = vector.load %arg3[%c0_32, %c0_33, %c0_34] : memref<9x128x128xbf16, #tpu.memory_space<vmem>>, vector<1x128x128xbf16>
      %30 = vector.shape_cast %29 : vector<1x128x128xbf16> to vector<128x128xbf16>
      %cst_35 = arith.constant dense<0.000000e+00> : vector<192x128xf32>
      %31 = tpu.matmul %28, %30, %cst_35 {dimension_numbers = #tpu.dot_dimension_numbers<[1], [0], [0], [1], [0, 0, 1, 1], [], []>} : vector<192x128xbf16>, vector<128x128xbf16>, vector<192x128xf32> -> vector<192x128xf32>
      %32 = arith.addf %13, %31 : vector<192x128xf32>
      %33 = vector.extract_strided_slice %27 {offsets = [8, 0], sizes = [192, 128], strides = [1, 1]} : vector<208x128xbf16> to vector<192x128xbf16>
      %c1 = arith.constant 1 : index
      %c0_36 = arith.constant 0 : index
      %c0_37 = arith.constant 0 : index
      %34 = vector.load %arg3[%c1, %c0_36, %c0_37] : memref<9x128x128xbf16, #tpu.memory_space<vmem>>, vector<1x128x128xbf16>
      %35 = vector.shape_cast %34 : vector<1x128x128xbf16> to vector<128x128xbf16>
      %cst_38 = arith.constant dense<0.000000e+00> : vector<192x128xf32>
      %36 = tpu.matmul %33, %35, %cst_38 {dimension_numbers = #tpu.dot_dimension_numbers<[1], [0], [0], [1], [0, 0, 1, 1], [], []>} : vector<192x128xbf16>, vector<128x128xbf16>, vector<192x128xf32> -> vector<192x128xf32>
      %37 = arith.addf %32, %36 : vector<192x128xf32>
      %38 = vector.extract_strided_slice %27 {offsets = [9, 0], sizes = [192, 128], strides = [1, 1]} : vector<208x128xbf16> to vector<192x128xbf16>
      %c2 = arith.constant 2 : index
      %c0_39 = arith.constant 0 : index
      %c0_40 = arith.constant 0 : index
      %39 = vector.load %arg3[%c2, %c0_39, %c0_40] : memref<9x128x128xbf16, #tpu.memory_space<vmem>>, vector<1x128x128xbf16>
      %40 = vector.shape_cast %39 : vector<1x128x128xbf16> to vector<128x128xbf16>
      %cst_41 = arith.constant dense<0.000000e+00> : vector<192x128xf32>
      %41 = tpu.matmul %38, %40, %cst_41 {dimension_numbers = #tpu.dot_dimension_numbers<[1], [0], [0], [1], [0, 0, 1, 1], [], []>} : vector<192x128xbf16>, vector<128x128xbf16>, vector<192x128xf32> -> vector<192x128xf32>
      %42 = arith.addf %37, %41 : vector<192x128xf32>
      %c24_i32 = arith.constant 24 : i32
      %43 = arith.addi %22, %c24_i32 : i32
      %c0_i32_42 = arith.constant 0 : i32
      %44 = arith.addi %43, %c0_i32_42 : i32
      %45 = tpu.assume_multiple %44, 8 : i32
      %46 = arith.index_cast %45 : i32 to index
      %c0_43 = arith.constant 0 : index
      %47 = vector.load %arg10[%46, %c0_43] : memref<480x128xbf16, #tpu.memory_space<vmem>>, vector<208x128xbf16>
      %48 = vector.extract_strided_slice %47 {offsets = [7, 0], sizes = [192, 128], strides = [1, 1]} : vector<208x128xbf16> to vector<192x128xbf16>
      %c3 = arith.constant 3 : index
      %c0_44 = arith.constant 0 : index
      %c0_45 = arith.constant 0 : index
      %49 = vector.load %arg3[%c3, %c0_44, %c0_45] : memref<9x128x128xbf16, #tpu.memory_space<vmem>>, vector<1x128x128xbf16>
      %50 = vector.shape_cast %49 : vector<1x128x128xbf16> to vector<128x128xbf16>
      %cst_46 = arith.constant dense<0.000000e+00> : vector<192x128xf32>
      %51 = tpu.matmul %48, %50, %cst_46 {dimension_numbers = #tpu.dot_dimension_numbers<[1], [0], [0], [1], [0, 0, 1, 1], [], []>} : vector<192x128xbf16>, vector<128x128xbf16>, vector<192x128xf32> -> vector<192x128xf32>
      %52 = arith.addf %42, %51 : vector<192x128xf32>
      %53 = vector.extract_strided_slice %47 {offsets = [8, 0], sizes = [192, 128], strides = [1, 1]} : vector<208x128xbf16> to vector<192x128xbf16>
      %c4 = arith.constant 4 : index
      %c0_47 = arith.constant 0 : index
      %c0_48 = arith.constant 0 : index
      %54 = vector.load %arg3[%c4, %c0_47, %c0_48] : memref<9x128x128xbf16, #tpu.memory_space<vmem>>, vector<1x128x128xbf16>
      %55 = vector.shape_cast %54 : vector<1x128x128xbf16> to vector<128x128xbf16>
      %cst_49 = arith.constant dense<0.000000e+00> : vector<192x128xf32>
      %56 = tpu.matmul %53, %55, %cst_49 {dimension_numbers = #tpu.dot_dimension_numbers<[1], [0], [0], [1], [0, 0, 1, 1], [], []>} : vector<192x128xbf16>, vector<128x128xbf16>, vector<192x128xf32> -> vector<192x128xf32>
      %57 = arith.addf %52, %56 : vector<192x128xf32>
      %58 = vector.extract_strided_slice %47 {offsets = [9, 0], sizes = [192, 128], strides = [1, 1]} : vector<208x128xbf16> to vector<192x128xbf16>
      %c5 = arith.constant 5 : index
      %c0_50 = arith.constant 0 : index
      %c0_51 = arith.constant 0 : index
      %59 = vector.load %arg3[%c5, %c0_50, %c0_51] : memref<9x128x128xbf16, #tpu.memory_space<vmem>>, vector<1x128x128xbf16>
      %60 = vector.shape_cast %59 : vector<1x128x128xbf16> to vector<128x128xbf16>
      %cst_52 = arith.constant dense<0.000000e+00> : vector<192x128xf32>
      %61 = tpu.matmul %58, %60, %cst_52 {dimension_numbers = #tpu.dot_dimension_numbers<[1], [0], [0], [1], [0, 0, 1, 1], [], []>} : vector<192x128xbf16>, vector<128x128xbf16>, vector<192x128xf32> -> vector<192x128xf32>
      %62 = arith.addf %57, %61 : vector<192x128xf32>
      %c48_i32 = arith.constant 48 : i32
      %63 = arith.addi %22, %c48_i32 : i32
      %c0_i32_53 = arith.constant 0 : i32
      %64 = arith.addi %63, %c0_i32_53 : i32
      %65 = tpu.assume_multiple %64, 8 : i32
      %66 = arith.index_cast %65 : i32 to index
      %c0_54 = arith.constant 0 : index
      %67 = vector.load %arg10[%66, %c0_54] : memref<480x128xbf16, #tpu.memory_space<vmem>>, vector<208x128xbf16>
      %68 = vector.extract_strided_slice %67 {offsets = [7, 0], sizes = [192, 128], strides = [1, 1]} : vector<208x128xbf16> to vector<192x128xbf16>
      %c6 = arith.constant 6 : index
      %c0_55 = arith.constant 0 : index
      %c0_56 = arith.constant 0 : index
      %69 = vector.load %arg3[%c6, %c0_55, %c0_56] : memref<9x128x128xbf16, #tpu.memory_space<vmem>>, vector<1x128x128xbf16>
      %70 = vector.shape_cast %69 : vector<1x128x128xbf16> to vector<128x128xbf16>
      %cst_57 = arith.constant dense<0.000000e+00> : vector<192x128xf32>
      %71 = tpu.matmul %68, %70, %cst_57 {dimension_numbers = #tpu.dot_dimension_numbers<[1], [0], [0], [1], [0, 0, 1, 1], [], []>} : vector<192x128xbf16>, vector<128x128xbf16>, vector<192x128xf32> -> vector<192x128xf32>
      %72 = arith.addf %62, %71 : vector<192x128xf32>
      %73 = vector.extract_strided_slice %67 {offsets = [8, 0], sizes = [192, 128], strides = [1, 1]} : vector<208x128xbf16> to vector<192x128xbf16>
      %c7 = arith.constant 7 : index
      %c0_58 = arith.constant 0 : index
      %c0_59 = arith.constant 0 : index
      %74 = vector.load %arg3[%c7, %c0_58, %c0_59] : memref<9x128x128xbf16, #tpu.memory_space<vmem>>, vector<1x128x128xbf16>
      %75 = vector.shape_cast %74 : vector<1x128x128xbf16> to vector<128x128xbf16>
      %cst_60 = arith.constant dense<0.000000e+00> : vector<192x128xf32>
      %76 = tpu.matmul %73, %75, %cst_60 {dimension_numbers = #tpu.dot_dimension_numbers<[1], [0], [0], [1], [0, 0, 1, 1], [], []>} : vector<192x128xbf16>, vector<128x128xbf16>, vector<192x128xf32> -> vector<192x128xf32>
      %77 = arith.addf %72, %76 : vector<192x128xf32>
      %78 = vector.extract_strided_slice %67 {offsets = [9, 0], sizes = [192, 128], strides = [1, 1]} : vector<208x128xbf16> to vector<192x128xbf16>
      %c8_61 = arith.constant 8 : index
      %c0_62 = arith.constant 0 : index
      %c0_63 = arith.constant 0 : index
      %79 = vector.load %arg3[%c8_61, %c0_62, %c0_63] : memref<9x128x128xbf16, #tpu.memory_space<vmem>>, vector<1x128x128xbf16>
      %80 = vector.shape_cast %79 : vector<1x128x128xbf16> to vector<128x128xbf16>
      %cst_64 = arith.constant dense<0.000000e+00> : vector<192x128xf32>
      %81 = tpu.matmul %78, %80, %cst_64 {dimension_numbers = #tpu.dot_dimension_numbers<[1], [0], [0], [1], [0, 0, 1, 1], [], []>} : vector<192x128xbf16>, vector<128x128xbf16>, vector<192x128xf32> -> vector<192x128xf32>
      %82 = arith.addf %77, %81 : vector<192x128xf32>
      %cst_65 = arith.constant 0.000000e+00 : f32
      %83 = vector.broadcast %cst_65 : f32 to vector<192x128xf32>
      %84 = arith.maximumf %82, %83 : vector<192x128xf32>
      %85 = arith.index_cast %22 : i32 to index
      %c0_66 = arith.constant 0 : index
      %86 = vector.load %arg2[%85, %c0_66] : memref<384x1xbf16, #tpu.memory_space<vmem>>, vector<192x1xbf16>
      %87 = arith.truncf %84 : vector<192x128xf32> to vector<192x128xbf16>
      %88 = vector.broadcast %86 : vector<192x1xbf16> to vector<192x128xbf16>
      %89 = arith.mulf %87, %88 : vector<192x128xbf16>
      %c32_i32 = arith.constant 32 : i32
      %90 = arith.addi %c32_i32, %22 : i32
      %91 = arith.index_cast %90 : i32 to index
      %c0_67 = arith.constant 0 : index
      %92 = vector.load %arg11[%91, %c0_67] : memref<480x128xbf16, #tpu.memory_space<vmem>>, vector<192x128xbf16>
      tpu.vector_store %arg11[%91, %c0_67], %89 {strides = array<i32>} : memref<480x128xbf16, #tpu.memory_space<vmem>>, vector<192x128xbf16>,
    }
    %c2_i32_18 = arith.constant 2 : i32
    %c0_19 = arith.constant 0 : index
    %c0_20 = arith.constant 0 : index
    %15 = vector.load %arg6[%c0_19, %c0_20] : memref<1x128xf32, #tpu.memory_space<vmem>>, vector<1x128xf32>
    %16 = vector.shape_cast %15 : vector<1x128xf32> to vector<1x128xf32>
    %17 = vector.broadcast %16 : vector<1x128xf32> to vector<192x128xf32>
    %c0_21 = arith.constant 0 : index
    %c0_22 = arith.constant 0 : index
    %18 = vector.load %arg7[%c0_21, %c0_22] : memref<128x128xbf16, #tpu.memory_space<vmem>>, vector<128x128xbf16>
    %c0_23 = arith.constant 0 : index
    %c0_24 = arith.constant 0 : index
    %19 = vector.load %arg8[%c0_23, %c0_24] : memref<1x128xf32, #tpu.memory_space<vmem>>, vector<1x128xf32>
    %c0_i32_25 = arith.constant 0 : i32
    %c2_i32_26 = arith.constant 2 : i32
    %20 = arith.addi %c0_i32_25, %c2_i32_26 : i32
    %c1_i32_27 = arith.constant 1 : i32
    scf.for %arg12 = %c0_i32_25 to %20 step %c1_i32_27  : i32 {
      %c192_i32 = arith.constant 192 : i32
      %21 = arith.muli %arg12, %c192_i32 : i32
      %22 = tpu.assume_multiple %21, 8 : i32
      %c0_i32_29 = arith.constant 0 : i32
      %23 = arith.addi %22, %c0_i32_29 : i32
      %c0_i32_30 = arith.constant 0 : i32
      %24 = arith.addi %23, %c0_i32_30 : i32
      %25 = tpu.assume_multiple %24, 8 : i32
      %26 = arith.index_cast %25 : i32 to index
      %c0_31 = arith.constant 0 : index
      %27 = vector.load %arg11[%26, %c0_31] : memref<480x128xbf16, #tpu.memory_space<vmem>>, vector<208x128xbf16>
      %28 = vector.extract_strided_slice %27 {offsets = [7, 0], sizes = [192, 128], strides = [1, 1]} : vector<208x128xbf16> to vector<192x128xbf16>
      %c0_32 = arith.constant 0 : index
      %c0_33 = arith.constant 0 : index
      %c0_34 = arith.constant 0 : index
      %29 = vector.load %arg5[%c0_32, %c0_33, %c0_34] : memref<9x128x128xbf16, #tpu.memory_space<vmem>>, vector<1x128x128xbf16>
      %30 = vector.shape_cast %29 : vector<1x128x128xbf16> to vector<128x128xbf16>
      %cst_35 = arith.constant dense<0.000000e+00> : vector<192x128xf32>
      %31 = tpu.matmul %28, %30, %cst_35 {dimension_numbers = #tpu.dot_dimension_numbers<[1], [0], [0], [1], [0, 0, 1, 1], [], []>} : vector<192x128xbf16>, vector<128x128xbf16>, vector<192x128xf32> -> vector<192x128xf32>
      %32 = arith.addf %17, %31 : vector<192x128xf32>
      %33 = vector.extract_strided_slice %27 {offsets = [8, 0], sizes = [192, 128], strides = [1, 1]} : vector<208x128xbf16> to vector<192x128xbf16>
      %c1 = arith.constant 1 : index
      %c0_36 = arith.constant 0 : index
      %c0_37 = arith.constant 0 : index
      %34 = vector.load %arg5[%c1, %c0_36, %c0_37] : memref<9x128x128xbf16, #tpu.memory_space<vmem>>, vector<1x128x128xbf16>
      %35 = vector.shape_cast %34 : vector<1x128x128xbf16> to vector<128x128xbf16>
      %cst_38 = arith.constant dense<0.000000e+00> : vector<192x128xf32>
      %36 = tpu.matmul %33, %35, %cst_38 {dimension_numbers = #tpu.dot_dimension_numbers<[1], [0], [0], [1], [0, 0, 1, 1], [], []>} : vector<192x128xbf16>, vector<128x128xbf16>, vector<192x128xf32> -> vector<192x128xf32>
      %37 = arith.addf %32, %36 : vector<192x128xf32>
      %38 = vector.extract_strided_slice %27 {offsets = [9, 0], sizes = [192, 128], strides = [1, 1]} : vector<208x128xbf16> to vector<192x128xbf16>
      %c2 = arith.constant 2 : index
      %c0_39 = arith.constant 0 : index
      %c0_40 = arith.constant 0 : index
      %39 = vector.load %arg5[%c2, %c0_39, %c0_40] : memref<9x128x128xbf16, #tpu.memory_space<vmem>>, vector<1x128x128xbf16>
      %40 = vector.shape_cast %39 : vector<1x128x128xbf16> to vector<128x128xbf16>
      %cst_41 = arith.constant dense<0.000000e+00> : vector<192x128xf32>
      %41 = tpu.matmul %38, %40, %cst_41 {dimension_numbers = #tpu.dot_dimension_numbers<[1], [0], [0], [1], [0, 0, 1, 1], [], []>} : vector<192x128xbf16>, vector<128x128xbf16>, vector<192x128xf32> -> vector<192x128xf32>
      %42 = arith.addf %37, %41 : vector<192x128xf32>
      %c24_i32 = arith.constant 24 : i32
      %43 = arith.addi %22, %c24_i32 : i32
      %c0_i32_42 = arith.constant 0 : i32
      %44 = arith.addi %43, %c0_i32_42 : i32
      %45 = tpu.assume_multiple %44, 8 : i32
      %46 = arith.index_cast %45 : i32 to index
      %c0_43 = arith.constant 0 : index
      %47 = vector.load %arg11[%46, %c0_43] : memref<480x128xbf16, #tpu.memory_space<vmem>>, vector<208x128xbf16>
      %48 = vector.extract_strided_slice %47 {offsets = [7, 0], sizes = [192, 128], strides = [1, 1]} : vector<208x128xbf16> to vector<192x128xbf16>
      %c3 = arith.constant 3 : index
      %c0_44 = arith.constant 0 : index
      %c0_45 = arith.constant 0 : index
      %49 = vector.load %arg5[%c3, %c0_44, %c0_45] : memref<9x128x128xbf16, #tpu.memory_space<vmem>>, vector<1x128x128xbf16>
      %50 = vector.shape_cast %49 : vector<1x128x128xbf16> to vector<128x128xbf16>
      %cst_46 = arith.constant dense<0.000000e+00> : vector<192x128xf32>
      %51 = tpu.matmul %48, %50, %cst_46 {dimension_numbers = #tpu.dot_dimension_numbers<[1], [0], [0], [1], [0, 0, 1, 1], [], []>} : vector<192x128xbf16>, vector<128x128xbf16>, vector<192x128xf32> -> vector<192x128xf32>
      %52 = arith.addf %42, %51 : vector<192x128xf32>
      %53 = vector.extract_strided_slice %47 {offsets = [8, 0], sizes = [192, 128], strides = [1, 1]} : vector<208x128xbf16> to vector<192x128xbf16>
      %c4 = arith.constant 4 : index
      %c0_47 = arith.constant 0 : index
      %c0_48 = arith.constant 0 : index
      %54 = vector.load %arg5[%c4, %c0_47, %c0_48] : memref<9x128x128xbf16, #tpu.memory_space<vmem>>, vector<1x128x128xbf16>
      %55 = vector.shape_cast %54 : vector<1x128x128xbf16> to vector<128x128xbf16>
      %cst_49 = arith.constant dense<0.000000e+00> : vector<192x128xf32>
      %56 = tpu.matmul %53, %55, %cst_49 {dimension_numbers = #tpu.dot_dimension_numbers<[1], [0], [0], [1], [0, 0, 1, 1], [], []>} : vector<192x128xbf16>, vector<128x128xbf16>, vector<192x128xf32> -> vector<192x128xf32>
      %57 = arith.addf %52, %56 : vector<192x128xf32>
      %58 = vector.extract_strided_slice %47 {offsets = [9, 0], sizes = [192, 128], strides = [1, 1]} : vector<208x128xbf16> to vector<192x128xbf16>
      %c5 = arith.constant 5 : index
      %c0_50 = arith.constant 0 : index
      %c0_51 = arith.constant 0 : index
      %59 = vector.load %arg5[%c5, %c0_50, %c0_51] : memref<9x128x128xbf16, #tpu.memory_space<vmem>>, vector<1x128x128xbf16>
      %60 = vector.shape_cast %59 : vector<1x128x128xbf16> to vector<128x128xbf16>
      %cst_52 = arith.constant dense<0.000000e+00> : vector<192x128xf32>
      %61 = tpu.matmul %58, %60, %cst_52 {dimension_numbers = #tpu.dot_dimension_numbers<[1], [0], [0], [1], [0, 0, 1, 1], [], []>} : vector<192x128xbf16>, vector<128x128xbf16>, vector<192x128xf32> -> vector<192x128xf32>
      %62 = arith.addf %57, %61 : vector<192x128xf32>
      %c48_i32 = arith.constant 48 : i32
      %63 = arith.addi %22, %c48_i32 : i32
      %c0_i32_53 = arith.constant 0 : i32
      %64 = arith.addi %63, %c0_i32_53 : i32
      %65 = tpu.assume_multiple %64, 8 : i32
      %66 = arith.index_cast %65 : i32 to index
      %c0_54 = arith.constant 0 : index
      %67 = vector.load %arg11[%66, %c0_54] : memref<480x128xbf16, #tpu.memory_space<vmem>>, vector<208x128xbf16>
      %68 = vector.extract_strided_slice %67 {offsets = [7, 0], sizes = [192, 128], strides = [1, 1]} : vector<208x128xbf16> to vector<192x128xbf16>
      %c6 = arith.constant 6 : index
      %c0_55 = arith.constant 0 : index
      %c0_56 = arith.constant 0 : index
      %69 = vector.load %arg5[%c6, %c0_55, %c0_56] : memref<9x128x128xbf16, #tpu.memory_space<vmem>>, vector<1x128x128xbf16>
      %70 = vector.shape_cast %69 : vector<1x128x128xbf16> to vector<128x128xbf16>
      %cst_57 = arith.constant dense<0.000000e+00> : vector<192x128xf32>
      %71 = tpu.matmul %68, %70, %cst_57 {dimension_numbers = #tpu.dot_dimension_numbers<[1], [0], [0], [1], [0, 0, 1, 1], [], []>} : vector<192x128xbf16>, vector<128x128xbf16>, vector<192x128xf32> -> vector<192x128xf32>
      %72 = arith.addf %62, %71 : vector<192x128xf32>
      %73 = vector.extract_strided_slice %67 {offsets = [8, 0], sizes = [192, 128], strides = [1, 1]} : vector<208x128xbf16> to vector<192x128xbf16>
      %c7 = arith.constant 7 : index
      %c0_58 = arith.constant 0 : index
      %c0_59 = arith.constant 0 : index
      %74 = vector.load %arg5[%c7, %c0_58, %c0_59] : memref<9x128x128xbf16, #tpu.memory_space<vmem>>, vector<1x128x128xbf16>
      %75 = vector.shape_cast %74 : vector<1x128x128xbf16> to vector<128x128xbf16>
      %cst_60 = arith.constant dense<0.000000e+00> : vector<192x128xf32>
      %76 = tpu.matmul %73, %75, %cst_60 {dimension_numbers = #tpu.dot_dimension_numbers<[1], [0], [0], [1], [0, 0, 1, 1], [], []>} : vector<192x128xbf16>, vector<128x128xbf16>, vector<192x128xf32> -> vector<192x128xf32>
      %77 = arith.addf %72, %76 : vector<192x128xf32>
      %78 = vector.extract_strided_slice %67 {offsets = [9, 0], sizes = [192, 128], strides = [1, 1]} : vector<208x128xbf16> to vector<192x128xbf16>
      %c8_61 = arith.constant 8 : index
      %c0_62 = arith.constant 0 : index
      %c0_63 = arith.constant 0 : index
      %79 = vector.load %arg5[%c8_61, %c0_62, %c0_63] : memref<9x128x128xbf16, #tpu.memory_space<vmem>>, vector<1x128x128xbf16>
      %80 = vector.shape_cast %79 : vector<1x128x128xbf16> to vector<128x128xbf16>
      %cst_64 = arith.constant dense<0.000000e+00> : vector<192x128xf32>
      %81 = tpu.matmul %78, %80, %cst_64 {dimension_numbers = #tpu.dot_dimension_numbers<[1], [0], [0], [1], [0, 0, 1, 1], [], []>} : vector<192x128xbf16>, vector<128x128xbf16>, vector<192x128xf32> -> vector<192x128xf32>
      %82 = arith.addf %77, %81 : vector<192x128xf32>
      %cst_65 = arith.constant 0.000000e+00 : f32
      %83 = vector.broadcast %cst_65 : f32 to vector<192x128xf32>
      %84 = arith.maximumf %82, %83 : vector<192x128xf32>
      %85 = arith.truncf %84 : vector<192x128xf32> to vector<192x128xbf16>
      %cst_66 = arith.constant dense<0.000000e+00> : vector<192x128xf32>
      %86 = tpu.matmul %85, %18, %cst_66 {dimension_numbers = #tpu.dot_dimension_numbers<[1], [0], [0], [1], [0, 0, 1, 1], [], []>} : vector<192x128xbf16>, vector<128x128xbf16>, vector<192x128xf32> -> vector<192x128xf32>
      %87 = vector.broadcast %19 : vector<1x128xf32> to vector<192x128xf32>
      %88 = arith.addf %86, %87 : vector<192x128xf32>
      %89 = arith.truncf %88 : vector<192x128xf32> to vector<192x128xbf16>
      %c0_67 = arith.constant 0 : index
      %90 = arith.index_cast %22 : i32 to index
      %c0_68 = arith.constant 0 : index
      %91 = vector.load %arg9[%c0_67, %90, %c0_68] : memref<1x384x128xbf16, #tpu.memory_space<vmem>>, vector<1x192x128xbf16>
      %92 = vector.shape_cast %91 : vector<1x192x128xbf16> to vector<192x128xbf16>
      %93 = vector.shape_cast %89 : vector<192x128xbf16> to vector<1x192x128xbf16>
      tpu.vector_store %arg9[%c0_67, %90, %c0_68], %93 {strides = array<i32>} : memref<1x384x128xbf16, #tpu.memory_space<vmem>>, vector<1x192x128xbf16>,
    }
    %c2_i32_28 = arith.constant 2 : i32
    return
  }
  func.func @transform_0(%arg0: i32) -> (i32, i32, i32, i32) {
    %c0_i32 = arith.constant 0 : i32
    %c0_i32_0 = arith.constant 0 : i32
    %c0_i32_1 = arith.constant 0 : i32
    %c0_i32_2 = arith.constant 0 : i32
    return %arg0, %c0_i32, %c0_i32_0, %c0_i32_1 : i32, i32, i32, i32
  }
  func.func @transform_1(%arg0: i32) -> (i32, i32) {
    %c0_i32 = arith.constant 0 : i32
    %c0_i32_0 = arith.constant 0 : i32
    %c0_i32_1 = arith.constant 0 : i32
    return %c0_i32, %c0_i32_0 : i32, i32
  }
  func.func @transform_2(%arg0: i32) -> (i32, i32, i32) {
    %c0_i32 = arith.constant 0 : i32
    %c0_i32_0 = arith.constant 0 : i32
    %c0_i32_1 = arith.constant 0 : i32
    %c0_i32_2 = arith.constant 0 : i32
    return %c0_i32, %c0_i32_0, %c0_i32_1 : i32, i32, i32
  }
  func.func @transform_3(%arg0: i32) -> (i32, i32) {
    %c0_i32 = arith.constant 0 : i32
    %c0_i32_0 = arith.constant 0 : i32
    %c0_i32_1 = arith.constant 0 : i32
    return %c0_i32, %c0_i32_0 : i32, i32
  }
  func.func @transform_4(%arg0: i32) -> (i32, i32, i32) {
    %c0_i32 = arith.constant 0 : i32
    %c0_i32_0 = arith.constant 0 : i32
    %c0_i32_1 = arith.constant 0 : i32
    %c0_i32_2 = arith.constant 0 : i32
    return %c0_i32, %c0_i32_0, %c0_i32_1 : i32, i32, i32
  }
  func.func @transform_5(%arg0: i32) -> (i32, i32) {
    %c0_i32 = arith.constant 0 : i32
    %c0_i32_0 = arith.constant 0 : i32
    %c0_i32_1 = arith.constant 0 : i32
    return %c0_i32, %c0_i32_0 : i32, i32
  }
  func.func @transform_6(%arg0: i32) -> (i32, i32) {
    %c0_i32 = arith.constant 0 : i32
    %c0_i32_0 = arith.constant 0 : i32
    %c0_i32_1 = arith.constant 0 : i32
    return %c0_i32, %c0_i32_0 : i32, i32
  }
  func.func @transform_7(%arg0: i32) -> (i32, i32) {
    %c0_i32 = arith.constant 0 : i32
    %c0_i32_0 = arith.constant 0 : i32
    %c0_i32_1 = arith.constant 0 : i32
    return %c0_i32, %c0_i32_0 : i32, i32
  }
  func.func @transform_8(%arg0: i32) -> (i32, i32, i32) {
    %c0_i32 = arith.constant 0 : i32
    %c0_i32_0 = arith.constant 0 : i32
    %c0_i32_1 = arith.constant 0 : i32
    return %arg0, %c0_i32, %c0_i32_0 : i32, i32, i32
  }
}

</mosaic_0001>

<llo_original>
// kernel: mask_branch_forward.1
$region0: #{mask_branch_forward.1}
  #allocation0 [shape = 'u32[]', space=smem, size = 0x4, offset = 0x4, fixed_abs, tag = 'smem constant byte address 0x4 - core index']
  #allocation1 [shape = 'u32[144,128]{1,0:T(1,128)}', space=vmem, size = 0x12000, scoped, tag = 'internal scratch']
  #allocation2 [shape = 'bf16[480,128]{1,0:T(8,128)(2,1)}', space=vmem, size = 0x1e000, scoped, tag = 'scratch operand']
  #allocation3 [shape = 'bf16[480,128]{1,0:T(8,128)(2,1)}', space=vmem, size = 0x1e000, scoped, tag = 'scratch operand']
  %s0 = inlined_call_operand.vmem [shape: bf16[2,16,16,8], index: 0, kind: input, shape index: {}]
  %s1 = inlined_call_operand.vmem [shape: bf16[384,1], index: 1, kind: input, shape index: {}]
  %s2 = inlined_call_operand.vmem [shape: bf16[9,128,128], index: 2, kind: input, shape index: {}]
  %s3 = inlined_call_operand.vmem [shape: f32[1,128], index: 3, kind: input, shape index: {}]
  %s4 = inlined_call_operand.vmem [shape: bf16[9,128,128], index: 4, kind: input, shape index: {}]
  %s5 = inlined_call_operand.vmem [shape: f32[1,128], index: 5, kind: input, shape index: {}]
  %s6 = inlined_call_operand.vmem [shape: bf16[128,128], index: 6, kind: input, shape index: {}]
  %s7 = inlined_call_operand.vmem [shape: f32[1,128], index: 7, kind: input, shape index: {}]
  %s8 = inlined_call_operand.vmem [shape: bf16[2,384,128], index: 8, kind: output, shape index: {}]
  %s9 = sld [smem:[#allocation0]]
  $region86: #{mask_branch_forward.1} parent=0
    _
  %s11 = ssub.s32 1, %s9
  %s12 = scalar_select 0, %s11, %s9
  loop: start=0, step=1, limit=4
  $region2: #{mask_branch_forward.1} parent=0 // loop_pre_header
    _
  $region3: #{mask_branch_forward.1} parent=0 // loop_header
    %s14 = sphi 0, %s18
    %p15 = scmp.ge.s32.totalorder %s14, 4
    %s24 = sphi 0, %s26
    %s27 = sphi 0, %s24
    %s28 = sphi 0, %s27
    %s44 = sphi 0, %s28
    %s48 = sphi 0, %s48
    %s50 = sphi 0, %s48
    %s51 = sphi 0, %s50
    %s65 = sphi 0, %s51
    %s69 = sphi 0, %s69
    %s71 = sphi 0, %s69
    %s72 = sphi 0, %s71
    %s86 = sphi 0, %s72
    %s90 = sphi 0, %s90
    %s92 = sphi 0, %s90
    %s93 = sphi 0, %s92
    %s107 = sphi 0, %s93
    %s111 = sphi 0, %s111
    %s113 = sphi 0, %s111
    %s114 = sphi 0, %s113
    %s128 = sphi 0, %s114
    %s132 = sphi 0, %s132
    %s134 = sphi 0, %s132
    %s135 = sphi 0, %s134
    %s149 = sphi 0, %s135
    %s153 = sphi 0, %s153
    %s155 = sphi 0, %s153
    %s156 = sphi 0, %s155
    %s170 = sphi 0, %s156
    %s174 = sphi 0, %s174
    %s176 = sphi 0, %s174
    %s177 = sphi 0, %s176
    %s191 = sphi 0, %s177
    %s197 = sphi 0, %s199
    %s200 = sphi 0, %s197
    %s201 = sphi 0, %s200
    %s217 = sphi 0, %s201
  $region4: #{mask_branch_forward.1} parent=0 // loop_header_branch
    %17 = sbr.rel (%p15) target = $region8
  $region5: #{mask_branch_forward.1} parent=0 // loop_body
    %s19 = ssub.s32 %s14, 1
    %s20 = ssub.s32 %s14, 2
    %s21 = sadd.s32 %s14, 1
    %s22 = ssub.s32 %s14, %s21
    %p23 = scmp.eq.s32.totalorder %s22, 0
    %s25 = sadd.s32 %s24, 1
    %s26 = scalar_select %p23, %s24, %s25
    %p29 = pneg %p23
    %p30 = scmp.eq.s32.totalorder %s14, 1
    %p31 = por %p29, %p30
    %p32 = scmp.ne.s32.totalorder %s24, %s27
    %p33 = scmp.eq.s32.totalorder %s14, 0
    %p34 = por %p32, %p33
    %p35 = scmp.ne.s32.totalorder %s24, %s27
    %p36 = scmp.eq.s32.totalorder %s19, 1
    %p37 = por %p35, %p36
    %p38 = scmp.ne.s32.totalorder %s27, %s28
    %p39 = scmp.eq.s32.totalorder %s19, 0
    %p40 = por %p38, %p39
    %p41 = scmp.ne.s32.totalorder %s27, %s28
    %p42 = scmp.eq.s32.totalorder %s20, 1
    %p43 = por %p41, %p42
    %p45 = scmp.ne.s32.totalorder %s28, %s44
    %p46 = scmp.eq.s32.totalorder %s20, 0
    %p47 = por %p45, %p46
    %s49 = sadd.s32 %s48, 1
    %p52 = scmp.eq.s32.totalorder %s14, 1
    %p53 = scmp.ne.s32.totalorder %s48, %s50
    %p54 = scmp.eq.s32.totalorder %s14, 0
    %p55 = por %p53, %p54
    %p56 = scmp.ne.s32.totalorder %s48, %s50
    %p57 = scmp.eq.s32.totalorder %s19, 1
    %p58 = por %p56, %p57
    %p59 = scmp.ne.s32.totalorder %s50, %s51
    %p60 = scmp.eq.s32.totalorder %s19, 0
    %p61 = por %p59, %p60
    %p62 = scmp.ne.s32.totalorder %s50, %s51
    %p63 = scmp.eq.s32.totalorder %s20, 1
    %p64 = por %p62, %p63
    %p66 = scmp.ne.s32.totalorder %s51, %s65
    %p67 = scmp.eq.s32.totalorder %s20, 0
    %p68 = por %p66, %p67
    %s70 = sadd.s32 %s69, 1
    %p73 = scmp.eq.s32.totalorder %s14, 1
    %p74 = scmp.ne.s32.totalorder %s69, %s71
    %p75 = scmp.eq.s32.totalorder %s14, 0
    %p76 = por %p74, %p75
    %p77 = scmp.ne.s32.totalorder %s69, %s71
    %p78 = scmp.eq.s32.totalorder %s19, 1
    %p79 = por %p77, %p78
    %p80 = scmp.ne.s32.totalorder %s71, %s72
    %p81 = scmp.eq.s32.totalorder %s19, 0
    %p82 = por %p80, %p81
    %p83 = scmp.ne.s32.totalorder %s71, %s72
    %p84 = scmp.eq.s32.totalorder %s20, 1
    %p85 = por %p83, %p84
    %p87 = scmp.ne.s32.totalorder %s72, %s86
    %p88 = scmp.eq.s32.totalorder %s20, 0
    %p89 = por %p87, %p88
    %s91 = sadd.s32 %s90, 1
    %p94 = scmp.eq.s32.totalorder %s14, 1
    %p95 = scmp.ne.s32.totalorder %s90, %s92
    %p96 = scmp.eq.s32.totalorder %s14, 0
    %p97 = por %p95, %p96
    %p98 = scmp.ne.s32.totalorder %s90, %s92
    %p99 = scmp.eq.s32.totalorder %s19, 1
    %p100 = por %p98, %p99
    %p101 = scmp.ne.s32.totalorder %s92, %s93
    %p102 = scmp.eq.s32.totalorder %s19, 0
    %p103 = por %p101, %p102
    %p104 = scmp.ne.s32.totalorder %s92, %s93
    %p105 = scmp.eq.s32.totalorder %s20, 1
    %p106 = por %p104, %p105
    %p108 = scmp.ne.s32.totalorder %s93, %s107
    %p109 = scmp.eq.s32.totalorder %s20, 0
    %p110 = por %p108, %p109
    %s112 = sadd.s32 %s111, 1
    %p115 = scmp.eq.s32.totalorder %s14, 1
    %p116 = scmp.ne.s32.totalorder %s111, %s113
    %p117 = scmp.eq.s32.totalorder %s14, 0
    %p118 = por %p116, %p117
    %p119 = scmp.ne.s32.totalorder %s111, %s113
    %p120 = scmp.eq.s32.totalorder %s19, 1
    %p121 = por %p119, %p120
    %p122 = scmp.ne.s32.totalorder %s113, %s114
    %p123 = scmp.eq.s32.totalorder %s19, 0
    %p124 = por %p122, %p123
    %p125 = scmp.ne.s32.totalorder %s113, %s114
    %p126 = scmp.eq.s32.totalorder %s20, 1
    %p127 = por %p125, %p126
    %p129 = scmp.ne.s32.totalorder %s114, %s128
    %p130 = scmp.eq.s32.totalorder %s20, 0
    %p131 = por %p129, %p130
    %s133 = sadd.s32 %s132, 1
    %p136 = scmp.eq.s32.totalorder %s14, 1
    %p137 = scmp.ne.s32.totalorder %s132, %s134
    %p138 = scmp.eq.s32.totalorder %s14, 0
    %p139 = por %p137, %p138
    %p140 = scmp.ne.s32.totalorder %s132, %s134
    %p141 = scmp.eq.s32.totalorder %s19, 1
    %p142 = por %p140, %p141
    %p143 = scmp.ne.s32.totalorder %s134, %s135
    %p144 = scmp.eq.s32.totalorder %s19, 0
    %p145 = por %p143, %p144
    %p146 = scmp.ne.s32.totalorder %s134, %s135
    %p147 = scmp.eq.s32.totalorder %s20, 1
    %p148 = por %p146, %p147
    %p150 = scmp.ne.s32.totalorder %s135, %s149
    %p151 = scmp.eq.s32.totalorder %s20, 0
    %p152 = por %p150, %p151
    %s154 = sadd.s32 %s153, 1
    %p157 = scmp.eq.s32.totalorder %s14, 1
    %p158 = scmp.ne.s32.totalorder %s153, %s155
    %p159 = scmp.eq.s32.totalorder %s14, 0
    %p160 = por %p158, %p159
    %p161 = scmp.ne.s32.totalorder %s153, %s155
    %p162 = scmp.eq.s32.totalorder %s19, 1
    %p163 = por %p161, %p162
    %p164 = scmp.ne.s32.totalorder %s155, %s156
    %p165 = scmp.eq.s32.totalorder %s19, 0
    %p166 = por %p164, %p165
    %p167 = scmp.ne.s32.totalorder %s155, %s156
    %p168 = scmp.eq.s32.totalorder %s20, 1
    %p169 = por %p167, %p168
    %p171 = scmp.ne.s32.totalorder %s156, %s170
    %p172 = scmp.eq.s32.totalorder %s20, 0
    %p173 = por %p171, %p172
    %s175 = sadd.s32 %s174, 1
    %p178 = scmp.eq.s32.totalorder %s14, 1
    %p179 = scmp.ne.s32.totalorder %s174, %s176
    %p180 = scmp.eq.s32.totalorder %s14, 0
    %p181 = por %p179, %p180
    %p182 = scmp.ne.s32.totalorder %s174, %s176
    %p183 = scmp.eq.s32.totalorder %s19, 1
    %p184 = por %p182, %p183
    %p185 = scmp.ne.s32.totalorder %s176, %s177
    %p186 = scmp.eq.s32.totalorder %s19, 0
    %p187 = por %p185, %p186
    %p188 = scmp.ne.s32.totalorder %s176, %s177
    %p189 = scmp.eq.s32.totalorder %s20, 1
    %p190 = por %p188, %p189
    %p192 = scmp.ne.s32.totalorder %s177, %s191
    %p193 = scmp.eq.s32.totalorder %s20, 0
    %p194 = por %p192, %p193
    %s195 = ssub.s32 %s14, %s21
    %p196 = scmp.eq.s32.totalorder %s195, 0
    %s198 = sadd.s32 %s197, 1
    %s199 = scalar_select %p196, %s197, %s198
    %p202 = pneg %p196
    %p203 = scmp.eq.s32.totalorder %s14, 1
    %p204 = por %p202, %p203
    %p205 = scmp.ne.s32.totalorder %s197, %s200
    %p206 = scmp.eq.s32.totalorder %s14, 0
    %p207 = por %p205, %p206
    %p208 = scmp.ne.s32.totalorder %s197, %s200
    %p209 = scmp.eq.s32.totalorder %s19, 1
    %p210 = por %p208, %p209
    %p211 = scmp.ne.s32.totalorder %s200, %s201
    %p212 = scmp.eq.s32.totalorder %s19, 0
    %p213 = por %p211, %p212
    %p214 = scmp.ne.s32.totalorder %s200, %s201
    %p215 = scmp.eq.s32.totalorder %s20, 1
    %p216 = por %p214, %p215
    %p218 = scmp.ne.s32.totalorder %s201, %s217
    %p219 = scmp.eq.s32.totalorder %s20, 0
    %p220 = por %p218, %p219
    %p221 = scmp.le.s32.totalorder 1, %s14
    %p222 = scmp.lt.s32.totalorder %s14, 3
    %p223 = pnand %p221, %p222
    %p224 = pneg %p223
    // Predicated region
    $region9: #{mask_branch_forward.1} parent=5 // pred_check
      _
    $region10: #{mask_branch_forward.1} parent=5 // pred_check_branch
      %226 = sbr.rel (%p223) target = $region12
    $region11: #{mask_branch_forward.1} parent=5 // pred_region
      %s227 = ssub.s32 %s14, 1
      // Predicated region
      $region13: #{mask_branch_forward.1} parent=11 // pred_check
        %p228 = pneg %p61
      $region14: #{mask_branch_forward.1} parent=11 // pred_check_branch
        %230 = sbr.rel (%p228) target = $region16
      $region15: #{mask_branch_forward.1} parent=11 // pred_region
        _
      $region16: #{mask_branch_forward.1} parent=11 // pred_fallthru
        _
      // Predicated region
      $region17: #{mask_branch_forward.1} parent=11 // pred_check
        %p231 = pneg %p82
      $region18: #{mask_branch_forward.1} parent=11 // pred_check_branch
        %233 = sbr.rel (%p231) target = $region20
      $region19: #{mask_branch_forward.1} parent=11 // pred_region
        _
      $region20: #{mask_branch_forward.1} parent=11 // pred_fallthru
        _
      // Predicated region
      $region21: #{mask_branch_forward.1} parent=11 // pred_check
        %p234 = pneg %p103
      $region22: #{mask_branch_forward.1} parent=11 // pred_check_branch
        %236 = sbr.rel (%p234) target = $region24
      $region23: #{mask_branch_forward.1} parent=11 // pred_region
        _
      $region24: #{mask_branch_forward.1} parent=11 // pred_fallthru
        _
      // Predicated region
      $region25: #{mask_branch_forward.1} parent=11 // pred_check
        %p237 = pneg %p124
      $region26: #{mask_branch_forward.1} parent=11 // pred_check_branch
        %239 = sbr.rel (%p237) target = $region28
      $region27: #{mask_branch_forward.1} parent=11 // pred_region
        _
      $region28: #{mask_branch_forward.1} parent=11 // pred_fallthru
        _
      // Predicated region
      $region29: #{mask_branch_forward.1} parent=11 // pred_check
        %p240 = pneg %p145
      $region30: #{mask_branch_forward.1} parent=11 // pred_check_branch
        %242 = sbr.rel (%p240) target = $region32
      $region31: #{mask_branch_forward.1} parent=11 // pred_region
        _
      $region32: #{mask_branch_forward.1} parent=11 // pred_fallthru
        _
      // Predicated region
      $region33: #{mask_branch_forward.1} parent=11 // pred_check
        %p243 = pneg %p166
      $region34: #{mask_branch_forward.1} parent=11 // pred_check_branch
        %245 = sbr.rel (%p243) target = $region36
      $region35: #{mask_branch_forward.1} parent=11 // pred_region
        _
      $region36: #{mask_branch_forward.1} parent=11 // pred_fallthru
        _
      // Predicated region
      $region37: #{mask_branch_forward.1} parent=11 // pred_check
        %p246 = pneg %p187
      $region38: #{mask_branch_forward.1} parent=11 // pred_check_branch
        %248 = sbr.rel (%p246) target = $region40
      $region39: #{mask_branch_forward.1} parent=11 // pred_region
        _
      $region40: #{mask_branch_forward.1} parent=11 // pred_fallthru
        _
    $region12: #{mask_branch_forward.1} parent=5 // pred_fallthru
      _
    %p249 = scmp.lt.s32.totalorder %s14, 2
    // Predicated region
    $region41: #{mask_branch_forward.1} parent=5 // pred_check
      %p250 = pneg %p249
    $region42: #{mask_branch_forward.1} parent=5 // pred_check_branch
      %252 = sbr.rel (%p250) target = $region44
    $region43: #{mask_branch_forward.1} parent=5 // pred_region
      // Predicated region
      $region45: #{mask_branch_forward.1} parent=43 // pred_check
        %p253 = pneg %p34
      $region46: #{mask_branch_forward.1} parent=43 // pred_check_branch
        %255 = sbr.rel (%p253) target = $region48
      $region47: #{mask_branch_forward.1} parent=43 // pred_region
        %p256 = scmp.lt.s32.totalorder %s14, 1
        %s257 = scalar_select %p256, %s14, 1
        %s258 = smul.addr %s257, 32
        %s259 = smul.addr %s258, 4
        %s260 = scalar_lea.vmem %s0, %s259
      $region48: #{mask_branch_forward.1} parent=43 // pred_fallthru
        _
    $region44: #{mask_branch_forward.1} parent=5 // pred_fallthru
      _
    %p261 = scmp.le.s32.totalorder 1, %s14
    %p262 = scmp.lt.s32.totalorder %s14, 3
    %p263 = pnand %p261, %p262
    %p264 = pneg %p263
    // Predicated region
    $region49: #{mask_branch_forward.1} parent=5 // pred_check
      _
    $region50: #{mask_branch_forward.1} parent=5 // pred_check_branch
      %266 = sbr.rel (%p263) target = $region52
    $region51: #{mask_branch_forward.1} parent=5 // pred_region
      %s267 = ssub.s32 %s14, 1
      %p268 = scmp.lt.s32.totalorder %s19, 1
      %s269 = scalar_select %p268, %s19, 1
      %s270 = smul.addr %s269, 32
      %s271 = smul.addr %s270, 4
      %s272 = scalar_lea.vmem %s0, %s271
      %p273 = pneg %p40
      %p274 = pneg %p37
      %p275 = pneg %p61
      %p276 = pneg %p58
      %p277 = pneg %p82
      %p278 = pneg %p79
      %p279 = pneg %p103
      %p280 = pneg %p100
      %p281 = pneg %p124
      %p282 = pneg %p121
      %p283 = pneg %p145
      %p284 = pneg %p142
      %p285 = pneg %p166
      %p286 = pneg %p163
      %p287 = pneg %p187
      %p288 = pneg %p184
      %p289 = pneg %p213
      %p290 = pneg %p210
      %p291 = scmp.lt.s32.totalorder %s19, 1
      %s292 = scalar_select %p291, %s19, 1
      %s293 = smul.addr %s292, 48
      %s294 = smul.addr %s293, 4
      %s295 = scalar_lea.vmem %s8, %s294
      %p296 = scmp.lt.s32.totalorder %s19, 1
      %s297 = scalar_select %p296, %s19, 1
      %s298 = smul.addr %s297, 32
      %s299 = smul.addr %s298, 4
      %s300 = scalar_lea.vmem %s0, %s299
      %p301 = scmp.lt.s32.totalorder %s19, 1
      %s302 = scalar_select %p301, %s19, 1
      %s303 = smul.addr %s302, 48
      %s304 = smul.addr %s303, 4
      %s305 = scalar_lea.vmem %s8, %s304
      %307 = vst [vmem:[#allocation2] sm:$0xf] 0
      %308 = vst [vmem:[#allocation2 + $0x4] sm:$0xf] 0
      %309 = vst [vmem:[#allocation2 + $0x8] sm:$0xf] 0
      %310 = vst [vmem:[#allocation2 + $0x4] sm:$0xf] 0
      %311 = vst [vmem:[#allocation2 + $0x8] sm:$0xf] 0
      %312 = vst [vmem:[#allocation2 + $0xc] sm:$0xf] 0
      %313 = vst [vmem:[#allocation2 + $0xd0] sm:$0xf] 0
      %314 = vst [vmem:[#allocation2 + $0xd4] sm:$0xf] 0
      %315 = vst [vmem:[#allocation2 + $0xd8] sm:$0xf] 0
      %316 = vst [vmem:[#allocation2 + $0xdc] sm:$0xf] 0
      %317 = vst [vmem:[#allocation2 + $0xe0] sm:$0xf] 0
      %318 = vst [vmem:[#allocation2 + $0xe4] sm:$0xf] 0
      %319 = vst [vmem:[#allocation3] sm:$0xf] 0
      %320 = vst [vmem:[#allocation3 + $0x4] sm:$0xf] 0
      %321 = vst [vmem:[#allocation3 + $0x8] sm:$0xf] 0
      %322 = vst [vmem:[#allocation3 + $0x4] sm:$0xf] 0
      %323 = vst [vmem:[#allocation3 + $0x8] sm:$0xf] 0
      %324 = vst [vmem:[#allocation3 + $0xc] sm:$0xf] 0
      %325 = vst [vmem:[#allocation3 + $0xd0] sm:$0xf] 0
      %326 = vst [vmem:[#allocation3 + $0xd4] sm:$0xf] 0
      %327 = vst [vmem:[#allocation3 + $0xd8] sm:$0xf] 0
      %328 = vst [vmem:[#allocation3 + $0xdc] sm:$0xf] 0
      %329 = vst [vmem:[#allocation3 + $0xe0] sm:$0xf] 0
      %330 = vst [vmem:[#allocation3 + $0xe4] sm:$0xf] 0
      loop: start=0, step=1, limit=16
      $region53: #{mask_branch_forward.1} parent=51 // loop_pre_header
        _
      $region54: #{mask_branch_forward.1} parent=51 // loop_header
        %s332 = sphi 0, %s336
        %p333 = scmp.ge.s32.totalorder %s332, 16
      $region55: #{mask_branch_forward.1} parent=51 // loop_header_branch
        %335 = sbr.rel (%p333) target = $region59
      $region56: #{mask_branch_forward.1} parent=51 // loop_body
        %s337 = smul.u32 %s332, 24
        %s338 = sadd.s32 %s337, 32
        %s339 = sshra.s32 %s338, 3
        %s340 = sand.u32 %s338, 7
        %s341 = smul.addr %s339, 4
        %s342 = scalar_lea.vmem [#allocation2], %s341
        %343 = vst [vmem:[%s342] sm:$0xf] 0
        %344 = vst [vmem:[%s342 + $0x4] sm:$0xf] 0
        %345 = vst [vmem:[%s342 + $0x8] sm:$0xf] 0
        %s346 = smul.u32 %s332, 2
        %s347 = smul.addr %s346, 4
        %s348 = scalar_lea.vmem %s300, %s347
        %v349 = vld [vmem:[%s348] sm:$0xf]
        %v350 = vld [vmem:[%s348 + $0x4] sm:$0xf]
        %vm351 = vcmask 60416
        %352 = vst.msk [vmem:[%s342] sm:$0xf] %vm351, %v349
        %353 = vst.msk [vmem:[%s342 + $0x4] sm:$0xf] %vm351, %v350
      $region57: #{mask_branch_forward.1} parent=51 // loop_footer
        %s336 = sadd.s32 1, %s332
      $region58: #{mask_branch_forward.1} parent=51 // loop_footer_branch
        %331 = sbr.rel target = $region54
      $region59: #{mask_branch_forward.1} parent=51 // loop_exit
        _
      %v354 = vld [vmem:[%s3] sm:$0x1]
      %v356 = vlaneseq
      %v357 = vshrl.u32 %v356, 7
      %v358 = vsub.s32 0, %v357
      %v359 = vrot.slane %v354, %v358
      loop: start=0, step=1, limit=2
      $region60: #{mask_branch_forward.1} parent=51 // loop_pre_header
        _
      $region61: #{mask_branch_forward.1} parent=51 // loop_header
        %s362 = sphi 0, %s366
        %p363 = scmp.ge.s32.totalorder %s362, 2
      $region62: #{mask_branch_forward.1} parent=51 // loop_header_branch
        %365 = sbr.rel (%p363) target = $region66
      $region63: #{mask_branch_forward.1} parent=51 // loop_body
        %s367 = smul.u32 %s362, 192
        %s368 = sshra.s32 %s367, 3
        %s369 = sand.u32 %s367, 7
        %s370 = smul.addr %s368, 4
        %s371 = scalar_lea.vmem [#allocation2], %s370
        %v372 = vld [vmem:[%s371] sm:$0xf]
        %v373 = vld [vmem:[%s371 + $0x4] sm:$0xf]
        %v374 = vld [vmem:[%s371 + $0x8] sm:$0xf]
        %v375 = vld [vmem:[%s371 + $0xc] sm:$0xf]
        %v376 = vld [vmem:[%s371 + $0x10] sm:$0xf]
        %v377 = vld [vmem:[%s371 + $0x14] sm:$0xf]
        %v378 = vld [vmem:[%s371 + $0x18] sm:$0xf]
        %v379 = vld [vmem:[%s371 + $0x1c] sm:$0xf]
        %v380 = vld [vmem:[%s371 + $0x20] sm:$0xf]
        %v381 = vld [vmem:[%s371 + $0x24] sm:$0xf]
        %v382 = vld [vmem:[%s371 + $0x28] sm:$0xf]
        %v383 = vld [vmem:[%s371 + $0x2c] sm:$0xf]
        %v384 = vld [vmem:[%s371 + $0x30] sm:$0xf]
        %v385 = vld [vmem:[%s371 + $0x34] sm:$0xf]
        %v386 = vld [vmem:[%s371 + $0x38] sm:$0xf]
        %v387 = vld [vmem:[%s371 + $0x3c] sm:$0xf]
        %v388 = vld [vmem:[%s371 + $0x40] sm:$0xf]
        %v389 = vld [vmem:[%s371 + $0x44] sm:$0xf]
        %v390 = vld [vmem:[%s371 + $0x48] sm:$0xf]
        %v391 = vld [vmem:[%s371 + $0x4c] sm:$0xf]
        %v392 = vld [vmem:[%s371 + $0x50] sm:$0xf]
        %v393 = vld [vmem:[%s371 + $0x54] sm:$0xf]
        %v394 = vld [vmem:[%s371 + $0x58] sm:$0xf]
        %v395 = vld [vmem:[%s371 + $0x5c] sm:$0xf]
        %v396 = vld [vmem:[%s371 + $0x60] sm:$0xf]
        %v397 = vld [vmem:[%s371 + $0x64] sm:$0xf]
        %v398 = vld [vmem:[%s2] sm:$0xf]
        %v399 = vld [vmem:[%s2 + $0x4] sm:$0xf]
        %v400 = vld [vmem:[%s2 + $0x8] sm:$0xf]
        %v401 = vld [vmem:[%s2 + $0xc] sm:$0xf]
        %v402 = vld [vmem:[%s2 + $0x10] sm:$0xf]
        %v403 = vld [vmem:[%s2 + $0x14] sm:$0xf]
        %v404 = vld [vmem:[%s2 + $0x18] sm:$0xf]
        %v405 = vld [vmem:[%s2 + $0x1c] sm:$0xf]
        %v406 = vld [vmem:[%s2 + $0x20] sm:$0xf]
        %v407 = vld [vmem:[%s2 + $0x24] sm:$0xf]
        %v408 = vld [vmem:[%s2 + $0x28] sm:$0xf]
        %v409 = vld [vmem:[%s2 + $0x2c] sm:$0xf]
        %v410 = vld [vmem:[%s2 + $0x30] sm:$0xf]
        %v411 = vld [vmem:[%s2 + $0x34] sm:$0xf]
        %v412 = vld [vmem:[%s2 + $0x38] sm:$0xf]
        %v413 = vld [vmem:[%s2 + $0x3c] sm:$0xf]
        %v439 = vunpack.c.l.b16 %v372
        %v440 = vunpack.c.l.b16 %v373
        %v441 = vunpack.c.l.b16 %v374
        %v442 = vunpack.c.l.b16 %v375
        %v443 = vunpack.c.l.b16 %v376
        %v444 = vunpack.c.l.b16 %v377
        %v445 = vunpack.c.l.b16 %v378
        %v446 = vunpack.c.l.b16 %v379
        %v447 = vunpack.c.l.b16 %v380
        %v448 = vunpack.c.l.b16 %v381
        %v449 = vunpack.c.l.b16 %v382
        %v450 = vunpack.c.l.b16 %v383
        %v451 = vunpack.c.l.b16 %v384
        %v452 = vunpack.c.l.b16 %v385
        %v453 = vunpack.c.l.b16 %v386
        %v454 = vunpack.c.l.b16 %v387
        %v455 = vunpack.c.l.b16 %v388
        %v456 = vunpack.c.l.b16 %v389
        %v457 = vunpack.c.l.b16 %v390
        %v458 = vunpack.c.l.b16 %v391
        %v459 = vunpack.c.l.b16 %v392
        %v460 = vunpack.c.l.b16 %v393
        %v461 = vunpack.c.l.b16 %v394
        %v462 = vunpack.c.l.b16 %v395
        %v463 = vunpack.c.l.b16 %v396
        %v464 = vpack.c.b16 %v440, %v439
        %v465 = vpack.c.b16 %v442, %v441
        %v466 = vpack.c.b16 %v444, %v443
        %v467 = vpack.c.b16 %v446, %v445
        %v468 = vpack.c.b16 %v448, %v447
        %v469 = vpack.c.b16 %v450, %v449
        %v470 = vpack.c.b16 %v452, %v451
        %v471 = vpack.c.b16 %v454, %v453
        %v472 = vpack.c.b16 %v456, %v455
        %v473 = vpack.c.b16 %v458, %v457
        %v474 = vpack.c.b16 %v460, %v459
        %v475 = vpack.c.b16 %v462, %v461
        %v476 = vpack.c.b16 %v463, %v463
        %vm477 = vsmask.f32 4352
        %v479 = vshrl.u32 %v464, 16
        %v481 = vrot.slane %v479, 3
        %v482 = vshll.u32 %v464, 16
        %v484 = vrot.slane %v482, 4
        %v485 = vor.u32 %v481, %v484
        %v487 = vshrl.u32 %v465, 16
        %v489 = vrot.slane %v487, 3
        %v490 = vshll.u32 %v465, 16
        %v492 = vrot.slane %v490, 4
        %v493 = vor.u32 %v489, %v492
        %v494 = vsel %vm477, %v485, %v493
        %v496 = vshrl.u32 %v466, 16
        %v498 = vrot.slane %v496, 3
        %v499 = vshll.u32 %v466, 16
        %v501 = vrot.slane %v499, 4
        %v502 = vor.u32 %v498, %v501
        %v503 = vsel %vm477, %v493, %v502
        %v505 = vshrl.u32 %v467, 16
        %v507 = vrot.slane %v505, 3
        %v508 = vshll.u32 %v467, 16
        %v510 = vrot.slane %v508, 4
        %v511 = vor.u32 %v507, %v510
        %v512 = vsel %vm477, %v502, %v511
        %v514 = vshrl.u32 %v468, 16
        %v516 = vrot.slane %v514, 3
        %v517 = vshll.u32 %v468, 16
        %v519 = vrot.slane %v517, 4
        %v520 = vor.u32 %v516, %v519
        %v521 = vsel %vm477, %v511, %v520
        %v523 = vshrl.u32 %v469, 16
        %v525 = vrot.slane %v523, 3
        %v526 = vshll.u32 %v469, 16
        %v528 = vrot.slane %v526, 4
        %v529 = vor.u32 %v525, %v528
        %v530 = vsel %vm477, %v520, %v529
        %v532 = vshrl.u32 %v470, 16
        %v534 = vrot.slane %v532, 3
        %v535 = vshll.u32 %v470, 16
        %v537 = vrot.slane %v535, 4
        %v538 = vor.u32 %v534, %v537
        %v539 = vsel %vm477, %v529, %v538
        %v541 = vshrl.u32 %v471, 16
        %v543 = vrot.slane %v541, 3
        %v544 = vshll.u32 %v471, 16
        %v546 = vrot.slane %v544, 4
        %v547 = vor.u32 %v543, %v546
        %v548 = vsel %vm477, %v538, %v547
        %v550 = vshrl.u32 %v472, 16
        %v552 = vrot.slane %v550, 3
        %v553 = vshll.u32 %v472, 16
        %v555 = vrot.slane %v553, 4
        %v556 = vor.u32 %v552, %v555
        %v557 = vsel %vm477, %v547, %v556
        %v559 = vshrl.u32 %v473, 16
        %v561 = vrot.slane %v559, 3
        %v562 = vshll.u32 %v473, 16
        %v564 = vrot.slane %v562, 4
        %v565 = vor.u32 %v561, %v564
        %v566 = vsel %vm477, %v556, %v565
        %v568 = vshrl.u32 %v474, 16
        %v570 = vrot.slane %v568, 3
        %v571 = vshll.u32 %v474, 16
        %v573 = vrot.slane %v571, 4
        %v574 = vor.u32 %v570, %v573
        %v575 = vsel %vm477, %v565, %v574
        %v577 = vshrl.u32 %v475, 16
        %v579 = vrot.slane %v577, 3
        %v580 = vshll.u32 %v475, 16
        %v582 = vrot.slane %v580, 4
        %v583 = vor.u32 %v579, %v582
        %v584 = vsel %vm477, %v574, %v583
        %v586 = vshrl.u32 %v476, 16
        %v588 = vrot.slane %v586, 3
        %v589 = vshll.u32 %v476, 16
        %v591 = vrot.slane %v589, 4
        %v592 = vor.u32 %v588, %v591
        %v593 = vsel %vm477, %v583, %v592
        %v622 = vunpack.c.l.b16 %v398
        %v623 = vunpack.c.l.b16 %v399
        %v624 = vunpack.c.l.b16 %v400
        %v625 = vunpack.c.l.b16 %v401
        %v626 = vunpack.c.l.b16 %v402
        %v627 = vunpack.c.l.b16 %v403
        %v628 = vunpack.c.l.b16 %v404
        %v629 = vunpack.c.l.b16 %v405
        %v630 = vunpack.c.l.b16 %v406
        %v631 = vunpack.c.l.b16 %v407
        %v632 = vunpack.c.l.b16 %v408
        %v633 = vunpack.c.l.b16 %v409
        %v634 = vunpack.c.l.b16 %v410
        %v635 = vunpack.c.l.b16 %v411
        %v636 = vunpack.c.l.b16 %v412
        %v637 = vunpack.c.l.b16 %v413
        %v638 = vpack.c.b16 %v623, %v622
        %v639 = vpack.c.b16 %v625, %v624
        %v640 = vpack.c.b16 %v627, %v626
        %v641 = vpack.c.b16 %v629, %v628
        %v642 = vpack.c.b16 %v631, %v630
        %v643 = vpack.c.b16 %v633, %v632
        %v644 = vpack.c.b16 %v635, %v634
        %v645 = vpack.c.b16 %v637, %v636
        %654 = vmatprep.subr.bf16.mxu0 0
        %655 = vmatpush1.bf16.msra.mxu0 %v645
        %656 = vmatprep.subr.bf16.mxu0 0
        %657 = vmatpush1.bf16.msra.mxu0 %v644
        %658 = vmatprep.subr.bf16.mxu0 0
        %659 = vmatpush1.bf16.msra.mxu0 %v643
        %660 = vmatprep.subr.bf16.mxu0 0
        %661 = vmatpush1.bf16.msra.mxu0 %v642
        %662 = vmatprep.subr.bf16.mxu0 0
        %663 = vmatpush1.bf16.msra.mxu0 %v641
        %664 = vmatprep.subr.bf16.mxu0 0
        %665 = vmatpush1.bf16.msra.mxu0 %v640
        %666 = vmatprep.subr.bf16.mxu0 0
        %667 = vmatpush1.bf16.msra.mxu0 %v639
        %668 = vmatprep.subr.bf16.mxu0 0
        %669 = vmatpush1.bf16.msra.mxu0 %v638
        %670 = vmatprep.subr.bf16.mxu0 0
        %671 = vmatpush2.bf16.msra.mxu0 0
        %672 = vmatprep.subr.bf16.mxu0 0
        %673 = vmatpush2.bf16.msra.mxu0 0
        %674 = vmatprep.subr.bf16.mxu0 0
        %675 = vmatpush2.bf16.msra.mxu0 0
        %676 = vmatprep.subr.bf16.mxu0 0
        %677 = vmatpush2.bf16.msra.mxu0 0
        %678 = vmatprep.subr.bf16.mxu0 0
        %679 = vmatpush2.bf16.msra.mxu0 0
        %680 = vmatprep.subr.bf16.mxu0 0
        %681 = vmatpush2.bf16.msra.mxu0 0
        %682 = vmatprep.subr.bf16.mxu0 0
        %683 = vmatpush2.bf16.msra.mxu0 0
        %684 = vmatprep.subr.bf16.mxu0 0
        %685 = vmatpush2.bf16.msra.mxu0 0
        %686 = vmatprep.mubr.bf16.mxu0 0
        %687 = vmatmul.mubr.bf16.gmra.mxu0 %v494
        %v688 = vpop.f32.mrf.mxu0
        %v689 = vadd.f32 0.0, %v688
        %v690 = vpop.f32.mrf.mxu0
        %v691 = vpop.f32.mrf.mxu0
        %v692 = vadd.f32 0.0, %v691
        %v693 = vpop.f32.mrf.mxu0
        %694 = vmatprep.mubr.bf16.mxu0 0
        %695 = vmatmul.mubr.bf16.gmra.mxu0 %v503
        %v696 = vpop.f32.mrf.mxu0
        %v697 = vadd.f32 0.0, %v696
        %v698 = vpop.f32.mrf.mxu0
        %v699 = vpop.f32.mrf.mxu0
        %v700 = vadd.f32 0.0, %v699
        %v701 = vpop.f32.mrf.mxu0
        %702 = vmatprep.mubr.bf16.mxu0 0
        %703 = vmatmul.mubr.bf16.gmra.mxu0 %v512
        %v704 = vpop.f32.mrf.mxu0
        %v705 = vadd.f32 0.0, %v704
        %v706 = vpop.f32.mrf.mxu0
        %v707 = vpop.f32.mrf.mxu0
        %v708 = vadd.f32 0.0, %v707
        %v709 = vpop.f32.mrf.mxu0
        %710 = vmatprep.mubr.bf16.mxu0 0
        %711 = vmatmul.mubr.bf16.gmra.mxu0 %v521
        %v712 = vpop.f32.mrf.mxu0
        %v713 = vadd.f32 0.0, %v712
        %v714 = vpop.f32.mrf.mxu0
        %v715 = vpop.f32.mrf.mxu0
        %v716 = vadd.f32 0.0, %v715
        %v717 = vpop.f32.mrf.mxu0
        %718 = vmatprep.mubr.bf16.mxu0 0
        %719 = vmatmul.mubr.bf16.gmra.mxu0 %v530
        %v720 = vpop.f32.mrf.mxu0
        %v721 = vadd.f32 0.0, %v720
        %v722 = vpop.f32.mrf.mxu0
        %v723 = vpop.f32.mrf.mxu0
        %v724 = vadd.f32 0.0, %v723
        %v725 = vpop.f32.mrf.mxu0
        %726 = vmatprep.mubr.bf16.mxu0 0
        %727 = vmatmul.mubr.bf16.gmra.mxu0 %v539
        %v728 = vpop.f32.mrf.mxu0
        %v729 = vadd.f32 0.0, %v728
        %v730 = vpop.f32.mrf.mxu0
        %v731 = vpop.f32.mrf.mxu0
        %v732 = vadd.f32 0.0, %v731
        %v733 = vpop.f32.mrf.mxu0
        %734 = vmatprep.mubr.bf16.mxu0 0
        %735 = vmatmul.mubr.bf16.gmra.mxu0 %v548
        %v736 = vpop.f32.mrf.mxu0
        %v737 = vadd.f32 0.0, %v736
        %v738 = vpop.f32.mrf.mxu0
        %v739 = vpop.f32.mrf.mxu0
        %v740 = vadd.f32 0.0, %v739
        %v741 = vpop.f32.mrf.mxu0
        %742 = vmatprep.mubr.bf16.mxu0 0
        %743 = vmatmul.mubr.bf16.gmra.mxu0 %v557
        %v744 = vpop.f32.mrf.mxu0
        %v745 = vadd.f32 0.0, %v744
        %v746 = vpop.f32.mrf.mxu0
        %v747 = vpop.f32.mrf.mxu0
        %v748 = vadd.f32 0.0, %v747
        %v749 = vpop.f32.mrf.mxu0
        %750 = vmatprep.mubr.bf16.mxu0 0
        %751 = vmatmul.mubr.bf16.gmra.mxu0 %v566
        %v752 = vpop.f32.mrf.mxu0
        %v753 = vadd.f32 0.0, %v752
        %v754 = vpop.f32.mrf.mxu0
        %v755 = vpop.f32.mrf.mxu0
        %v756 = vadd.f32 0.0, %v755
        %v757 = vpop.f32.mrf.mxu0
        %758 = vmatprep.mubr.bf16.mxu0 0
        %759 = vmatmul.mubr.bf16.gmra.mxu0 %v575
        %v760 = vpop.f32.mrf.mxu0
        %v761 = vadd.f32 0.0, %v760
        %v762 = vpop.f32.mrf.mxu0
        %v763 = vpop.f32.mrf.mxu0
        %v764 = vadd.f32 0.0, %v763
        %v765 = vpop.f32.mrf.mxu0
        %766 = vmatprep.mubr.bf16.mxu0 0
        %767 = vmatmul.mubr.bf16.gmra.mxu0 %v584
        %v768 = vpop.f32.mrf.mxu0
        %v769 = vadd.f32 0.0, %v768
        %v770 = vpop.f32.mrf.mxu0
        %v771 = vpop.f32.mrf.mxu0
        %v772 = vadd.f32 0.0, %v771
        %v773 = vpop.f32.mrf.mxu0
        %774 = vmatprep.mubr.bf16.mxu0 0
        %775 = vmatmul.mubr.bf16.gmra.mxu0 %v593
        %v776 = vpop.f32.mrf.mxu0
        %v777 = vadd.f32 0.0, %v776
        %v778 = vpop.f32.mrf.mxu0
        %v779 = vpop.f32.mrf.mxu0
        %v780 = vadd.f32 0.0, %v779
        %v781 = vpop.f32.mrf.mxu0
        %782 = vdwg.mxu0
        %v783 = vadd.f32 %v359, %v689
        %v784 = vadd.f32 %v359, %v692
        %v785 = vadd.f32 %v359, %v697
        %v786 = vadd.f32 %v359, %v700
        %v787 = vadd.f32 %v359, %v705
        %v788 = vadd.f32 %v359, %v708
        %v789 = vadd.f32 %v359, %v713
        %v790 = vadd.f32 %v359, %v716
        %v791 = vadd.f32 %v359, %v721
        %v792 = vadd.f32 %v359, %v724
        %v793 = vadd.f32 %v359, %v729
        %v794 = vadd.f32 %v359, %v732
        %v795 = vadd.f32 %v359, %v737
        %v796 = vadd.f32 %v359, %v740
        %v797 = vadd.f32 %v359, %v745
        %v798 = vadd.f32 %v359, %v748
        %v799 = vadd.f32 %v359, %v753
        %v800 = vadd.f32 %v359, %v756
        %v801 = vadd.f32 %v359, %v761
        %v802 = vadd.f32 %v359, %v764
        %v803 = vadd.f32 %v359, %v769
        %v804 = vadd.f32 %v359, %v772
        %v805 = vadd.f32 %v359, %v777
        %v806 = vadd.f32 %v359, %v780
        %s807 = scalar_lea.vmem %s2, 64
        %v808 = vld [vmem:[%s807] sm:$0xf]
        %v809 = vld [vmem:[%s807 + $0x4] sm:$0xf]
        %v810 = vld [vmem:[%s807 + $0x8] sm:$0xf]
        %v811 = vld [vmem:[%s807 + $0xc] sm:$0xf]
        %v812 = vld [vmem:[%s807 + $0x10] sm:$0xf]
        %v813 = vld [vmem:[%s807 + $0x14] sm:$0xf]
        %v814 = vld [vmem:[%s807 + $0x18] sm:$0xf]
        %v815 = vld [vmem:[%s807 + $0x1c] sm:$0xf]
        %v816 = vld [vmem:[%s807 + $0x20] sm:$0xf]
        %v817 = vld [vmem:[%s807 + $0x24] sm:$0xf]
        %v818 = vld [vmem:[%s807 + $0x28] sm:$0xf]
        %v819 = vld [vmem:[%s807 + $0x2c] sm:$0xf]
        %v820 = vld [vmem:[%s807 + $0x30] sm:$0xf]
        %v821 = vld [vmem:[%s807 + $0x34] sm:$0xf]
        %v822 = vld [vmem:[%s807 + $0x38] sm:$0xf]
        %v823 = vld [vmem:[%s807 + $0x3c] sm:$0xf]
        %v824 = vpack.c.b16 %v441, %v440
        %v825 = vpack.c.b16 %v443, %v442
        %v826 = vpack.c.b16 %v445, %v444
        %v827 = vpack.c.b16 %v447, %v446
        %v828 = vpack.c.b16 %v449, %v448
        %v829 = vpack.c.b16 %v451, %v450
        %v830 = vpack.c.b16 %v453, %v452
        %v831 = vpack.c.b16 %v455, %v454
        %v832 = vpack.c.b16 %v457, %v456
        %v833 = vpack.c.b16 %v459, %v458
        %v834 = vpack.c.b16 %v461, %v460
        %v835 = vpack.c.b16 %v463, %v462
        %v864 = vunpack.c.l.b16 %v808
        %v865 = vunpack.c.l.b16 %v809
        %v866 = vunpack.c.l.b16 %v810
        %v867 = vunpack.c.l.b16 %v811
        %v868 = vunpack.c.l.b16 %v812
        %v869 = vunpack.c.l.b16 %v813
        %v870 = vunpack.c.l.b16 %v814
        %v871 = vunpack.c.l.b16 %v815
        %v872 = vunpack.c.l.b16 %v816
        %v873 = vunpack.c.l.b16 %v817
        %v874 = vunpack.c.l.b16 %v818
        %v875 = vunpack.c.l.b16 %v819
        %v876 = vunpack.c.l.b16 %v820
        %v877 = vunpack.c.l.b16 %v821
        %v878 = vunpack.c.l.b16 %v822
        %v879 = vunpack.c.l.b16 %v823
        %v880 = vpack.c.b16 %v865, %v864
        %v881 = vpack.c.b16 %v867, %v866
        %v882 = vpack.c.b16 %v869, %v868
        %v883 = vpack.c.b16 %v871, %v870
        %v884 = vpack.c.b16 %v873, %v872
        %v885 = vpack.c.b16 %v875, %v874
        %v886 = vpack.c.b16 %v877, %v876
        %v887 = vpack.c.b16 %v879, %v878
        %896 = vmatprep.subr.bf16.mxu0 0
        %897 = vmatpush1.bf16.msra.mxu0 %v887
        %898 = vmatprep.subr.bf16.mxu0 0
        %899 = vmatpush1.bf16.msra.mxu0 %v886
        %900 = vmatprep.subr.bf16.mxu0 0
        %901 = vmatpush1.bf16.msra.mxu0 %v885
        %902 = vmatprep.subr.bf16.mxu0 0
        %903 = vmatpush1.bf16.msra.mxu0 %v884
        %904 = vmatprep.subr.bf16.mxu0 0
        %905 = vmatpush1.bf16.msra.mxu0 %v883
        %906 = vmatprep.subr.bf16.mxu0 0
        %907 = vmatpush1.bf16.msra.mxu0 %v882
        %908 = vmatprep.subr.bf16.mxu0 0
        %909 = vmatpush1.bf16.msra.mxu0 %v881
        %910 = vmatprep.subr.bf16.mxu0 0
        %911 = vmatpush1.bf16.msra.mxu0 %v880
        %912 = vmatprep.subr.bf16.mxu0 0
        %913 = vmatpush2.bf16.msra.mxu0 0
        %914 = vmatprep.subr.bf16.mxu0 0
        %915 = vmatpush2.bf16.msra.mxu0 0
        %916 = vmatprep.subr.bf16.mxu0 0
        %917 = vmatpush2.bf16.msra.mxu0 0
        %918 = vmatprep.subr.bf16.mxu0 0
        %919 = vmatpush2.bf16.msra.mxu0 0
        %920 = vmatprep.subr.bf16.mxu0 0
        %921 = vmatpush2.bf16.msra.mxu0 0
        %922 = vmatprep.subr.bf16.mxu0 0
        %923 = vmatpush2.bf16.msra.mxu0 0
        %924 = vmatprep.subr.bf16.mxu0 0
        %925 = vmatpush2.bf16.msra.mxu0 0
        %926 = vmatprep.subr.bf16.mxu0 0
        %927 = vmatpush2.bf16.msra.mxu0 0
        %928 = vmatprep.mubr.bf16.mxu0 0
        %929 = vmatmul.mubr.bf16.gmra.mxu0 %v824
        %v930 = vpop.f32.mrf.mxu0
        %v931 = vadd.f32 0.0, %v930
        %v932 = vpop.f32.mrf.mxu0
        %v933 = vpop.f32.mrf.mxu0
        %v934 = vadd.f32 0.0, %v933
        %v935 = vpop.f32.mrf.mxu0
        %936 = vmatprep.mubr.bf16.mxu0 0
        %937 = vmatmul.mubr.bf16.gmra.mxu0 %v825
        %v938 = vpop.f32.mrf.mxu0
        %v939 = vadd.f32 0.0, %v938
        %v940 = vpop.f32.mrf.mxu0
        %v941 = vpop.f32.mrf.mxu0
        %v942 = vadd.f32 0.0, %v941
        %v943 = vpop.f32.mrf.mxu0
        %944 = vmatprep.mubr.bf16.mxu0 0
        %945 = vmatmul.mubr.bf16.gmra.mxu0 %v826
        %v946 = vpop.f32.mrf.mxu0
        %v947 = vadd.f32 0.0, %v946
        %v948 = vpop.f32.mrf.mxu0
        %v949 = vpop.f32.mrf.mxu0
        %v950 = vadd.f32 0.0, %v949
        %v951 = vpop.f32.mrf.mxu0
        %952 = vmatprep.mubr.bf16.mxu0 0
        %953 = vmatmul.mubr.bf16.gmra.mxu0 %v827
        %v954 = vpop.f32.mrf.mxu0
        %v955 = vadd.f32 0.0, %v954
        %v956 = vpop.f32.mrf.mxu0
        %v957 = vpop.f32.mrf.mxu0
        %v958 = vadd.f32 0.0, %v957
        %v959 = vpop.f32.mrf.mxu0
        %960 = vmatprep.mubr.bf16.mxu0 0
        %961 = vmatmul.mubr.bf16.gmra.mxu0 %v828
        %v962 = vpop.f32.mrf.mxu0
        %v963 = vadd.f32 0.0, %v962
        %v964 = vpop.f32.mrf.mxu0
        %v965 = vpop.f32.mrf.mxu0
        %v966 = vadd.f32 0.0, %v965
        %v967 = vpop.f32.mrf.mxu0
        %968 = vmatprep.mubr.bf16.mxu0 0
        %969 = vmatmul.mubr.bf16.gmra.mxu0 %v829
        %v970 = vpop.f32.mrf.mxu0
        %v971 = vadd.f32 0.0, %v970
        %v972 = vpop.f32.mrf.mxu0
        %v973 = vpop.f32.mrf.mxu0
        %v974 = vadd.f32 0.0, %v973
        %v975 = vpop.f32.mrf.mxu0
        %976 = vmatprep.mubr.bf16.mxu0 0
        %977 = vmatmul.mubr.bf16.gmra.mxu0 %v830
        %v978 = vpop.f32.mrf.mxu0
        %v979 = vadd.f32 0.0, %v978
        %v980 = vpop.f32.mrf.mxu0
        %v981 = vpop.f32.mrf.mxu0
        %v982 = vadd.f32 0.0, %v981
        %v983 = vpop.f32.mrf.mxu0
        %984 = vmatprep.mubr.bf16.mxu0 0
        %985 = vmatmul.mubr.bf16.gmra.mxu0 %v831
        %v986 = vpop.f32.mrf.mxu0
        %v987 = vadd.f32 0.0, %v986
        %v988 = vpop.f32.mrf.mxu0
        %v989 = vpop.f32.mrf.mxu0
        %v990 = vadd.f32 0.0, %v989
        %v991 = vpop.f32.mrf.mxu0
        %992 = vmatprep.mubr.bf16.mxu0 0
        %993 = vmatmul.mubr.bf16.gmra.mxu0 %v832
        %v994 = vpop.f32.mrf.mxu0
        %v995 = vadd.f32 0.0, %v994
        %v996 = vpop.f32.mrf.mxu0
        %v997 = vpop.f32.mrf.mxu0
        %v998 = vadd.f32 0.0, %v997
        %v999 = vpop.f32.mrf.mxu0
        %1000 = vmatprep.mubr.bf16.mxu0 0
        %1001 = vmatmul.mubr.bf16.gmra.mxu0 %v833
        %v1002 = vpop.f32.mrf.mxu0
        %v1003 = vadd.f32 0.0, %v1002
        %v1004 = vpop.f32.mrf.mxu0
        %v1005 = vpop.f32.mrf.mxu0
        %v1006 = vadd.f32 0.0, %v1005
        %v1007 = vpop.f32.mrf.mxu0
        %1008 = vmatprep.mubr.bf16.mxu0 0
        %1009 = vmatmul.mubr.bf16.gmra.mxu0 %v834
        %v1010 = vpop.f32.mrf.mxu0
        %v1011 = vadd.f32 0.0, %v1010
        %v1012 = vpop.f32.mrf.mxu0
        %v1013 = vpop.f32.mrf.mxu0
        %v1014 = vadd.f32 0.0, %v1013
        %v1015 = vpop.f32.mrf.mxu0
        %1016 = vmatprep.mubr.bf16.mxu0 0
        %1017 = vmatmul.mubr.bf16.gmra.mxu0 %v835
        %v1018 = vpop.f32.mrf.mxu0
        %v1019 = vadd.f32 0.0, %v1018
        %v1020 = vpop.f32.mrf.mxu0
        %v1021 = vpop.f32.mrf.mxu0
        %v1022 = vadd.f32 0.0, %v1021
        %v1023 = vpop.f32.mrf.mxu0
        %1024 = vdwg.mxu0
        %v1025 = vadd.f32 %v783, %v931
        %v1026 = vadd.f32 %v784, %v934
        %v1027 = vadd.f32 %v785, %v939
        %v1028 = vadd.f32 %v786, %v942
        %v1029 = vadd.f32 %v787, %v947
        %v1030 = vadd.f32 %v788, %v950
        %v1031 = vadd.f32 %v789, %v955
        %v1032 = vadd.f32 %v790, %v958
        %v1033 = vadd.f32 %v791, %v963
        %v1034 = vadd.f32 %v792, %v966
        %v1035 = vadd.f32 %v793, %v971
        %v1036 = vadd.f32 %v794, %v974
        %v1037 = vadd.f32 %v795, %v979
        %v1038 = vadd.f32 %v796, %v982
        %v1039 = vadd.f32 %v797, %v987
        %v1040 = vadd.f32 %v798, %v990
        %v1041 = vadd.f32 %v799, %v995
        %v1042 = vadd.f32 %v800, %v998
        %v1043 = vadd.f32 %v801, %v1003
        %v1044 = vadd.f32 %v802, %v1006
        %v1045 = vadd.f32 %v803, %v1011
        %v1046 = vadd.f32 %v804, %v1014
        %v1047 = vadd.f32 %v805, %v1019
        %v1048 = vadd.f32 %v806, %v1022
        %s1049 = scalar_lea.vmem %s2, 128
        %v1050 = vld [vmem:[%s1049] sm:$0xf]
        %v1051 = vld [vmem:[%s1049 + $0x4] sm:$0xf]
        %v1052 = vld [vmem:[%s1049 + $0x8] sm:$0xf]
        %v1053 = vld [vmem:[%s1049 + $0xc] sm:$0xf]
        %v1054 = vld [vmem:[%s1049 + $0x10] sm:$0xf]
        %v1055 = vld [vmem:[%s1049 + $0x14] sm:$0xf]
        %v1056 = vld [vmem:[%s1049 + $0x18] sm:$0xf]
        %v1057 = vld [vmem:[%s1049 + $0x1c] sm:$0xf]
        %v1058 = vld [vmem:[%s1049 + $0x20] sm:$0xf]
        %v1059 = vld [vmem:[%s1049 + $0x24] sm:$0xf]
        %v1060 = vld [vmem:[%s1049 + $0x28] sm:$0xf]
        %v1061 = vld [vmem:[%s1049 + $0x2c] sm:$0xf]
        %v1062 = vld [vmem:[%s1049 + $0x30] sm:$0xf]
        %v1063 = vld [vmem:[%s1049 + $0x34] sm:$0xf]
        %v1064 = vld [vmem:[%s1049 + $0x38] sm:$0xf]
        %v1065 = vld [vmem:[%s1049 + $0x3c] sm:$0xf]
        %v1067 = vunpack.c.l.b16 %v397
        %v1068 = vpack.c.b16 %v1067, %v1067
        %vm1069 = vsmask.f32 7424
        %v1071 = vshrl.u32 %v824, 16
        %v1073 = vshll.u32 %v824, 16
        %v1075 = vrot.slane %v1073, 1
        %v1076 = vor.u32 %v1071, %v1075
        %v1078 = vshll.u32 %v825, 16
        %v1080 = vrot.slane %v1078, 1
        %v1081 = vsel %vm1069, %v1076, %v1080
        %v1082 = vshrl.u32 %v825, 16
        %v1084 = vor.u32 %v1082, %v1080
        %v1086 = vshll.u32 %v826, 16
        %v1088 = vrot.slane %v1086, 1
        %v1089 = vsel %vm1069, %v1084, %v1088
        %v1090 = vshrl.u32 %v826, 16
        %v1092 = vor.u32 %v1090, %v1088
        %v1094 = vshll.u32 %v827, 16
        %v1096 = vrot.slane %v1094, 1
        %v1097 = vsel %vm1069, %v1092, %v1096
        %v1098 = vshrl.u32 %v827, 16
        %v1100 = vor.u32 %v1098, %v1096
        %v1102 = vshll.u32 %v828, 16
        %v1104 = vrot.slane %v1102, 1
        %v1105 = vsel %vm1069, %v1100, %v1104
        %v1106 = vshrl.u32 %v828, 16
        %v1108 = vor.u32 %v1106, %v1104
        %v1110 = vshll.u32 %v829, 16
        %v1112 = vrot.slane %v1110, 1
        %v1113 = vsel %vm1069, %v1108, %v1112
        %v1114 = vshrl.u32 %v829, 16
        %v1116 = vor.u32 %v1114, %v1112
        %v1118 = vshll.u32 %v830, 16
        %v1120 = vrot.slane %v1118, 1
        %v1121 = vsel %vm1069, %v1116, %v1120
        %v1122 = vshrl.u32 %v830, 16
        %v1124 = vor.u32 %v1122, %v1120
        %v1126 = vshll.u32 %v831, 16
        %v1128 = vrot.slane %v1126, 1
        %v1129 = vsel %vm1069, %v1124, %v1128
        %v1130 = vshrl.u32 %v831, 16
        %v1132 = vor.u32 %v1130, %v1128
        %v1134 = vshll.u32 %v832, 16
        %v1136 = vrot.slane %v1134, 1
        %v1137 = vsel %vm1069, %v1132, %v1136
        %v1138 = vshrl.u32 %v832, 16
        %v1140 = vor.u32 %v1138, %v1136
        %v1142 = vshll.u32 %v833, 16
        %v1144 = vrot.slane %v1142, 1
        %v1145 = vsel %vm1069, %v1140, %v1144
        %v1146 = vshrl.u32 %v833, 16
        %v1148 = vor.u32 %v1146, %v1144
        %v1150 = vshll.u32 %v834, 16
        %v1152 = vrot.slane %v1150, 1
        %v1153 = vsel %vm1069, %v1148, %v1152
        %v1154 = vshrl.u32 %v834, 16
        %v1156 = vor.u32 %v1154, %v1152
        %v1158 = vshll.u32 %v835, 16
        %v1160 = vrot.slane %v1158, 1
        %v1161 = vsel %vm1069, %v1156, %v1160
        %v1162 = vshrl.u32 %v835, 16
        %v1164 = vor.u32 %v1162, %v1160
        %v1166 = vshll.u32 %v1068, 16
        %v1168 = vrot.slane %v1166, 1
        %v1169 = vsel %vm1069, %v1164, %v1168
        %v1198 = vunpack.c.l.b16 %v1050
        %v1199 = vunpack.c.l.b16 %v1051
        %v1200 = vunpack.c.l.b16 %v1052
        %v1201 = vunpack.c.l.b16 %v1053
        %v1202 = vunpack.c.l.b16 %v1054
        %v1203 = vunpack.c.l.b16 %v1055
        %v1204 = vunpack.c.l.b16 %v1056
        %v1205 = vunpack.c.l.b16 %v1057
        %v1206 = vunpack.c.l.b16 %v1058
        %v1207 = vunpack.c.l.b16 %v1059
        %v1208 = vunpack.c.l.b16 %v1060
        %v1209 = vunpack.c.l.b16 %v1061
        %v1210 = vunpack.c.l.b16 %v1062
        %v1211 = vunpack.c.l.b16 %v1063
        %v1212 = vunpack.c.l.b16 %v1064
        %v1213 = vunpack.c.l.b16 %v1065
        %v1214 = vpack.c.b16 %v1199, %v1198
        %v1215 = vpack.c.b16 %v1201, %v1200
        %v1216 = vpack.c.b16 %v1203, %v1202
        %v1217 = vpack.c.b16 %v1205, %v1204
        %v1218 = vpack.c.b16 %v1207, %v1206
        %v1219 = vpack.c.b16 %v1209, %v1208
        %v1220 = vpack.c.b16 %v1211, %v1210
        %v1221 = vpack.c.b16 %v1213, %v1212
        %1230 = vmatprep.subr.bf16.mxu0 0
        %1231 = vmatpush1.bf16.msra.mxu0 %v1221
        %1232 = vmatprep.subr.bf16.mxu0 0
        %1233 = vmatpush1.bf16.msra.mxu0 %v1220
        %1234 = vmatprep.subr.bf16.mxu0 0
        %1235 = vmatpush1.bf16.msra.mxu0 %v1219
        %1236 = vmatprep.subr.bf16.mxu0 0
        %1237 = vmatpush1.bf16.msra.mxu0 %v1218
        %1238 = vmatprep.subr.bf16.mxu0 0
        %1239 = vmatpush1.bf16.msra.mxu0 %v1217
        %1240 = vmatprep.subr.bf16.mxu0 0
        %1241 = vmatpush1.bf16.msra.mxu0 %v1216
        %1242 = vmatprep.subr.bf16.mxu0 0
        %1243 = vmatpush1.bf16.msra.mxu0 %v1215
        %1244 = vmatprep.subr.bf16.mxu0 0
        %1245 = vmatpush1.bf16.msra.mxu0 %v1214
        %1246 = vmatprep.subr.bf16.mxu0 0
        %1247 = vmatpush2.bf16.msra.mxu0 0
        %1248 = vmatprep.subr.bf16.mxu0 0
        %1249 = vmatpush2.bf16.msra.mxu0 0
        %1250 = vmatprep.subr.bf16.mxu0 0
        %1251 = vmatpush2.bf16.msra.mxu0 0
        %1252 = vmatprep.subr.bf16.mxu0 0
        %1253 = vmatpush2.bf16.msra.mxu0 0
        %1254 = vmatprep.subr.bf16.mxu0 0
        %1255 = vmatpush2.bf16.msra.mxu0 0
        %1256 = vmatprep.subr.bf16.mxu0 0
        %1257 = vmatpush2.bf16.msra.mxu0 0
        %1258 = vmatprep.subr.bf16.mxu0 0
        %1259 = vmatpush2.bf16.msra.mxu0 0
        %1260 = vmatprep.subr.bf16.mxu0 0
        %1261 = vmatpush2.bf16.msra.mxu0 0
        %1262 = vmatprep.mubr.bf16.mxu0 0
        %1263 = vmatmul.mubr.bf16.gmra.mxu0 %v1081
        %v1264 = vpop.f32.mrf.mxu0
        %v1265 = vadd.f32 0.0, %v1264
        %v1266 = vpop.f32.mrf.mxu0
        %v1267 = vpop.f32.mrf.mxu0
        %v1268 = vadd.f32 0.0, %v1267
        %v1269 = vpop.f32.mrf.mxu0
        %1270 = vmatprep.mubr.bf16.mxu0 0
        %1271 = vmatmul.mubr.bf16.gmra.mxu0 %v1089
        %v1272 = vpop.f32.mrf.mxu0
        %v1273 = vadd.f32 0.0, %v1272
        %v1274 = vpop.f32.mrf.mxu0
        %v1275 = vpop.f32.mrf.mxu0
        %v1276 = vadd.f32 0.0, %v1275
        %v1277 = vpop.f32.mrf.mxu0
        %1278 = vmatprep.mubr.bf16.mxu0 0
        %1279 = vmatmul.mubr.bf16.gmra.mxu0 %v1097
        %v1280 = vpop.f32.mrf.mxu0
        %v1281 = vadd.f32 0.0, %v1280
        %v1282 = vpop.f32.mrf.mxu0
        %v1283 = vpop.f32.mrf.mxu0
        %v1284 = vadd.f32 0.0, %v1283
        %v1285 = vpop.f32.mrf.mxu0
        %1286 = vmatprep.mubr.bf16.mxu0 0
        %1287 = vmatmul.mubr.bf16.gmra.mxu0 %v1105
        %v1288 = vpop.f32.mrf.mxu0
        %v1289 = vadd.f32 0.0, %v1288
        %v1290 = vpop.f32.mrf.mxu0
        %v1291 = vpop.f32.mrf.mxu0
        %v1292 = vadd.f32 0.0, %v1291
        %v1293 = vpop.f32.mrf.mxu0
        %1294 = vmatprep.mubr.bf16.mxu0 0
        %1295 = vmatmul.mubr.bf16.gmra.mxu0 %v1113
        %v1296 = vpop.f32.mrf.mxu0
        %v1297 = vadd.f32 0.0, %v1296
        %v1298 = vpop.f32.mrf.mxu0
        %v1299 = vpop.f32.mrf.mxu0
        %v1300 = vadd.f32 0.0, %v1299
        %v1301 = vpop.f32.mrf.mxu0
        %1302 = vmatprep.mubr.bf16.mxu0 0
        %1303 = vmatmul.mubr.bf16.gmra.mxu0 %v1121
        %v1304 = vpop.f32.mrf.mxu0
        %v1305 = vadd.f32 0.0, %v1304
        %v1306 = vpop.f32.mrf.mxu0
        %v1307 = vpop.f32.mrf.mxu0
        %v1308 = vadd.f32 0.0, %v1307
        %v1309 = vpop.f32.mrf.mxu0
        %1310 = vmatprep.mubr.bf16.mxu0 0
        %1311 = vmatmul.mubr.bf16.gmra.mxu0 %v1129
        %v1312 = vpop.f32.mrf.mxu0
        %v1313 = vadd.f32 0.0, %v1312
        %v1314 = vpop.f32.mrf.mxu0
        %v1315 = vpop.f32.mrf.mxu0
        %v1316 = vadd.f32 0.0, %v1315
        %v1317 = vpop.f32.mrf.mxu0
        %1318 = vmatprep.mubr.bf16.mxu0 0
        %1319 = vmatmul.mubr.bf16.gmra.mxu0 %v1137
        %v1320 = vpop.f32.mrf.mxu0
        %v1321 = vadd.f32 0.0, %v1320
        %v1322 = vpop.f32.mrf.mxu0
        %v1323 = vpop.f32.mrf.mxu0
        %v1324 = vadd.f32 0.0, %v1323
        %v1325 = vpop.f32.mrf.mxu0
        %1326 = vmatprep.mubr.bf16.mxu0 0
        %1327 = vmatmul.mubr.bf16.gmra.mxu0 %v1145
        %v1328 = vpop.f32.mrf.mxu0
        %v1329 = vadd.f32 0.0, %v1328
        %v1330 = vpop.f32.mrf.mxu0
        %v1331 = vpop.f32.mrf.mxu0
        %v1332 = vadd.f32 0.0, %v1331
        %v1333 = vpop.f32.mrf.mxu0
        %1334 = vmatprep.mubr.bf16.mxu0 0
        %1335 = vmatmul.mubr.bf16.gmra.mxu0 %v1153
        %v1336 = vpop.f32.mrf.mxu0
        %v1337 = vadd.f32 0.0, %v1336
        %v1338 = vpop.f32.mrf.mxu0
        %v1339 = vpop.f32.mrf.mxu0
        %v1340 = vadd.f32 0.0, %v1339
        %v1341 = vpop.f32.mrf.mxu0
        %1342 = vmatprep.mubr.bf16.mxu0 0
        %1343 = vmatmul.mubr.bf16.gmra.mxu0 %v1161
        %v1344 = vpop.f32.mrf.mxu0
        %v1345 = vadd.f32 0.0, %v1344
        %v1346 = vpop.f32.mrf.mxu0
        %v1347 = vpop.f32.mrf.mxu0
        %v1348 = vadd.f32 0.0, %v1347
        %v1349 = vpop.f32.mrf.mxu0
        %1350 = vmatprep.mubr.bf16.mxu0 0
        %1351 = vmatmul.mubr.bf16.gmra.mxu0 %v1169
        %v1352 = vpop.f32.mrf.mxu0
        %v1353 = vadd.f32 0.0, %v1352
        %v1354 = vpop.f32.mrf.mxu0
        %v1355 = vpop.f32.mrf.mxu0
        %v1356 = vadd.f32 0.0, %v1355
        %v1357 = vpop.f32.mrf.mxu0
        %1358 = vdwg.mxu0
        %v1359 = vadd.f32 %v1025, %v1265
        %v1360 = vadd.f32 %v1026, %v1268
        %v1361 = vadd.f32 %v1027, %v1273
        %v1362 = vadd.f32 %v1028, %v1276
        %v1363 = vadd.f32 %v1029, %v1281
        %v1364 = vadd.f32 %v1030, %v1284
        %v1365 = vadd.f32 %v1031, %v1289
        %v1366 = vadd.f32 %v1032, %v1292
        %v1367 = vadd.f32 %v1033, %v1297
        %v1368 = vadd.f32 %v1034, %v1300
        %v1369 = vadd.f32 %v1035, %v1305
        %v1370 = vadd.f32 %v1036, %v1308
        %v1371 = vadd.f32 %v1037, %v1313
        %v1372 = vadd.f32 %v1038, %v1316
        %v1373 = vadd.f32 %v1039, %v1321
        %v1374 = vadd.f32 %v1040, %v1324
        %v1375 = vadd.f32 %v1041, %v1329
        %v1376 = vadd.f32 %v1042, %v1332
        %v1377 = vadd.f32 %v1043, %v1337
        %v1378 = vadd.f32 %v1044, %v1340
        %v1379 = vadd.f32 %v1045, %v1345
        %v1380 = vadd.f32 %v1046, %v1348
        %v1381 = vadd.f32 %v1047, %v1353
        %v1382 = vadd.f32 %v1048, %v1356
        %s1383 = sadd.s32 %s367, 24
        %s1384 = sshra.s32 %s1383, 3
        %s1385 = sand.u32 %s1383, 7
        %s1386 = smul.addr %s1384, 4
        %s1387 = scalar_lea.vmem [#allocation2], %s1386
        %v1388 = vld [vmem:[%s1387] sm:$0xf]
        %v1389 = vld [vmem:[%s1387 + $0x4] sm:$0xf]
        %v1390 = vld [vmem:[%s1387 + $0x8] sm:$0xf]
        %v1391 = vld [vmem:[%s1387 + $0xc] sm:$0xf]
        %v1392 = vld [vmem:[%s1387 + $0x10] sm:$0xf]
        %v1393 = vld [vmem:[%s1387 + $0x14] sm:$0xf]
        %v1394 = vld [vmem:[%s1387 + $0x18] sm:$0xf]
        %v1395 = vld [vmem:[%s1387 + $0x1c] sm:$0xf]
        %v1396 = vld [vmem:[%s1387 + $0x20] sm:$0xf]
        %v1397 = vld [vmem:[%s1387 + $0x24] sm:$0xf]
        %v1398 = vld [vmem:[%s1387 + $0x28] sm:$0xf]
        %v1399 = vld [vmem:[%s1387 + $0x2c] sm:$0xf]
        %v1400 = vld [vmem:[%s1387 + $0x30] sm:$0xf]
        %v1401 = vld [vmem:[%s1387 + $0x34] sm:$0xf]
        %v1402 = vld [vmem:[%s1387 + $0x38] sm:$0xf]
        %v1403 = vld [vmem:[%s1387 + $0x3c] sm:$0xf]
        %v1404 = vld [vmem:[%s1387 + $0x40] sm:$0xf]
        %v1405 = vld [vmem:[%s1387 + $0x44] sm:$0xf]
        %v1406 = vld [vmem:[%s1387 + $0x48] sm:$0xf]
        %v1407 = vld [vmem:[%s1387 + $0x4c] sm:$0xf]
        %v1408 = vld [vmem:[%s1387 + $0x50] sm:$0xf]
        %v1409 = vld [vmem:[%s1387 + $0x54] sm:$0xf]
        %v1410 = vld [vmem:[%s1387 + $0x58] sm:$0xf]
        %v1411 = vld [vmem:[%s1387 + $0x5c] sm:$0xf]
        %v1412 = vld [vmem:[%s1387 + $0x60] sm:$0xf]
        %v1413 = vld [vmem:[%s1387 + $0x64] sm:$0xf]
        %s1414 = scalar_lea.vmem %s2, 192
        %v1415 = vld [vmem:[%s1414] sm:$0xf]
        %v1416 = vld [vmem:[%s1414 + $0x4] sm:$0xf]
        %v1417 = vld [vmem:[%s1414 + $0x8] sm:$0xf]
        %v1418 = vld [vmem:[%s1414 + $0xc] sm:$0xf]
        %v1419 = vld [vmem:[%s1414 + $0x10] sm:$0xf]
        %v1420 = vld [vmem:[%s1414 + $0x14] sm:$0xf]
        %v1421 = vld [vmem:[%s1414 + $0x18] sm:$0xf]
        %v1422 = vld [vmem:[%s1414 + $0x1c] sm:$0xf]
        %v1423 = vld [vmem:[%s1414 + $0x20] sm:$0xf]
        %v1424 = vld [vmem:[%s1414 + $0x24] sm:$0xf]
        %v1425 = vld [vmem:[%s1414 + $0x28] sm:$0xf]
        %v1426 = vld [vmem:[%s1414 + $0x2c] sm:$0xf]
        %v1427 = vld [vmem:[%s1414 + $0x30] sm:$0xf]
        %v1428 = vld [vmem:[%s1414 + $0x34] sm:$0xf]
        %v1429 = vld [vmem:[%s1414 + $0x38] sm:$0xf]
        %v1430 = vld [vmem:[%s1414 + $0x3c] sm:$0xf]
        %v1456 = vunpack.c.l.b16 %v1388
        %v1457 = vunpack.c.l.b16 %v1389
        %v1458 = vunpack.c.l.b16 %v1390
        %v1459 = vunpack.c.l.b16 %v1391
        %v1460 = vunpack.c.l.b16 %v1392
        %v1461 = vunpack.c.l.b16 %v1393
        %v1462 = vunpack.c.l.b16 %v1394
        %v1463 = vunpack.c.l.b16 %v1395
        %v1464 = vunpack.c.l.b16 %v1396
        %v1465 = vunpack.c.l.b16 %v1397
        %v1466 = vunpack.c.l.b16 %v1398
        %v1467 = vunpack.c.l.b16 %v1399
        %v1468 = vunpack.c.l.b16 %v1400
        %v1469 = vunpack.c.l.b16 %v1401
        %v1470 = vunpack.c.l.b16 %v1402
        %v1471 = vunpack.c.l.b16 %v1403
        %v1472 = vunpack.c.l.b16 %v1404
        %v1473 = vunpack.c.l.b16 %v1405
        %v1474 = vunpack.c.l.b16 %v1406
        %v1475 = vunpack.c.l.b16 %v1407
        %v1476 = vunpack.c.l.b16 %v1408
        %v1477 = vunpack.c.l.b16 %v1409
        %v1478 = vunpack.c.l.b16 %v1410
        %v1479 = vunpack.c.l.b16 %v1411
        %v1480 = vunpack.c.l.b16 %v1412
        %v1481 = vpack.c.b16 %v1457, %v1456
        %v1482 = vpack.c.b16 %v1459, %v1458
        %v1483 = vpack.c.b16 %v1461, %v1460
        %v1484 = vpack.c.b16 %v1463, %v1462
        %v1485 = vpack.c.b16 %v1465, %v1464
        %v1486 = vpack.c.b16 %v1467, %v1466
        %v1487 = vpack.c.b16 %v1469, %v1468
        %v1488 = vpack.c.b16 %v1471, %v1470
        %v1489 = vpack.c.b16 %v1473, %v1472
        %v1490 = vpack.c.b16 %v1475, %v1474
        %v1491 = vpack.c.b16 %v1477, %v1476
        %v1492 = vpack.c.b16 %v1479, %v1478
        %v1493 = vpack.c.b16 %v1480, %v1480
        %v1495 = vshrl.u32 %v1481, 16
        %v1497 = vrot.slane %v1495, 3
        %v1498 = vshll.u32 %v1481, 16
        %v1500 = vrot.slane %v1498, 4
        %v1501 = vor.u32 %v1497, %v1500
        %v1503 = vshrl.u32 %v1482, 16
        %v1505 = vrot.slane %v1503, 3
        %v1506 = vshll.u32 %v1482, 16
        %v1508 = vrot.slane %v1506, 4
        %v1509 = vor.u32 %v1505, %v1508
        %v1510 = vsel %vm477, %v1501, %v1509
        %v1512 = vshrl.u32 %v1483, 16
        %v1514 = vrot.slane %v1512, 3
        %v1515 = vshll.u32 %v1483, 16
        %v1517 = vrot.slane %v1515, 4
        %v1518 = vor.u32 %v1514, %v1517
        %v1519 = vsel %vm477, %v1509, %v1518
        %v1521 = vshrl.u32 %v1484, 16
        %v1523 = vrot.slane %v1521, 3
        %v1524 = vshll.u32 %v1484, 16
        %v1526 = vrot.slane %v1524, 4
        %v1527 = vor.u32 %v1523, %v1526
        %v1528 = vsel %vm477, %v1518, %v1527
        %v1530 = vshrl.u32 %v1485, 16
        %v1532 = vrot.slane %v1530, 3
        %v1533 = vshll.u32 %v1485, 16
        %v1535 = vrot.slane %v1533, 4
        %v1536 = vor.u32 %v1532, %v1535
        %v1537 = vsel %vm477, %v1527, %v1536
        %v1539 = vshrl.u32 %v1486, 16
        %v1541 = vrot.slane %v1539, 3
        %v1542 = vshll.u32 %v1486, 16
        %v1544 = vrot.slane %v1542, 4
        %v1545 = vor.u32 %v1541, %v1544
        %v1546 = vsel %vm477, %v1536, %v1545
        %v1548 = vshrl.u32 %v1487, 16
        %v1550 = vrot.slane %v1548, 3
        %v1551 = vshll.u32 %v1487, 16
        %v1553 = vrot.slane %v1551, 4
        %v1554 = vor.u32 %v1550, %v1553
        %v1555 = vsel %vm477, %v1545, %v1554
        %v1557 = vshrl.u32 %v1488, 16
        %v1559 = vrot.slane %v1557, 3
        %v1560 = vshll.u32 %v1488, 16
        %v1562 = vrot.slane %v1560, 4
        %v1563 = vor.u32 %v1559, %v1562
        %v1564 = vsel %vm477, %v1554, %v1563
        %v1566 = vshrl.u32 %v1489, 16
        %v1568 = vrot.slane %v1566, 3
        %v1569 = vshll.u32 %v1489, 16
        %v1571 = vrot.slane %v1569, 4
        %v1572 = vor.u32 %v1568, %v1571
        %v1573 = vsel %vm477, %v1563, %v1572
        %v1575 = vshrl.u32 %v1490, 16
        %v1577 = vrot.slane %v1575, 3
        %v1578 = vshll.u32 %v1490, 16
        %v1580 = vrot.slane %v1578, 4
        %v1581 = vor.u32 %v1577, %v1580
        %v1582 = vsel %vm477, %v1572, %v1581
        %v1584 = vshrl.u32 %v1491, 16
        %v1586 = vrot.slane %v1584, 3
        %v1587 = vshll.u32 %v1491, 16
        %v1589 = vrot.slane %v1587, 4
        %v1590 = vor.u32 %v1586, %v1589
        %v1591 = vsel %vm477, %v1581, %v1590
        %v1593 = vshrl.u32 %v1492, 16
        %v1595 = vrot.slane %v1593, 3
        %v1596 = vshll.u32 %v1492, 16
        %v1598 = vrot.slane %v1596, 4
        %v1599 = vor.u32 %v1595, %v1598
        %v1600 = vsel %vm477, %v1590, %v1599
        %v1602 = vshrl.u32 %v1493, 16
        %v1604 = vrot.slane %v1602, 3
        %v1605 = vshll.u32 %v1493, 16
        %v1607 = vrot.slane %v1605, 4
        %v1608 = vor.u32 %v1604, %v1607
        %v1609 = vsel %vm477, %v1599, %v1608
        %v1638 = vunpack.c.l.b16 %v1415
        %v1639 = vunpack.c.l.b16 %v1416
        %v1640 = vunpack.c.l.b16 %v1417
        %v1641 = vunpack.c.l.b16 %v1418
        %v1642 = vunpack.c.l.b16 %v1419
        %v1643 = vunpack.c.l.b16 %v1420
        %v1644 = vunpack.c.l.b16 %v1421
        %v1645 = vunpack.c.l.b16 %v1422
        %v1646 = vunpack.c.l.b16 %v1423
        %v1647 = vunpack.c.l.b16 %v1424
        %v1648 = vunpack.c.l.b16 %v1425
        %v1649 = vunpack.c.l.b16 %v1426
        %v1650 = vunpack.c.l.b16 %v1427
        %v1651 = vunpack.c.l.b16 %v1428
        %v1652 = vunpack.c.l.b16 %v1429
        %v1653 = vunpack.c.l.b16 %v1430
        %v1654 = vpack.c.b16 %v1639, %v1638
        %v1655 = vpack.c.b16 %v1641, %v1640
        %v1656 = vpack.c.b16 %v1643, %v1642
        %v1657 = vpack.c.b16 %v1645, %v1644
        %v1658 = vpack.c.b16 %v1647, %v1646
        %v1659 = vpack.c.b16 %v1649, %v1648
        %v1660 = vpack.c.b16 %v1651, %v1650
        %v1661 = vpack.c.b16 %v1653, %v1652
        %1670 = vmatprep.subr.bf16.mxu0 0
        %1671 = vmatpush1.bf16.msra.mxu0 %v1661
        %1672 = vmatprep.subr.bf16.mxu0 0
        %1673 = vmatpush1.bf16.msra.mxu0 %v1660
        %1674 = vmatprep.subr.bf16.mxu0 0
        %1675 = vmatpush1.bf16.msra.mxu0 %v1659
        %1676 = vmatprep.subr.bf16.mxu0 0
        %1677 = vmatpush1.bf16.msra.mxu0 %v1658
        %1678 = vmatprep.subr.bf16.mxu0 0
        %1679 = vmatpush1.bf16.msra.mxu0 %v1657
        %1680 = vmatprep.subr.bf16.mxu0 0
        %1681 = vmatpush1.bf16.msra.mxu0 %v1656
        %1682 = vmatprep.subr.bf16.mxu0 0
        %1683 = vmatpush1.bf16.msra.mxu0 %v1655
        %1684 = vmatprep.subr.bf16.mxu0 0
        %1685 = vmatpush1.bf16.msra.mxu0 %v1654
        %1686 = vmatprep.subr.bf16.mxu0 0
        %1687 = vmatpush2.bf16.msra.mxu0 0
        %1688 = vmatprep.subr.bf16.mxu0 0
        %1689 = vmatpush2.bf16.msra.mxu0 0
        %1690 = vmatprep.subr.bf16.mxu0 0
        %1691 = vmatpush2.bf16.msra.mxu0 0
        %1692 = vmatprep.subr.bf16.mxu0 0
        %1693 = vmatpush2.bf16.msra.mxu0 0
        %1694 = vmatprep.subr.bf16.mxu0 0
        %1695 = vmatpush2.bf16.msra.mxu0 0
        %1696 = vmatprep.subr.bf16.mxu0 0
        %1697 = vmatpush2.bf16.msra.mxu0 0
        %1698 = vmatprep.subr.bf16.mxu0 0
        %1699 = vmatpush2.bf16.msra.mxu0 0
        %1700 = vmatprep.subr.bf16.mxu0 0
        %1701 = vmatpush2.bf16.msra.mxu0 0
        %1702 = vmatprep.mubr.bf16.mxu0 0
        %1703 = vmatmul.mubr.bf16.gmra.mxu0 %v1510
        %v1704 = vpop.f32.mrf.mxu0
        %v1705 = vadd.f32 0.0, %v1704
        %v1706 = vpop.f32.mrf.mxu0
        %v1707 = vpop.f32.mrf.mxu0
        %v1708 = vadd.f32 0.0, %v1707
        %v1709 = vpop.f32.mrf.mxu0
        %1710 = vmatprep.mubr.bf16.mxu0 0
        %1711 = vmatmul.mubr.bf16.gmra.mxu0 %v1519
        %v1712 = vpop.f32.mrf.mxu0
        %v1713 = vadd.f32 0.0, %v1712
        %v1714 = vpop.f32.mrf.mxu0
        %v1715 = vpop.f32.mrf.mxu0
        %v1716 = vadd.f32 0.0, %v1715
        %v1717 = vpop.f32.mrf.mxu0
        %1718 = vmatprep.mubr.bf16.mxu0 0
        %1719 = vmatmul.mubr.bf16.gmra.mxu0 %v1528
        %v1720 = vpop.f32.mrf.mxu0
        %v1721 = vadd.f32 0.0, %v1720
        %v1722 = vpop.f32.mrf.mxu0
        %v1723 = vpop.f32.mrf.mxu0
        %v1724 = vadd.f32 0.0, %v1723
        %v1725 = vpop.f32.mrf.mxu0
        %1726 = vmatprep.mubr.bf16.mxu0 0
        %1727 = vmatmul.mubr.bf16.gmra.mxu0 %v1537
        %v1728 = vpop.f32.mrf.mxu0
        %v1729 = vadd.f32 0.0, %v1728
        %v1730 = vpop.f32.mrf.mxu0
        %v1731 = vpop.f32.mrf.mxu0
        %v1732 = vadd.f32 0.0, %v1731
        %v1733 = vpop.f32.mrf.mxu0
        %1734 = vmatprep.mubr.bf16.mxu0 0
        %1735 = vmatmul.mubr.bf16.gmra.mxu0 %v1546
        %v1736 = vpop.f32.mrf.mxu0
        %v1737 = vadd.f32 0.0, %v1736
        %v1738 = vpop.f32.mrf.mxu0
        %v1739 = vpop.f32.mrf.mxu0
        %v1740 = vadd.f32 0.0, %v1739
        %v1741 = vpop.f32.mrf.mxu0
        %1742 = vmatprep.mubr.bf16.mxu0 0
        %1743 = vmatmul.mubr.bf16.gmra.mxu0 %v1555
        %v1744 = vpop.f32.mrf.mxu0
        %v1745 = vadd.f32 0.0, %v1744
        %v1746 = vpop.f32.mrf.mxu0
        %v1747 = vpop.f32.mrf.mxu0
        %v1748 = vadd.f32 0.0, %v1747
        %v1749 = vpop.f32.mrf.mxu0
        %1750 = vmatprep.mubr.bf16.mxu0 0
        %1751 = vmatmul.mubr.bf16.gmra.mxu0 %v1564
        %v1752 = vpop.f32.mrf.mxu0
        %v1753 = vadd.f32 0.0, %v1752
        %v1754 = vpop.f32.mrf.mxu0
        %v1755 = vpop.f32.mrf.mxu0
        %v1756 = vadd.f32 0.0, %v1755
        %v1757 = vpop.f32.mrf.mxu0
        %1758 = vmatprep.mubr.bf16.mxu0 0
        %1759 = vmatmul.mubr.bf16.gmra.mxu0 %v1573
        %v1760 = vpop.f32.mrf.mxu0
        %v1761 = vadd.f32 0.0, %v1760
        %v1762 = vpop.f32.mrf.mxu0
        %v1763 = vpop.f32.mrf.mxu0
        %v1764 = vadd.f32 0.0, %v1763
        %v1765 = vpop.f32.mrf.mxu0
        %1766 = vmatprep.mubr.bf16.mxu0 0
        %1767 = vmatmul.mubr.bf16.gmra.mxu0 %v1582
        %v1768 = vpop.f32.mrf.mxu0
        %v1769 = vadd.f32 0.0, %v1768
        %v1770 = vpop.f32.mrf.mxu0
        %v1771 = vpop.f32.mrf.mxu0
        %v1772 = vadd.f32 0.0, %v1771
        %v1773 = vpop.f32.mrf.mxu0
        %1774 = vmatprep.mubr.bf16.mxu0 0
        %1775 = vmatmul.mubr.bf16.gmra.mxu0 %v1591
        %v1776 = vpop.f32.mrf.mxu0
        %v1777 = vadd.f32 0.0, %v1776
        %v1778 = vpop.f32.mrf.mxu0
        %v1779 = vpop.f32.mrf.mxu0
        %v1780 = vadd.f32 0.0, %v1779
        %v1781 = vpop.f32.mrf.mxu0
        %1782 = vmatprep.mubr.bf16.mxu0 0
        %1783 = vmatmul.mubr.bf16.gmra.mxu0 %v1600
        %v1784 = vpop.f32.mrf.mxu0
        %v1785 = vadd.f32 0.0, %v1784
        %v1786 = vpop.f32.mrf.mxu0
        %v1787 = vpop.f32.mrf.mxu0
        %v1788 = vadd.f32 0.0, %v1787
        %v1789 = vpop.f32.mrf.mxu0
        %1790 = vmatprep.mubr.bf16.mxu0 0
        %1791 = vmatmul.mubr.bf16.gmra.mxu0 %v1609
        %v1792 = vpop.f32.mrf.mxu0
        %v1793 = vadd.f32 0.0, %v1792
        %v1794 = vpop.f32.mrf.mxu0
        %v1795 = vpop.f32.mrf.mxu0
        %v1796 = vadd.f32 0.0, %v1795
        %v1797 = vpop.f32.mrf.mxu0
        %1798 = vdwg.mxu0
        %v1799 = vadd.f32 %v1359, %v1705
        %v1800 = vadd.f32 %v1360, %v1708
        %v1801 = vadd.f32 %v1361, %v1713
        %v1802 = vadd.f32 %v1362, %v1716
        %v1803 = vadd.f32 %v1363, %v1721
        %v1804 = vadd.f32 %v1364, %v1724
        %v1805 = vadd.f32 %v1365, %v1729
        %v1806 = vadd.f32 %v1366, %v1732
        %v1807 = vadd.f32 %v1367, %v1737
        %v1808 = vadd.f32 %v1368, %v1740
        %v1809 = vadd.f32 %v1369, %v1745
        %v1810 = vadd.f32 %v1370, %v1748
        %v1811 = vadd.f32 %v1371, %v1753
        %v1812 = vadd.f32 %v1372, %v1756
        %v1813 = vadd.f32 %v1373, %v1761
        %v1814 = vadd.f32 %v1374, %v1764
        %v1815 = vadd.f32 %v1375, %v1769
        %v1816 = vadd.f32 %v1376, %v1772
        %v1817 = vadd.f32 %v1377, %v1777
        %v1818 = vadd.f32 %v1378, %v1780
        %v1819 = vadd.f32 %v1379, %v1785
        %v1820 = vadd.f32 %v1380, %v1788
        %v1821 = vadd.f32 %v1381, %v1793
        %v1822 = vadd.f32 %v1382, %v1796
        %s1823 = scalar_lea.vmem %s2, 256
        %v1824 = vld [vmem:[%s1823] sm:$0xf]
        %v1825 = vld [vmem:[%s1823 + $0x4] sm:$0xf]
        %v1826 = vld [vmem:[%s1823 + $0x8] sm:$0xf]
        %v1827 = vld [vmem:[%s1823 + $0xc] sm:$0xf]
        %v1828 = vld [vmem:[%s1823 + $0x10] sm:$0xf]
        %v1829 = vld [vmem:[%s1823 + $0x14] sm:$0xf]
        %v1830 = vld [vmem:[%s1823 + $0x18] sm:$0xf]
        %v1831 = vld [vmem:[%s1823 + $0x1c] sm:$0xf]
        %v1832 = vld [vmem:[%s1823 + $0x20] sm:$0xf]
        %v1833 = vld [vmem:[%s1823 + $0x24] sm:$0xf]
        %v1834 = vld [vmem:[%s1823 + $0x28] sm:$0xf]
        %v1835 = vld [vmem:[%s1823 + $0x2c] sm:$0xf]
        %v1836 = vld [vmem:[%s1823 + $0x30] sm:$0xf]
        %v1837 = vld [vmem:[%s1823 + $0x34] sm:$0xf]
        %v1838 = vld [vmem:[%s1823 + $0x38] sm:$0xf]
        %v1839 = vld [vmem:[%s1823 + $0x3c] sm:$0xf]
        %v1840 = vpack.c.b16 %v1458, %v1457
        %v1841 = vpack.c.b16 %v1460, %v1459
        %v1842 = vpack.c.b16 %v1462, %v1461
        %v1843 = vpack.c.b16 %v1464, %v1463
        %v1844 = vpack.c.b16 %v1466, %v1465
        %v1845 = vpack.c.b16 %v1468, %v1467
        %v1846 = vpack.c.b16 %v1470, %v1469
        %v1847 = vpack.c.b16 %v1472, %v1471
        %v1848 = vpack.c.b16 %v1474, %v1473
        %v1849 = vpack.c.b16 %v1476, %v1475
        %v1850 = vpack.c.b16 %v1478, %v1477
        %v1851 = vpack.c.b16 %v1480, %v1479
        %v1880 = vunpack.c.l.b16 %v1824
        %v1881 = vunpack.c.l.b16 %v1825
        %v1882 = vunpack.c.l.b16 %v1826
        %v1883 = vunpack.c.l.b16 %v1827
        %v1884 = vunpack.c.l.b16 %v1828
        %v1885 = vunpack.c.l.b16 %v1829
        %v1886 = vunpack.c.l.b16 %v1830
        %v1887 = vunpack.c.l.b16 %v1831
        %v1888 = vunpack.c.l.b16 %v1832
        %v1889 = vunpack.c.l.b16 %v1833
        %v1890 = vunpack.c.l.b16 %v1834
        %v1891 = vunpack.c.l.b16 %v1835
        %v1892 = vunpack.c.l.b16 %v1836
        %v1893 = vunpack.c.l.b16 %v1837
        %v1894 = vunpack.c.l.b16 %v1838
        %v1895 = vunpack.c.l.b16 %v1839
        %v1896 = vpack.c.b16 %v1881, %v1880
        %v1897 = vpack.c.b16 %v1883, %v1882
        %v1898 = vpack.c.b16 %v1885, %v1884
        %v1899 = vpack.c.b16 %v1887, %v1886
        %v1900 = vpack.c.b16 %v1889, %v1888
        %v1901 = vpack.c.b16 %v1891, %v1890
        %v1902 = vpack.c.b16 %v1893, %v1892
        %v1903 = vpack.c.b16 %v1895, %v1894
        %1912 = vmatprep.subr.bf16.mxu0 0
        %1913 = vmatpush1.bf16.msra.mxu0 %v1903
        %1914 = vmatprep.subr.bf16.mxu0 0
        %1915 = vmatpush1.bf16.msra.mxu0 %v1902
        %1916 = vmatprep.subr.bf16.mxu0 0
        %1917 = vmatpush1.bf16.msra.mxu0 %v1901
        %1918 = vmatprep.subr.bf16.mxu0 0
        %1919 = vmatpush1.bf16.msra.mxu0 %v1900
        %1920 = vmatprep.subr.bf16.mxu0 0
        %1921 = vmatpush1.bf16.msra.mxu0 %v1899
        %1922 = vmatprep.subr.bf16.mxu0 0
        %1923 = vmatpush1.bf16.msra.mxu0 %v1898
        %1924 = vmatprep.subr.bf16.mxu0 0
        %1925 = vmatpush1.bf16.msra.mxu0 %v1897
        %1926 = vmatprep.subr.bf16.mxu0 0
        %1927 = vmatpush1.bf16.msra.mxu0 %v1896
        %1928 = vmatprep.subr.bf16.mxu0 0
        %1929 = vmatpush2.bf16.msra.mxu0 0
        %1930 = vmatprep.subr.bf16.mxu0 0
        %1931 = vmatpush2.bf16.msra.mxu0 0
        %1932 = vmatprep.subr.bf16.mxu0 0
        %1933 = vmatpush2.bf16.msra.mxu0 0
        %1934 = vmatprep.subr.bf16.mxu0 0
        %1935 = vmatpush2.bf16.msra.mxu0 0
        %1936 = vmatprep.subr.bf16.mxu0 0
        %1937 = vmatpush2.bf16.msra.mxu0 0
        %1938 = vmatprep.subr.bf16.mxu0 0
        %1939 = vmatpush2.bf16.msra.mxu0 0
        %1940 = vmatprep.subr.bf16.mxu0 0
        %1941 = vmatpush2.bf16.msra.mxu0 0
        %1942 = vmatprep.subr.bf16.mxu0 0
        %1943 = vmatpush2.bf16.msra.mxu0 0
        %1944 = vmatprep.mubr.bf16.mxu0 0
        %1945 = vmatmul.mubr.bf16.gmra.mxu0 %v1840
        %v1946 = vpop.f32.mrf.mxu0
        %v1947 = vadd.f32 0.0, %v1946
        %v1948 = vpop.f32.mrf.mxu0
        %v1949 = vpop.f32.mrf.mxu0
        %v1950 = vadd.f32 0.0, %v1949
        %v1951 = vpop.f32.mrf.mxu0
        %1952 = vmatprep.mubr.bf16.mxu0 0
        %1953 = vmatmul.mubr.bf16.gmra.mxu0 %v1841
        %v1954 = vpop.f32.mrf.mxu0
        %v1955 = vadd.f32 0.0, %v1954
        %v1956 = vpop.f32.mrf.mxu0
        %v1957 = vpop.f32.mrf.mxu0
        %v1958 = vadd.f32 0.0, %v1957
        %v1959 = vpop.f32.mrf.mxu0
        %1960 = vmatprep.mubr.bf16.mxu0 0
        %1961 = vmatmul.mubr.bf16.gmra.mxu0 %v1842
        %v1962 = vpop.f32.mrf.mxu0
        %v1963 = vadd.f32 0.0, %v1962
        %v1964 = vpop.f32.mrf.mxu0
        %v1965 = vpop.f32.mrf.mxu0
        %v1966 = vadd.f32 0.0, %v1965
        %v1967 = vpop.f32.mrf.mxu0
        %1968 = vmatprep.mubr.bf16.mxu0 0
        %1969 = vmatmul.mubr.bf16.gmra.mxu0 %v1843
        %v1970 = vpop.f32.mrf.mxu0
        %v1971 = vadd.f32 0.0, %v1970
        %v1972 = vpop.f32.mrf.mxu0
        %v1973 = vpop.f32.mrf.mxu0
        %v1974 = vadd.f32 0.0, %v1973
        %v1975 = vpop.f32.mrf.mxu0
        %1976 = vmatprep.mubr.bf16.mxu0 0
        %1977 = vmatmul.mubr.bf16.gmra.mxu0 %v1844
        %v1978 = vpop.f32.mrf.mxu0
        %v1979 = vadd.f32 0.0, %v1978
        %v1980 = vpop.f32.mrf.mxu0
        %v1981 = vpop.f32.mrf.mxu0
        %v1982 = vadd.f32 0.0, %v1981
        %v1983 = vpop.f32.mrf.mxu0
        %1984 = vmatprep.mubr.bf16.mxu0 0
        %1985 = vmatmul.mubr.bf16.gmra.mxu0 %v1845
        %v1986 = vpop.f32.mrf.mxu0
        %v1987 = vadd.f32 0.0, %v1986
        %v1988 = vpop.f32.mrf.mxu0
        %v1989 = vpop.f32.mrf.mxu0
        %v1990 = vadd.f32 0.0, %v1989
        %v1991 = vpop.f32.mrf.mxu0
        %1992 = vmatprep.mubr.bf16.mxu0 0
        %1993 = vmatmul.mubr.bf16.gmra.mxu0 %v1846
        %v1994 = vpop.f32.mrf.mxu0
        %v1995 = vadd.f32 0.0, %v1994
        %v1996 = vpop.f32.mrf.mxu0
        %v1997 = vpop.f32.mrf.mxu0
        %v1998 = vadd.f32 0.0, %v1997
        %v1999 = vpop.f32.mrf.mxu0
        %2000 = vmatprep.mubr.bf16.mxu0 0
        %2001 = vmatmul.mubr.bf16.gmra.mxu0 %v1847
        %v2002 = vpop.f32.mrf.mxu0
        %v2003 = vadd.f32 0.0, %v2002
        %v2004 = vpop.f32.mrf.mxu0
        %v2005 = vpop.f32.mrf.mxu0
        %v2006 = vadd.f32 0.0, %v2005
        %v2007 = vpop.f32.mrf.mxu0
        %2008 = vmatprep.mubr.bf16.mxu0 0
        %2009 = vmatmul.mubr.bf16.gmra.mxu0 %v1848
        %v2010 = vpop.f32.mrf.mxu0
        %v2011 = vadd.f32 0.0, %v2010
        %v2012 = vpop.f32.mrf.mxu0
        %v2013 = vpop.f32.mrf.mxu0
        %v2014 = vadd.f32 0.0, %v2013
        %v2015 = vpop.f32.mrf.mxu0
        %2016 = vmatprep.mubr.bf16.mxu0 0
        %2017 = vmatmul.mubr.bf16.gmra.mxu0 %v1849
        %v2018 = vpop.f32.mrf.mxu0
        %v2019 = vadd.f32 0.0, %v2018
        %v2020 = vpop.f32.mrf.mxu0
        %v2021 = vpop.f32.mrf.mxu0
        %v2022 = vadd.f32 0.0, %v2021
        %v2023 = vpop.f32.mrf.mxu0
        %2024 = vmatprep.mubr.bf16.mxu0 0
        %2025 = vmatmul.mubr.bf16.gmra.mxu0 %v1850
        %v2026 = vpop.f32.mrf.mxu0
        %v2027 = vadd.f32 0.0, %v2026
        %v2028 = vpop.f32.mrf.mxu0
        %v2029 = vpop.f32.mrf.mxu0
        %v2030 = vadd.f32 0.0, %v2029
        %v2031 = vpop.f32.mrf.mxu0
        %2032 = vmatprep.mubr.bf16.mxu0 0
        %2033 = vmatmul.mubr.bf16.gmra.mxu0 %v1851
        %v2034 = vpop.f32.mrf.mxu0
        %v2035 = vadd.f32 0.0, %v2034
        %v2036 = vpop.f32.mrf.mxu0
        %v2037 = vpop.f32.mrf.mxu0
        %v2038 = vadd.f32 0.0, %v2037
        %v2039 = vpop.f32.mrf.mxu0
        %2040 = vdwg.mxu0
        %v2041 = vadd.f32 %v1799, %v1947
        %v2042 = vadd.f32 %v1800, %v1950
        %v2043 = vadd.f32 %v1801, %v1955
        %v2044 = vadd.f32 %v1802, %v1958
        %v2045 = vadd.f32 %v1803, %v1963
        %v2046 = vadd.f32 %v1804, %v1966
        %v2047 = vadd.f32 %v1805, %v1971
        %v2048 = vadd.f32 %v1806, %v1974
        %v2049 = vadd.f32 %v1807, %v1979
        %v2050 = vadd.f32 %v1808, %v1982
        %v2051 = vadd.f32 %v1809, %v1987
        %v2052 = vadd.f32 %v1810, %v1990
        %v2053 = vadd.f32 %v1811, %v1995
        %v2054 = vadd.f32 %v1812, %v1998
        %v2055 = vadd.f32 %v1813, %v2003
        %v2056 = vadd.f32 %v1814, %v2006
        %v2057 = vadd.f32 %v1815, %v2011
        %v2058 = vadd.f32 %v1816, %v2014
        %v2059 = vadd.f32 %v1817, %v2019
        %v2060 = vadd.f32 %v1818, %v2022
        %v2061 = vadd.f32 %v1819, %v2027
        %v2062 = vadd.f32 %v1820, %v2030
        %v2063 = vadd.f32 %v1821, %v2035
        %v2064 = vadd.f32 %v1822, %v2038
        %s2065 = scalar_lea.vmem %s2, 320
        %v2066 = vld [vmem:[%s2065] sm:$0xf]
        %v2067 = vld [vmem:[%s2065 + $0x4] sm:$0xf]
        %v2068 = vld [vmem:[%s2065 + $0x8] sm:$0xf]
        %v2069 = vld [vmem:[%s2065 + $0xc] sm:$0xf]
        %v2070 = vld [vmem:[%s2065 + $0x10] sm:$0xf]
        %v2071 = vld [vmem:[%s2065 + $0x14] sm:$0xf]
        %v2072 = vld [vmem:[%s2065 + $0x18] sm:$0xf]
        %v2073 = vld [vmem:[%s2065 + $0x1c] sm:$0xf]
        %v2074 = vld [vmem:[%s2065 + $0x20] sm:$0xf]
        %v2075 = vld [vmem:[%s2065 + $0x24] sm:$0xf]
        %v2076 = vld [vmem:[%s2065 + $0x28] sm:$0xf]
        %v2077 = vld [vmem:[%s2065 + $0x2c] sm:$0xf]
        %v2078 = vld [vmem:[%s2065 + $0x30] sm:$0xf]
        %v2079 = vld [vmem:[%s2065 + $0x34] sm:$0xf]
        %v2080 = vld [vmem:[%s2065 + $0x38] sm:$0xf]
        %v2081 = vld [vmem:[%s2065 + $0x3c] sm:$0xf]
        %v2083 = vunpack.c.l.b16 %v1413
        %v2084 = vpack.c.b16 %v2083, %v2083
        %v2086 = vshrl.u32 %v1840, 16
        %v2088 = vshll.u32 %v1840, 16
        %v2090 = vrot.slane %v2088, 1
        %v2091 = vor.u32 %v2086, %v2090
        %v2093 = vshll.u32 %v1841, 16
        %v2095 = vrot.slane %v2093, 1
        %v2096 = vsel %vm1069, %v2091, %v2095
        %v2097 = vshrl.u32 %v1841, 16
        %v2099 = vor.u32 %v2097, %v2095
        %v2101 = vshll.u32 %v1842, 16
        %v2103 = vrot.slane %v2101, 1
        %v2104 = vsel %vm1069, %v2099, %v2103
        %v2105 = vshrl.u32 %v1842, 16
        %v2107 = vor.u32 %v2105, %v2103
        %v2109 = vshll.u32 %v1843, 16
        %v2111 = vrot.slane %v2109, 1
        %v2112 = vsel %vm1069, %v2107, %v2111
        %v2113 = vshrl.u32 %v1843, 16
        %v2115 = vor.u32 %v2113, %v2111
        %v2117 = vshll.u32 %v1844, 16
        %v2119 = vrot.slane %v2117, 1
        %v2120 = vsel %vm1069, %v2115, %v2119
        %v2121 = vshrl.u32 %v1844, 16
        %v2123 = vor.u32 %v2121, %v2119
        %v2125 = vshll.u32 %v1845, 16
        %v2127 = vrot.slane %v2125, 1
        %v2128 = vsel %vm1069, %v2123, %v2127
        %v2129 = vshrl.u32 %v1845, 16
        %v2131 = vor.u32 %v2129, %v2127
        %v2133 = vshll.u32 %v1846, 16
        %v2135 = vrot.slane %v2133, 1
        %v2136 = vsel %vm1069, %v2131, %v2135
        %v2137 = vshrl.u32 %v1846, 16
        %v2139 = vor.u32 %v2137, %v2135
        %v2141 = vshll.u32 %v1847, 16
        %v2143 = vrot.slane %v2141, 1
        %v2144 = vsel %vm1069, %v2139, %v2143
        %v2145 = vshrl.u32 %v1847, 16
        %v2147 = vor.u32 %v2145, %v2143
        %v2149 = vshll.u32 %v1848, 16
        %v2151 = vrot.slane %v2149, 1
        %v2152 = vsel %vm1069, %v2147, %v2151
        %v2153 = vshrl.u32 %v1848, 16
        %v2155 = vor.u32 %v2153, %v2151
        %v2157 = vshll.u32 %v1849, 16
        %v2159 = vrot.slane %v2157, 1
        %v2160 = vsel %vm1069, %v2155, %v2159
        %v2161 = vshrl.u32 %v1849, 16
        %v2163 = vor.u32 %v2161, %v2159
        %v2165 = vshll.u32 %v1850, 16
        %v2167 = vrot.slane %v2165, 1
        %v2168 = vsel %vm1069, %v2163, %v2167
        %v2169 = vshrl.u32 %v1850, 16
        %v2171 = vor.u32 %v2169, %v2167
        %v2173 = vshll.u32 %v1851, 16
        %v2175 = vrot.slane %v2173, 1
        %v2176 = vsel %vm1069, %v2171, %v2175
        %v2177 = vshrl.u32 %v1851, 16
        %v2179 = vor.u32 %v2177, %v2175
        %v2181 = vshll.u32 %v2084, 16
        %v2183 = vrot.slane %v2181, 1
        %v2184 = vsel %vm1069, %v2179, %v2183
        %v2213 = vunpack.c.l.b16 %v2066
        %v2214 = vunpack.c.l.b16 %v2067
        %v2215 = vunpack.c.l.b16 %v2068
        %v2216 = vunpack.c.l.b16 %v2069
        %v2217 = vunpack.c.l.b16 %v2070
        %v2218 = vunpack.c.l.b16 %v2071
        %v2219 = vunpack.c.l.b16 %v2072
        %v2220 = vunpack.c.l.b16 %v2073
        %v2221 = vunpack.c.l.b16 %v2074
        %v2222 = vunpack.c.l.b16 %v2075
        %v2223 = vunpack.c.l.b16 %v2076
        %v2224 = vunpack.c.l.b16 %v2077
        %v2225 = vunpack.c.l.b16 %v2078
        %v2226 = vunpack.c.l.b16 %v2079
        %v2227 = vunpack.c.l.b16 %v2080
        %v2228 = vunpack.c.l.b16 %v2081
        %v2229 = vpack.c.b16 %v2214, %v2213
        %v2230 = vpack.c.b16 %v2216, %v2215
        %v2231 = vpack.c.b16 %v2218, %v2217
        %v2232 = vpack.c.b16 %v2220, %v2219
        %v2233 = vpack.c.b16 %v2222, %v2221
        %v2234 = vpack.c.b16 %v2224, %v2223
        %v2235 = vpack.c.b16 %v2226, %v2225
        %v2236 = vpack.c.b16 %v2228, %v2227
        %2245 = vmatprep.subr.bf16.mxu0 0
        %2246 = vmatpush1.bf16.msra.mxu0 %v2236
        %2247 = vmatprep.subr.bf16.mxu0 0
        %2248 = vmatpush1.bf16.msra.mxu0 %v2235
        %2249 = vmatprep.subr.bf16.mxu0 0
        %2250 = vmatpush1.bf16.msra.mxu0 %v2234
        %2251 = vmatprep.subr.bf16.mxu0 0
        %2252 = vmatpush1.bf16.msra.mxu0 %v2233
        %2253 = vmatprep.subr.bf16.mxu0 0
        %2254 = vmatpush1.bf16.msra.mxu0 %v2232
        %2255 = vmatprep.subr.bf16.mxu0 0
        %2256 = vmatpush1.bf16.msra.mxu0 %v2231
        %2257 = vmatprep.subr.bf16.mxu0 0
        %2258 = vmatpush1.bf16.msra.mxu0 %v2230
        %2259 = vmatprep.subr.bf16.mxu0 0
        %2260 = vmatpush1.bf16.msra.mxu0 %v2229
        %2261 = vmatprep.subr.bf16.mxu0 0
        %2262 = vmatpush2.bf16.msra.mxu0 0
        %2263 = vmatprep.subr.bf16.mxu0 0
        %2264 = vmatpush2.bf16.msra.mxu0 0
        %2265 = vmatprep.subr.bf16.mxu0 0
        %2266 = vmatpush2.bf16.msra.mxu0 0
        %2267 = vmatprep.subr.bf16.mxu0 0
        %2268 = vmatpush2.bf16.msra.mxu0 0
        %2269 = vmatprep.subr.bf16.mxu0 0
        %2270 = vmatpush2.bf16.msra.mxu0 0
        %2271 = vmatprep.subr.bf16.mxu0 0
        %2272 = vmatpush2.bf16.msra.mxu0 0
        %2273 = vmatprep.subr.bf16.mxu0 0
        %2274 = vmatpush2.bf16.msra.mxu0 0
        %2275 = vmatprep.subr.bf16.mxu0 0
        %2276 = vmatpush2.bf16.msra.mxu0 0
        %2277 = vmatprep.mubr.bf16.mxu0 0
        %2278 = vmatmul.mubr.bf16.gmra.mxu0 %v2096
        %v2279 = vpop.f32.mrf.mxu0
        %v2280 = vadd.f32 0.0, %v2279
        %v2281 = vpop.f32.mrf.mxu0
        %v2282 = vpop.f32.mrf.mxu0
        %v2283 = vadd.f32 0.0, %v2282
        %v2284 = vpop.f32.mrf.mxu0
        %2285 = vmatprep.mubr.bf16.mxu0 0
        %2286 = vmatmul.mubr.bf16.gmra.mxu0 %v2104
        %v2287 = vpop.f32.mrf.mxu0
        %v2288 = vadd.f32 0.0, %v2287
        %v2289 = vpop.f32.mrf.mxu0
        %v2290 = vpop.f32.mrf.mxu0
        %v2291 = vadd.f32 0.0, %v2290
        %v2292 = vpop.f32.mrf.mxu0
        %2293 = vmatprep.mubr.bf16.mxu0 0
        %2294 = vmatmul.mubr.bf16.gmra.mxu0 %v2112
        %v2295 = vpop.f32.mrf.mxu0
        %v2296 = vadd.f32 0.0, %v2295
        %v2297 = vpop.f32.mrf.mxu0
        %v2298 = vpop.f32.mrf.mxu0
        %v2299 = vadd.f32 0.0, %v2298
        %v2300 = vpop.f32.mrf.mxu0
        %2301 = vmatprep.mubr.bf16.mxu0 0
        %2302 = vmatmul.mubr.bf16.gmra.mxu0 %v2120
        %v2303 = vpop.f32.mrf.mxu0
        %v2304 = vadd.f32 0.0, %v2303
        %v2305 = vpop.f32.mrf.mxu0
        %v2306 = vpop.f32.mrf.mxu0
        %v2307 = vadd.f32 0.0, %v2306
        %v2308 = vpop.f32.mrf.mxu0
        %2309 = vmatprep.mubr.bf16.mxu0 0
        %2310 = vmatmul.mubr.bf16.gmra.mxu0 %v2128
        %v2311 = vpop.f32.mrf.mxu0
        %v2312 = vadd.f32 0.0, %v2311
        %v2313 = vpop.f32.mrf.mxu0
        %v2314 = vpop.f32.mrf.mxu0
        %v2315 = vadd.f32 0.0, %v2314
        %v2316 = vpop.f32.mrf.mxu0
        %2317 = vmatprep.mubr.bf16.mxu0 0
        %2318 = vmatmul.mubr.bf16.gmra.mxu0 %v2136
        %v2319 = vpop.f32.mrf.mxu0
        %v2320 = vadd.f32 0.0, %v2319
        %v2321 = vpop.f32.mrf.mxu0
        %v2322 = vpop.f32.mrf.mxu0
        %v2323 = vadd.f32 0.0, %v2322
        %v2324 = vpop.f32.mrf.mxu0
        %2325 = vmatprep.mubr.bf16.mxu0 0
        %2326 = vmatmul.mubr.bf16.gmra.mxu0 %v2144
        %v2327 = vpop.f32.mrf.mxu0
        %v2328 = vadd.f32 0.0, %v2327
        %v2329 = vpop.f32.mrf.mxu0
        %v2330 = vpop.f32.mrf.mxu0
        %v2331 = vadd.f32 0.0, %v2330
        %v2332 = vpop.f32.mrf.mxu0
        %2333 = vmatprep.mubr.bf16.mxu0 0
        %2334 = vmatmul.mubr.bf16.gmra.mxu0 %v2152
        %v2335 = vpop.f32.mrf.mxu0
        %v2336 = vadd.f32 0.0, %v2335
        %v2337 = vpop.f32.mrf.mxu0
        %v2338 = vpop.f32.mrf.mxu0
        %v2339 = vadd.f32 0.0, %v2338
        %v2340 = vpop.f32.mrf.mxu0
        %2341 = vmatprep.mubr.bf16.mxu0 0
        %2342 = vmatmul.mubr.bf16.gmra.mxu0 %v2160
        %v2343 = vpop.f32.mrf.mxu0
        %v2344 = vadd.f32 0.0, %v2343
        %v2345 = vpop.f32.mrf.mxu0
        %v2346 = vpop.f32.mrf.mxu0
        %v2347 = vadd.f32 0.0, %v2346
        %v2348 = vpop.f32.mrf.mxu0
        %2349 = vmatprep.mubr.bf16.mxu0 0
        %2350 = vmatmul.mubr.bf16.gmra.mxu0 %v2168
        %v2351 = vpop.f32.mrf.mxu0
        %v2352 = vadd.f32 0.0, %v2351
        %v2353 = vpop.f32.mrf.mxu0
        %v2354 = vpop.f32.mrf.mxu0
        %v2355 = vadd.f32 0.0, %v2354
        %v2356 = vpop.f32.mrf.mxu0
        %2357 = vmatprep.mubr.bf16.mxu0 0
        %2358 = vmatmul.mubr.bf16.gmra.mxu0 %v2176
        %v2359 = vpop.f32.mrf.mxu0
        %v2360 = vadd.f32 0.0, %v2359
        %v2361 = vpop.f32.mrf.mxu0
        %v2362 = vpop.f32.mrf.mxu0
        %v2363 = vadd.f32 0.0, %v2362
        %v2364 = vpop.f32.mrf.mxu0
        %2365 = vmatprep.mubr.bf16.mxu0 0
        %2366 = vmatmul.mubr.bf16.gmra.mxu0 %v2184
        %v2367 = vpop.f32.mrf.mxu0
        %v2368 = vadd.f32 0.0, %v2367
        %v2369 = vpop.f32.mrf.mxu0
        %v2370 = vpop.f32.mrf.mxu0
        %v2371 = vadd.f32 0.0, %v2370
        %v2372 = vpop.f32.mrf.mxu0
        %2373 = vdwg.mxu0
        %v2374 = vadd.f32 %v2041, %v2280
        %v2375 = vadd.f32 %v2042, %v2283
        %v2376 = vadd.f32 %v2043, %v2288
        %v2377 = vadd.f32 %v2044, %v2291
        %v2378 = vadd.f32 %v2045, %v2296
        %v2379 = vadd.f32 %v2046, %v2299
        %v2380 = vadd.f32 %v2047, %v2304
        %v2381 = vadd.f32 %v2048, %v2307
        %v2382 = vadd.f32 %v2049, %v2312
        %v2383 = vadd.f32 %v2050, %v2315
        %v2384 = vadd.f32 %v2051, %v2320
        %v2385 = vadd.f32 %v2052, %v2323
        %v2386 = vadd.f32 %v2053, %v2328
        %v2387 = vadd.f32 %v2054, %v2331
        %v2388 = vadd.f32 %v2055, %v2336
        %v2389 = vadd.f32 %v2056, %v2339
        %v2390 = vadd.f32 %v2057, %v2344
        %v2391 = vadd.f32 %v2058, %v2347
        %v2392 = vadd.f32 %v2059, %v2352
        %v2393 = vadd.f32 %v2060, %v2355
        %v2394 = vadd.f32 %v2061, %v2360
        %v2395 = vadd.f32 %v2062, %v2363
        %v2396 = vadd.f32 %v2063, %v2368
        %v2397 = vadd.f32 %v2064, %v2371
        %s2398 = sadd.s32 %s367, 48
        %s2399 = sshra.s32 %s2398, 3
        %s2400 = sand.u32 %s2398, 7
        %s2401 = smul.addr %s2399, 4
        %s2402 = scalar_lea.vmem [#allocation2], %s2401
        %v2403 = vld [vmem:[%s2402] sm:$0xf]
        %v2404 = vld [vmem:[%s2402 + $0x4] sm:$0xf]
        %v2405 = vld [vmem:[%s2402 + $0x8] sm:$0xf]
        %v2406 = vld [vmem:[%s2402 + $0xc] sm:$0xf]
        %v2407 = vld [vmem:[%s2402 + $0x10] sm:$0xf]
        %v2408 = vld [vmem:[%s2402 + $0x14] sm:$0xf]
        %v2409 = vld [vmem:[%s2402 + $0x18] sm:$0xf]
        %v2410 = vld [vmem:[%s2402 + $0x1c] sm:$0xf]
        %v2411 = vld [vmem:[%s2402 + $0x20] sm:$0xf]
        %v2412 = vld [vmem:[%s2402 + $0x24] sm:$0xf]
        %v2413 = vld [vmem:[%s2402 + $0x28] sm:$0xf]
        %v2414 = vld [vmem:[%s2402 + $0x2c] sm:$0xf]
        %v2415 = vld [vmem:[%s2402 + $0x30] sm:$0xf]
        %v2416 = vld [vmem:[%s2402 + $0x34] sm:$0xf]
        %v2417 = vld [vmem:[%s2402 + $0x38] sm:$0xf]
        %v2418 = vld [vmem:[%s2402 + $0x3c] sm:$0xf]
        %v2419 = vld [vmem:[%s2402 + $0x40] sm:$0xf]
        %v2420 = vld [vmem:[%s2402 + $0x44] sm:$0xf]
        %v2421 = vld [vmem:[%s2402 + $0x48] sm:$0xf]
        %v2422 = vld [vmem:[%s2402 + $0x4c] sm:$0xf]
        %v2423 = vld [vmem:[%s2402 + $0x50] sm:$0xf]
        %v2424 = vld [vmem:[%s2402 + $0x54] sm:$0xf]
        %v2425 = vld [vmem:[%s2402 + $0x58] sm:$0xf]
        %v2426 = vld [vmem:[%s2402 + $0x5c] sm:$0xf]
        %v2427 = vld [vmem:[%s2402 + $0x60] sm:$0xf]
        %v2428 = vld [vmem:[%s2402 + $0x64] sm:$0xf]
        %s2429 = scalar_lea.vmem %s2, 384
        %v2430 = vld [vmem:[%s2429] sm:$0xf]
        %v2431 = vld [vmem:[%s2429 + $0x4] sm:$0xf]
        %v2432 = vld [vmem:[%s2429 + $0x8] sm:$0xf]
        %v2433 = vld [vmem:[%s2429 + $0xc] sm:$0xf]
        %v2434 = vld [vmem:[%s2429 + $0x10] sm:$0xf]
        %v2435 = vld [vmem:[%s2429 + $0x14] sm:$0xf]
        %v2436 = vld [vmem:[%s2429 + $0x18] sm:$0xf]
        %v2437 = vld [vmem:[%s2429 + $0x1c] sm:$0xf]
        %v2438 = vld [vmem:[%s2429 + $0x20] sm:$0xf]
        %v2439 = vld [vmem:[%s2429 + $0x24] sm:$0xf]
        %v2440 = vld [vmem:[%s2429 + $0x28] sm:$0xf]
        %v2441 = vld [vmem:[%s2429 + $0x2c] sm:$0xf]
        %v2442 = vld [vmem:[%s2429 + $0x30] sm:$0xf]
        %v2443 = vld [vmem:[%s2429 + $0x34] sm:$0xf]
        %v2444 = vld [vmem:[%s2429 + $0x38] sm:$0xf]
        %v2445 = vld [vmem:[%s2429 + $0x3c] sm:$0xf]
        %v2471 = vunpack.c.l.b16 %v2403
        %v2472 = vunpack.c.l.b16 %v2404
        %v2473 = vunpack.c.l.b16 %v2405
        %v2474 = vunpack.c.l.b16 %v2406
        %v2475 = vunpack.c.l.b16 %v2407
        %v2476 = vunpack.c.l.b16 %v2408
        %v2477 = vunpack.c.l.b16 %v2409
        %v2478 = vunpack.c.l.b16 %v2410
        %v2479 = vunpack.c.l.b16 %v2411
        %v2480 = vunpack.c.l.b16 %v2412
        %v2481 = vunpack.c.l.b16 %v2413
        %v2482 = vunpack.c.l.b16 %v2414
        %v2483 = vunpack.c.l.b16 %v2415
        %v2484 = vunpack.c.l.b16 %v2416
        %v2485 = vunpack.c.l.b16 %v2417
        %v2486 = vunpack.c.l.b16 %v2418
        %v2487 = vunpack.c.l.b16 %v2419
        %v2488 = vunpack.c.l.b16 %v2420
        %v2489 = vunpack.c.l.b16 %v2421
        %v2490 = vunpack.c.l.b16 %v2422
        %v2491 = vunpack.c.l.b16 %v2423
        %v2492 = vunpack.c.l.b16 %v2424
        %v2493 = vunpack.c.l.b16 %v2425
        %v2494 = vunpack.c.l.b16 %v2426
        %v2495 = vunpack.c.l.b16 %v2427
        %v2496 = vpack.c.b16 %v2472, %v2471
        %v2497 = vpack.c.b16 %v2474, %v2473
        %v2498 = vpack.c.b16 %v2476, %v2475
        %v2499 = vpack.c.b16 %v2478, %v2477
        %v2500 = vpack.c.b16 %v2480, %v2479
        %v2501 = vpack.c.b16 %v2482, %v2481
        %v2502 = vpack.c.b16 %v2484, %v2483
        %v2503 = vpack.c.b16 %v2486, %v2485
        %v2504 = vpack.c.b16 %v2488, %v2487
        %v2505 = vpack.c.b16 %v2490, %v2489
        %v2506 = vpack.c.b16 %v2492, %v2491
        %v2507 = vpack.c.b16 %v2494, %v2493
        %v2508 = vpack.c.b16 %v2495, %v2495
        %v2510 = vshrl.u32 %v2496, 16
        %v2512 = vrot.slane %v2510, 3
        %v2513 = vshll.u32 %v2496, 16
        %v2515 = vrot.slane %v2513, 4
        %v2516 = vor.u32 %v2512, %v2515
        %v2518 = vshrl.u32 %v2497, 16
        %v2520 = vrot.slane %v2518, 3
        %v2521 = vshll.u32 %v2497, 16
        %v2523 = vrot.slane %v2521, 4
        %v2524 = vor.u32 %v2520, %v2523
        %v2525 = vsel %vm477, %v2516, %v2524
        %v2527 = vshrl.u32 %v2498, 16
        %v2529 = vrot.slane %v2527, 3
        %v2530 = vshll.u32 %v2498, 16
        %v2532 = vrot.slane %v2530, 4
        %v2533 = vor.u32 %v2529, %v2532
        %v2534 = vsel %vm477, %v2524, %v2533
        %v2536 = vshrl.u32 %v2499, 16
        %v2538 = vrot.slane %v2536, 3
        %v2539 = vshll.u32 %v2499, 16
        %v2541 = vrot.slane %v2539, 4
        %v2542 = vor.u32 %v2538, %v2541
        %v2543 = vsel %vm477, %v2533, %v2542
        %v2545 = vshrl.u32 %v2500, 16
        %v2547 = vrot.slane %v2545, 3
        %v2548 = vshll.u32 %v2500, 16
        %v2550 = vrot.slane %v2548, 4
        %v2551 = vor.u32 %v2547, %v2550
        %v2552 = vsel %vm477, %v2542, %v2551
        %v2554 = vshrl.u32 %v2501, 16
        %v2556 = vrot.slane %v2554, 3
        %v2557 = vshll.u32 %v2501, 16
        %v2559 = vrot.slane %v2557, 4
        %v2560 = vor.u32 %v2556, %v2559
        %v2561 = vsel %vm477, %v2551, %v2560
        %v2563 = vshrl.u32 %v2502, 16
        %v2565 = vrot.slane %v2563, 3
        %v2566 = vshll.u32 %v2502, 16
        %v2568 = vrot.slane %v2566, 4
        %v2569 = vor.u32 %v2565, %v2568
        %v2570 = vsel %vm477, %v2560, %v2569
        %v2572 = vshrl.u32 %v2503, 16
        %v2574 = vrot.slane %v2572, 3
        %v2575 = vshll.u32 %v2503, 16
        %v2577 = vrot.slane %v2575, 4
        %v2578 = vor.u32 %v2574, %v2577
        %v2579 = vsel %vm477, %v2569, %v2578
        %v2581 = vshrl.u32 %v2504, 16
        %v2583 = vrot.slane %v2581, 3
        %v2584 = vshll.u32 %v2504, 16
        %v2586 = vrot.slane %v2584, 4
        %v2587 = vor.u32 %v2583, %v2586
        %v2588 = vsel %vm477, %v2578, %v2587
        %v2590 = vshrl.u32 %v2505, 16
        %v2592 = vrot.slane %v2590, 3
        %v2593 = vshll.u32 %v2505, 16
        %v2595 = vrot.slane %v2593, 4
        %v2596 = vor.u32 %v2592, %v2595
        %v2597 = vsel %vm477, %v2587, %v2596
        %v2599 = vshrl.u32 %v2506, 16
        %v2601 = vrot.slane %v2599, 3
        %v2602 = vshll.u32 %v2506, 16
        %v2604 = vrot.slane %v2602, 4
        %v2605 = vor.u32 %v2601, %v2604
        %v2606 = vsel %vm477, %v2596, %v2605
        %v2608 = vshrl.u32 %v2507, 16
        %v2610 = vrot.slane %v2608, 3
        %v2611 = vshll.u32 %v2507, 16
        %v2613 = vrot.slane %v2611, 4
        %v2614 = vor.u32 %v2610, %v2613
        %v2615 = vsel %vm477, %v2605, %v2614
        %v2617 = vshrl.u32 %v2508, 16
        %v2619 = vrot.slane %v2617, 3
        %v2620 = vshll.u32 %v2508, 16
        %v2622 = vrot.slane %v2620, 4
        %v2623 = vor.u32 %v2619, %v2622
        %v2624 = vsel %vm477, %v2614, %v2623
        %v2653 = vunpack.c.l.b16 %v2430
        %v2654 = vunpack.c.l.b16 %v2431
        %v2655 = vunpack.c.l.b16 %v2432
        %v2656 = vunpack.c.l.b16 %v2433
        %v2657 = vunpack.c.l.b16 %v2434
        %v2658 = vunpack.c.l.b16 %v2435
        %v2659 = vunpack.c.l.b16 %v2436
        %v2660 = vunpack.c.l.b16 %v2437
        %v2661 = vunpack.c.l.b16 %v2438
        %v2662 = vunpack.c.l.b16 %v2439
        %v2663 = vunpack.c.l.b16 %v2440
        %v2664 = vunpack.c.l.b16 %v2441
        %v2665 = vunpack.c.l.b16 %v2442
        %v2666 = vunpack.c.l.b16 %v2443
        %v2667 = vunpack.c.l.b16 %v2444
        %v2668 = vunpack.c.l.b16 %v2445
        %v2669 = vpack.c.b16 %v2654, %v2653
        %v2670 = vpack.c.b16 %v2656, %v2655
        %v2671 = vpack.c.b16 %v2658, %v2657
        %v2672 = vpack.c.b16 %v2660, %v2659
        %v2673 = vpack.c.b16 %v2662, %v2661
        %v2674 = vpack.c.b16 %v2664, %v2663
        %v2675 = vpack.c.b16 %v2666, %v2665
        %v2676 = vpack.c.b16 %v2668, %v2667
        %2685 = vmatprep.subr.bf16.mxu0 0
        %2686 = vmatpush1.bf16.msra.mxu0 %v2676
        %2687 = vmatprep.subr.bf16.mxu0 0
        %2688 = vmatpush1.bf16.msra.mxu0 %v2675
        %2689 = vmatprep.subr.bf16.mxu0 0
        %2690 = vmatpush1.bf16.msra.mxu0 %v2674
        %2691 = vmatprep.subr.bf16.mxu0 0
        %2692 = vmatpush1.bf16.msra.mxu0 %v2673
        %2693 = vmatprep.subr.bf16.mxu0 0
        %2694 = vmatpush1.bf16.msra.mxu0 %v2672
        %2695 = vmatprep.subr.bf16.mxu0 0
        %2696 = vmatpush1.bf16.msra.mxu0 %v2671
        %2697 = vmatprep.subr.bf16.mxu0 0
        %2698 = vmatpush1.bf16.msra.mxu0 %v2670
        %2699 = vmatprep.subr.bf16.mxu0 0
        %2700 = vmatpush1.bf16.msra.mxu0 %v2669
        %2701 = vmatprep.subr.bf16.mxu0 0
        %2702 = vmatpush2.bf16.msra.mxu0 0
        %2703 = vmatprep.subr.bf16.mxu0 0
        %2704 = vmatpush2.bf16.msra.mxu0 0
        %2705 = vmatprep.subr.bf16.mxu0 0
        %2706 = vmatpush2.bf16.msra.mxu0 0
        %2707 = vmatprep.subr.bf16.mxu0 0
        %2708 = vmatpush2.bf16.msra.mxu0 0
        %2709 = vmatprep.subr.bf16.mxu0 0
        %2710 = vmatpush2.bf16.msra.mxu0 0
        %2711 = vmatprep.subr.bf16.mxu0 0
        %2712 = vmatpush2.bf16.msra.mxu0 0
        %2713 = vmatprep.subr.bf16.mxu0 0
        %2714 = vmatpush2.bf16.msra.mxu0 0
        %2715 = vmatprep.subr.bf16.mxu0 0
        %2716 = vmatpush2.bf16.msra.mxu0 0
        %2717 = vmatprep.mubr.bf16.mxu0 0
        %2718 = vmatmul.mubr.bf16.gmra.mxu0 %v2525
        %v2719 = vpop.f32.mrf.mxu0
        %v2720 = vadd.f32 0.0, %v2719
        %v2721 = vpop.f32.mrf.mxu0
        %v2722 = vpop.f32.mrf.mxu0
        %v2723 = vadd.f32 0.0, %v2722
        %v2724 = vpop.f32.mrf.mxu0
        %2725 = vmatprep.mubr.bf16.mxu0 0
        %2726 = vmatmul.mubr.bf16.gmra.mxu0 %v2534
        %v2727 = vpop.f32.mrf.mxu0
        %v2728 = vadd.f32 0.0, %v2727
        %v2729 = vpop.f32.mrf.mxu0
        %v2730 = vpop.f32.mrf.mxu0
        %v2731 = vadd.f32 0.0, %v2730
        %v2732 = vpop.f32.mrf.mxu0
        %2733 = vmatprep.mubr.bf16.mxu0 0
        %2734 = vmatmul.mubr.bf16.gmra.mxu0 %v2543
        %v2735 = vpop.f32.mrf.mxu0
        %v2736 = vadd.f32 0.0, %v2735
        %v2737 = vpop.f32.mrf.mxu0
        %v2738 = vpop.f32.mrf.mxu0
        %v2739 = vadd.f32 0.0, %v2738
        %v2740 = vpop.f32.mrf.mxu0
        %2741 = vmatprep.mubr.bf16.mxu0 0
        %2742 = vmatmul.mubr.bf16.gmra.mxu0 %v2552
        %v2743 = vpop.f32.mrf.mxu0
        %v2744 = vadd.f32 0.0, %v2743
        %v2745 = vpop.f32.mrf.mxu0
        %v2746 = vpop.f32.mrf.mxu0
        %v2747 = vadd.f32 0.0, %v2746
        %v2748 = vpop.f32.mrf.mxu0
        %2749 = vmatprep.mubr.bf16.mxu0 0
        %2750 = vmatmul.mubr.bf16.gmra.mxu0 %v2561
        %v2751 = vpop.f32.mrf.mxu0
        %v2752 = vadd.f32 0.0, %v2751
        %v2753 = vpop.f32.mrf.mxu0
        %v2754 = vpop.f32.mrf.mxu0
        %v2755 = vadd.f32 0.0, %v2754
        %v2756 = vpop.f32.mrf.mxu0
        %2757 = vmatprep.mubr.bf16.mxu0 0
        %2758 = vmatmul.mubr.bf16.gmra.mxu0 %v2570
        %v2759 = vpop.f32.mrf.mxu0
        %v2760 = vadd.f32 0.0, %v2759
        %v2761 = vpop.f32.mrf.mxu0
        %v2762 = vpop.f32.mrf.mxu0
        %v2763 = vadd.f32 0.0, %v2762
        %v2764 = vpop.f32.mrf.mxu0
        %2765 = vmatprep.mubr.bf16.mxu0 0
        %2766 = vmatmul.mubr.bf16.gmra.mxu0 %v2579
        %v2767 = vpop.f32.mrf.mxu0
        %v2768 = vadd.f32 0.0, %v2767
        %v2769 = vpop.f32.mrf.mxu0
        %v2770 = vpop.f32.mrf.mxu0
        %v2771 = vadd.f32 0.0, %v2770
        %v2772 = vpop.f32.mrf.mxu0
        %2773 = vmatprep.mubr.bf16.mxu0 0
        %2774 = vmatmul.mubr.bf16.gmra.mxu0 %v2588
        %v2775 = vpop.f32.mrf.mxu0
        %v2776 = vadd.f32 0.0, %v2775
        %v2777 = vpop.f32.mrf.mxu0
        %v2778 = vpop.f32.mrf.mxu0
        %v2779 = vadd.f32 0.0, %v2778
        %v2780 = vpop.f32.mrf.mxu0
        %2781 = vmatprep.mubr.bf16.mxu0 0
        %2782 = vmatmul.mubr.bf16.gmra.mxu0 %v2597
        %v2783 = vpop.f32.mrf.mxu0
        %v2784 = vadd.f32 0.0, %v2783
        %v2785 = vpop.f32.mrf.mxu0
        %v2786 = vpop.f32.mrf.mxu0
        %v2787 = vadd.f32 0.0, %v2786
        %v2788 = vpop.f32.mrf.mxu0
        %2789 = vmatprep.mubr.bf16.mxu0 0
        %2790 = vmatmul.mubr.bf16.gmra.mxu0 %v2606
        %v2791 = vpop.f32.mrf.mxu0
        %v2792 = vadd.f32 0.0, %v2791
        %v2793 = vpop.f32.mrf.mxu0
        %v2794 = vpop.f32.mrf.mxu0
        %v2795 = vadd.f32 0.0, %v2794
        %v2796 = vpop.f32.mrf.mxu0
        %2797 = vmatprep.mubr.bf16.mxu0 0
        %2798 = vmatmul.mubr.bf16.gmra.mxu0 %v2615
        %v2799 = vpop.f32.mrf.mxu0
        %v2800 = vadd.f32 0.0, %v2799
        %v2801 = vpop.f32.mrf.mxu0
        %v2802 = vpop.f32.mrf.mxu0
        %v2803 = vadd.f32 0.0, %v2802
        %v2804 = vpop.f32.mrf.mxu0
        %2805 = vmatprep.mubr.bf16.mxu0 0
        %2806 = vmatmul.mubr.bf16.gmra.mxu0 %v2624
        %v2807 = vpop.f32.mrf.mxu0
        %v2808 = vadd.f32 0.0, %v2807
        %v2809 = vpop.f32.mrf.mxu0
        %v2810 = vpop.f32.mrf.mxu0
        %v2811 = vadd.f32 0.0, %v2810
        %v2812 = vpop.f32.mrf.mxu0
        %2813 = vdwg.mxu0
        %v2814 = vadd.f32 %v2374, %v2720
        %v2815 = vadd.f32 %v2375, %v2723
        %v2816 = vadd.f32 %v2376, %v2728
        %v2817 = vadd.f32 %v2377, %v2731
        %v2818 = vadd.f32 %v2378, %v2736
        %v2819 = vadd.f32 %v2379, %v2739
        %v2820 = vadd.f32 %v2380, %v2744
        %v2821 = vadd.f32 %v2381, %v2747
        %v2822 = vadd.f32 %v2382, %v2752
        %v2823 = vadd.f32 %v2383, %v2755
        %v2824 = vadd.f32 %v2384, %v2760
        %v2825 = vadd.f32 %v2385, %v2763
        %v2826 = vadd.f32 %v2386, %v2768
        %v2827 = vadd.f32 %v2387, %v2771
        %v2828 = vadd.f32 %v2388, %v2776
        %v2829 = vadd.f32 %v2389, %v2779
        %v2830 = vadd.f32 %v2390, %v2784
        %v2831 = vadd.f32 %v2391, %v2787
        %v2832 = vadd.f32 %v2392, %v2792
        %v2833 = vadd.f32 %v2393, %v2795
        %v2834 = vadd.f32 %v2394, %v2800
        %v2835 = vadd.f32 %v2395, %v2803
        %v2836 = vadd.f32 %v2396, %v2808
        %v2837 = vadd.f32 %v2397, %v2811
        %s2838 = scalar_lea.vmem %s2, 448
        %v2839 = vld [vmem:[%s2838] sm:$0xf]
        %v2840 = vld [vmem:[%s2838 + $0x4] sm:$0xf]
        %v2841 = vld [vmem:[%s2838 + $0x8] sm:$0xf]
        %v2842 = vld [vmem:[%s2838 + $0xc] sm:$0xf]
        %v2843 = vld [vmem:[%s2838 + $0x10] sm:$0xf]
        %v2844 = vld [vmem:[%s2838 + $0x14] sm:$0xf]
        %v2845 = vld [vmem:[%s2838 + $0x18] sm:$0xf]
        %v2846 = vld [vmem:[%s2838 + $0x1c] sm:$0xf]
        %v2847 = vld [vmem:[%s2838 + $0x20] sm:$0xf]
        %v2848 = vld [vmem:[%s2838 + $0x24] sm:$0xf]
        %v2849 = vld [vmem:[%s2838 + $0x28] sm:$0xf]
        %v2850 = vld [vmem:[%s2838 + $0x2c] sm:$0xf]
        %v2851 = vld [vmem:[%s2838 + $0x30] sm:$0xf]
        %v2852 = vld [vmem:[%s2838 + $0x34] sm:$0xf]
        %v2853 = vld [vmem:[%s2838 + $0x38] sm:$0xf]
        %v2854 = vld [vmem:[%s2838 + $0x3c] sm:$0xf]
        %v2855 = vpack.c.b16 %v2473, %v2472
        %v2856 = vpack.c.b16 %v2475, %v2474
        %v2857 = vpack.c.b16 %v2477, %v2476
        %v2858 = vpack.c.b16 %v2479, %v2478
        %v2859 = vpack.c.b16 %v2481, %v2480
        %v2860 = vpack.c.b16 %v2483, %v2482
        %v2861 = vpack.c.b16 %v2485, %v2484
        %v2862 = vpack.c.b16 %v2487, %v2486
        %v2863 = vpack.c.b16 %v2489, %v2488
        %v2864 = vpack.c.b16 %v2491, %v2490
        %v2865 = vpack.c.b16 %v2493, %v2492
        %v2866 = vpack.c.b16 %v2495, %v2494
        %v2895 = vunpack.c.l.b16 %v2839
        %v2896 = vunpack.c.l.b16 %v2840
        %v2897 = vunpack.c.l.b16 %v2841
        %v2898 = vunpack.c.l.b16 %v2842
        %v2899 = vunpack.c.l.b16 %v2843
        %v2900 = vunpack.c.l.b16 %v2844
        %v2901 = vunpack.c.l.b16 %v2845
        %v2902 = vunpack.c.l.b16 %v2846
        %v2903 = vunpack.c.l.b16 %v2847
        %v2904 = vunpack.c.l.b16 %v2848
        %v2905 = vunpack.c.l.b16 %v2849
        %v2906 = vunpack.c.l.b16 %v2850
        %v2907 = vunpack.c.l.b16 %v2851
        %v2908 = vunpack.c.l.b16 %v2852
        %v2909 = vunpack.c.l.b16 %v2853
        %v2910 = vunpack.c.l.b16 %v2854
        %v2911 = vpack.c.b16 %v2896, %v2895
        %v2912 = vpack.c.b16 %v2898, %v2897
        %v2913 = vpack.c.b16 %v2900, %v2899
        %v2914 = vpack.c.b16 %v2902, %v2901
        %v2915 = vpack.c.b16 %v2904, %v2903
        %v2916 = vpack.c.b16 %v2906, %v2905
        %v2917 = vpack.c.b16 %v2908, %v2907
        %v2918 = vpack.c.b16 %v2910, %v2909
        %2927 = vmatprep.subr.bf16.mxu0 0
        %2928 = vmatpush1.bf16.msra.mxu0 %v2918
        %2929 = vmatprep.subr.bf16.mxu0 0
        %2930 = vmatpush1.bf16.msra.mxu0 %v2917
        %2931 = vmatprep.subr.bf16.mxu0 0
        %2932 = vmatpush1.bf16.msra.mxu0 %v2916
        %2933 = vmatprep.subr.bf16.mxu0 0
        %2934 = vmatpush1.bf16.msra.mxu0 %v2915
        %2935 = vmatprep.subr.bf16.mxu0 0
        %2936 = vmatpush1.bf16.msra.mxu0 %v2914
        %2937 = vmatprep.subr.bf16.mxu0 0
        %2938 = vmatpush1.bf16.msra.mxu0 %v2913
        %2939 = vmatprep.subr.bf16.mxu0 0
        %2940 = vmatpush1.bf16.msra.mxu0 %v2912
        %2941 = vmatprep.subr.bf16.mxu0 0
        %2942 = vmatpush1.bf16.msra.mxu0 %v2911
        %2943 = vmatprep.subr.bf16.mxu0 0
        %2944 = vmatpush2.bf16.msra.mxu0 0
        %2945 = vmatprep.subr.bf16.mxu0 0
        %2946 = vmatpush2.bf16.msra.mxu0 0
        %2947 = vmatprep.subr.bf16.mxu0 0
        %2948 = vmatpush2.bf16.msra.mxu0 0
        %2949 = vmatprep.subr.bf16.mxu0 0
        %2950 = vmatpush2.bf16.msra.mxu0 0
        %2951 = vmatprep.subr.bf16.mxu0 0
        %2952 = vmatpush2.bf16.msra.mxu0 0
        %2953 = vmatprep.subr.bf16.mxu0 0
        %2954 = vmatpush2.bf16.msra.mxu0 0
        %2955 = vmatprep.subr.bf16.mxu0 0
        %2956 = vmatpush2.bf16.msra.mxu0 0
        %2957 = vmatprep.subr.bf16.mxu0 0
        %2958 = vmatpush2.bf16.msra.mxu0 0
        %2959 = vmatprep.mubr.bf16.mxu0 0
        %2960 = vmatmul.mubr.bf16.gmra.mxu0 %v2855
        %v2961 = vpop.f32.mrf.mxu0
        %v2962 = vadd.f32 0.0, %v2961
        %v2963 = vpop.f32.mrf.mxu0
        %v2964 = vpop.f32.mrf.mxu0
        %v2965 = vadd.f32 0.0, %v2964
        %v2966 = vpop.f32.mrf.mxu0
        %2967 = vmatprep.mubr.bf16.mxu0 0
        %2968 = vmatmul.mubr.bf16.gmra.mxu0 %v2856
        %v2969 = vpop.f32.mrf.mxu0
        %v2970 = vadd.f32 0.0, %v2969
        %v2971 = vpop.f32.mrf.mxu0
        %v2972 = vpop.f32.mrf.mxu0
        %v2973 = vadd.f32 0.0, %v2972
        %v2974 = vpop.f32.mrf.mxu0
        %2975 = vmatprep.mubr.bf16.mxu0 0
        %2976 = vmatmul.mubr.bf16.gmra.mxu0 %v2857
        %v2977 = vpop.f32.mrf.mxu0
        %v2978 = vadd.f32 0.0, %v2977
        %v2979 = vpop.f32.mrf.mxu0
        %v2980 = vpop.f32.mrf.mxu0
        %v2981 = vadd.f32 0.0, %v2980
        %v2982 = vpop.f32.mrf.mxu0
        %2983 = vmatprep.mubr.bf16.mxu0 0
        %2984 = vmatmul.mubr.bf16.gmra.mxu0 %v2858
        %v2985 = vpop.f32.mrf.mxu0
        %v2986 = vadd.f32 0.0, %v2985
        %v2987 = vpop.f32.mrf.mxu0
        %v2988 = vpop.f32.mrf.mxu0
        %v2989 = vadd.f32 0.0, %v2988
        %v2990 = vpop.f32.mrf.mxu0
        %2991 = vmatprep.mubr.bf16.mxu0 0
        %2992 = vmatmul.mubr.bf16.gmra.mxu0 %v2859
        %v2993 = vpop.f32.mrf.mxu0
        %v2994 = vadd.f32 0.0, %v2993
        %v2995 = vpop.f32.mrf.mxu0
        %v2996 = vpop.f32.mrf.mxu0
        %v2997 = vadd.f32 0.0, %v2996
        %v2998 = vpop.f32.mrf.mxu0
        %2999 = vmatprep.mubr.bf16.mxu0 0
        %3000 = vmatmul.mubr.bf16.gmra.mxu0 %v2860
        %v3001 = vpop.f32.mrf.mxu0
        %v3002 = vadd.f32 0.0, %v3001
        %v3003 = vpop.f32.mrf.mxu0
        %v3004 = vpop.f32.mrf.mxu0
        %v3005 = vadd.f32 0.0, %v3004
        %v3006 = vpop.f32.mrf.mxu0
        %3007 = vmatprep.mubr.bf16.mxu0 0
        %3008 = vmatmul.mubr.bf16.gmra.mxu0 %v2861
        %v3009 = vpop.f32.mrf.mxu0
        %v3010 = vadd.f32 0.0, %v3009
        %v3011 = vpop.f32.mrf.mxu0
        %v3012 = vpop.f32.mrf.mxu0
        %v3013 = vadd.f32 0.0, %v3012
        %v3014 = vpop.f32.mrf.mxu0
        %3015 = vmatprep.mubr.bf16.mxu0 0
        %3016 = vmatmul.mubr.bf16.gmra.mxu0 %v2862
        %v3017 = vpop.f32.mrf.mxu0
        %v3018 = vadd.f32 0.0, %v3017
        %v3019 = vpop.f32.mrf.mxu0
        %v3020 = vpop.f32.mrf.mxu0
        %v3021 = vadd.f32 0.0, %v3020
        %v3022 = vpop.f32.mrf.mxu0
        %3023 = vmatprep.mubr.bf16.mxu0 0
        %3024 = vmatmul.mubr.bf16.gmra.mxu0 %v2863
        %v3025 = vpop.f32.mrf.mxu0
        %v3026 = vadd.f32 0.0, %v3025
        %v3027 = vpop.f32.mrf.mxu0
        %v3028 = vpop.f32.mrf.mxu0
        %v3029 = vadd.f32 0.0, %v3028
        %v3030 = vpop.f32.mrf.mxu0
        %3031 = vmatprep.mubr.bf16.mxu0 0
        %3032 = vmatmul.mubr.bf16.gmra.mxu0 %v2864
        %v3033 = vpop.f32.mrf.mxu0
        %v3034 = vadd.f32 0.0, %v3033
        %v3035 = vpop.f32.mrf.mxu0
        %v3036 = vpop.f32.mrf.mxu0
        %v3037 = vadd.f32 0.0, %v3036
        %v3038 = vpop.f32.mrf.mxu0
        %3039 = vmatprep.mubr.bf16.mxu0 0
        %3040 = vmatmul.mubr.bf16.gmra.mxu0 %v2865
        %v3041 = vpop.f32.mrf.mxu0
        %v3042 = vadd.f32 0.0, %v3041
        %v3043 = vpop.f32.mrf.mxu0
        %v3044 = vpop.f32.mrf.mxu0
        %v3045 = vadd.f32 0.0, %v3044
        %v3046 = vpop.f32.mrf.mxu0
        %3047 = vmatprep.mubr.bf16.mxu0 0
        %3048 = vmatmul.mubr.bf16.gmra.mxu0 %v2866
        %v3049 = vpop.f32.mrf.mxu0
        %v3050 = vadd.f32 0.0, %v3049
        %v3051 = vpop.f32.mrf.mxu0
        %v3052 = vpop.f32.mrf.mxu0
        %v3053 = vadd.f32 0.0, %v3052
        %v3054 = vpop.f32.mrf.mxu0
        %3055 = vdwg.mxu0
        %v3056 = vadd.f32 %v2814, %v2962
        %v3057 = vadd.f32 %v2815, %v2965
        %v3058 = vadd.f32 %v2816, %v2970
        %v3059 = vadd.f32 %v2817, %v2973
        %v3060 = vadd.f32 %v2818, %v2978
        %v3061 = vadd.f32 %v2819, %v2981
        %v3062 = vadd.f32 %v2820, %v2986
        %v3063 = vadd.f32 %v2821, %v2989
        %v3064 = vadd.f32 %v2822, %v2994
        %v3065 = vadd.f32 %v2823, %v2997
        %v3066 = vadd.f32 %v2824, %v3002
        %v3067 = vadd.f32 %v2825, %v3005
        %v3068 = vadd.f32 %v2826, %v3010
        %v3069 = vadd.f32 %v2827, %v3013
        %v3070 = vadd.f32 %v2828, %v3018
        %v3071 = vadd.f32 %v2829, %v3021
        %v3072 = vadd.f32 %v2830, %v3026
        %v3073 = vadd.f32 %v2831, %v3029
        %v3074 = vadd.f32 %v2832, %v3034
        %v3075 = vadd.f32 %v2833, %v3037
        %v3076 = vadd.f32 %v2834, %v3042
        %v3077 = vadd.f32 %v2835, %v3045
        %v3078 = vadd.f32 %v2836, %v3050
        %v3079 = vadd.f32 %v2837, %v3053
        %s3080 = scalar_lea.vmem %s2, 512
        %v3081 = vld [vmem:[%s3080] sm:$0xf]
        %v3082 = vld [vmem:[%s3080 + $0x4] sm:$0xf]
        %v3083 = vld [vmem:[%s3080 + $0x8] sm:$0xf]
        %v3084 = vld [vmem:[%s3080 + $0xc] sm:$0xf]
        %v3085 = vld [vmem:[%s3080 + $0x10] sm:$0xf]
        %v3086 = vld [vmem:[%s3080 + $0x14] sm:$0xf]
        %v3087 = vld [vmem:[%s3080 + $0x18] sm:$0xf]
        %v3088 = vld [vmem:[%s3080 + $0x1c] sm:$0xf]
        %v3089 = vld [vmem:[%s3080 + $0x20] sm:$0xf]
        %v3090 = vld [vmem:[%s3080 + $0x24] sm:$0xf]
        %v3091 = vld [vmem:[%s3080 + $0x28] sm:$0xf]
        %v3092 = vld [vmem:[%s3080 + $0x2c] sm:$0xf]
        %v3093 = vld [vmem:[%s3080 + $0x30] sm:$0xf]
        %v3094 = vld [vmem:[%s3080 + $0x34] sm:$0xf]
        %v3095 = vld [vmem:[%s3080 + $0x38] sm:$0xf]
        %v3096 = vld [vmem:[%s3080 + $0x3c] sm:$0xf]
        %v3098 = vunpack.c.l.b16 %v2428
        %v3099 = vpack.c.b16 %v3098, %v3098
        %v3101 = vshrl.u32 %v2855, 16
        %v3103 = vshll.u32 %v2855, 16
        %v3105 = vrot.slane %v3103, 1
        %v3106 = vor.u32 %v3101, %v3105
        %v3108 = vshll.u32 %v2856, 16
        %v3110 = vrot.slane %v3108, 1
        %v3111 = vsel %vm1069, %v3106, %v3110
        %v3112 = vshrl.u32 %v2856, 16
        %v3114 = vor.u32 %v3112, %v3110
        %v3116 = vshll.u32 %v2857, 16
        %v3118 = vrot.slane %v3116, 1
        %v3119 = vsel %vm1069, %v3114, %v3118
        %v3120 = vshrl.u32 %v2857, 16
        %v3122 = vor.u32 %v3120, %v3118
        %v3124 = vshll.u32 %v2858, 16
        %v3126 = vrot.slane %v3124, 1
        %v3127 = vsel %vm1069, %v3122, %v3126
        %v3128 = vshrl.u32 %v2858, 16
        %v3130 = vor.u32 %v3128, %v3126
        %v3132 = vshll.u32 %v2859, 16
        %v3134 = vrot.slane %v3132, 1
        %v3135 = vsel %vm1069, %v3130, %v3134
        %v3136 = vshrl.u32 %v2859, 16
        %v3138 = vor.u32 %v3136, %v3134
        %v3140 = vshll.u32 %v2860, 16
        %v3142 = vrot.slane %v3140, 1
        %v3143 = vsel %vm1069, %v3138, %v3142
        %v3144 = vshrl.u32 %v2860, 16
        %v3146 = vor.u32 %v3144, %v3142
        %v3148 = vshll.u32 %v2861, 16
        %v3150 = vrot.slane %v3148, 1
        %v3151 = vsel %vm1069, %v3146, %v3150
        %v3152 = vshrl.u32 %v2861, 16
        %v3154 = vor.u32 %v3152, %v3150
        %v3156 = vshll.u32 %v2862, 16
        %v3158 = vrot.slane %v3156, 1
        %v3159 = vsel %vm1069, %v3154, %v3158
        %v3160 = vshrl.u32 %v2862, 16
        %v3162 = vor.u32 %v3160, %v3158
        %v3164 = vshll.u32 %v2863, 16
        %v3166 = vrot.slane %v3164, 1
        %v3167 = vsel %vm1069, %v3162, %v3166
        %v3168 = vshrl.u32 %v2863, 16
        %v3170 = vor.u32 %v3168, %v3166
        %v3172 = vshll.u32 %v2864, 16
        %v3174 = vrot.slane %v3172, 1
        %v3175 = vsel %vm1069, %v3170, %v3174
        %v3176 = vshrl.u32 %v2864, 16
        %v3178 = vor.u32 %v3176, %v3174
        %v3180 = vshll.u32 %v2865, 16
        %v3182 = vrot.slane %v3180, 1
        %v3183 = vsel %vm1069, %v3178, %v3182
        %v3184 = vshrl.u32 %v2865, 16
        %v3186 = vor.u32 %v3184, %v3182
        %v3188 = vshll.u32 %v2866, 16
        %v3190 = vrot.slane %v3188, 1
        %v3191 = vsel %vm1069, %v3186, %v3190
        %v3192 = vshrl.u32 %v2866, 16
        %v3194 = vor.u32 %v3192, %v3190
        %v3196 = vshll.u32 %v3099, 16
        %v3198 = vrot.slane %v3196, 1
        %v3199 = vsel %vm1069, %v3194, %v3198
        %v3228 = vunpack.c.l.b16 %v3081
        %v3229 = vunpack.c.l.b16 %v3082
        %v3230 = vunpack.c.l.b16 %v3083
        %v3231 = vunpack.c.l.b16 %v3084
        %v3232 = vunpack.c.l.b16 %v3085
        %v3233 = vunpack.c.l.b16 %v3086
        %v3234 = vunpack.c.l.b16 %v3087
        %v3235 = vunpack.c.l.b16 %v3088
        %v3236 = vunpack.c.l.b16 %v3089
        %v3237 = vunpack.c.l.b16 %v3090
        %v3238 = vunpack.c.l.b16 %v3091
        %v3239 = vunpack.c.l.b16 %v3092
        %v3240 = vunpack.c.l.b16 %v3093
        %v3241 = vunpack.c.l.b16 %v3094
        %v3242 = vunpack.c.l.b16 %v3095
        %v3243 = vunpack.c.l.b16 %v3096
        %v3244 = vpack.c.b16 %v3229, %v3228
        %v3245 = vpack.c.b16 %v3231, %v3230
        %v3246 = vpack.c.b16 %v3233, %v3232
        %v3247 = vpack.c.b16 %v3235, %v3234
        %v3248 = vpack.c.b16 %v3237, %v3236
        %v3249 = vpack.c.b16 %v3239, %v3238
        %v3250 = vpack.c.b16 %v3241, %v3240
        %v3251 = vpack.c.b16 %v3243, %v3242
        %3260 = vmatprep.subr.bf16.mxu0 0
        %3261 = vmatpush1.bf16.msra.mxu0 %v3251
        %3262 = vmatprep.subr.bf16.mxu0 0
        %3263 = vmatpush1.bf16.msra.mxu0 %v3250
        %3264 = vmatprep.subr.bf16.mxu0 0
        %3265 = vmatpush1.bf16.msra.mxu0 %v3249
        %3266 = vmatprep.subr.bf16.mxu0 0
        %3267 = vmatpush1.bf16.msra.mxu0 %v3248
        %3268 = vmatprep.subr.bf16.mxu0 0
        %3269 = vmatpush1.bf16.msra.mxu0 %v3247
        %3270 = vmatprep.subr.bf16.mxu0 0
        %3271 = vmatpush1.bf16.msra.mxu0 %v3246
        %3272 = vmatprep.subr.bf16.mxu0 0
        %3273 = vmatpush1.bf16.msra.mxu0 %v3245
        %3274 = vmatprep.subr.bf16.mxu0 0
        %3275 = vmatpush1.bf16.msra.mxu0 %v3244
        %3276 = vmatprep.subr.bf16.mxu0 0
        %3277 = vmatpush2.bf16.msra.mxu0 0
        %3278 = vmatprep.subr.bf16.mxu0 0
        %3279 = vmatpush2.bf16.msra.mxu0 0
        %3280 = vmatprep.subr.bf16.mxu0 0
        %3281 = vmatpush2.bf16.msra.mxu0 0
        %3282 = vmatprep.subr.bf16.mxu0 0
        %3283 = vmatpush2.bf16.msra.mxu0 0
        %3284 = vmatprep.subr.bf16.mxu0 0
        %3285 = vmatpush2.bf16.msra.mxu0 0
        %3286 = vmatprep.subr.bf16.mxu0 0
        %3287 = vmatpush2.bf16.msra.mxu0 0
        %3288 = vmatprep.subr.bf16.mxu0 0
        %3289 = vmatpush2.bf16.msra.mxu0 0
        %3290 = vmatprep.subr.bf16.mxu0 0
        %3291 = vmatpush2.bf16.msra.mxu0 0
        %3292 = vmatprep.mubr.bf16.mxu0 0
        %3293 = vmatmul.mubr.bf16.gmra.mxu0 %v3111
        %v3294 = vpop.f32.mrf.mxu0
        %v3295 = vadd.f32 0.0, %v3294
        %v3296 = vpop.f32.mrf.mxu0
        %v3297 = vpop.f32.mrf.mxu0
        %v3298 = vadd.f32 0.0, %v3297
        %v3299 = vpop.f32.mrf.mxu0
        %3300 = vmatprep.mubr.bf16.mxu0 0
        %3301 = vmatmul.mubr.bf16.gmra.mxu0 %v3119
        %v3302 = vpop.f32.mrf.mxu0
        %v3303 = vadd.f32 0.0, %v3302
        %v3304 = vpop.f32.mrf.mxu0
        %v3305 = vpop.f32.mrf.mxu0
        %v3306 = vadd.f32 0.0, %v3305
        %v3307 = vpop.f32.mrf.mxu0
        %3308 = vmatprep.mubr.bf16.mxu0 0
        %3309 = vmatmul.mubr.bf16.gmra.mxu0 %v3127
        %v3310 = vpop.f32.mrf.mxu0
        %v3311 = vadd.f32 0.0, %v3310
        %v3312 = vpop.f32.mrf.mxu0
        %v3313 = vpop.f32.mrf.mxu0
        %v3314 = vadd.f32 0.0, %v3313
        %v3315 = vpop.f32.mrf.mxu0
        %3316 = vmatprep.mubr.bf16.mxu0 0
        %3317 = vmatmul.mubr.bf16.gmra.mxu0 %v3135
        %v3318 = vpop.f32.mrf.mxu0
        %v3319 = vadd.f32 0.0, %v3318
        %v3320 = vpop.f32.mrf.mxu0
        %v3321 = vpop.f32.mrf.mxu0
        %v3322 = vadd.f32 0.0, %v3321
        %v3323 = vpop.f32.mrf.mxu0
        %3324 = vmatprep.mubr.bf16.mxu0 0
        %3325 = vmatmul.mubr.bf16.gmra.mxu0 %v3143
        %v3326 = vpop.f32.mrf.mxu0
        %v3327 = vadd.f32 0.0, %v3326
        %v3328 = vpop.f32.mrf.mxu0
        %v3329 = vpop.f32.mrf.mxu0
        %v3330 = vadd.f32 0.0, %v3329
        %v3331 = vpop.f32.mrf.mxu0
        %3332 = vmatprep.mubr.bf16.mxu0 0
        %3333 = vmatmul.mubr.bf16.gmra.mxu0 %v3151
        %v3334 = vpop.f32.mrf.mxu0
        %v3335 = vadd.f32 0.0, %v3334
        %v3336 = vpop.f32.mrf.mxu0
        %v3337 = vpop.f32.mrf.mxu0
        %v3338 = vadd.f32 0.0, %v3337
        %v3339 = vpop.f32.mrf.mxu0
        %3340 = vmatprep.mubr.bf16.mxu0 0
        %3341 = vmatmul.mubr.bf16.gmra.mxu0 %v3159
        %v3342 = vpop.f32.mrf.mxu0
        %v3343 = vadd.f32 0.0, %v3342
        %v3344 = vpop.f32.mrf.mxu0
        %v3345 = vpop.f32.mrf.mxu0
        %v3346 = vadd.f32 0.0, %v3345
        %v3347 = vpop.f32.mrf.mxu0
        %3348 = vmatprep.mubr.bf16.mxu0 0
        %3349 = vmatmul.mubr.bf16.gmra.mxu0 %v3167
        %v3350 = vpop.f32.mrf.mxu0
        %v3351 = vadd.f32 0.0, %v3350
        %v3352 = vpop.f32.mrf.mxu0
        %v3353 = vpop.f32.mrf.mxu0
        %v3354 = vadd.f32 0.0, %v3353
        %v3355 = vpop.f32.mrf.mxu0
        %3356 = vmatprep.mubr.bf16.mxu0 0
        %3357 = vmatmul.mubr.bf16.gmra.mxu0 %v3175
        %v3358 = vpop.f32.mrf.mxu0
        %v3359 = vadd.f32 0.0, %v3358
        %v3360 = vpop.f32.mrf.mxu0
        %v3361 = vpop.f32.mrf.mxu0
        %v3362 = vadd.f32 0.0, %v3361
        %v3363 = vpop.f32.mrf.mxu0
        %3364 = vmatprep.mubr.bf16.mxu0 0
        %3365 = vmatmul.mubr.bf16.gmra.mxu0 %v3183
        %v3366 = vpop.f32.mrf.mxu0
        %v3367 = vadd.f32 0.0, %v3366
        %v3368 = vpop.f32.mrf.mxu0
        %v3369 = vpop.f32.mrf.mxu0
        %v3370 = vadd.f32 0.0, %v3369
        %v3371 = vpop.f32.mrf.mxu0
        %3372 = vmatprep.mubr.bf16.mxu0 0
        %3373 = vmatmul.mubr.bf16.gmra.mxu0 %v3191
        %v3374 = vpop.f32.mrf.mxu0
        %v3375 = vadd.f32 0.0, %v3374
        %v3376 = vpop.f32.mrf.mxu0
        %v3377 = vpop.f32.mrf.mxu0
        %v3378 = vadd.f32 0.0, %v3377
        %v3379 = vpop.f32.mrf.mxu0
        %3380 = vmatprep.mubr.bf16.mxu0 0
        %3381 = vmatmul.mubr.bf16.gmra.mxu0 %v3199
        %v3382 = vpop.f32.mrf.mxu0
        %v3383 = vadd.f32 0.0, %v3382
        %v3384 = vpop.f32.mrf.mxu0
        %v3385 = vpop.f32.mrf.mxu0
        %v3386 = vadd.f32 0.0, %v3385
        %v3387 = vpop.f32.mrf.mxu0
        %3388 = vdwg.mxu0
        %v3389 = vadd.f32 %v3056, %v3295
        %v3390 = vadd.f32 %v3057, %v3298
        %v3391 = vadd.f32 %v3058, %v3303
        %v3392 = vadd.f32 %v3059, %v3306
        %v3393 = vadd.f32 %v3060, %v3311
        %v3394 = vadd.f32 %v3061, %v3314
        %v3395 = vadd.f32 %v3062, %v3319
        %v3396 = vadd.f32 %v3063, %v3322
        %v3397 = vadd.f32 %v3064, %v3327
        %v3398 = vadd.f32 %v3065, %v3330
        %v3399 = vadd.f32 %v3066, %v3335
        %v3400 = vadd.f32 %v3067, %v3338
        %v3401 = vadd.f32 %v3068, %v3343
        %v3402 = vadd.f32 %v3069, %v3346
        %v3403 = vadd.f32 %v3070, %v3351
        %v3404 = vadd.f32 %v3071, %v3354
        %v3405 = vadd.f32 %v3072, %v3359
        %v3406 = vadd.f32 %v3073, %v3362
        %v3407 = vadd.f32 %v3074, %v3367
        %v3408 = vadd.f32 %v3075, %v3370
        %v3409 = vadd.f32 %v3076, %v3375
        %v3410 = vadd.f32 %v3077, %v3378
        %v3411 = vadd.f32 %v3078, %v3383
        %v3412 = vadd.f32 %v3079, %v3386
        %v3413 = vmax.f32 %v3389, 0.0
        %v3414 = vmax.f32 %v3390, 0.0
        %v3415 = vmax.f32 %v3391, 0.0
        %v3416 = vmax.f32 %v3392, 0.0
        %v3417 = vmax.f32 %v3393, 0.0
        %v3418 = vmax.f32 %v3394, 0.0
        %v3419 = vmax.f32 %v3395, 0.0
        %v3420 = vmax.f32 %v3396, 0.0
        %v3421 = vmax.f32 %v3397, 0.0
        %v3422 = vmax.f32 %v3398, 0.0
        %v3423 = vmax.f32 %v3399, 0.0
        %v3424 = vmax.f32 %v3400, 0.0
        %v3425 = vmax.f32 %v3401, 0.0
        %v3426 = vmax.f32 %v3402, 0.0
        %v3427 = vmax.f32 %v3403, 0.0
        %v3428 = vmax.f32 %v3404, 0.0
        %v3429 = vmax.f32 %v3405, 0.0
        %v3430 = vmax.f32 %v3406, 0.0
        %v3431 = vmax.f32 %v3407, 0.0
        %v3432 = vmax.f32 %v3408, 0.0
        %v3433 = vmax.f32 %v3409, 0.0
        %v3434 = vmax.f32 %v3410, 0.0
        %v3435 = vmax.f32 %v3411, 0.0
        %v3436 = vmax.f32 %v3412, 0.0
        %s3437 = sshra.s32 %s367, 3
        %s3438 = sand.u32 %s367, 7
        %s3439 = smul.addr %s3437, 4
        %s3440 = scalar_lea.vmem %s1, %s3439
        %v3441 = vld [vmem:[%s3440] sm:$0xf]
        %v3442 = vld [vmem:[%s3440 + $0x4] sm:$0xf]
        %v3443 = vld [vmem:[%s3440 + $0x8] sm:$0xf]
        %v3444 = vld [vmem:[%s3440 + $0xc] sm:$0xf]
        %v3445 = vld [vmem:[%s3440 + $0x10] sm:$0xf]
        %v3446 = vld [vmem:[%s3440 + $0x14] sm:$0xf]
        %v3447 = vld [vmem:[%s3440 + $0x18] sm:$0xf]
        %v3448 = vld [vmem:[%s3440 + $0x1c] sm:$0xf]
        %v3449 = vld [vmem:[%s3440 + $0x20] sm:$0xf]
        %v3450 = vld [vmem:[%s3440 + $0x24] sm:$0xf]
        %v3451 = vld [vmem:[%s3440 + $0x28] sm:$0xf]
        %v3452 = vld [vmem:[%s3440 + $0x2c] sm:$0xf]
        %v3453 = vld [vmem:[%s3440 + $0x30] sm:$0xf]
        %v3454 = vld [vmem:[%s3440 + $0x34] sm:$0xf]
        %v3455 = vld [vmem:[%s3440 + $0x38] sm:$0xf]
        %v3456 = vld [vmem:[%s3440 + $0x3c] sm:$0xf]
        %v3457 = vld [vmem:[%s3440 + $0x40] sm:$0xf]
        %v3458 = vld [vmem:[%s3440 + $0x44] sm:$0xf]
        %v3459 = vld [vmem:[%s3440 + $0x48] sm:$0xf]
        %v3460 = vld [vmem:[%s3440 + $0x4c] sm:$0xf]
        %v3461 = vld [vmem:[%s3440 + $0x50] sm:$0xf]
        %v3462 = vld [vmem:[%s3440 + $0x54] sm:$0xf]
        %v3463 = vld [vmem:[%s3440 + $0x58] sm:$0xf]
        %v3464 = vld [vmem:[%s3440 + $0x5c] sm:$0xf]
        %v3465 = vpack.c.bf16 %v3414, %v3413
        %v3466 = vpack.c.bf16 %v3416, %v3415
        %v3467 = vpack.c.bf16 %v3418, %v3417
        %v3468 = vpack.c.bf16 %v3420, %v3419
        %v3469 = vpack.c.bf16 %v3422, %v3421
        %v3470 = vpack.c.bf16 %v3424, %v3423
        %v3471 = vpack.c.bf16 %v3426, %v3425
        %v3472 = vpack.c.bf16 %v3428, %v3427
        %v3473 = vpack.c.bf16 %v3430, %v3429
        %v3474 = vpack.c.bf16 %v3432, %v3431
        %v3475 = vpack.c.bf16 %v3434, %v3433
        %v3476 = vpack.c.bf16 %v3436, %v3435
        %3478 = vset.pattern.permute.xlu0 0
        %3479 = vperm.xlu0 %3478, %v3441
        %v3480 = vpop.permute.xlu0 %3479
        %v3483 = vunpack.c.l.s4 839922192
        %v3484 = vunpack.c.0.s8 %v3483
        %v3485 = vlaneseq
        %v3486 = vshrl.u32 %v3485, 7
        %v3487 = vsub.s32 %v3484, %v3486
        %v3488 = vrot.slane %v3480, %v3487
        %3490 = vset.pattern.permute.xlu0 0
        %3491 = vperm.xlu0 %3490, %v3442
        %v3492 = vpop.permute.xlu0 %3491
        %v3495 = vunpack.c.l.s4 839922192
        %v3496 = vunpack.c.0.s8 %v3495
        %v3497 = vlaneseq
        %v3498 = vshrl.u32 %v3497, 7
        %v3499 = vsub.s32 %v3496, %v3498
        %v3500 = vrot.slane %v3492, %v3499
        %3502 = vset.pattern.permute.xlu0 0
        %3503 = vperm.xlu0 %3502, %v3443
        %v3504 = vpop.permute.xlu0 %3503
        %v3507 = vunpack.c.l.s4 839922192
        %v3508 = vunpack.c.0.s8 %v3507
        %v3509 = vlaneseq
        %v3510 = vshrl.u32 %v3509, 7
        %v3511 = vsub.s32 %v3508, %v3510
        %v3512 = vrot.slane %v3504, %v3511
        %3514 = vset.pattern.permute.xlu0 0
        %3515 = vperm.xlu0 %3514, %v3444
        %v3516 = vpop.permute.xlu0 %3515
        %v3519 = vunpack.c.l.s4 839922192
        %v3520 = vunpack.c.0.s8 %v3519
        %v3521 = vlaneseq
        %v3522 = vshrl.u32 %v3521, 7
        %v3523 = vsub.s32 %v3520, %v3522
        %v3524 = vrot.slane %v3516, %v3523
        %3526 = vset.pattern.permute.xlu0 0
        %3527 = vperm.xlu0 %3526, %v3445
        %v3528 = vpop.permute.xlu0 %3527
        %v3531 = vunpack.c.l.s4 839922192
        %v3532 = vunpack.c.0.s8 %v3531
        %v3533 = vlaneseq
        %v3534 = vshrl.u32 %v3533, 7
        %v3535 = vsub.s32 %v3532, %v3534
        %v3536 = vrot.slane %v3528, %v3535
        %3538 = vset.pattern.permute.xlu0 0
        %3539 = vperm.xlu0 %3538, %v3446
        %v3540 = vpop.permute.xlu0 %3539
        %v3543 = vunpack.c.l.s4 839922192
        %v3544 = vunpack.c.0.s8 %v3543
        %v3545 = vlaneseq
        %v3546 = vshrl.u32 %v3545, 7
        %v3547 = vsub.s32 %v3544, %v3546
        %v3548 = vrot.slane %v3540, %v3547
        %3550 = vset.pattern.permute.xlu0 0
        %3551 = vperm.xlu0 %3550, %v3447
        %v3552 = vpop.permute.xlu0 %3551
        %v3555 = vunpack.c.l.s4 839922192
        %v3556 = vunpack.c.0.s8 %v3555
        %v3557 = vlaneseq
        %v3558 = vshrl.u32 %v3557, 7
        %v3559 = vsub.s32 %v3556, %v3558
        %v3560 = vrot.slane %v3552, %v3559
        %3562 = vset.pattern.permute.xlu0 0
        %3563 = vperm.xlu0 %3562, %v3448
        %v3564 = vpop.permute.xlu0 %3563
        %v3567 = vunpack.c.l.s4 839922192
        %v3568 = vunpack.c.0.s8 %v3567
        %v3569 = vlaneseq
        %v3570 = vshrl.u32 %v3569, 7
        %v3571 = vsub.s32 %v3568, %v3570
        %v3572 = vrot.slane %v3564, %v3571
        %3574 = vset.pattern.permute.xlu0 0
        %3575 = vperm.xlu0 %3574, %v3449
        %v3576 = vpop.permute.xlu0 %3575
        %v3579 = vunpack.c.l.s4 839922192
        %v3580 = vunpack.c.0.s8 %v3579
        %v3581 = vlaneseq
        %v3582 = vshrl.u32 %v3581, 7
        %v3583 = vsub.s32 %v3580, %v3582
        %v3584 = vrot.slane %v3576, %v3583
        %3586 = vset.pattern.permute.xlu0 0
        %3587 = vperm.xlu0 %3586, %v3450
        %v3588 = vpop.permute.xlu0 %3587
        %v3591 = vunpack.c.l.s4 839922192
        %v3592 = vunpack.c.0.s8 %v3591
        %v3593 = vlaneseq
        %v3594 = vshrl.u32 %v3593, 7
        %v3595 = vsub.s32 %v3592, %v3594
        %v3596 = vrot.slane %v3588, %v3595
        %3598 = vset.pattern.permute.xlu0 0
        %3599 = vperm.xlu0 %3598, %v3451
        %v3600 = vpop.permute.xlu0 %3599
        %v3603 = vunpack.c.l.s4 839922192
        %v3604 = vunpack.c.0.s8 %v3603
        %v3605 = vlaneseq
        %v3606 = vshrl.u32 %v3605, 7
        %v3607 = vsub.s32 %v3604, %v3606
        %v3608 = vrot.slane %v3600, %v3607
        %3610 = vset.pattern.permute.xlu0 0
        %3611 = vperm.xlu0 %3610, %v3452
        %v3612 = vpop.permute.xlu0 %3611
        %v3615 = vunpack.c.l.s4 839922192
        %v3616 = vunpack.c.0.s8 %v3615
        %v3617 = vlaneseq
        %v3618 = vshrl.u32 %v3617, 7
        %v3619 = vsub.s32 %v3616, %v3618
        %v3620 = vrot.slane %v3612, %v3619
        %3622 = vset.pattern.permute.xlu0 0
        %3623 = vperm.xlu0 %3622, %v3453
        %v3624 = vpop.permute.xlu0 %3623
        %v3627 = vunpack.c.l.s4 839922192
        %v3628 = vunpack.c.0.s8 %v3627
        %v3629 = vlaneseq
        %v3630 = vshrl.u32 %v3629, 7
        %v3631 = vsub.s32 %v3628, %v3630
        %v3632 = vrot.slane %v3624, %v3631
        %3634 = vset.pattern.permute.xlu0 0
        %3635 = vperm.xlu0 %3634, %v3454
        %v3636 = vpop.permute.xlu0 %3635
        %v3639 = vunpack.c.l.s4 839922192
        %v3640 = vunpack.c.0.s8 %v3639
        %v3641 = vlaneseq
        %v3642 = vshrl.u32 %v3641, 7
        %v3643 = vsub.s32 %v3640, %v3642
        %v3644 = vrot.slane %v3636, %v3643
        %3646 = vset.pattern.permute.xlu0 0
        %3647 = vperm.xlu0 %3646, %v3455
        %v3648 = vpop.permute.xlu0 %3647
        %v3651 = vunpack.c.l.s4 839922192
        %v3652 = vunpack.c.0.s8 %v3651
        %v3653 = vlaneseq
        %v3654 = vshrl.u32 %v3653, 7
        %v3655 = vsub.s32 %v3652, %v3654
        %v3656 = vrot.slane %v3648, %v3655
        %3658 = vset.pattern.permute.xlu0 0
        %3659 = vperm.xlu0 %3658, %v3456
        %v3660 = vpop.permute.xlu0 %3659
        %v3663 = vunpack.c.l.s4 839922192
        %v3664 = vunpack.c.0.s8 %v3663
        %v3665 = vlaneseq
        %v3666 = vshrl.u32 %v3665, 7
        %v3667 = vsub.s32 %v3664, %v3666
        %v3668 = vrot.slane %v3660, %v3667
        %3670 = vset.pattern.permute.xlu0 0
        %3671 = vperm.xlu0 %3670, %v3457
        %v3672 = vpop.permute.xlu0 %3671
        %v3675 = vunpack.c.l.s4 839922192
        %v3676 = vunpack.c.0.s8 %v3675
        %v3677 = vlaneseq
        %v3678 = vshrl.u32 %v3677, 7
        %v3679 = vsub.s32 %v3676, %v3678
        %v3680 = vrot.slane %v3672, %v3679
        %3682 = vset.pattern.permute.xlu0 0
        %3683 = vperm.xlu0 %3682, %v3458
        %v3684 = vpop.permute.xlu0 %3683
        %v3687 = vunpack.c.l.s4 839922192
        %v3688 = vunpack.c.0.s8 %v3687
        %v3689 = vlaneseq
        %v3690 = vshrl.u32 %v3689, 7
        %v3691 = vsub.s32 %v3688, %v3690
        %v3692 = vrot.slane %v3684, %v3691
        %3694 = vset.pattern.permute.xlu0 0
        %3695 = vperm.xlu0 %3694, %v3459
        %v3696 = vpop.permute.xlu0 %3695
        %v3699 = vunpack.c.l.s4 839922192
        %v3700 = vunpack.c.0.s8 %v3699
        %v3701 = vlaneseq
        %v3702 = vshrl.u32 %v3701, 7
        %v3703 = vsub.s32 %v3700, %v3702
        %v3704 = vrot.slane %v3696, %v3703
        %3706 = vset.pattern.permute.xlu0 0
        %3707 = vperm.xlu0 %3706, %v3460
        %v3708 = vpop.permute.xlu0 %3707
        %v3711 = vunpack.c.l.s4 839922192
        %v3712 = vunpack.c.0.s8 %v3711
        %v3713 = vlaneseq
        %v3714 = vshrl.u32 %v3713, 7
        %v3715 = vsub.s32 %v3712, %v3714
        %v3716 = vrot.slane %v3708, %v3715
        %3718 = vset.pattern.permute.xlu0 0
        %3719 = vperm.xlu0 %3718, %v3461
        %v3720 = vpop.permute.xlu0 %3719
        %v3723 = vunpack.c.l.s4 839922192
        %v3724 = vunpack.c.0.s8 %v3723
        %v3725 = vlaneseq
        %v3726 = vshrl.u32 %v3725, 7
        %v3727 = vsub.s32 %v3724, %v3726
        %v3728 = vrot.slane %v3720, %v3727
        %3730 = vset.pattern.permute.xlu0 0
        %3731 = vperm.xlu0 %3730, %v3462
        %v3732 = vpop.permute.xlu0 %3731
        %v3735 = vunpack.c.l.s4 839922192
        %v3736 = vunpack.c.0.s8 %v3735
        %v3737 = vlaneseq
        %v3738 = vshrl.u32 %v3737, 7
        %v3739 = vsub.s32 %v3736, %v3738
        %v3740 = vrot.slane %v3732, %v3739
        %3742 = vset.pattern.permute.xlu0 0
        %3743 = vperm.xlu0 %3742, %v3463
        %v3744 = vpop.permute.xlu0 %3743
        %v3747 = vunpack.c.l.s4 839922192
        %v3748 = vunpack.c.0.s8 %v3747
        %v3749 = vlaneseq
        %v3750 = vshrl.u32 %v3749, 7
        %v3751 = vsub.s32 %v3748, %v3750
        %v3752 = vrot.slane %v3744, %v3751
        %3754 = vset.pattern.permute.xlu0 0
        %3755 = vperm.xlu0 %3754, %v3464
        %v3756 = vpop.permute.xlu0 %3755
        %v3759 = vunpack.c.l.s4 839922192
        %v3760 = vunpack.c.0.s8 %v3759
        %v3761 = vlaneseq
        %v3762 = vshrl.u32 %v3761, 7
        %v3763 = vsub.s32 %v3760, %v3762
        %v3764 = vrot.slane %v3756, %v3763
        %v3789 = vunpack.c.l.b16 %v3488
        %v3790 = vunpack.c.l.b16 %v3500
        %v3791 = vunpack.c.l.b16 %v3512
        %v3792 = vunpack.c.l.b16 %v3524
        %v3793 = vunpack.c.l.b16 %v3536
        %v3794 = vunpack.c.l.b16 %v3548
        %v3795 = vunpack.c.l.b16 %v3560
        %v3796 = vunpack.c.l.b16 %v3572
        %v3797 = vunpack.c.l.b16 %v3584
        %v3798 = vunpack.c.l.b16 %v3596
        %v3799 = vunpack.c.l.b16 %v3608
        %v3800 = vunpack.c.l.b16 %v3620
        %v3801 = vunpack.c.l.b16 %v3632
        %v3802 = vunpack.c.l.b16 %v3644
        %v3803 = vunpack.c.l.b16 %v3656
        %v3804 = vunpack.c.l.b16 %v3668
        %v3805 = vunpack.c.l.b16 %v3680
        %v3806 = vunpack.c.l.b16 %v3692
        %v3807 = vunpack.c.l.b16 %v3704
        %v3808 = vunpack.c.l.b16 %v3716
        %v3809 = vunpack.c.l.b16 %v3728
        %v3810 = vunpack.c.l.b16 %v3740
        %v3811 = vunpack.c.l.b16 %v3752
        %v3812 = vunpack.c.l.b16 %v3764
        %v3813 = vpack.c.b16 %v3790, %v3789
        %v3814 = vpack.c.b16 %v3792, %v3791
        %v3815 = vpack.c.b16 %v3794, %v3793
        %v3816 = vpack.c.b16 %v3796, %v3795
        %v3817 = vpack.c.b16 %v3798, %v3797
        %v3818 = vpack.c.b16 %v3800, %v3799
        %v3819 = vpack.c.b16 %v3802, %v3801
        %v3820 = vpack.c.b16 %v3804, %v3803
        %v3821 = vpack.c.b16 %v3806, %v3805
        %v3822 = vpack.c.b16 %v3808, %v3807
        %v3823 = vpack.c.b16 %v3810, %v3809
        %v3824 = vpack.c.b16 %v3812, %v3811
        %v3837 = vmul.bf16 %v3465, %v3813
        %v3838 = vmul.bf16 %v3466, %v3814
        %v3839 = vmul.bf16 %v3467, %v3815
        %v3840 = vmul.bf16 %v3468, %v3816
        %v3841 = vmul.bf16 %v3469, %v3817
        %v3842 = vmul.bf16 %v3470, %v3818
        %v3843 = vmul.bf16 %v3471, %v3819
        %v3844 = vmul.bf16 %v3472, %v3820
        %v3845 = vmul.bf16 %v3473, %v3821
        %v3846 = vmul.bf16 %v3474, %v3822
        %v3847 = vmul.bf16 %v3475, %v3823
        %v3848 = vmul.bf16 %v3476, %v3824
        %s3849 = sadd.s32 %s367, 32
        %v3862 = vunpack.c.l.b16 %v3837
        %v3863 = vunpack.c.h.b16 %v3837
        %v3864 = vunpack.c.l.b16 %v3838
        %v3865 = vunpack.c.h.b16 %v3838
        %v3866 = vunpack.c.l.b16 %v3839
        %v3867 = vunpack.c.h.b16 %v3839
        %v3868 = vunpack.c.l.b16 %v3840
        %v3869 = vunpack.c.h.b16 %v3840
        %v3870 = vunpack.c.l.b16 %v3841
        %v3871 = vunpack.c.h.b16 %v3841
        %v3872 = vunpack.c.l.b16 %v3842
        %v3873 = vunpack.c.h.b16 %v3842
        %v3874 = vunpack.c.l.b16 %v3843
        %v3875 = vunpack.c.h.b16 %v3843
        %v3876 = vunpack.c.l.b16 %v3844
        %v3877 = vunpack.c.h.b16 %v3844
        %v3878 = vunpack.c.l.b16 %v3845
        %v3879 = vunpack.c.h.b16 %v3845
        %v3880 = vunpack.c.l.b16 %v3846
        %v3881 = vunpack.c.h.b16 %v3846
        %v3882 = vunpack.c.l.b16 %v3847
        %v3883 = vunpack.c.h.b16 %v3847
        %v3884 = vunpack.c.l.b16 %v3848
        %v3885 = vunpack.c.h.b16 %v3848
        %v3886 = vpack.c.b16 %v3862, %v3862
        %v3887 = vpack.c.b16 %v3863, %v3863
        %v3888 = vpack.c.b16 %v3864, %v3864
        %v3889 = vpack.c.b16 %v3865, %v3865
        %v3890 = vpack.c.b16 %v3866, %v3866
        %v3891 = vpack.c.b16 %v3867, %v3867
        %v3892 = vpack.c.b16 %v3868, %v3868
        %v3893 = vpack.c.b16 %v3869, %v3869
        %v3894 = vpack.c.b16 %v3870, %v3870
        %v3895 = vpack.c.b16 %v3871, %v3871
        %v3896 = vpack.c.b16 %v3872, %v3872
        %v3897 = vpack.c.b16 %v3873, %v3873
        %v3898 = vpack.c.b16 %v3874, %v3874
        %v3899 = vpack.c.b16 %v3875, %v3875
        %v3900 = vpack.c.b16 %v3876, %v3876
        %v3901 = vpack.c.b16 %v3877, %v3877
        %v3902 = vpack.c.b16 %v3878, %v3878
        %v3903 = vpack.c.b16 %v3879, %v3879
        %v3904 = vpack.c.b16 %v3880, %v3880
        %v3905 = vpack.c.b16 %v3881, %v3881
        %v3906 = vpack.c.b16 %v3882, %v3882
        %v3907 = vpack.c.b16 %v3883, %v3883
        %v3908 = vpack.c.b16 %v3884, %v3884
        %v3909 = vpack.c.b16 %v3885, %v3885
        %s3934 = sshra.s32 %s3849, 3
        %s3935 = sand.u32 %s3849, 7
        %s3936 = smul.addr %s3934, 4
        %s3937 = scalar_lea.vmem [#allocation3], %s3936
        %3938 = vst [vmem:[%s3937] sm:$0xf] %v3886
        %3939 = vst [vmem:[%s3937 + $0x4] sm:$0xf] %v3887
        %3940 = vst [vmem:[%s3937 + $0x8] sm:$0xf] %v3888
        %3941 = vst [vmem:[%s3937 + $0xc] sm:$0xf] %v3889
        %3942 = vst [vmem:[%s3937 + $0x10] sm:$0xf] %v3890
        %3943 = vst [vmem:[%s3937 + $0x14] sm:$0xf] %v3891
        %3944 = vst [vmem:[%s3937 + $0x18] sm:$0xf] %v3892
        %3945 = vst [vmem:[%s3937 + $0x1c] sm:$0xf] %v3893
        %3946 = vst [vmem:[%s3937 + $0x20] sm:$0xf] %v3894
        %3947 = vst [vmem:[%s3937 + $0x24] sm:$0xf] %v3895
        %3948 = vst [vmem:[%s3937 + $0x28] sm:$0xf] %v3896
        %3949 = vst [vmem:[%s3937 + $0x2c] sm:$0xf] %v3897
        %3950 = vst [vmem:[%s3937 + $0x30] sm:$0xf] %v3898
        %3951 = vst [vmem:[%s3937 + $0x34] sm:$0xf] %v3899
        %3952 = vst [vmem:[%s3937 + $0x38] sm:$0xf] %v3900
        %3953 = vst [vmem:[%s3937 + $0x3c] sm:$0xf] %v3901
        %3954 = vst [vmem:[%s3937 + $0x40] sm:$0xf] %v3902
        %3955 = vst [vmem:[%s3937 + $0x44] sm:$0xf] %v3903
        %3956 = vst [vmem:[%s3937 + $0x48] sm:$0xf] %v3904
        %3957 = vst [vmem:[%s3937 + $0x4c] sm:$0xf] %v3905
        %3958 = vst [vmem:[%s3937 + $0x50] sm:$0xf] %v3906
        %3959 = vst [vmem:[%s3937 + $0x54] sm:$0xf] %v3907
        %3960 = vst [vmem:[%s3937 + $0x58] sm:$0xf] %v3908
        %3961 = vst [vmem:[%s3937 + $0x5c] sm:$0xf] %v3909
      $region64: #{mask_branch_forward.1} parent=51 // loop_footer
        %s366 = sadd.s32 1, %s362
      $region65: #{mask_branch_forward.1} parent=51 // loop_footer_branch
        %361 = sbr.rel target = $region61
      $region66: #{mask_branch_forward.1} parent=51 // loop_exit
        _
      %v3962 = vld [vmem:[%s5] sm:$0x1]
      %v3964 = vlaneseq
      %v3965 = vshrl.u32 %v3964, 7
      %v3966 = vsub.s32 0, %v3965
      %v3967 = vrot.slane %v3962, %v3966
      %v3969 = vld [vmem:[%s6] sm:$0xf]
      %v3970 = vld [vmem:[%s6 + $0x4] sm:$0xf]
      %v3971 = vld [vmem:[%s6 + $0x8] sm:$0xf]
      %v3972 = vld [vmem:[%s6 + $0xc] sm:$0xf]
      %v3973 = vld [vmem:[%s6 + $0x10] sm:$0xf]
      %v3974 = vld [vmem:[%s6 + $0x14] sm:$0xf]
      %v3975 = vld [vmem:[%s6 + $0x18] sm:$0xf]
      %v3976 = vld [vmem:[%s6 + $0x1c] sm:$0xf]
      %v3977 = vld [vmem:[%s6 + $0x20] sm:$0xf]
      %v3978 = vld [vmem:[%s6 + $0x24] sm:$0xf]
      %v3979 = vld [vmem:[%s6 + $0x28] sm:$0xf]
      %v3980 = vld [vmem:[%s6 + $0x2c] sm:$0xf]
      %v3981 = vld [vmem:[%s6 + $0x30] sm:$0xf]
      %v3982 = vld [vmem:[%s6 + $0x34] sm:$0xf]
      %v3983 = vld [vmem:[%s6 + $0x38] sm:$0xf]
      %v3984 = vld [vmem:[%s6 + $0x3c] sm:$0xf]
      %v3985 = vld [vmem:[%s7] sm:$0x1]
      loop: start=0, step=1, limit=2
      $region67: #{mask_branch_forward.1} parent=51 // loop_pre_header
        _
      $region68: #{mask_branch_forward.1} parent=51 // loop_header
        %s3987 = sphi 0, %s3991
        %p3988 = scmp.ge.s32.totalorder %s3987, 2
      $region69: #{mask_branch_forward.1} parent=51 // loop_header_branch
        %3990 = sbr.rel (%p3988) target = $region73
      $region70: #{mask_branch_forward.1} parent=51 // loop_body
        %s3992 = smul.u32 %s3987, 192
        %s3993 = sshra.s32 %s3992, 3
        %s3994 = sand.u32 %s3992, 7
        %s3995 = smul.addr %s3993, 4
        %s3996 = scalar_lea.vmem [#allocation3], %s3995
        %v3997 = vld [vmem:[%s3996] sm:$0xf]
        %v3998 = vld [vmem:[%s3996 + $0x4] sm:$0xf]
        %v3999 = vld [vmem:[%s3996 + $0x8] sm:$0xf]
        %v4000 = vld [vmem:[%s3996 + $0xc] sm:$0xf]
        %v4001 = vld [vmem:[%s3996 + $0x10] sm:$0xf]
        %v4002 = vld [vmem:[%s3996 + $0x14] sm:$0xf]
        %v4003 = vld [vmem:[%s3996 + $0x18] sm:$0xf]
        %v4004 = vld [vmem:[%s3996 + $0x1c] sm:$0xf]
        %v4005 = vld [vmem:[%s3996 + $0x20] sm:$0xf]
        %v4006 = vld [vmem:[%s3996 + $0x24] sm:$0xf]
        %v4007 = vld [vmem:[%s3996 + $0x28] sm:$0xf]
        %v4008 = vld [vmem:[%s3996 + $0x2c] sm:$0xf]
        %v4009 = vld [vmem:[%s3996 + $0x30] sm:$0xf]
        %v4010 = vld [vmem:[%s3996 + $0x34] sm:$0xf]
        %v4011 = vld [vmem:[%s3996 + $0x38] sm:$0xf]
        %v4012 = vld [vmem:[%s3996 + $0x3c] sm:$0xf]
        %v4013 = vld [vmem:[%s3996 + $0x40] sm:$0xf]
        %v4014 = vld [vmem:[%s3996 + $0x44] sm:$0xf]
        %v4015 = vld [vmem:[%s3996 + $0x48] sm:$0xf]
        %v4016 = vld [vmem:[%s3996 + $0x4c] sm:$0xf]
        %v4017 = vld [vmem:[%s3996 + $0x50] sm:$0xf]
        %v4018 = vld [vmem:[%s3996 + $0x54] sm:$0xf]
        %v4019 = vld [vmem:[%s3996 + $0x58] sm:$0xf]
        %v4020 = vld [vmem:[%s3996 + $0x5c] sm:$0xf]
        %v4021 = vld [vmem:[%s3996 + $0x60] sm:$0xf]
        %v4022 = vld [vmem:[%s3996 + $0x64] sm:$0xf]
        %v4023 = vld [vmem:[%s4] sm:$0xf]
        %v4024 = vld [vmem:[%s4 + $0x4] sm:$0xf]
        %v4025 = vld [vmem:[%s4 + $0x8] sm:$0xf]
        %v4026 = vld [vmem:[%s4 + $0xc] sm:$0xf]
        %v4027 = vld [vmem:[%s4 + $0x10] sm:$0xf]
        %v4028 = vld [vmem:[%s4 + $0x14] sm:$0xf]
        %v4029 = vld [vmem:[%s4 + $0x18] sm:$0xf]
        %v4030 = vld [vmem:[%s4 + $0x1c] sm:$0xf]
        %v4031 = vld [vmem:[%s4 + $0x20] sm:$0xf]
        %v4032 = vld [vmem:[%s4 + $0x24] sm:$0xf]
        %v4033 = vld [vmem:[%s4 + $0x28] sm:$0xf]
        %v4034 = vld [vmem:[%s4 + $0x2c] sm:$0xf]
        %v4035 = vld [vmem:[%s4 + $0x30] sm:$0xf]
        %v4036 = vld [vmem:[%s4 + $0x34] sm:$0xf]
        %v4037 = vld [vmem:[%s4 + $0x38] sm:$0xf]
        %v4038 = vld [vmem:[%s4 + $0x3c] sm:$0xf]
        %v4064 = vunpack.c.l.b16 %v3997
        %v4065 = vunpack.c.l.b16 %v3998
        %v4066 = vunpack.c.l.b16 %v3999
        %v4067 = vunpack.c.l.b16 %v4000
        %v4068 = vunpack.c.l.b16 %v4001
        %v4069 = vunpack.c.l.b16 %v4002
        %v4070 = vunpack.c.l.b16 %v4003
        %v4071 = vunpack.c.l.b16 %v4004
        %v4072 = vunpack.c.l.b16 %v4005
        %v4073 = vunpack.c.l.b16 %v4006
        %v4074 = vunpack.c.l.b16 %v4007
        %v4075 = vunpack.c.l.b16 %v4008
        %v4076 = vunpack.c.l.b16 %v4009
        %v4077 = vunpack.c.l.b16 %v4010
        %v4078 = vunpack.c.l.b16 %v4011
        %v4079 = vunpack.c.l.b16 %v4012
        %v4080 = vunpack.c.l.b16 %v4013
        %v4081 = vunpack.c.l.b16 %v4014
        %v4082 = vunpack.c.l.b16 %v4015
        %v4083 = vunpack.c.l.b16 %v4016
        %v4084 = vunpack.c.l.b16 %v4017
        %v4085 = vunpack.c.l.b16 %v4018
        %v4086 = vunpack.c.l.b16 %v4019
        %v4087 = vunpack.c.l.b16 %v4020
        %v4088 = vunpack.c.l.b16 %v4021
        %v4089 = vpack.c.b16 %v4065, %v4064
        %v4090 = vpack.c.b16 %v4067, %v4066
        %v4091 = vpack.c.b16 %v4069, %v4068
        %v4092 = vpack.c.b16 %v4071, %v4070
        %v4093 = vpack.c.b16 %v4073, %v4072
        %v4094 = vpack.c.b16 %v4075, %v4074
        %v4095 = vpack.c.b16 %v4077, %v4076
        %v4096 = vpack.c.b16 %v4079, %v4078
        %v4097 = vpack.c.b16 %v4081, %v4080
        %v4098 = vpack.c.b16 %v4083, %v4082
        %v4099 = vpack.c.b16 %v4085, %v4084
        %v4100 = vpack.c.b16 %v4087, %v4086
        %v4101 = vpack.c.b16 %v4088, %v4088
        %vm4102 = vsmask.f32 4352
        %v4104 = vshrl.u32 %v4089, 16
        %v4106 = vrot.slane %v4104, 3
        %v4107 = vshll.u32 %v4089, 16
        %v4109 = vrot.slane %v4107, 4
        %v4110 = vor.u32 %v4106, %v4109
        %v4112 = vshrl.u32 %v4090, 16
        %v4114 = vrot.slane %v4112, 3
        %v4115 = vshll.u32 %v4090, 16
        %v4117 = vrot.slane %v4115, 4
        %v4118 = vor.u32 %v4114, %v4117
        %v4119 = vsel %vm4102, %v4110, %v4118
        %v4121 = vshrl.u32 %v4091, 16
        %v4123 = vrot.slane %v4121, 3
        %v4124 = vshll.u32 %v4091, 16
        %v4126 = vrot.slane %v4124, 4
        %v4127 = vor.u32 %v4123, %v4126
        %v4128 = vsel %vm4102, %v4118, %v4127
        %v4130 = vshrl.u32 %v4092, 16
        %v4132 = vrot.slane %v4130, 3
        %v4133 = vshll.u32 %v4092, 16
        %v4135 = vrot.slane %v4133, 4
        %v4136 = vor.u32 %v4132, %v4135
        %v4137 = vsel %vm4102, %v4127, %v4136
        %v4139 = vshrl.u32 %v4093, 16
        %v4141 = vrot.slane %v4139, 3
        %v4142 = vshll.u32 %v4093, 16
        %v4144 = vrot.slane %v4142, 4
        %v4145 = vor.u32 %v4141, %v4144
        %v4146 = vsel %vm4102, %v4136, %v4145
        %v4148 = vshrl.u32 %v4094, 16
        %v4150 = vrot.slane %v4148, 3
        %v4151 = vshll.u32 %v4094, 16
        %v4153 = vrot.slane %v4151, 4
        %v4154 = vor.u32 %v4150, %v4153
        %v4155 = vsel %vm4102, %v4145, %v4154
        %v4157 = vshrl.u32 %v4095, 16
        %v4159 = vrot.slane %v4157, 3
        %v4160 = vshll.u32 %v4095, 16
        %v4162 = vrot.slane %v4160, 4
        %v4163 = vor.u32 %v4159, %v4162
        %v4164 = vsel %vm4102, %v4154, %v4163
        %v4166 = vshrl.u32 %v4096, 16
        %v4168 = vrot.slane %v4166, 3
        %v4169 = vshll.u32 %v4096, 16
        %v4171 = vrot.slane %v4169, 4
        %v4172 = vor.u32 %v4168, %v4171
        %v4173 = vsel %vm4102, %v4163, %v4172
        %v4175 = vshrl.u32 %v4097, 16
        %v4177 = vrot.slane %v4175, 3
        %v4178 = vshll.u32 %v4097, 16
        %v4180 = vrot.slane %v4178, 4
        %v4181 = vor.u32 %v4177, %v4180
        %v4182 = vsel %vm4102, %v4172, %v4181
        %v4184 = vshrl.u32 %v4098, 16
        %v4186 = vrot.slane %v4184, 3
        %v4187 = vshll.u32 %v4098, 16
        %v4189 = vrot.slane %v4187, 4
        %v4190 = vor.u32 %v4186, %v4189
        %v4191 = vsel %vm4102, %v4181, %v4190
        %v4193 = vshrl.u32 %v4099, 16
        %v4195 = vrot.slane %v4193, 3
        %v4196 = vshll.u32 %v4099, 16
        %v4198 = vrot.slane %v4196, 4
        %v4199 = vor.u32 %v4195, %v4198
        %v4200 = vsel %vm4102, %v4190, %v4199
        %v4202 = vshrl.u32 %v4100, 16
        %v4204 = vrot.slane %v4202, 3
        %v4205 = vshll.u32 %v4100, 16
        %v4207 = vrot.slane %v4205, 4
        %v4208 = vor.u32 %v4204, %v4207
        %v4209 = vsel %vm4102, %v4199, %v4208
        %v4211 = vshrl.u32 %v4101, 16
        %v4213 = vrot.slane %v4211, 3
        %v4214 = vshll.u32 %v4101, 16
        %v4216 = vrot.slane %v4214, 4
        %v4217 = vor.u32 %v4213, %v4216
        %v4218 = vsel %vm4102, %v4208, %v4217
        %v4247 = vunpack.c.l.b16 %v4023
        %v4248 = vunpack.c.l.b16 %v4024
        %v4249 = vunpack.c.l.b16 %v4025
        %v4250 = vunpack.c.l.b16 %v4026
        %v4251 = vunpack.c.l.b16 %v4027
        %v4252 = vunpack.c.l.b16 %v4028
        %v4253 = vunpack.c.l.b16 %v4029
        %v4254 = vunpack.c.l.b16 %v4030
        %v4255 = vunpack.c.l.b16 %v4031
        %v4256 = vunpack.c.l.b16 %v4032
        %v4257 = vunpack.c.l.b16 %v4033
        %v4258 = vunpack.c.l.b16 %v4034
        %v4259 = vunpack.c.l.b16 %v4035
        %v4260 = vunpack.c.l.b16 %v4036
        %v4261 = vunpack.c.l.b16 %v4037
        %v4262 = vunpack.c.l.b16 %v4038
        %v4263 = vpack.c.b16 %v4248, %v4247
        %v4264 = vpack.c.b16 %v4250, %v4249
        %v4265 = vpack.c.b16 %v4252, %v4251
        %v4266 = vpack.c.b16 %v4254, %v4253
        %v4267 = vpack.c.b16 %v4256, %v4255
        %v4268 = vpack.c.b16 %v4258, %v4257
        %v4269 = vpack.c.b16 %v4260, %v4259
        %v4270 = vpack.c.b16 %v4262, %v4261
        %4279 = vmatprep.subr.bf16.mxu0 0
        %4280 = vmatpush1.bf16.msra.mxu0 %v4270
        %4281 = vmatprep.subr.bf16.mxu0 0
        %4282 = vmatpush1.bf16.msra.mxu0 %v4269
        %4283 = vmatprep.subr.bf16.mxu0 0
        %4284 = vmatpush1.bf16.msra.mxu0 %v4268
        %4285 = vmatprep.subr.bf16.mxu0 0
        %4286 = vmatpush1.bf16.msra.mxu0 %v4267
        %4287 = vmatprep.subr.bf16.mxu0 0
        %4288 = vmatpush1.bf16.msra.mxu0 %v4266
        %4289 = vmatprep.subr.bf16.mxu0 0
        %4290 = vmatpush1.bf16.msra.mxu0 %v4265
        %4291 = vmatprep.subr.bf16.mxu0 0
        %4292 = vmatpush1.bf16.msra.mxu0 %v4264
        %4293 = vmatprep.subr.bf16.mxu0 0
        %4294 = vmatpush1.bf16.msra.mxu0 %v4263
        %4295 = vmatprep.subr.bf16.mxu0 0
        %4296 = vmatpush2.bf16.msra.mxu0 0
        %4297 = vmatprep.subr.bf16.mxu0 0
        %4298 = vmatpush2.bf16.msra.mxu0 0
        %4299 = vmatprep.subr.bf16.mxu0 0
        %4300 = vmatpush2.bf16.msra.mxu0 0
        %4301 = vmatprep.subr.bf16.mxu0 0
        %4302 = vmatpush2.bf16.msra.mxu0 0
        %4303 = vmatprep.subr.bf16.mxu0 0
        %4304 = vmatpush2.bf16.msra.mxu0 0
        %4305 = vmatprep.subr.bf16.mxu0 0
        %4306 = vmatpush2.bf16.msra.mxu0 0
        %4307 = vmatprep.subr.bf16.mxu0 0
        %4308 = vmatpush2.bf16.msra.mxu0 0
        %4309 = vmatprep.subr.bf16.mxu0 0
        %4310 = vmatpush2.bf16.msra.mxu0 0
        %4311 = vmatprep.mubr.bf16.mxu0 0
        %4312 = vmatmul.mubr.bf16.gmra.mxu0 %v4119
        %v4313 = vpop.f32.mrf.mxu0
        %v4314 = vadd.f32 0.0, %v4313
        %v4315 = vpop.f32.mrf.mxu0
        %v4316 = vpop.f32.mrf.mxu0
        %v4317 = vadd.f32 0.0, %v4316
        %v4318 = vpop.f32.mrf.mxu0
        %4319 = vmatprep.mubr.bf16.mxu0 0
        %4320 = vmatmul.mubr.bf16.gmra.mxu0 %v4128
        %v4321 = vpop.f32.mrf.mxu0
        %v4322 = vadd.f32 0.0, %v4321
        %v4323 = vpop.f32.mrf.mxu0
        %v4324 = vpop.f32.mrf.mxu0
        %v4325 = vadd.f32 0.0, %v4324
        %v4326 = vpop.f32.mrf.mxu0
        %4327 = vmatprep.mubr.bf16.mxu0 0
        %4328 = vmatmul.mubr.bf16.gmra.mxu0 %v4137
        %v4329 = vpop.f32.mrf.mxu0
        %v4330 = vadd.f32 0.0, %v4329
        %v4331 = vpop.f32.mrf.mxu0
        %v4332 = vpop.f32.mrf.mxu0
        %v4333 = vadd.f32 0.0, %v4332
        %v4334 = vpop.f32.mrf.mxu0
        %4335 = vmatprep.mubr.bf16.mxu0 0
        %4336 = vmatmul.mubr.bf16.gmra.mxu0 %v4146
        %v4337 = vpop.f32.mrf.mxu0
        %v4338 = vadd.f32 0.0, %v4337
        %v4339 = vpop.f32.mrf.mxu0
        %v4340 = vpop.f32.mrf.mxu0
        %v4341 = vadd.f32 0.0, %v4340
        %v4342 = vpop.f32.mrf.mxu0
        %4343 = vmatprep.mubr.bf16.mxu0 0
        %4344 = vmatmul.mubr.bf16.gmra.mxu0 %v4155
        %v4345 = vpop.f32.mrf.mxu0
        %v4346 = vadd.f32 0.0, %v4345
        %v4347 = vpop.f32.mrf.mxu0
        %v4348 = vpop.f32.mrf.mxu0
        %v4349 = vadd.f32 0.0, %v4348
        %v4350 = vpop.f32.mrf.mxu0
        %4351 = vmatprep.mubr.bf16.mxu0 0
        %4352 = vmatmul.mubr.bf16.gmra.mxu0 %v4164
        %v4353 = vpop.f32.mrf.mxu0
        %v4354 = vadd.f32 0.0, %v4353
        %v4355 = vpop.f32.mrf.mxu0
        %v4356 = vpop.f32.mrf.mxu0
        %v4357 = vadd.f32 0.0, %v4356
        %v4358 = vpop.f32.mrf.mxu0
        %4359 = vmatprep.mubr.bf16.mxu0 0
        %4360 = vmatmul.mubr.bf16.gmra.mxu0 %v4173
        %v4361 = vpop.f32.mrf.mxu0
        %v4362 = vadd.f32 0.0, %v4361
        %v4363 = vpop.f32.mrf.mxu0
        %v4364 = vpop.f32.mrf.mxu0
        %v4365 = vadd.f32 0.0, %v4364
        %v4366 = vpop.f32.mrf.mxu0
        %4367 = vmatprep.mubr.bf16.mxu0 0
        %4368 = vmatmul.mubr.bf16.gmra.mxu0 %v4182
        %v4369 = vpop.f32.mrf.mxu0
        %v4370 = vadd.f32 0.0, %v4369
        %v4371 = vpop.f32.mrf.mxu0
        %v4372 = vpop.f32.mrf.mxu0
        %v4373 = vadd.f32 0.0, %v4372
        %v4374 = vpop.f32.mrf.mxu0
        %4375 = vmatprep.mubr.bf16.mxu0 0
        %4376 = vmatmul.mubr.bf16.gmra.mxu0 %v4191
        %v4377 = vpop.f32.mrf.mxu0
        %v4378 = vadd.f32 0.0, %v4377
        %v4379 = vpop.f32.mrf.mxu0
        %v4380 = vpop.f32.mrf.mxu0
        %v4381 = vadd.f32 0.0, %v4380
        %v4382 = vpop.f32.mrf.mxu0
        %4383 = vmatprep.mubr.bf16.mxu0 0
        %4384 = vmatmul.mubr.bf16.gmra.mxu0 %v4200
        %v4385 = vpop.f32.mrf.mxu0
        %v4386 = vadd.f32 0.0, %v4385
        %v4387 = vpop.f32.mrf.mxu0
        %v4388 = vpop.f32.mrf.mxu0
        %v4389 = vadd.f32 0.0, %v4388
        %v4390 = vpop.f32.mrf.mxu0
        %4391 = vmatprep.mubr.bf16.mxu0 0
        %4392 = vmatmul.mubr.bf16.gmra.mxu0 %v4209
        %v4393 = vpop.f32.mrf.mxu0
        %v4394 = vadd.f32 0.0, %v4393
        %v4395 = vpop.f32.mrf.mxu0
        %v4396 = vpop.f32.mrf.mxu0
        %v4397 = vadd.f32 0.0, %v4396
        %v4398 = vpop.f32.mrf.mxu0
        %4399 = vmatprep.mubr.bf16.mxu0 0
        %4400 = vmatmul.mubr.bf16.gmra.mxu0 %v4218
        %v4401 = vpop.f32.mrf.mxu0
        %v4402 = vadd.f32 0.0, %v4401
        %v4403 = vpop.f32.mrf.mxu0
        %v4404 = vpop.f32.mrf.mxu0
        %v4405 = vadd.f32 0.0, %v4404
        %v4406 = vpop.f32.mrf.mxu0
        %4407 = vdwg.mxu0
        %v4408 = vadd.f32 %v3967, %v4314
        %v4409 = vadd.f32 %v3967, %v4317
        %v4410 = vadd.f32 %v3967, %v4322
        %v4411 = vadd.f32 %v3967, %v4325
        %v4412 = vadd.f32 %v3967, %v4330
        %v4413 = vadd.f32 %v3967, %v4333
        %v4414 = vadd.f32 %v3967, %v4338
        %v4415 = vadd.f32 %v3967, %v4341
        %v4416 = vadd.f32 %v3967, %v4346
        %v4417 = vadd.f32 %v3967, %v4349
        %v4418 = vadd.f32 %v3967, %v4354
        %v4419 = vadd.f32 %v3967, %v4357
        %v4420 = vadd.f32 %v3967, %v4362
        %v4421 = vadd.f32 %v3967, %v4365
        %v4422 = vadd.f32 %v3967, %v4370
        %v4423 = vadd.f32 %v3967, %v4373
        %v4424 = vadd.f32 %v3967, %v4378
        %v4425 = vadd.f32 %v3967, %v4381
        %v4426 = vadd.f32 %v3967, %v4386
        %v4427 = vadd.f32 %v3967, %v4389
        %v4428 = vadd.f32 %v3967, %v4394
        %v4429 = vadd.f32 %v3967, %v4397
        %v4430 = vadd.f32 %v3967, %v4402
        %v4431 = vadd.f32 %v3967, %v4405
        %s4432 = scalar_lea.vmem %s4, 64
        %v4433 = vld [vmem:[%s4432] sm:$0xf]
        %v4434 = vld [vmem:[%s4432 + $0x4] sm:$0xf]
        %v4435 = vld [vmem:[%s4432 + $0x8] sm:$0xf]
        %v4436 = vld [vmem:[%s4432 + $0xc] sm:$0xf]
        %v4437 = vld [vmem:[%s4432 + $0x10] sm:$0xf]
        %v4438 = vld [vmem:[%s4432 + $0x14] sm:$0xf]
        %v4439 = vld [vmem:[%s4432 + $0x18] sm:$0xf]
        %v4440 = vld [vmem:[%s4432 + $0x1c] sm:$0xf]
        %v4441 = vld [vmem:[%s4432 + $0x20] sm:$0xf]
        %v4442 = vld [vmem:[%s4432 + $0x24] sm:$0xf]
        %v4443 = vld [vmem:[%s4432 + $0x28] sm:$0xf]
        %v4444 = vld [vmem:[%s4432 + $0x2c] sm:$0xf]
        %v4445 = vld [vmem:[%s4432 + $0x30] sm:$0xf]
        %v4446 = vld [vmem:[%s4432 + $0x34] sm:$0xf]
        %v4447 = vld [vmem:[%s4432 + $0x38] sm:$0xf]
        %v4448 = vld [vmem:[%s4432 + $0x3c] sm:$0xf]
        %v4449 = vpack.c.b16 %v4066, %v4065
        %v4450 = vpack.c.b16 %v4068, %v4067
        %v4451 = vpack.c.b16 %v4070, %v4069
        %v4452 = vpack.c.b16 %v4072, %v4071
        %v4453 = vpack.c.b16 %v4074, %v4073
        %v4454 = vpack.c.b16 %v4076, %v4075
        %v4455 = vpack.c.b16 %v4078, %v4077
        %v4456 = vpack.c.b16 %v4080, %v4079
        %v4457 = vpack.c.b16 %v4082, %v4081
        %v4458 = vpack.c.b16 %v4084, %v4083
        %v4459 = vpack.c.b16 %v4086, %v4085
        %v4460 = vpack.c.b16 %v4088, %v4087
        %v4489 = vunpack.c.l.b16 %v4433
        %v4490 = vunpack.c.l.b16 %v4434
        %v4491 = vunpack.c.l.b16 %v4435
        %v4492 = vunpack.c.l.b16 %v4436
        %v4493 = vunpack.c.l.b16 %v4437
        %v4494 = vunpack.c.l.b16 %v4438
        %v4495 = vunpack.c.l.b16 %v4439
        %v4496 = vunpack.c.l.b16 %v4440
        %v4497 = vunpack.c.l.b16 %v4441
        %v4498 = vunpack.c.l.b16 %v4442
        %v4499 = vunpack.c.l.b16 %v4443
        %v4500 = vunpack.c.l.b16 %v4444
        %v4501 = vunpack.c.l.b16 %v4445
        %v4502 = vunpack.c.l.b16 %v4446
        %v4503 = vunpack.c.l.b16 %v4447
        %v4504 = vunpack.c.l.b16 %v4448
        %v4505 = vpack.c.b16 %v4490, %v4489
        %v4506 = vpack.c.b16 %v4492, %v4491
        %v4507 = vpack.c.b16 %v4494, %v4493
        %v4508 = vpack.c.b16 %v4496, %v4495
        %v4509 = vpack.c.b16 %v4498, %v4497
        %v4510 = vpack.c.b16 %v4500, %v4499
        %v4511 = vpack.c.b16 %v4502, %v4501
        %v4512 = vpack.c.b16 %v4504, %v4503
        %4521 = vmatprep.subr.bf16.mxu0 0
        %4522 = vmatpush1.bf16.msra.mxu0 %v4512
        %4523 = vmatprep.subr.bf16.mxu0 0
        %4524 = vmatpush1.bf16.msra.mxu0 %v4511
        %4525 = vmatprep.subr.bf16.mxu0 0
        %4526 = vmatpush1.bf16.msra.mxu0 %v4510
        %4527 = vmatprep.subr.bf16.mxu0 0
        %4528 = vmatpush1.bf16.msra.mxu0 %v4509
        %4529 = vmatprep.subr.bf16.mxu0 0
        %4530 = vmatpush1.bf16.msra.mxu0 %v4508
        %4531 = vmatprep.subr.bf16.mxu0 0
        %4532 = vmatpush1.bf16.msra.mxu0 %v4507
        %4533 = vmatprep.subr.bf16.mxu0 0
        %4534 = vmatpush1.bf16.msra.mxu0 %v4506
        %4535 = vmatprep.subr.bf16.mxu0 0
        %4536 = vmatpush1.bf16.msra.mxu0 %v4505
        %4537 = vmatprep.subr.bf16.mxu0 0
        %4538 = vmatpush2.bf16.msra.mxu0 0
        %4539 = vmatprep.subr.bf16.mxu0 0
        %4540 = vmatpush2.bf16.msra.mxu0 0
        %4541 = vmatprep.subr.bf16.mxu0 0
        %4542 = vmatpush2.bf16.msra.mxu0 0
        %4543 = vmatprep.subr.bf16.mxu0 0
        %4544 = vmatpush2.bf16.msra.mxu0 0
        %4545 = vmatprep.subr.bf16.mxu0 0
        %4546 = vmatpush2.bf16.msra.mxu0 0
        %4547 = vmatprep.subr.bf16.mxu0 0
        %4548 = vmatpush2.bf16.msra.mxu0 0
        %4549 = vmatprep.subr.bf16.mxu0 0
        %4550 = vmatpush2.bf16.msra.mxu0 0
        %4551 = vmatprep.subr.bf16.mxu0 0
        %4552 = vmatpush2.bf16.msra.mxu0 0
        %4553 = vmatprep.mubr.bf16.mxu0 0
        %4554 = vmatmul.mubr.bf16.gmra.mxu0 %v4449
        %v4555 = vpop.f32.mrf.mxu0
        %v4556 = vadd.f32 0.0, %v4555
        %v4557 = vpop.f32.mrf.mxu0
        %v4558 = vpop.f32.mrf.mxu0
        %v4559 = vadd.f32 0.0, %v4558
        %v4560 = vpop.f32.mrf.mxu0
        %4561 = vmatprep.mubr.bf16.mxu0 0
        %4562 = vmatmul.mubr.bf16.gmra.mxu0 %v4450
        %v4563 = vpop.f32.mrf.mxu0
        %v4564 = vadd.f32 0.0, %v4563
        %v4565 = vpop.f32.mrf.mxu0
        %v4566 = vpop.f32.mrf.mxu0
        %v4567 = vadd.f32 0.0, %v4566
        %v4568 = vpop.f32.mrf.mxu0
        %4569 = vmatprep.mubr.bf16.mxu0 0
        %4570 = vmatmul.mubr.bf16.gmra.mxu0 %v4451
        %v4571 = vpop.f32.mrf.mxu0
        %v4572 = vadd.f32 0.0, %v4571
        %v4573 = vpop.f32.mrf.mxu0
        %v4574 = vpop.f32.mrf.mxu0
        %v4575 = vadd.f32 0.0, %v4574
        %v4576 = vpop.f32.mrf.mxu0
        %4577 = vmatprep.mubr.bf16.mxu0 0
        %4578 = vmatmul.mubr.bf16.gmra.mxu0 %v4452
        %v4579 = vpop.f32.mrf.mxu0
        %v4580 = vadd.f32 0.0, %v4579
        %v4581 = vpop.f32.mrf.mxu0
        %v4582 = vpop.f32.mrf.mxu0
        %v4583 = vadd.f32 0.0, %v4582
        %v4584 = vpop.f32.mrf.mxu0
        %4585 = vmatprep.mubr.bf16.mxu0 0
        %4586 = vmatmul.mubr.bf16.gmra.mxu0 %v4453
        %v4587 = vpop.f32.mrf.mxu0
        %v4588 = vadd.f32 0.0, %v4587
        %v4589 = vpop.f32.mrf.mxu0
        %v4590 = vpop.f32.mrf.mxu0
        %v4591 = vadd.f32 0.0, %v4590
        %v4592 = vpop.f32.mrf.mxu0
        %4593 = vmatprep.mubr.bf16.mxu0 0
        %4594 = vmatmul.mubr.bf16.gmra.mxu0 %v4454
        %v4595 = vpop.f32.mrf.mxu0
        %v4596 = vadd.f32 0.0, %v4595
        %v4597 = vpop.f32.mrf.mxu0
        %v4598 = vpop.f32.mrf.mxu0
        %v4599 = vadd.f32 0.0, %v4598
        %v4600 = vpop.f32.mrf.mxu0
        %4601 = vmatprep.mubr.bf16.mxu0 0
        %4602 = vmatmul.mubr.bf16.gmra.mxu0 %v4455
        %v4603 = vpop.f32.mrf.mxu0
        %v4604 = vadd.f32 0.0, %v4603
        %v4605 = vpop.f32.mrf.mxu0
        %v4606 = vpop.f32.mrf.mxu0
        %v4607 = vadd.f32 0.0, %v4606
        %v4608 = vpop.f32.mrf.mxu0
        %4609 = vmatprep.mubr.bf16.mxu0 0
        %4610 = vmatmul.mubr.bf16.gmra.mxu0 %v4456
        %v4611 = vpop.f32.mrf.mxu0
        %v4612 = vadd.f32 0.0, %v4611
        %v4613 = vpop.f32.mrf.mxu0
        %v4614 = vpop.f32.mrf.mxu0
        %v4615 = vadd.f32 0.0, %v4614
        %v4616 = vpop.f32.mrf.mxu0
        %4617 = vmatprep.mubr.bf16.mxu0 0
        %4618 = vmatmul.mubr.bf16.gmra.mxu0 %v4457
        %v4619 = vpop.f32.mrf.mxu0
        %v4620 = vadd.f32 0.0, %v4619
        %v4621 = vpop.f32.mrf.mxu0
        %v4622 = vpop.f32.mrf.mxu0
        %v4623 = vadd.f32 0.0, %v4622
        %v4624 = vpop.f32.mrf.mxu0
        %4625 = vmatprep.mubr.bf16.mxu0 0
        %4626 = vmatmul.mubr.bf16.gmra.mxu0 %v4458
        %v4627 = vpop.f32.mrf.mxu0
        %v4628 = vadd.f32 0.0, %v4627
        %v4629 = vpop.f32.mrf.mxu0
        %v4630 = vpop.f32.mrf.mxu0
        %v4631 = vadd.f32 0.0, %v4630
        %v4632 = vpop.f32.mrf.mxu0
        %4633 = vmatprep.mubr.bf16.mxu0 0
        %4634 = vmatmul.mubr.bf16.gmra.mxu0 %v4459
        %v4635 = vpop.f32.mrf.mxu0
        %v4636 = vadd.f32 0.0, %v4635
        %v4637 = vpop.f32.mrf.mxu0
        %v4638 = vpop.f32.mrf.mxu0
        %v4639 = vadd.f32 0.0, %v4638
        %v4640 = vpop.f32.mrf.mxu0
        %4641 = vmatprep.mubr.bf16.mxu0 0
        %4642 = vmatmul.mubr.bf16.gmra.mxu0 %v4460
        %v4643 = vpop.f32.mrf.mxu0
        %v4644 = vadd.f32 0.0, %v4643
        %v4645 = vpop.f32.mrf.mxu0
        %v4646 = vpop.f32.mrf.mxu0
        %v4647 = vadd.f32 0.0, %v4646
        %v4648 = vpop.f32.mrf.mxu0
        %4649 = vdwg.mxu0
        %v4650 = vadd.f32 %v4408, %v4556
        %v4651 = vadd.f32 %v4409, %v4559
        %v4652 = vadd.f32 %v4410, %v4564
        %v4653 = vadd.f32 %v4411, %v4567
        %v4654 = vadd.f32 %v4412, %v4572
        %v4655 = vadd.f32 %v4413, %v4575
        %v4656 = vadd.f32 %v4414, %v4580
        %v4657 = vadd.f32 %v4415, %v4583
        %v4658 = vadd.f32 %v4416, %v4588
        %v4659 = vadd.f32 %v4417, %v4591
        %v4660 = vadd.f32 %v4418, %v4596
        %v4661 = vadd.f32 %v4419, %v4599
        %v4662 = vadd.f32 %v4420, %v4604
        %v4663 = vadd.f32 %v4421, %v4607
        %v4664 = vadd.f32 %v4422, %v4612
        %v4665 = vadd.f32 %v4423, %v4615
        %v4666 = vadd.f32 %v4424, %v4620
        %v4667 = vadd.f32 %v4425, %v4623
        %v4668 = vadd.f32 %v4426, %v4628
        %v4669 = vadd.f32 %v4427, %v4631
        %v4670 = vadd.f32 %v4428, %v4636
        %v4671 = vadd.f32 %v4429, %v4639
        %v4672 = vadd.f32 %v4430, %v4644
        %v4673 = vadd.f32 %v4431, %v4647
        %s4674 = scalar_lea.vmem %s4, 128
        %v4675 = vld [vmem:[%s4674] sm:$0xf]
        %v4676 = vld [vmem:[%s4674 + $0x4] sm:$0xf]
        %v4677 = vld [vmem:[%s4674 + $0x8] sm:$0xf]
        %v4678 = vld [vmem:[%s4674 + $0xc] sm:$0xf]
        %v4679 = vld [vmem:[%s4674 + $0x10] sm:$0xf]
        %v4680 = vld [vmem:[%s4674 + $0x14] sm:$0xf]
        %v4681 = vld [vmem:[%s4674 + $0x18] sm:$0xf]
        %v4682 = vld [vmem:[%s4674 + $0x1c] sm:$0xf]
        %v4683 = vld [vmem:[%s4674 + $0x20] sm:$0xf]
        %v4684 = vld [vmem:[%s4674 + $0x24] sm:$0xf]
        %v4685 = vld [vmem:[%s4674 + $0x28] sm:$0xf]
        %v4686 = vld [vmem:[%s4674 + $0x2c] sm:$0xf]
        %v4687 = vld [vmem:[%s4674 + $0x30] sm:$0xf]
        %v4688 = vld [vmem:[%s4674 + $0x34] sm:$0xf]
        %v4689 = vld [vmem:[%s4674 + $0x38] sm:$0xf]
        %v4690 = vld [vmem:[%s4674 + $0x3c] sm:$0xf]
        %v4692 = vunpack.c.l.b16 %v4022
        %v4693 = vpack.c.b16 %v4692, %v4692
        %vm4694 = vsmask.f32 7424
        %v4696 = vshrl.u32 %v4449, 16
        %v4698 = vshll.u32 %v4449, 16
        %v4700 = vrot.slane %v4698, 1
        %v4701 = vor.u32 %v4696, %v4700
        %v4703 = vshll.u32 %v4450, 16
        %v4705 = vrot.slane %v4703, 1
        %v4706 = vsel %vm4694, %v4701, %v4705
        %v4707 = vshrl.u32 %v4450, 16
        %v4709 = vor.u32 %v4707, %v4705
        %v4711 = vshll.u32 %v4451, 16
        %v4713 = vrot.slane %v4711, 1
        %v4714 = vsel %vm4694, %v4709, %v4713
        %v4715 = vshrl.u32 %v4451, 16
        %v4717 = vor.u32 %v4715, %v4713
        %v4719 = vshll.u32 %v4452, 16
        %v4721 = vrot.slane %v4719, 1
        %v4722 = vsel %vm4694, %v4717, %v4721
        %v4723 = vshrl.u32 %v4452, 16
        %v4725 = vor.u32 %v4723, %v4721
        %v4727 = vshll.u32 %v4453, 16
        %v4729 = vrot.slane %v4727, 1
        %v4730 = vsel %vm4694, %v4725, %v4729
        %v4731 = vshrl.u32 %v4453, 16
        %v4733 = vor.u32 %v4731, %v4729
        %v4735 = vshll.u32 %v4454, 16
        %v4737 = vrot.slane %v4735, 1
        %v4738 = vsel %vm4694, %v4733, %v4737
        %v4739 = vshrl.u32 %v4454, 16
        %v4741 = vor.u32 %v4739, %v4737
        %v4743 = vshll.u32 %v4455, 16
        %v4745 = vrot.slane %v4743, 1
        %v4746 = vsel %vm4694, %v4741, %v4745
        %v4747 = vshrl.u32 %v4455, 16
        %v4749 = vor.u32 %v4747, %v4745
        %v4751 = vshll.u32 %v4456, 16
        %v4753 = vrot.slane %v4751, 1
        %v4754 = vsel %vm4694, %v4749, %v4753
        %v4755 = vshrl.u32 %v4456, 16
        %v4757 = vor.u32 %v4755, %v4753
        %v4759 = vshll.u32 %v4457, 16
        %v4761 = vrot.slane %v4759, 1
        %v4762 = vsel %vm4694, %v4757, %v4761
        %v4763 = vshrl.u32 %v4457, 16
        %v4765 = vor.u32 %v4763, %v4761
        %v4767 = vshll.u32 %v4458, 16
        %v4769 = vrot.slane %v4767, 1
        %v4770 = vsel %vm4694, %v4765, %v4769
        %v4771 = vshrl.u32 %v4458, 16
        %v4773 = vor.u32 %v4771, %v4769
        %v4775 = vshll.u32 %v4459, 16
        %v4777 = vrot.slane %v4775, 1
        %v4778 = vsel %vm4694, %v4773, %v4777
        %v4779 = vshrl.u32 %v4459, 16
        %v4781 = vor.u32 %v4779, %v4777
        %v4783 = vshll.u32 %v4460, 16
        %v4785 = vrot.slane %v4783, 1
        %v4786 = vsel %vm4694, %v4781, %v4785
        %v4787 = vshrl.u32 %v4460, 16
        %v4789 = vor.u32 %v4787, %v4785
        %v4791 = vshll.u32 %v4693, 16
        %v4793 = vrot.slane %v4791, 1
        %v4794 = vsel %vm4694, %v4789, %v4793
        %v4823 = vunpack.c.l.b16 %v4675
        %v4824 = vunpack.c.l.b16 %v4676
        %v4825 = vunpack.c.l.b16 %v4677
        %v4826 = vunpack.c.l.b16 %v4678
        %v4827 = vunpack.c.l.b16 %v4679
        %v4828 = vunpack.c.l.b16 %v4680
        %v4829 = vunpack.c.l.b16 %v4681
        %v4830 = vunpack.c.l.b16 %v4682
        %v4831 = vunpack.c.l.b16 %v4683
        %v4832 = vunpack.c.l.b16 %v4684
        %v4833 = vunpack.c.l.b16 %v4685
        %v4834 = vunpack.c.l.b16 %v4686
        %v4835 = vunpack.c.l.b16 %v4687
        %v4836 = vunpack.c.l.b16 %v4688
        %v4837 = vunpack.c.l.b16 %v4689
        %v4838 = vunpack.c.l.b16 %v4690
        %v4839 = vpack.c.b16 %v4824, %v4823
        %v4840 = vpack.c.b16 %v4826, %v4825
        %v4841 = vpack.c.b16 %v4828, %v4827
        %v4842 = vpack.c.b16 %v4830, %v4829
        %v4843 = vpack.c.b16 %v4832, %v4831
        %v4844 = vpack.c.b16 %v4834, %v4833
        %v4845 = vpack.c.b16 %v4836, %v4835
        %v4846 = vpack.c.b16 %v4838, %v4837
        %4855 = vmatprep.subr.bf16.mxu0 0
        %4856 = vmatpush1.bf16.msra.mxu0 %v4846
        %4857 = vmatprep.subr.bf16.mxu0 0
        %4858 = vmatpush1.bf16.msra.mxu0 %v4845
        %4859 = vmatprep.subr.bf16.mxu0 0
        %4860 = vmatpush1.bf16.msra.mxu0 %v4844
        %4861 = vmatprep.subr.bf16.mxu0 0
        %4862 = vmatpush1.bf16.msra.mxu0 %v4843
        %4863 = vmatprep.subr.bf16.mxu0 0
        %4864 = vmatpush1.bf16.msra.mxu0 %v4842
        %4865 = vmatprep.subr.bf16.mxu0 0
        %4866 = vmatpush1.bf16.msra.mxu0 %v4841
        %4867 = vmatprep.subr.bf16.mxu0 0
        %4868 = vmatpush1.bf16.msra.mxu0 %v4840
        %4869 = vmatprep.subr.bf16.mxu0 0
        %4870 = vmatpush1.bf16.msra.mxu0 %v4839
        %4871 = vmatprep.subr.bf16.mxu0 0
        %4872 = vmatpush2.bf16.msra.mxu0 0
        %4873 = vmatprep.subr.bf16.mxu0 0
        %4874 = vmatpush2.bf16.msra.mxu0 0
        %4875 = vmatprep.subr.bf16.mxu0 0
        %4876 = vmatpush2.bf16.msra.mxu0 0
        %4877 = vmatprep.subr.bf16.mxu0 0
        %4878 = vmatpush2.bf16.msra.mxu0 0
        %4879 = vmatprep.subr.bf16.mxu0 0
        %4880 = vmatpush2.bf16.msra.mxu0 0
        %4881 = vmatprep.subr.bf16.mxu0 0
        %4882 = vmatpush2.bf16.msra.mxu0 0
        %4883 = vmatprep.subr.bf16.mxu0 0
        %4884 = vmatpush2.bf16.msra.mxu0 0
        %4885 = vmatprep.subr.bf16.mxu0 0
        %4886 = vmatpush2.bf16.msra.mxu0 0
        %4887 = vmatprep.mubr.bf16.mxu0 0
        %4888 = vmatmul.mubr.bf16.gmra.mxu0 %v4706
        %v4889 = vpop.f32.mrf.mxu0
        %v4890 = vadd.f32 0.0, %v4889
        %v4891 = vpop.f32.mrf.mxu0
        %v4892 = vpop.f32.mrf.mxu0
        %v4893 = vadd.f32 0.0, %v4892
        %v4894 = vpop.f32.mrf.mxu0
        %4895 = vmatprep.mubr.bf16.mxu0 0
        %4896 = vmatmul.mubr.bf16.gmra.mxu0 %v4714
        %v4897 = vpop.f32.mrf.mxu0
        %v4898 = vadd.f32 0.0, %v4897
        %v4899 = vpop.f32.mrf.mxu0
        %v4900 = vpop.f32.mrf.mxu0
        %v4901 = vadd.f32 0.0, %v4900
        %v4902 = vpop.f32.mrf.mxu0
        %4903 = vmatprep.mubr.bf16.mxu0 0
        %4904 = vmatmul.mubr.bf16.gmra.mxu0 %v4722
        %v4905 = vpop.f32.mrf.mxu0
        %v4906 = vadd.f32 0.0, %v4905
        %v4907 = vpop.f32.mrf.mxu0
        %v4908 = vpop.f32.mrf.mxu0
        %v4909 = vadd.f32 0.0, %v4908
        %v4910 = vpop.f32.mrf.mxu0
        %4911 = vmatprep.mubr.bf16.mxu0 0
        %4912 = vmatmul.mubr.bf16.gmra.mxu0 %v4730
        %v4913 = vpop.f32.mrf.mxu0
        %v4914 = vadd.f32 0.0, %v4913
        %v4915 = vpop.f32.mrf.mxu0
        %v4916 = vpop.f32.mrf.mxu0
        %v4917 = vadd.f32 0.0, %v4916
        %v4918 = vpop.f32.mrf.mxu0
        %4919 = vmatprep.mubr.bf16.mxu0 0
        %4920 = vmatmul.mubr.bf16.gmra.mxu0 %v4738
        %v4921 = vpop.f32.mrf.mxu0
        %v4922 = vadd.f32 0.0, %v4921
        %v4923 = vpop.f32.mrf.mxu0
        %v4924 = vpop.f32.mrf.mxu0
        %v4925 = vadd.f32 0.0, %v4924
        %v4926 = vpop.f32.mrf.mxu0
        %4927 = vmatprep.mubr.bf16.mxu0 0
        %4928 = vmatmul.mubr.bf16.gmra.mxu0 %v4746
        %v4929 = vpop.f32.mrf.mxu0
        %v4930 = vadd.f32 0.0, %v4929
        %v4931 = vpop.f32.mrf.mxu0
        %v4932 = vpop.f32.mrf.mxu0
        %v4933 = vadd.f32 0.0, %v4932
        %v4934 = vpop.f32.mrf.mxu0
        %4935 = vmatprep.mubr.bf16.mxu0 0
        %4936 = vmatmul.mubr.bf16.gmra.mxu0 %v4754
        %v4937 = vpop.f32.mrf.mxu0
        %v4938 = vadd.f32 0.0, %v4937
        %v4939 = vpop.f32.mrf.mxu0
        %v4940 = vpop.f32.mrf.mxu0
        %v4941 = vadd.f32 0.0, %v4940
        %v4942 = vpop.f32.mrf.mxu0
        %4943 = vmatprep.mubr.bf16.mxu0 0
        %4944 = vmatmul.mubr.bf16.gmra.mxu0 %v4762
        %v4945 = vpop.f32.mrf.mxu0
        %v4946 = vadd.f32 0.0, %v4945
        %v4947 = vpop.f32.mrf.mxu0
        %v4948 = vpop.f32.mrf.mxu0
        %v4949 = vadd.f32 0.0, %v4948
        %v4950 = vpop.f32.mrf.mxu0
        %4951 = vmatprep.mubr.bf16.mxu0 0
        %4952 = vmatmul.mubr.bf16.gmra.mxu0 %v4770
        %v4953 = vpop.f32.mrf.mxu0
        %v4954 = vadd.f32 0.0, %v4953
        %v4955 = vpop.f32.mrf.mxu0
        %v4956 = vpop.f32.mrf.mxu0
        %v4957 = vadd.f32 0.0, %v4956
        %v4958 = vpop.f32.mrf.mxu0
        %4959 = vmatprep.mubr.bf16.mxu0 0
        %4960 = vmatmul.mubr.bf16.gmra.mxu0 %v4778
        %v4961 = vpop.f32.mrf.mxu0
        %v4962 = vadd.f32 0.0, %v4961
        %v4963 = vpop.f32.mrf.mxu0
        %v4964 = vpop.f32.mrf.mxu0
        %v4965 = vadd.f32 0.0, %v4964
        %v4966 = vpop.f32.mrf.mxu0
        %4967 = vmatprep.mubr.bf16.mxu0 0
        %4968 = vmatmul.mubr.bf16.gmra.mxu0 %v4786
        %v4969 = vpop.f32.mrf.mxu0
        %v4970 = vadd.f32 0.0, %v4969
        %v4971 = vpop.f32.mrf.mxu0
        %v4972 = vpop.f32.mrf.mxu0
        %v4973 = vadd.f32 0.0, %v4972
        %v4974 = vpop.f32.mrf.mxu0
        %4975 = vmatprep.mubr.bf16.mxu0 0
        %4976 = vmatmul.mubr.bf16.gmra.mxu0 %v4794
        %v4977 = vpop.f32.mrf.mxu0
        %v4978 = vadd.f32 0.0, %v4977
        %v4979 = vpop.f32.mrf.mxu0
        %v4980 = vpop.f32.mrf.mxu0
        %v4981 = vadd.f32 0.0, %v4980
        %v4982 = vpop.f32.mrf.mxu0
        %4983 = vdwg.mxu0
        %v4984 = vadd.f32 %v4650, %v4890
        %v4985 = vadd.f32 %v4651, %v4893
        %v4986 = vadd.f32 %v4652, %v4898
        %v4987 = vadd.f32 %v4653, %v4901
        %v4988 = vadd.f32 %v4654, %v4906
        %v4989 = vadd.f32 %v4655, %v4909
        %v4990 = vadd.f32 %v4656, %v4914
        %v4991 = vadd.f32 %v4657, %v4917
        %v4992 = vadd.f32 %v4658, %v4922
        %v4993 = vadd.f32 %v4659, %v4925
        %v4994 = vadd.f32 %v4660, %v4930
        %v4995 = vadd.f32 %v4661, %v4933
        %v4996 = vadd.f32 %v4662, %v4938
        %v4997 = vadd.f32 %v4663, %v4941
        %v4998 = vadd.f32 %v4664, %v4946
        %v4999 = vadd.f32 %v4665, %v4949
        %v5000 = vadd.f32 %v4666, %v4954
        %v5001 = vadd.f32 %v4667, %v4957
        %v5002 = vadd.f32 %v4668, %v4962
        %v5003 = vadd.f32 %v4669, %v4965
        %v5004 = vadd.f32 %v4670, %v4970
        %v5005 = vadd.f32 %v4671, %v4973
        %v5006 = vadd.f32 %v4672, %v4978
        %v5007 = vadd.f32 %v4673, %v4981
        %s5008 = sadd.s32 %s3992, 24
        %s5009 = sshra.s32 %s5008, 3
        %s5010 = sand.u32 %s5008, 7
        %s5011 = smul.addr %s5009, 4
        %s5012 = scalar_lea.vmem [#allocation3], %s5011
        %v5013 = vld [vmem:[%s5012] sm:$0xf]
        %v5014 = vld [vmem:[%s5012 + $0x4] sm:$0xf]
        %v5015 = vld [vmem:[%s5012 + $0x8] sm:$0xf]
        %v5016 = vld [vmem:[%s5012 + $0xc] sm:$0xf]
        %v5017 = vld [vmem:[%s5012 + $0x10] sm:$0xf]
        %v5018 = vld [vmem:[%s5012 + $0x14] sm:$0xf]
        %v5019 = vld [vmem:[%s5012 + $0x18] sm:$0xf]
        %v5020 = vld [vmem:[%s5012 + $0x1c] sm:$0xf]
        %v5021 = vld [vmem:[%s5012 + $0x20] sm:$0xf]
        %v5022 = vld [vmem:[%s5012 + $0x24] sm:$0xf]
        %v5023 = vld [vmem:[%s5012 + $0x28] sm:$0xf]
        %v5024 = vld [vmem:[%s5012 + $0x2c] sm:$0xf]
        %v5025 = vld [vmem:[%s5012 + $0x30] sm:$0xf]
        %v5026 = vld [vmem:[%s5012 + $0x34] sm:$0xf]
        %v5027 = vld [vmem:[%s5012 + $0x38] sm:$0xf]
        %v5028 = vld [vmem:[%s5012 + $0x3c] sm:$0xf]
        %v5029 = vld [vmem:[%s5012 + $0x40] sm:$0xf]
        %v5030 = vld [vmem:[%s5012 + $0x44] sm:$0xf]
        %v5031 = vld [vmem:[%s5012 + $0x48] sm:$0xf]
        %v5032 = vld [vmem:[%s5012 + $0x4c] sm:$0xf]
        %v5033 = vld [vmem:[%s5012 + $0x50] sm:$0xf]
        %v5034 = vld [vmem:[%s5012 + $0x54] sm:$0xf]
        %v5035 = vld [vmem:[%s5012 + $0x58] sm:$0xf]
        %v5036 = vld [vmem:[%s5012 + $0x5c] sm:$0xf]
        %v5037 = vld [vmem:[%s5012 + $0x60] sm:$0xf]
        %v5038 = vld [vmem:[%s5012 + $0x64] sm:$0xf]
        %s5039 = scalar_lea.vmem %s4, 192
        %v5040 = vld [vmem:[%s5039] sm:$0xf]
        %v5041 = vld [vmem:[%s5039 + $0x4] sm:$0xf]
        %v5042 = vld [vmem:[%s5039 + $0x8] sm:$0xf]
        %v5043 = vld [vmem:[%s5039 + $0xc] sm:$0xf]
        %v5044 = vld [vmem:[%s5039 + $0x10] sm:$0xf]
        %v5045 = vld [vmem:[%s5039 + $0x14] sm:$0xf]
        %v5046 = vld [vmem:[%s5039 + $0x18] sm:$0xf]
        %v5047 = vld [vmem:[%s5039 + $0x1c] sm:$0xf]
        %v5048 = vld [vmem:[%s5039 + $0x20] sm:$0xf]
        %v5049 = vld [vmem:[%s5039 + $0x24] sm:$0xf]
        %v5050 = vld [vmem:[%s5039 + $0x28] sm:$0xf]
        %v5051 = vld [vmem:[%s5039 + $0x2c] sm:$0xf]
        %v5052 = vld [vmem:[%s5039 + $0x30] sm:$0xf]
        %v5053 = vld [vmem:[%s5039 + $0x34] sm:$0xf]
        %v5054 = vld [vmem:[%s5039 + $0x38] sm:$0xf]
        %v5055 = vld [vmem:[%s5039 + $0x3c] sm:$0xf]
        %v5081 = vunpack.c.l.b16 %v5013
        %v5082 = vunpack.c.l.b16 %v5014
        %v5083 = vunpack.c.l.b16 %v5015
        %v5084 = vunpack.c.l.b16 %v5016
        %v5085 = vunpack.c.l.b16 %v5017
        %v5086 = vunpack.c.l.b16 %v5018
        %v5087 = vunpack.c.l.b16 %v5019
        %v5088 = vunpack.c.l.b16 %v5020
        %v5089 = vunpack.c.l.b16 %v5021
        %v5090 = vunpack.c.l.b16 %v5022
        %v5091 = vunpack.c.l.b16 %v5023
        %v5092 = vunpack.c.l.b16 %v5024
        %v5093 = vunpack.c.l.b16 %v5025
        %v5094 = vunpack.c.l.b16 %v5026
        %v5095 = vunpack.c.l.b16 %v5027
        %v5096 = vunpack.c.l.b16 %v5028
        %v5097 = vunpack.c.l.b16 %v5029
        %v5098 = vunpack.c.l.b16 %v5030
        %v5099 = vunpack.c.l.b16 %v5031
        %v5100 = vunpack.c.l.b16 %v5032
        %v5101 = vunpack.c.l.b16 %v5033
        %v5102 = vunpack.c.l.b16 %v5034
        %v5103 = vunpack.c.l.b16 %v5035
        %v5104 = vunpack.c.l.b16 %v5036
        %v5105 = vunpack.c.l.b16 %v5037
        %v5106 = vpack.c.b16 %v5082, %v5081
        %v5107 = vpack.c.b16 %v5084, %v5083
        %v5108 = vpack.c.b16 %v5086, %v5085
        %v5109 = vpack.c.b16 %v5088, %v5087
        %v5110 = vpack.c.b16 %v5090, %v5089
        %v5111 = vpack.c.b16 %v5092, %v5091
        %v5112 = vpack.c.b16 %v5094, %v5093
        %v5113 = vpack.c.b16 %v5096, %v5095
        %v5114 = vpack.c.b16 %v5098, %v5097
        %v5115 = vpack.c.b16 %v5100, %v5099
        %v5116 = vpack.c.b16 %v5102, %v5101
        %v5117 = vpack.c.b16 %v5104, %v5103
        %v5118 = vpack.c.b16 %v5105, %v5105
        %v5120 = vshrl.u32 %v5106, 16
        %v5122 = vrot.slane %v5120, 3
        %v5123 = vshll.u32 %v5106, 16
        %v5125 = vrot.slane %v5123, 4
        %v5126 = vor.u32 %v5122, %v5125
        %v5128 = vshrl.u32 %v5107, 16
        %v5130 = vrot.slane %v5128, 3
        %v5131 = vshll.u32 %v5107, 16
        %v5133 = vrot.slane %v5131, 4
        %v5134 = vor.u32 %v5130, %v5133
        %v5135 = vsel %vm4102, %v5126, %v5134
        %v5137 = vshrl.u32 %v5108, 16
        %v5139 = vrot.slane %v5137, 3
        %v5140 = vshll.u32 %v5108, 16
        %v5142 = vrot.slane %v5140, 4
        %v5143 = vor.u32 %v5139, %v5142
        %v5144 = vsel %vm4102, %v5134, %v5143
        %v5146 = vshrl.u32 %v5109, 16
        %v5148 = vrot.slane %v5146, 3
        %v5149 = vshll.u32 %v5109, 16
        %v5151 = vrot.slane %v5149, 4
        %v5152 = vor.u32 %v5148, %v5151
        %v5153 = vsel %vm4102, %v5143, %v5152
        %v5155 = vshrl.u32 %v5110, 16
        %v5157 = vrot.slane %v5155, 3
        %v5158 = vshll.u32 %v5110, 16
        %v5160 = vrot.slane %v5158, 4
        %v5161 = vor.u32 %v5157, %v5160
        %v5162 = vsel %vm4102, %v5152, %v5161
        %v5164 = vshrl.u32 %v5111, 16
        %v5166 = vrot.slane %v5164, 3
        %v5167 = vshll.u32 %v5111, 16
        %v5169 = vrot.slane %v5167, 4
        %v5170 = vor.u32 %v5166, %v5169
        %v5171 = vsel %vm4102, %v5161, %v5170
        %v5173 = vshrl.u32 %v5112, 16
        %v5175 = vrot.slane %v5173, 3
        %v5176 = vshll.u32 %v5112, 16
        %v5178 = vrot.slane %v5176, 4
        %v5179 = vor.u32 %v5175, %v5178
        %v5180 = vsel %vm4102, %v5170, %v5179
        %v5182 = vshrl.u32 %v5113, 16
        %v5184 = vrot.slane %v5182, 3
        %v5185 = vshll.u32 %v5113, 16
        %v5187 = vrot.slane %v5185, 4
        %v5188 = vor.u32 %v5184, %v5187
        %v5189 = vsel %vm4102, %v5179, %v5188
        %v5191 = vshrl.u32 %v5114, 16
        %v5193 = vrot.slane %v5191, 3
        %v5194 = vshll.u32 %v5114, 16
        %v5196 = vrot.slane %v5194, 4
        %v5197 = vor.u32 %v5193, %v5196
        %v5198 = vsel %vm4102, %v5188, %v5197
        %v5200 = vshrl.u32 %v5115, 16
        %v5202 = vrot.slane %v5200, 3
        %v5203 = vshll.u32 %v5115, 16
        %v5205 = vrot.slane %v5203, 4
        %v5206 = vor.u32 %v5202, %v5205
        %v5207 = vsel %vm4102, %v5197, %v5206
        %v5209 = vshrl.u32 %v5116, 16
        %v5211 = vrot.slane %v5209, 3
        %v5212 = vshll.u32 %v5116, 16
        %v5214 = vrot.slane %v5212, 4
        %v5215 = vor.u32 %v5211, %v5214
        %v5216 = vsel %vm4102, %v5206, %v5215
        %v5218 = vshrl.u32 %v5117, 16
        %v5220 = vrot.slane %v5218, 3
        %v5221 = vshll.u32 %v5117, 16
        %v5223 = vrot.slane %v5221, 4
        %v5224 = vor.u32 %v5220, %v5223
        %v5225 = vsel %vm4102, %v5215, %v5224
        %v5227 = vshrl.u32 %v5118, 16
        %v5229 = vrot.slane %v5227, 3
        %v5230 = vshll.u32 %v5118, 16
        %v5232 = vrot.slane %v5230, 4
        %v5233 = vor.u32 %v5229, %v5232
        %v5234 = vsel %vm4102, %v5224, %v5233
        %v5263 = vunpack.c.l.b16 %v5040
        %v5264 = vunpack.c.l.b16 %v5041
        %v5265 = vunpack.c.l.b16 %v5042
        %v5266 = vunpack.c.l.b16 %v5043
        %v5267 = vunpack.c.l.b16 %v5044
        %v5268 = vunpack.c.l.b16 %v5045
        %v5269 = vunpack.c.l.b16 %v5046
        %v5270 = vunpack.c.l.b16 %v5047
        %v5271 = vunpack.c.l.b16 %v5048
        %v5272 = vunpack.c.l.b16 %v5049
        %v5273 = vunpack.c.l.b16 %v5050
        %v5274 = vunpack.c.l.b16 %v5051
        %v5275 = vunpack.c.l.b16 %v5052
        %v5276 = vunpack.c.l.b16 %v5053
        %v5277 = vunpack.c.l.b16 %v5054
        %v5278 = vunpack.c.l.b16 %v5055
        %v5279 = vpack.c.b16 %v5264, %v5263
        %v5280 = vpack.c.b16 %v5266, %v5265
        %v5281 = vpack.c.b16 %v5268, %v5267
        %v5282 = vpack.c.b16 %v5270, %v5269
        %v5283 = vpack.c.b16 %v5272, %v5271
        %v5284 = vpack.c.b16 %v5274, %v5273
        %v5285 = vpack.c.b16 %v5276, %v5275
        %v5286 = vpack.c.b16 %v5278, %v5277
        %5295 = vmatprep.subr.bf16.mxu0 0
        %5296 = vmatpush1.bf16.msra.mxu0 %v5286
        %5297 = vmatprep.subr.bf16.mxu0 0
        %5298 = vmatpush1.bf16.msra.mxu0 %v5285
        %5299 = vmatprep.subr.bf16.mxu0 0
        %5300 = vmatpush1.bf16.msra.mxu0 %v5284
        %5301 = vmatprep.subr.bf16.mxu0 0
        %5302 = vmatpush1.bf16.msra.mxu0 %v5283
        %5303 = vmatprep.subr.bf16.mxu0 0
        %5304 = vmatpush1.bf16.msra.mxu0 %v5282
        %5305 = vmatprep.subr.bf16.mxu0 0
        %5306 = vmatpush1.bf16.msra.mxu0 %v5281
        %5307 = vmatprep.subr.bf16.mxu0 0
        %5308 = vmatpush1.bf16.msra.mxu0 %v5280
        %5309 = vmatprep.subr.bf16.mxu0 0
        %5310 = vmatpush1.bf16.msra.mxu0 %v5279
        %5311 = vmatprep.subr.bf16.mxu0 0
        %5312 = vmatpush2.bf16.msra.mxu0 0
        %5313 = vmatprep.subr.bf16.mxu0 0
        %5314 = vmatpush2.bf16.msra.mxu0 0
        %5315 = vmatprep.subr.bf16.mxu0 0
        %5316 = vmatpush2.bf16.msra.mxu0 0
        %5317 = vmatprep.subr.bf16.mxu0 0
        %5318 = vmatpush2.bf16.msra.mxu0 0
        %5319 = vmatprep.subr.bf16.mxu0 0
        %5320 = vmatpush2.bf16.msra.mxu0 0
        %5321 = vmatprep.subr.bf16.mxu0 0
        %5322 = vmatpush2.bf16.msra.mxu0 0
        %5323 = vmatprep.subr.bf16.mxu0 0
        %5324 = vmatpush2.bf16.msra.mxu0 0
        %5325 = vmatprep.subr.bf16.mxu0 0
        %5326 = vmatpush2.bf16.msra.mxu0 0
        %5327 = vmatprep.mubr.bf16.mxu0 0
        %5328 = vmatmul.mubr.bf16.gmra.mxu0 %v5135
        %v5329 = vpop.f32.mrf.mxu0
        %v5330 = vadd.f32 0.0, %v5329
        %v5331 = vpop.f32.mrf.mxu0
        %v5332 = vpop.f32.mrf.mxu0
        %v5333 = vadd.f32 0.0, %v5332
        %v5334 = vpop.f32.mrf.mxu0
        %5335 = vmatprep.mubr.bf16.mxu0 0
        %5336 = vmatmul.mubr.bf16.gmra.mxu0 %v5144
        %v5337 = vpop.f32.mrf.mxu0
        %v5338 = vadd.f32 0.0, %v5337
        %v5339 = vpop.f32.mrf.mxu0
        %v5340 = vpop.f32.mrf.mxu0
        %v5341 = vadd.f32 0.0, %v5340
        %v5342 = vpop.f32.mrf.mxu0
        %5343 = vmatprep.mubr.bf16.mxu0 0
        %5344 = vmatmul.mubr.bf16.gmra.mxu0 %v5153
        %v5345 = vpop.f32.mrf.mxu0
        %v5346 = vadd.f32 0.0, %v5345
        %v5347 = vpop.f32.mrf.mxu0
        %v5348 = vpop.f32.mrf.mxu0
        %v5349 = vadd.f32 0.0, %v5348
        %v5350 = vpop.f32.mrf.mxu0
        %5351 = vmatprep.mubr.bf16.mxu0 0
        %5352 = vmatmul.mubr.bf16.gmra.mxu0 %v5162
        %v5353 = vpop.f32.mrf.mxu0
        %v5354 = vadd.f32 0.0, %v5353
        %v5355 = vpop.f32.mrf.mxu0
        %v5356 = vpop.f32.mrf.mxu0
        %v5357 = vadd.f32 0.0, %v5356
        %v5358 = vpop.f32.mrf.mxu0
        %5359 = vmatprep.mubr.bf16.mxu0 0
        %5360 = vmatmul.mubr.bf16.gmra.mxu0 %v5171
        %v5361 = vpop.f32.mrf.mxu0
        %v5362 = vadd.f32 0.0, %v5361
        %v5363 = vpop.f32.mrf.mxu0
        %v5364 = vpop.f32.mrf.mxu0
        %v5365 = vadd.f32 0.0, %v5364
        %v5366 = vpop.f32.mrf.mxu0
        %5367 = vmatprep.mubr.bf16.mxu0 0
        %5368 = vmatmul.mubr.bf16.gmra.mxu0 %v5180
        %v5369 = vpop.f32.mrf.mxu0
        %v5370 = vadd.f32 0.0, %v5369
        %v5371 = vpop.f32.mrf.mxu0
        %v5372 = vpop.f32.mrf.mxu0
        %v5373 = vadd.f32 0.0, %v5372
        %v5374 = vpop.f32.mrf.mxu0
        %5375 = vmatprep.mubr.bf16.mxu0 0
        %5376 = vmatmul.mubr.bf16.gmra.mxu0 %v5189
        %v5377 = vpop.f32.mrf.mxu0
        %v5378 = vadd.f32 0.0, %v5377
        %v5379 = vpop.f32.mrf.mxu0
        %v5380 = vpop.f32.mrf.mxu0
        %v5381 = vadd.f32 0.0, %v5380
        %v5382 = vpop.f32.mrf.mxu0
        %5383 = vmatprep.mubr.bf16.mxu0 0
        %5384 = vmatmul.mubr.bf16.gmra.mxu0 %v5198
        %v5385 = vpop.f32.mrf.mxu0
        %v5386 = vadd.f32 0.0, %v5385
        %v5387 = vpop.f32.mrf.mxu0
        %v5388 = vpop.f32.mrf.mxu0
        %v5389 = vadd.f32 0.0, %v5388
        %v5390 = vpop.f32.mrf.mxu0
        %5391 = vmatprep.mubr.bf16.mxu0 0
        %5392 = vmatmul.mubr.bf16.gmra.mxu0 %v5207
        %v5393 = vpop.f32.mrf.mxu0
        %v5394 = vadd.f32 0.0, %v5393
        %v5395 = vpop.f32.mrf.mxu0
        %v5396 = vpop.f32.mrf.mxu0
        %v5397 = vadd.f32 0.0, %v5396
        %v5398 = vpop.f32.mrf.mxu0
        %5399 = vmatprep.mubr.bf16.mxu0 0
        %5400 = vmatmul.mubr.bf16.gmra.mxu0 %v5216
        %v5401 = vpop.f32.mrf.mxu0
        %v5402 = vadd.f32 0.0, %v5401
        %v5403 = vpop.f32.mrf.mxu0
        %v5404 = vpop.f32.mrf.mxu0
        %v5405 = vadd.f32 0.0, %v5404
        %v5406 = vpop.f32.mrf.mxu0
        %5407 = vmatprep.mubr.bf16.mxu0 0
        %5408 = vmatmul.mubr.bf16.gmra.mxu0 %v5225
        %v5409 = vpop.f32.mrf.mxu0
        %v5410 = vadd.f32 0.0, %v5409
        %v5411 = vpop.f32.mrf.mxu0
        %v5412 = vpop.f32.mrf.mxu0
        %v5413 = vadd.f32 0.0, %v5412
        %v5414 = vpop.f32.mrf.mxu0
        %5415 = vmatprep.mubr.bf16.mxu0 0
        %5416 = vmatmul.mubr.bf16.gmra.mxu0 %v5234
        %v5417 = vpop.f32.mrf.mxu0
        %v5418 = vadd.f32 0.0, %v5417
        %v5419 = vpop.f32.mrf.mxu0
        %v5420 = vpop.f32.mrf.mxu0
        %v5421 = vadd.f32 0.0, %v5420
        %v5422 = vpop.f32.mrf.mxu0
        %5423 = vdwg.mxu0
        %v5424 = vadd.f32 %v4984, %v5330
        %v5425 = vadd.f32 %v4985, %v5333
        %v5426 = vadd.f32 %v4986, %v5338
        %v5427 = vadd.f32 %v4987, %v5341
        %v5428 = vadd.f32 %v4988, %v5346
        %v5429 = vadd.f32 %v4989, %v5349
        %v5430 = vadd.f32 %v4990, %v5354
        %v5431 = vadd.f32 %v4991, %v5357
        %v5432 = vadd.f32 %v4992, %v5362
        %v5433 = vadd.f32 %v4993, %v5365
        %v5434 = vadd.f32 %v4994, %v5370
        %v5435 = vadd.f32 %v4995, %v5373
        %v5436 = vadd.f32 %v4996, %v5378
        %v5437 = vadd.f32 %v4997, %v5381
        %v5438 = vadd.f32 %v4998, %v5386
        %v5439 = vadd.f32 %v4999, %v5389
        %v5440 = vadd.f32 %v5000, %v5394
        %v5441 = vadd.f32 %v5001, %v5397
        %v5442 = vadd.f32 %v5002, %v5402
        %v5443 = vadd.f32 %v5003, %v5405
        %v5444 = vadd.f32 %v5004, %v5410
        %v5445 = vadd.f32 %v5005, %v5413
        %v5446 = vadd.f32 %v5006, %v5418
        %v5447 = vadd.f32 %v5007, %v5421
        %s5448 = scalar_lea.vmem %s4, 256
        %v5449 = vld [vmem:[%s5448] sm:$0xf]
        %v5450 = vld [vmem:[%s5448 + $0x4] sm:$0xf]
        %v5451 = vld [vmem:[%s5448 + $0x8] sm:$0xf]
        %v5452 = vld [vmem:[%s5448 + $0xc] sm:$0xf]
        %v5453 = vld [vmem:[%s5448 + $0x10] sm:$0xf]
        %v5454 = vld [vmem:[%s5448 + $0x14] sm:$0xf]
        %v5455 = vld [vmem:[%s5448 + $0x18] sm:$0xf]
        %v5456 = vld [vmem:[%s5448 + $0x1c] sm:$0xf]
        %v5457 = vld [vmem:[%s5448 + $0x20] sm:$0xf]
        %v5458 = vld [vmem:[%s5448 + $0x24] sm:$0xf]
        %v5459 = vld [vmem:[%s5448 + $0x28] sm:$0xf]
        %v5460 = vld [vmem:[%s5448 + $0x2c] sm:$0xf]
        %v5461 = vld [vmem:[%s5448 + $0x30] sm:$0xf]
        %v5462 = vld [vmem:[%s5448 + $0x34] sm:$0xf]
        %v5463 = vld [vmem:[%s5448 + $0x38] sm:$0xf]
        %v5464 = vld [vmem:[%s5448 + $0x3c] sm:$0xf]
        %v5465 = vpack.c.b16 %v5083, %v5082
        %v5466 = vpack.c.b16 %v5085, %v5084
        %v5467 = vpack.c.b16 %v5087, %v5086
        %v5468 = vpack.c.b16 %v5089, %v5088
        %v5469 = vpack.c.b16 %v5091, %v5090
        %v5470 = vpack.c.b16 %v5093, %v5092
        %v5471 = vpack.c.b16 %v5095, %v5094
        %v5472 = vpack.c.b16 %v5097, %v5096
        %v5473 = vpack.c.b16 %v5099, %v5098
        %v5474 = vpack.c.b16 %v5101, %v5100
        %v5475 = vpack.c.b16 %v5103, %v5102
        %v5476 = vpack.c.b16 %v5105, %v5104
        %v5505 = vunpack.c.l.b16 %v5449
        %v5506 = vunpack.c.l.b16 %v5450
        %v5507 = vunpack.c.l.b16 %v5451
        %v5508 = vunpack.c.l.b16 %v5452
        %v5509 = vunpack.c.l.b16 %v5453
        %v5510 = vunpack.c.l.b16 %v5454
        %v5511 = vunpack.c.l.b16 %v5455
        %v5512 = vunpack.c.l.b16 %v5456
        %v5513 = vunpack.c.l.b16 %v5457
        %v5514 = vunpack.c.l.b16 %v5458
        %v5515 = vunpack.c.l.b16 %v5459
        %v5516 = vunpack.c.l.b16 %v5460
        %v5517 = vunpack.c.l.b16 %v5461
        %v5518 = vunpack.c.l.b16 %v5462
        %v5519 = vunpack.c.l.b16 %v5463
        %v5520 = vunpack.c.l.b16 %v5464
        %v5521 = vpack.c.b16 %v5506, %v5505
        %v5522 = vpack.c.b16 %v5508, %v5507
        %v5523 = vpack.c.b16 %v5510, %v5509
        %v5524 = vpack.c.b16 %v5512, %v5511
        %v5525 = vpack.c.b16 %v5514, %v5513
        %v5526 = vpack.c.b16 %v5516, %v5515
        %v5527 = vpack.c.b16 %v5518, %v5517
        %v5528 = vpack.c.b16 %v5520, %v5519
        %5537 = vmatprep.subr.bf16.mxu0 0
        %5538 = vmatpush1.bf16.msra.mxu0 %v5528
        %5539 = vmatprep.subr.bf16.mxu0 0
        %5540 = vmatpush1.bf16.msra.mxu0 %v5527
        %5541 = vmatprep.subr.bf16.mxu0 0
        %5542 = vmatpush1.bf16.msra.mxu0 %v5526
        %5543 = vmatprep.subr.bf16.mxu0 0
        %5544 = vmatpush1.bf16.msra.mxu0 %v5525
        %5545 = vmatprep.subr.bf16.mxu0 0
        %5546 = vmatpush1.bf16.msra.mxu0 %v5524
        %5547 = vmatprep.subr.bf16.mxu0 0
        %5548 = vmatpush1.bf16.msra.mxu0 %v5523
        %5549 = vmatprep.subr.bf16.mxu0 0
        %5550 = vmatpush1.bf16.msra.mxu0 %v5522
        %5551 = vmatprep.subr.bf16.mxu0 0
        %5552 = vmatpush1.bf16.msra.mxu0 %v5521
        %5553 = vmatprep.subr.bf16.mxu0 0
        %5554 = vmatpush2.bf16.msra.mxu0 0
        %5555 = vmatprep.subr.bf16.mxu0 0
        %5556 = vmatpush2.bf16.msra.mxu0 0
        %5557 = vmatprep.subr.bf16.mxu0 0
        %5558 = vmatpush2.bf16.msra.mxu0 0
        %5559 = vmatprep.subr.bf16.mxu0 0
        %5560 = vmatpush2.bf16.msra.mxu0 0
        %5561 = vmatprep.subr.bf16.mxu0 0
        %5562 = vmatpush2.bf16.msra.mxu0 0
        %5563 = vmatprep.subr.bf16.mxu0 0
        %5564 = vmatpush2.bf16.msra.mxu0 0
        %5565 = vmatprep.subr.bf16.mxu0 0
        %5566 = vmatpush2.bf16.msra.mxu0 0
        %5567 = vmatprep.subr.bf16.mxu0 0
        %5568 = vmatpush2.bf16.msra.mxu0 0
        %5569 = vmatprep.mubr.bf16.mxu0 0
        %5570 = vmatmul.mubr.bf16.gmra.mxu0 %v5465
        %v5571 = vpop.f32.mrf.mxu0
        %v5572 = vadd.f32 0.0, %v5571
        %v5573 = vpop.f32.mrf.mxu0
        %v5574 = vpop.f32.mrf.mxu0
        %v5575 = vadd.f32 0.0, %v5574
        %v5576 = vpop.f32.mrf.mxu0
        %5577 = vmatprep.mubr.bf16.mxu0 0
        %5578 = vmatmul.mubr.bf16.gmra.mxu0 %v5466
        %v5579 = vpop.f32.mrf.mxu0
        %v5580 = vadd.f32 0.0, %v5579
        %v5581 = vpop.f32.mrf.mxu0
        %v5582 = vpop.f32.mrf.mxu0
        %v5583 = vadd.f32 0.0, %v5582
        %v5584 = vpop.f32.mrf.mxu0
        %5585 = vmatprep.mubr.bf16.mxu0 0
        %5586 = vmatmul.mubr.bf16.gmra.mxu0 %v5467
        %v5587 = vpop.f32.mrf.mxu0
        %v5588 = vadd.f32 0.0, %v5587
        %v5589 = vpop.f32.mrf.mxu0
        %v5590 = vpop.f32.mrf.mxu0
        %v5591 = vadd.f32 0.0, %v5590
        %v5592 = vpop.f32.mrf.mxu0
        %5593 = vmatprep.mubr.bf16.mxu0 0
        %5594 = vmatmul.mubr.bf16.gmra.mxu0 %v5468
        %v5595 = vpop.f32.mrf.mxu0
        %v5596 = vadd.f32 0.0, %v5595
        %v5597 = vpop.f32.mrf.mxu0
        %v5598 = vpop.f32.mrf.mxu0
        %v5599 = vadd.f32 0.0, %v5598
        %v5600 = vpop.f32.mrf.mxu0
        %5601 = vmatprep.mubr.bf16.mxu0 0
        %5602 = vmatmul.mubr.bf16.gmra.mxu0 %v5469
        %v5603 = vpop.f32.mrf.mxu0
        %v5604 = vadd.f32 0.0, %v5603
        %v5605 = vpop.f32.mrf.mxu0
        %v5606 = vpop.f32.mrf.mxu0
        %v5607 = vadd.f32 0.0, %v5606
        %v5608 = vpop.f32.mrf.mxu0
        %5609 = vmatprep.mubr.bf16.mxu0 0
        %5610 = vmatmul.mubr.bf16.gmra.mxu0 %v5470
        %v5611 = vpop.f32.mrf.mxu0
        %v5612 = vadd.f32 0.0, %v5611
        %v5613 = vpop.f32.mrf.mxu0
        %v5614 = vpop.f32.mrf.mxu0
        %v5615 = vadd.f32 0.0, %v5614
        %v5616 = vpop.f32.mrf.mxu0
        %5617 = vmatprep.mubr.bf16.mxu0 0
        %5618 = vmatmul.mubr.bf16.gmra.mxu0 %v5471
        %v5619 = vpop.f32.mrf.mxu0
        %v5620 = vadd.f32 0.0, %v5619
        %v5621 = vpop.f32.mrf.mxu0
        %v5622 = vpop.f32.mrf.mxu0
        %v5623 = vadd.f32 0.0, %v5622
        %v5624 = vpop.f32.mrf.mxu0
        %5625 = vmatprep.mubr.bf16.mxu0 0
        %5626 = vmatmul.mubr.bf16.gmra.mxu0 %v5472
        %v5627 = vpop.f32.mrf.mxu0
        %v5628 = vadd.f32 0.0, %v5627
        %v5629 = vpop.f32.mrf.mxu0
        %v5630 = vpop.f32.mrf.mxu0
        %v5631 = vadd.f32 0.0, %v5630
        %v5632 = vpop.f32.mrf.mxu0
        %5633 = vmatprep.mubr.bf16.mxu0 0
        %5634 = vmatmul.mubr.bf16.gmra.mxu0 %v5473
        %v5635 = vpop.f32.mrf.mxu0
        %v5636 = vadd.f32 0.0, %v5635
        %v5637 = vpop.f32.mrf.mxu0
        %v5638 = vpop.f32.mrf.mxu0
        %v5639 = vadd.f32 0.0, %v5638
        %v5640 = vpop.f32.mrf.mxu0
        %5641 = vmatprep.mubr.bf16.mxu0 0
        %5642 = vmatmul.mubr.bf16.gmra.mxu0 %v5474
        %v5643 = vpop.f32.mrf.mxu0
        %v5644 = vadd.f32 0.0, %v5643
        %v5645 = vpop.f32.mrf.mxu0
        %v5646 = vpop.f32.mrf.mxu0
        %v5647 = vadd.f32 0.0, %v5646
        %v5648 = vpop.f32.mrf.mxu0
        %5649 = vmatprep.mubr.bf16.mxu0 0
        %5650 = vmatmul.mubr.bf16.gmra.mxu0 %v5475
        %v5651 = vpop.f32.mrf.mxu0
        %v5652 = vadd.f32 0.0, %v5651
        %v5653 = vpop.f32.mrf.mxu0
        %v5654 = vpop.f32.mrf.mxu0
        %v5655 = vadd.f32 0.0, %v5654
        %v5656 = vpop.f32.mrf.mxu0
        %5657 = vmatprep.mubr.bf16.mxu0 0
        %5658 = vmatmul.mubr.bf16.gmra.mxu0 %v5476
        %v5659 = vpop.f32.mrf.mxu0
        %v5660 = vadd.f32 0.0, %v5659
        %v5661 = vpop.f32.mrf.mxu0
        %v5662 = vpop.f32.mrf.mxu0
        %v5663 = vadd.f32 0.0, %v5662
        %v5664 = vpop.f32.mrf.mxu0
        %5665 = vdwg.mxu0
        %v5666 = vadd.f32 %v5424, %v5572
        %v5667 = vadd.f32 %v5425, %v5575
        %v5668 = vadd.f32 %v5426, %v5580
        %v5669 = vadd.f32 %v5427, %v5583
        %v5670 = vadd.f32 %v5428, %v5588
        %v5671 = vadd.f32 %v5429, %v5591
        %v5672 = vadd.f32 %v5430, %v5596
        %v5673 = vadd.f32 %v5431, %v5599
        %v5674 = vadd.f32 %v5432, %v5604
        %v5675 = vadd.f32 %v5433, %v5607
        %v5676 = vadd.f32 %v5434, %v5612
        %v5677 = vadd.f32 %v5435, %v5615
        %v5678 = vadd.f32 %v5436, %v5620
        %v5679 = vadd.f32 %v5437, %v5623
        %v5680 = vadd.f32 %v5438, %v5628
        %v5681 = vadd.f32 %v5439, %v5631
        %v5682 = vadd.f32 %v5440, %v5636
        %v5683 = vadd.f32 %v5441, %v5639
        %v5684 = vadd.f32 %v5442, %v5644
        %v5685 = vadd.f32 %v5443, %v5647
        %v5686 = vadd.f32 %v5444, %v5652
        %v5687 = vadd.f32 %v5445, %v5655
        %v5688 = vadd.f32 %v5446, %v5660
        %v5689 = vadd.f32 %v5447, %v5663
        %s5690 = scalar_lea.vmem %s4, 320
        %v5691 = vld [vmem:[%s5690] sm:$0xf]
        %v5692 = vld [vmem:[%s5690 + $0x4] sm:$0xf]
        %v5693 = vld [vmem:[%s5690 + $0x8] sm:$0xf]
        %v5694 = vld [vmem:[%s5690 + $0xc] sm:$0xf]
        %v5695 = vld [vmem:[%s5690 + $0x10] sm:$0xf]
        %v5696 = vld [vmem:[%s5690 + $0x14] sm:$0xf]
        %v5697 = vld [vmem:[%s5690 + $0x18] sm:$0xf]
        %v5698 = vld [vmem:[%s5690 + $0x1c] sm:$0xf]
        %v5699 = vld [vmem:[%s5690 + $0x20] sm:$0xf]
        %v5700 = vld [vmem:[%s5690 + $0x24] sm:$0xf]
        %v5701 = vld [vmem:[%s5690 + $0x28] sm:$0xf]
        %v5702 = vld [vmem:[%s5690 + $0x2c] sm:$0xf]
        %v5703 = vld [vmem:[%s5690 + $0x30] sm:$0xf]
        %v5704 = vld [vmem:[%s5690 + $0x34] sm:$0xf]
        %v5705 = vld [vmem:[%s5690 + $0x38] sm:$0xf]
        %v5706 = vld [vmem:[%s5690 + $0x3c] sm:$0xf]
        %v5708 = vunpack.c.l.b16 %v5038
        %v5709 = vpack.c.b16 %v5708, %v5708
        %v5711 = vshrl.u32 %v5465, 16
        %v5713 = vshll.u32 %v5465, 16
        %v5715 = vrot.slane %v5713, 1
        %v5716 = vor.u32 %v5711, %v5715
        %v5718 = vshll.u32 %v5466, 16
        %v5720 = vrot.slane %v5718, 1
        %v5721 = vsel %vm4694, %v5716, %v5720
        %v5722 = vshrl.u32 %v5466, 16
        %v5724 = vor.u32 %v5722, %v5720
        %v5726 = vshll.u32 %v5467, 16
        %v5728 = vrot.slane %v5726, 1
        %v5729 = vsel %vm4694, %v5724, %v5728
        %v5730 = vshrl.u32 %v5467, 16
        %v5732 = vor.u32 %v5730, %v5728
        %v5734 = vshll.u32 %v5468, 16
        %v5736 = vrot.slane %v5734, 1
        %v5737 = vsel %vm4694, %v5732, %v5736
        %v5738 = vshrl.u32 %v5468, 16
        %v5740 = vor.u32 %v5738, %v5736
        %v5742 = vshll.u32 %v5469, 16
        %v5744 = vrot.slane %v5742, 1
        %v5745 = vsel %vm4694, %v5740, %v5744
        %v5746 = vshrl.u32 %v5469, 16
        %v5748 = vor.u32 %v5746, %v5744
        %v5750 = vshll.u32 %v5470, 16
        %v5752 = vrot.slane %v5750, 1
        %v5753 = vsel %vm4694, %v5748, %v5752
        %v5754 = vshrl.u32 %v5470, 16
        %v5756 = vor.u32 %v5754, %v5752
        %v5758 = vshll.u32 %v5471, 16
        %v5760 = vrot.slane %v5758, 1
        %v5761 = vsel %vm4694, %v5756, %v5760
        %v5762 = vshrl.u32 %v5471, 16
        %v5764 = vor.u32 %v5762, %v5760
        %v5766 = vshll.u32 %v5472, 16
        %v5768 = vrot.slane %v5766, 1
        %v5769 = vsel %vm4694, %v5764, %v5768
        %v5770 = vshrl.u32 %v5472, 16
        %v5772 = vor.u32 %v5770, %v5768
        %v5774 = vshll.u32 %v5473, 16
        %v5776 = vrot.slane %v5774, 1
        %v5777 = vsel %vm4694, %v5772, %v5776
        %v5778 = vshrl.u32 %v5473, 16
        %v5780 = vor.u32 %v5778, %v5776
        %v5782 = vshll.u32 %v5474, 16
        %v5784 = vrot.slane %v5782, 1
        %v5785 = vsel %vm4694, %v5780, %v5784
        %v5786 = vshrl.u32 %v5474, 16
        %v5788 = vor.u32 %v5786, %v5784
        %v5790 = vshll.u32 %v5475, 16
        %v5792 = vrot.slane %v5790, 1
        %v5793 = vsel %vm4694, %v5788, %v5792
        %v5794 = vshrl.u32 %v5475, 16
        %v5796 = vor.u32 %v5794, %v5792
        %v5798 = vshll.u32 %v5476, 16
        %v5800 = vrot.slane %v5798, 1
        %v5801 = vsel %vm4694, %v5796, %v5800
        %v5802 = vshrl.u32 %v5476, 16
        %v5804 = vor.u32 %v5802, %v5800
        %v5806 = vshll.u32 %v5709, 16
        %v5808 = vrot.slane %v5806, 1
        %v5809 = vsel %vm4694, %v5804, %v5808
        %v5838 = vunpack.c.l.b16 %v5691
        %v5839 = vunpack.c.l.b16 %v5692
        %v5840 = vunpack.c.l.b16 %v5693
        %v5841 = vunpack.c.l.b16 %v5694
        %v5842 = vunpack.c.l.b16 %v5695
        %v5843 = vunpack.c.l.b16 %v5696
        %v5844 = vunpack.c.l.b16 %v5697
        %v5845 = vunpack.c.l.b16 %v5698
        %v5846 = vunpack.c.l.b16 %v5699
        %v5847 = vunpack.c.l.b16 %v5700
        %v5848 = vunpack.c.l.b16 %v5701
        %v5849 = vunpack.c.l.b16 %v5702
        %v5850 = vunpack.c.l.b16 %v5703
        %v5851 = vunpack.c.l.b16 %v5704
        %v5852 = vunpack.c.l.b16 %v5705
        %v5853 = vunpack.c.l.b16 %v5706
        %v5854 = vpack.c.b16 %v5839, %v5838
        %v5855 = vpack.c.b16 %v5841, %v5840
        %v5856 = vpack.c.b16 %v5843, %v5842
        %v5857 = vpack.c.b16 %v5845, %v5844
        %v5858 = vpack.c.b16 %v5847, %v5846
        %v5859 = vpack.c.b16 %v5849, %v5848
        %v5860 = vpack.c.b16 %v5851, %v5850
        %v5861 = vpack.c.b16 %v5853, %v5852
        %5870 = vmatprep.subr.bf16.mxu0 0
        %5871 = vmatpush1.bf16.msra.mxu0 %v5861
        %5872 = vmatprep.subr.bf16.mxu0 0
        %5873 = vmatpush1.bf16.msra.mxu0 %v5860
        %5874 = vmatprep.subr.bf16.mxu0 0
        %5875 = vmatpush1.bf16.msra.mxu0 %v5859
        %5876 = vmatprep.subr.bf16.mxu0 0
        %5877 = vmatpush1.bf16.msra.mxu0 %v5858
        %5878 = vmatprep.subr.bf16.mxu0 0
        %5879 = vmatpush1.bf16.msra.mxu0 %v5857
        %5880 = vmatprep.subr.bf16.mxu0 0
        %5881 = vmatpush1.bf16.msra.mxu0 %v5856
        %5882 = vmatprep.subr.bf16.mxu0 0
        %5883 = vmatpush1.bf16.msra.mxu0 %v5855
        %5884 = vmatprep.subr.bf16.mxu0 0
        %5885 = vmatpush1.bf16.msra.mxu0 %v5854
        %5886 = vmatprep.subr.bf16.mxu0 0
        %5887 = vmatpush2.bf16.msra.mxu0 0
        %5888 = vmatprep.subr.bf16.mxu0 0
        %5889 = vmatpush2.bf16.msra.mxu0 0
        %5890 = vmatprep.subr.bf16.mxu0 0
        %5891 = vmatpush2.bf16.msra.mxu0 0
        %5892 = vmatprep.subr.bf16.mxu0 0
        %5893 = vmatpush2.bf16.msra.mxu0 0
        %5894 = vmatprep.subr.bf16.mxu0 0
        %5895 = vmatpush2.bf16.msra.mxu0 0
        %5896 = vmatprep.subr.bf16.mxu0 0
        %5897 = vmatpush2.bf16.msra.mxu0 0
        %5898 = vmatprep.subr.bf16.mxu0 0
        %5899 = vmatpush2.bf16.msra.mxu0 0
        %5900 = vmatprep.subr.bf16.mxu0 0
        %5901 = vmatpush2.bf16.msra.mxu0 0
        %5902 = vmatprep.mubr.bf16.mxu0 0
        %5903 = vmatmul.mubr.bf16.gmra.mxu0 %v5721
        %v5904 = vpop.f32.mrf.mxu0
        %v5905 = vadd.f32 0.0, %v5904
        %v5906 = vpop.f32.mrf.mxu0
        %v5907 = vpop.f32.mrf.mxu0
        %v5908 = vadd.f32 0.0, %v5907
        %v5909 = vpop.f32.mrf.mxu0
        %5910 = vmatprep.mubr.bf16.mxu0 0
        %5911 = vmatmul.mubr.bf16.gmra.mxu0 %v5729
        %v5912 = vpop.f32.mrf.mxu0
        %v5913 = vadd.f32 0.0, %v5912
        %v5914 = vpop.f32.mrf.mxu0
        %v5915 = vpop.f32.mrf.mxu0
        %v5916 = vadd.f32 0.0, %v5915
        %v5917 = vpop.f32.mrf.mxu0
        %5918 = vmatprep.mubr.bf16.mxu0 0
        %5919 = vmatmul.mubr.bf16.gmra.mxu0 %v5737
        %v5920 = vpop.f32.mrf.mxu0
        %v5921 = vadd.f32 0.0, %v5920
        %v5922 = vpop.f32.mrf.mxu0
        %v5923 = vpop.f32.mrf.mxu0
        %v5924 = vadd.f32 0.0, %v5923
        %v5925 = vpop.f32.mrf.mxu0
        %5926 = vmatprep.mubr.bf16.mxu0 0
        %5927 = vmatmul.mubr.bf16.gmra.mxu0 %v5745
        %v5928 = vpop.f32.mrf.mxu0
        %v5929 = vadd.f32 0.0, %v5928
        %v5930 = vpop.f32.mrf.mxu0
        %v5931 = vpop.f32.mrf.mxu0
        %v5932 = vadd.f32 0.0, %v5931
        %v5933 = vpop.f32.mrf.mxu0
        %5934 = vmatprep.mubr.bf16.mxu0 0
        %5935 = vmatmul.mubr.bf16.gmra.mxu0 %v5753
        %v5936 = vpop.f32.mrf.mxu0
        %v5937 = vadd.f32 0.0, %v5936
        %v5938 = vpop.f32.mrf.mxu0
        %v5939 = vpop.f32.mrf.mxu0
        %v5940 = vadd.f32 0.0, %v5939
        %v5941 = vpop.f32.mrf.mxu0
        %5942 = vmatprep.mubr.bf16.mxu0 0
        %5943 = vmatmul.mubr.bf16.gmra.mxu0 %v5761
        %v5944 = vpop.f32.mrf.mxu0
        %v5945 = vadd.f32 0.0, %v5944
        %v5946 = vpop.f32.mrf.mxu0
        %v5947 = vpop.f32.mrf.mxu0
        %v5948 = vadd.f32 0.0, %v5947
        %v5949 = vpop.f32.mrf.mxu0
        %5950 = vmatprep.mubr.bf16.mxu0 0
        %5951 = vmatmul.mubr.bf16.gmra.mxu0 %v5769
        %v5952 = vpop.f32.mrf.mxu0
        %v5953 = vadd.f32 0.0, %v5952
        %v5954 = vpop.f32.mrf.mxu0
        %v5955 = vpop.f32.mrf.mxu0
        %v5956 = vadd.f32 0.0, %v5955
        %v5957 = vpop.f32.mrf.mxu0
        %5958 = vmatprep.mubr.bf16.mxu0 0
        %5959 = vmatmul.mubr.bf16.gmra.mxu0 %v5777
        %v5960 = vpop.f32.mrf.mxu0
        %v5961 = vadd.f32 0.0, %v5960
        %v5962 = vpop.f32.mrf.mxu0
        %v5963 = vpop.f32.mrf.mxu0
        %v5964 = vadd.f32 0.0, %v5963
        %v5965 = vpop.f32.mrf.mxu0
        %5966 = vmatprep.mubr.bf16.mxu0 0
        %5967 = vmatmul.mubr.bf16.gmra.mxu0 %v5785
        %v5968 = vpop.f32.mrf.mxu0
        %v5969 = vadd.f32 0.0, %v5968
        %v5970 = vpop.f32.mrf.mxu0
        %v5971 = vpop.f32.mrf.mxu0
        %v5972 = vadd.f32 0.0, %v5971
        %v5973 = vpop.f32.mrf.mxu0
        %5974 = vmatprep.mubr.bf16.mxu0 0
        %5975 = vmatmul.mubr.bf16.gmra.mxu0 %v5793
        %v5976 = vpop.f32.mrf.mxu0
        %v5977 = vadd.f32 0.0, %v5976
        %v5978 = vpop.f32.mrf.mxu0
        %v5979 = vpop.f32.mrf.mxu0
        %v5980 = vadd.f32 0.0, %v5979
        %v5981 = vpop.f32.mrf.mxu0
        %5982 = vmatprep.mubr.bf16.mxu0 0
        %5983 = vmatmul.mubr.bf16.gmra.mxu0 %v5801
        %v5984 = vpop.f32.mrf.mxu0
        %v5985 = vadd.f32 0.0, %v5984
        %v5986 = vpop.f32.mrf.mxu0
        %v5987 = vpop.f32.mrf.mxu0
        %v5988 = vadd.f32 0.0, %v5987
        %v5989 = vpop.f32.mrf.mxu0
        %5990 = vmatprep.mubr.bf16.mxu0 0
        %5991 = vmatmul.mubr.bf16.gmra.mxu0 %v5809
        %v5992 = vpop.f32.mrf.mxu0
        %v5993 = vadd.f32 0.0, %v5992
        %v5994 = vpop.f32.mrf.mxu0
        %v5995 = vpop.f32.mrf.mxu0
        %v5996 = vadd.f32 0.0, %v5995
        %v5997 = vpop.f32.mrf.mxu0
        %5998 = vdwg.mxu0
        %v5999 = vadd.f32 %v5666, %v5905
        %v6000 = vadd.f32 %v5667, %v5908
        %v6001 = vadd.f32 %v5668, %v5913
        %v6002 = vadd.f32 %v5669, %v5916
        %v6003 = vadd.f32 %v5670, %v5921
        %v6004 = vadd.f32 %v5671, %v5924
        %v6005 = vadd.f32 %v5672, %v5929
        %v6006 = vadd.f32 %v5673, %v5932
        %v6007 = vadd.f32 %v5674, %v5937
        %v6008 = vadd.f32 %v5675, %v5940
        %v6009 = vadd.f32 %v5676, %v5945
        %v6010 = vadd.f32 %v5677, %v5948
        %v6011 = vadd.f32 %v5678, %v5953
        %v6012 = vadd.f32 %v5679, %v5956
        %v6013 = vadd.f32 %v5680, %v5961
        %v6014 = vadd.f32 %v5681, %v5964
        %v6015 = vadd.f32 %v5682, %v5969
        %v6016 = vadd.f32 %v5683, %v5972
        %v6017 = vadd.f32 %v5684, %v5977
        %v6018 = vadd.f32 %v5685, %v5980
        %v6019 = vadd.f32 %v5686, %v5985
        %v6020 = vadd.f32 %v5687, %v5988
        %v6021 = vadd.f32 %v5688, %v5993
        %v6022 = vadd.f32 %v5689, %v5996
        %s6023 = sadd.s32 %s3992, 48
        %s6024 = sshra.s32 %s6023, 3
        %s6025 = sand.u32 %s6023, 7
        %s6026 = smul.addr %s6024, 4
        %s6027 = scalar_lea.vmem [#allocation3], %s6026
        %v6028 = vld [vmem:[%s6027] sm:$0xf]
        %v6029 = vld [vmem:[%s6027 + $0x4] sm:$0xf]
        %v6030 = vld [vmem:[%s6027 + $0x8] sm:$0xf]
        %v6031 = vld [vmem:[%s6027 + $0xc] sm:$0xf]
        %v6032 = vld [vmem:[%s6027 + $0x10] sm:$0xf]
        %v6033 = vld [vmem:[%s6027 + $0x14] sm:$0xf]
        %v6034 = vld [vmem:[%s6027 + $0x18] sm:$0xf]
        %v6035 = vld [vmem:[%s6027 + $0x1c] sm:$0xf]
        %v6036 = vld [vmem:[%s6027 + $0x20] sm:$0xf]
        %v6037 = vld [vmem:[%s6027 + $0x24] sm:$0xf]
        %v6038 = vld [vmem:[%s6027 + $0x28] sm:$0xf]
        %v6039 = vld [vmem:[%s6027 + $0x2c] sm:$0xf]
        %v6040 = vld [vmem:[%s6027 + $0x30] sm:$0xf]
        %v6041 = vld [vmem:[%s6027 + $0x34] sm:$0xf]
        %v6042 = vld [vmem:[%s6027 + $0x38] sm:$0xf]
        %v6043 = vld [vmem:[%s6027 + $0x3c] sm:$0xf]
        %v6044 = vld [vmem:[%s6027 + $0x40] sm:$0xf]
        %v6045 = vld [vmem:[%s6027 + $0x44] sm:$0xf]
        %v6046 = vld [vmem:[%s6027 + $0x48] sm:$0xf]
        %v6047 = vld [vmem:[%s6027 + $0x4c] sm:$0xf]
        %v6048 = vld [vmem:[%s6027 + $0x50] sm:$0xf]
        %v6049 = vld [vmem:[%s6027 + $0x54] sm:$0xf]
        %v6050 = vld [vmem:[%s6027 + $0x58] sm:$0xf]
        %v6051 = vld [vmem:[%s6027 + $0x5c] sm:$0xf]
        %v6052 = vld [vmem:[%s6027 + $0x60] sm:$0xf]
        %v6053 = vld [vmem:[%s6027 + $0x64] sm:$0xf]
        %s6054 = scalar_lea.vmem %s4, 384
        %v6055 = vld [vmem:[%s6054] sm:$0xf]
        %v6056 = vld [vmem:[%s6054 + $0x4] sm:$0xf]
        %v6057 = vld [vmem:[%s6054 + $0x8] sm:$0xf]
        %v6058 = vld [vmem:[%s6054 + $0xc] sm:$0xf]
        %v6059 = vld [vmem:[%s6054 + $0x10] sm:$0xf]
        %v6060 = vld [vmem:[%s6054 + $0x14] sm:$0xf]
        %v6061 = vld [vmem:[%s6054 + $0x18] sm:$0xf]
        %v6062 = vld [vmem:[%s6054 + $0x1c] sm:$0xf]
        %v6063 = vld [vmem:[%s6054 + $0x20] sm:$0xf]
        %v6064 = vld [vmem:[%s6054 + $0x24] sm:$0xf]
        %v6065 = vld [vmem:[%s6054 + $0x28] sm:$0xf]
        %v6066 = vld [vmem:[%s6054 + $0x2c] sm:$0xf]
        %v6067 = vld [vmem:[%s6054 + $0x30] sm:$0xf]
        %v6068 = vld [vmem:[%s6054 + $0x34] sm:$0xf]
        %v6069 = vld [vmem:[%s6054 + $0x38] sm:$0xf]
        %v6070 = vld [vmem:[%s6054 + $0x3c] sm:$0xf]
        %v6096 = vunpack.c.l.b16 %v6028
        %v6097 = vunpack.c.l.b16 %v6029
        %v6098 = vunpack.c.l.b16 %v6030
        %v6099 = vunpack.c.l.b16 %v6031
        %v6100 = vunpack.c.l.b16 %v6032
        %v6101 = vunpack.c.l.b16 %v6033
        %v6102 = vunpack.c.l.b16 %v6034
        %v6103 = vunpack.c.l.b16 %v6035
        %v6104 = vunpack.c.l.b16 %v6036
        %v6105 = vunpack.c.l.b16 %v6037
        %v6106 = vunpack.c.l.b16 %v6038
        %v6107 = vunpack.c.l.b16 %v6039
        %v6108 = vunpack.c.l.b16 %v6040
        %v6109 = vunpack.c.l.b16 %v6041
        %v6110 = vunpack.c.l.b16 %v6042
        %v6111 = vunpack.c.l.b16 %v6043
        %v6112 = vunpack.c.l.b16 %v6044
        %v6113 = vunpack.c.l.b16 %v6045
        %v6114 = vunpack.c.l.b16 %v6046
        %v6115 = vunpack.c.l.b16 %v6047
        %v6116 = vunpack.c.l.b16 %v6048
        %v6117 = vunpack.c.l.b16 %v6049
        %v6118 = vunpack.c.l.b16 %v6050
        %v6119 = vunpack.c.l.b16 %v6051
        %v6120 = vunpack.c.l.b16 %v6052
        %v6121 = vpack.c.b16 %v6097, %v6096
        %v6122 = vpack.c.b16 %v6099, %v6098
        %v6123 = vpack.c.b16 %v6101, %v6100
        %v6124 = vpack.c.b16 %v6103, %v6102
        %v6125 = vpack.c.b16 %v6105, %v6104
        %v6126 = vpack.c.b16 %v6107, %v6106
        %v6127 = vpack.c.b16 %v6109, %v6108
        %v6128 = vpack.c.b16 %v6111, %v6110
        %v6129 = vpack.c.b16 %v6113, %v6112
        %v6130 = vpack.c.b16 %v6115, %v6114
        %v6131 = vpack.c.b16 %v6117, %v6116
        %v6132 = vpack.c.b16 %v6119, %v6118
        %v6133 = vpack.c.b16 %v6120, %v6120
        %v6135 = vshrl.u32 %v6121, 16
        %v6137 = vrot.slane %v6135, 3
        %v6138 = vshll.u32 %v6121, 16
        %v6140 = vrot.slane %v6138, 4
        %v6141 = vor.u32 %v6137, %v6140
        %v6143 = vshrl.u32 %v6122, 16
        %v6145 = vrot.slane %v6143, 3
        %v6146 = vshll.u32 %v6122, 16
        %v6148 = vrot.slane %v6146, 4
        %v6149 = vor.u32 %v6145, %v6148
        %v6150 = vsel %vm4102, %v6141, %v6149
        %v6152 = vshrl.u32 %v6123, 16
        %v6154 = vrot.slane %v6152, 3
        %v6155 = vshll.u32 %v6123, 16
        %v6157 = vrot.slane %v6155, 4
        %v6158 = vor.u32 %v6154, %v6157
        %v6159 = vsel %vm4102, %v6149, %v6158
        %v6161 = vshrl.u32 %v6124, 16
        %v6163 = vrot.slane %v6161, 3
        %v6164 = vshll.u32 %v6124, 16
        %v6166 = vrot.slane %v6164, 4
        %v6167 = vor.u32 %v6163, %v6166
        %v6168 = vsel %vm4102, %v6158, %v6167
        %v6170 = vshrl.u32 %v6125, 16
        %v6172 = vrot.slane %v6170, 3
        %v6173 = vshll.u32 %v6125, 16
        %v6175 = vrot.slane %v6173, 4
        %v6176 = vor.u32 %v6172, %v6175
        %v6177 = vsel %vm4102, %v6167, %v6176
        %v6179 = vshrl.u32 %v6126, 16
        %v6181 = vrot.slane %v6179, 3
        %v6182 = vshll.u32 %v6126, 16
        %v6184 = vrot.slane %v6182, 4
        %v6185 = vor.u32 %v6181, %v6184
        %v6186 = vsel %vm4102, %v6176, %v6185
        %v6188 = vshrl.u32 %v6127, 16
        %v6190 = vrot.slane %v6188, 3
        %v6191 = vshll.u32 %v6127, 16
        %v6193 = vrot.slane %v6191, 4
        %v6194 = vor.u32 %v6190, %v6193
        %v6195 = vsel %vm4102, %v6185, %v6194
        %v6197 = vshrl.u32 %v6128, 16
        %v6199 = vrot.slane %v6197, 3
        %v6200 = vshll.u32 %v6128, 16
        %v6202 = vrot.slane %v6200, 4
        %v6203 = vor.u32 %v6199, %v6202
        %v6204 = vsel %vm4102, %v6194, %v6203
        %v6206 = vshrl.u32 %v6129, 16
        %v6208 = vrot.slane %v6206, 3
        %v6209 = vshll.u32 %v6129, 16
        %v6211 = vrot.slane %v6209, 4
        %v6212 = vor.u32 %v6208, %v6211
        %v6213 = vsel %vm4102, %v6203, %v6212
        %v6215 = vshrl.u32 %v6130, 16
        %v6217 = vrot.slane %v6215, 3
        %v6218 = vshll.u32 %v6130, 16
        %v6220 = vrot.slane %v6218, 4
        %v6221 = vor.u32 %v6217, %v6220
        %v6222 = vsel %vm4102, %v6212, %v6221
        %v6224 = vshrl.u32 %v6131, 16
        %v6226 = vrot.slane %v6224, 3
        %v6227 = vshll.u32 %v6131, 16
        %v6229 = vrot.slane %v6227, 4
        %v6230 = vor.u32 %v6226, %v6229
        %v6231 = vsel %vm4102, %v6221, %v6230
        %v6233 = vshrl.u32 %v6132, 16
        %v6235 = vrot.slane %v6233, 3
        %v6236 = vshll.u32 %v6132, 16
        %v6238 = vrot.slane %v6236, 4
        %v6239 = vor.u32 %v6235, %v6238
        %v6240 = vsel %vm4102, %v6230, %v6239
        %v6242 = vshrl.u32 %v6133, 16
        %v6244 = vrot.slane %v6242, 3
        %v6245 = vshll.u32 %v6133, 16
        %v6247 = vrot.slane %v6245, 4
        %v6248 = vor.u32 %v6244, %v6247
        %v6249 = vsel %vm4102, %v6239, %v6248
        %v6278 = vunpack.c.l.b16 %v6055
        %v6279 = vunpack.c.l.b16 %v6056
        %v6280 = vunpack.c.l.b16 %v6057
        %v6281 = vunpack.c.l.b16 %v6058
        %v6282 = vunpack.c.l.b16 %v6059
        %v6283 = vunpack.c.l.b16 %v6060
        %v6284 = vunpack.c.l.b16 %v6061
        %v6285 = vunpack.c.l.b16 %v6062
        %v6286 = vunpack.c.l.b16 %v6063
        %v6287 = vunpack.c.l.b16 %v6064
        %v6288 = vunpack.c.l.b16 %v6065
        %v6289 = vunpack.c.l.b16 %v6066
        %v6290 = vunpack.c.l.b16 %v6067
        %v6291 = vunpack.c.l.b16 %v6068
        %v6292 = vunpack.c.l.b16 %v6069
        %v6293 = vunpack.c.l.b16 %v6070
        %v6294 = vpack.c.b16 %v6279, %v6278
        %v6295 = vpack.c.b16 %v6281, %v6280
        %v6296 = vpack.c.b16 %v6283, %v6282
        %v6297 = vpack.c.b16 %v6285, %v6284
        %v6298 = vpack.c.b16 %v6287, %v6286
        %v6299 = vpack.c.b16 %v6289, %v6288
        %v6300 = vpack.c.b16 %v6291, %v6290
        %v6301 = vpack.c.b16 %v6293, %v6292
        %6310 = vmatprep.subr.bf16.mxu0 0
        %6311 = vmatpush1.bf16.msra.mxu0 %v6301
        %6312 = vmatprep.subr.bf16.mxu0 0
        %6313 = vmatpush1.bf16.msra.mxu0 %v6300
        %6314 = vmatprep.subr.bf16.mxu0 0
        %6315 = vmatpush1.bf16.msra.mxu0 %v6299
        %6316 = vmatprep.subr.bf16.mxu0 0
        %6317 = vmatpush1.bf16.msra.mxu0 %v6298
        %6318 = vmatprep.subr.bf16.mxu0 0
        %6319 = vmatpush1.bf16.msra.mxu0 %v6297
        %6320 = vmatprep.subr.bf16.mxu0 0
        %6321 = vmatpush1.bf16.msra.mxu0 %v6296
        %6322 = vmatprep.subr.bf16.mxu0 0
        %6323 = vmatpush1.bf16.msra.mxu0 %v6295
        %6324 = vmatprep.subr.bf16.mxu0 0
        %6325 = vmatpush1.bf16.msra.mxu0 %v6294
        %6326 = vmatprep.subr.bf16.mxu0 0
        %6327 = vmatpush2.bf16.msra.mxu0 0
        %6328 = vmatprep.subr.bf16.mxu0 0
        %6329 = vmatpush2.bf16.msra.mxu0 0
        %6330 = vmatprep.subr.bf16.mxu0 0
        %6331 = vmatpush2.bf16.msra.mxu0 0
        %6332 = vmatprep.subr.bf16.mxu0 0
        %6333 = vmatpush2.bf16.msra.mxu0 0
        %6334 = vmatprep.subr.bf16.mxu0 0
        %6335 = vmatpush2.bf16.msra.mxu0 0
        %6336 = vmatprep.subr.bf16.mxu0 0
        %6337 = vmatpush2.bf16.msra.mxu0 0
        %6338 = vmatprep.subr.bf16.mxu0 0
        %6339 = vmatpush2.bf16.msra.mxu0 0
        %6340 = vmatprep.subr.bf16.mxu0 0
        %6341 = vmatpush2.bf16.msra.mxu0 0
        %6342 = vmatprep.mubr.bf16.mxu0 0
        %6343 = vmatmul.mubr.bf16.gmra.mxu0 %v6150
        %v6344 = vpop.f32.mrf.mxu0
        %v6345 = vadd.f32 0.0, %v6344
        %v6346 = vpop.f32.mrf.mxu0
        %v6347 = vpop.f32.mrf.mxu0
        %v6348 = vadd.f32 0.0, %v6347
        %v6349 = vpop.f32.mrf.mxu0
        %6350 = vmatprep.mubr.bf16.mxu0 0
        %6351 = vmatmul.mubr.bf16.gmra.mxu0 %v6159
        %v6352 = vpop.f32.mrf.mxu0
        %v6353 = vadd.f32 0.0, %v6352
        %v6354 = vpop.f32.mrf.mxu0
        %v6355 = vpop.f32.mrf.mxu0
        %v6356 = vadd.f32 0.0, %v6355
        %v6357 = vpop.f32.mrf.mxu0
        %6358 = vmatprep.mubr.bf16.mxu0 0
        %6359 = vmatmul.mubr.bf16.gmra.mxu0 %v6168
        %v6360 = vpop.f32.mrf.mxu0
        %v6361 = vadd.f32 0.0, %v6360
        %v6362 = vpop.f32.mrf.mxu0
        %v6363 = vpop.f32.mrf.mxu0
        %v6364 = vadd.f32 0.0, %v6363
        %v6365 = vpop.f32.mrf.mxu0
        %6366 = vmatprep.mubr.bf16.mxu0 0
        %6367 = vmatmul.mubr.bf16.gmra.mxu0 %v6177
        %v6368 = vpop.f32.mrf.mxu0
        %v6369 = vadd.f32 0.0, %v6368
        %v6370 = vpop.f32.mrf.mxu0
        %v6371 = vpop.f32.mrf.mxu0
        %v6372 = vadd.f32 0.0, %v6371
        %v6373 = vpop.f32.mrf.mxu0
        %6374 = vmatprep.mubr.bf16.mxu0 0
        %6375 = vmatmul.mubr.bf16.gmra.mxu0 %v6186
        %v6376 = vpop.f32.mrf.mxu0
        %v6377 = vadd.f32 0.0, %v6376
        %v6378 = vpop.f32.mrf.mxu0
        %v6379 = vpop.f32.mrf.mxu0
        %v6380 = vadd.f32 0.0, %v6379
        %v6381 = vpop.f32.mrf.mxu0
        %6382 = vmatprep.mubr.bf16.mxu0 0
        %6383 = vmatmul.mubr.bf16.gmra.mxu0 %v6195
        %v6384 = vpop.f32.mrf.mxu0
        %v6385 = vadd.f32 0.0, %v6384
        %v6386 = vpop.f32.mrf.mxu0
        %v6387 = vpop.f32.mrf.mxu0
        %v6388 = vadd.f32 0.0, %v6387
        %v6389 = vpop.f32.mrf.mxu0
        %6390 = vmatprep.mubr.bf16.mxu0 0
        %6391 = vmatmul.mubr.bf16.gmra.mxu0 %v6204
        %v6392 = vpop.f32.mrf.mxu0
        %v6393 = vadd.f32 0.0, %v6392
        %v6394 = vpop.f32.mrf.mxu0
        %v6395 = vpop.f32.mrf.mxu0
        %v6396 = vadd.f32 0.0, %v6395
        %v6397 = vpop.f32.mrf.mxu0
        %6398 = vmatprep.mubr.bf16.mxu0 0
        %6399 = vmatmul.mubr.bf16.gmra.mxu0 %v6213
        %v6400 = vpop.f32.mrf.mxu0
        %v6401 = vadd.f32 0.0, %v6400
        %v6402 = vpop.f32.mrf.mxu0
        %v6403 = vpop.f32.mrf.mxu0
        %v6404 = vadd.f32 0.0, %v6403
        %v6405 = vpop.f32.mrf.mxu0
        %6406 = vmatprep.mubr.bf16.mxu0 0
        %6407 = vmatmul.mubr.bf16.gmra.mxu0 %v6222
        %v6408 = vpop.f32.mrf.mxu0
        %v6409 = vadd.f32 0.0, %v6408
        %v6410 = vpop.f32.mrf.mxu0
        %v6411 = vpop.f32.mrf.mxu0
        %v6412 = vadd.f32 0.0, %v6411
        %v6413 = vpop.f32.mrf.mxu0
        %6414 = vmatprep.mubr.bf16.mxu0 0
        %6415 = vmatmul.mubr.bf16.gmra.mxu0 %v6231
        %v6416 = vpop.f32.mrf.mxu0
        %v6417 = vadd.f32 0.0, %v6416
        %v6418 = vpop.f32.mrf.mxu0
        %v6419 = vpop.f32.mrf.mxu0
        %v6420 = vadd.f32 0.0, %v6419
        %v6421 = vpop.f32.mrf.mxu0
        %6422 = vmatprep.mubr.bf16.mxu0 0
        %6423 = vmatmul.mubr.bf16.gmra.mxu0 %v6240
        %v6424 = vpop.f32.mrf.mxu0
        %v6425 = vadd.f32 0.0, %v6424
        %v6426 = vpop.f32.mrf.mxu0
        %v6427 = vpop.f32.mrf.mxu0
        %v6428 = vadd.f32 0.0, %v6427
        %v6429 = vpop.f32.mrf.mxu0
        %6430 = vmatprep.mubr.bf16.mxu0 0
        %6431 = vmatmul.mubr.bf16.gmra.mxu0 %v6249
        %v6432 = vpop.f32.mrf.mxu0
        %v6433 = vadd.f32 0.0, %v6432
        %v6434 = vpop.f32.mrf.mxu0
        %v6435 = vpop.f32.mrf.mxu0
        %v6436 = vadd.f32 0.0, %v6435
        %v6437 = vpop.f32.mrf.mxu0
        %6438 = vdwg.mxu0
        %v6439 = vadd.f32 %v5999, %v6345
        %v6440 = vadd.f32 %v6000, %v6348
        %v6441 = vadd.f32 %v6001, %v6353
        %v6442 = vadd.f32 %v6002, %v6356
        %v6443 = vadd.f32 %v6003, %v6361
        %v6444 = vadd.f32 %v6004, %v6364
        %v6445 = vadd.f32 %v6005, %v6369
        %v6446 = vadd.f32 %v6006, %v6372
        %v6447 = vadd.f32 %v6007, %v6377
        %v6448 = vadd.f32 %v6008, %v6380
        %v6449 = vadd.f32 %v6009, %v6385
        %v6450 = vadd.f32 %v6010, %v6388
        %v6451 = vadd.f32 %v6011, %v6393
        %v6452 = vadd.f32 %v6012, %v6396
        %v6453 = vadd.f32 %v6013, %v6401
        %v6454 = vadd.f32 %v6014, %v6404
        %v6455 = vadd.f32 %v6015, %v6409
        %v6456 = vadd.f32 %v6016, %v6412
        %v6457 = vadd.f32 %v6017, %v6417
        %v6458 = vadd.f32 %v6018, %v6420
        %v6459 = vadd.f32 %v6019, %v6425
        %v6460 = vadd.f32 %v6020, %v6428
        %v6461 = vadd.f32 %v6021, %v6433
        %v6462 = vadd.f32 %v6022, %v6436
        %s6463 = scalar_lea.vmem %s4, 448
        %v6464 = vld [vmem:[%s6463] sm:$0xf]
        %v6465 = vld [vmem:[%s6463 + $0x4] sm:$0xf]
        %v6466 = vld [vmem:[%s6463 + $0x8] sm:$0xf]
        %v6467 = vld [vmem:[%s6463 + $0xc] sm:$0xf]
        %v6468 = vld [vmem:[%s6463 + $0x10] sm:$0xf]
        %v6469 = vld [vmem:[%s6463 + $0x14] sm:$0xf]
        %v6470 = vld [vmem:[%s6463 + $0x18] sm:$0xf]
        %v6471 = vld [vmem:[%s6463 + $0x1c] sm:$0xf]
        %v6472 = vld [vmem:[%s6463 + $0x20] sm:$0xf]
        %v6473 = vld [vmem:[%s6463 + $0x24] sm:$0xf]
        %v6474 = vld [vmem:[%s6463 + $0x28] sm:$0xf]
        %v6475 = vld [vmem:[%s6463 + $0x2c] sm:$0xf]
        %v6476 = vld [vmem:[%s6463 + $0x30] sm:$0xf]
        %v6477 = vld [vmem:[%s6463 + $0x34] sm:$0xf]
        %v6478 = vld [vmem:[%s6463 + $0x38] sm:$0xf]
        %v6479 = vld [vmem:[%s6463 + $0x3c] sm:$0xf]
        %v6480 = vpack.c.b16 %v6098, %v6097
        %v6481 = vpack.c.b16 %v6100, %v6099
        %v6482 = vpack.c.b16 %v6102, %v6101
        %v6483 = vpack.c.b16 %v6104, %v6103
        %v6484 = vpack.c.b16 %v6106, %v6105
        %v6485 = vpack.c.b16 %v6108, %v6107
        %v6486 = vpack.c.b16 %v6110, %v6109
        %v6487 = vpack.c.b16 %v6112, %v6111
        %v6488 = vpack.c.b16 %v6114, %v6113
        %v6489 = vpack.c.b16 %v6116, %v6115
        %v6490 = vpack.c.b16 %v6118, %v6117
        %v6491 = vpack.c.b16 %v6120, %v6119
        %v6520 = vunpack.c.l.b16 %v6464
        %v6521 = vunpack.c.l.b16 %v6465
        %v6522 = vunpack.c.l.b16 %v6466
        %v6523 = vunpack.c.l.b16 %v6467
        %v6524 = vunpack.c.l.b16 %v6468
        %v6525 = vunpack.c.l.b16 %v6469
        %v6526 = vunpack.c.l.b16 %v6470
        %v6527 = vunpack.c.l.b16 %v6471
        %v6528 = vunpack.c.l.b16 %v6472
        %v6529 = vunpack.c.l.b16 %v6473
        %v6530 = vunpack.c.l.b16 %v6474
        %v6531 = vunpack.c.l.b16 %v6475
        %v6532 = vunpack.c.l.b16 %v6476
        %v6533 = vunpack.c.l.b16 %v6477
        %v6534 = vunpack.c.l.b16 %v6478
        %v6535 = vunpack.c.l.b16 %v6479
        %v6536 = vpack.c.b16 %v6521, %v6520
        %v6537 = vpack.c.b16 %v6523, %v6522
        %v6538 = vpack.c.b16 %v6525, %v6524
        %v6539 = vpack.c.b16 %v6527, %v6526
        %v6540 = vpack.c.b16 %v6529, %v6528
        %v6541 = vpack.c.b16 %v6531, %v6530
        %v6542 = vpack.c.b16 %v6533, %v6532
        %v6543 = vpack.c.b16 %v6535, %v6534
        %6552 = vmatprep.subr.bf16.mxu0 0
        %6553 = vmatpush1.bf16.msra.mxu0 %v6543
        %6554 = vmatprep.subr.bf16.mxu0 0
        %6555 = vmatpush1.bf16.msra.mxu0 %v6542
        %6556 = vmatprep.subr.bf16.mxu0 0
        %6557 = vmatpush1.bf16.msra.mxu0 %v6541
        %6558 = vmatprep.subr.bf16.mxu0 0
        %6559 = vmatpush1.bf16.msra.mxu0 %v6540
        %6560 = vmatprep.subr.bf16.mxu0 0
        %6561 = vmatpush1.bf16.msra.mxu0 %v6539
        %6562 = vmatprep.subr.bf16.mxu0 0
        %6563 = vmatpush1.bf16.msra.mxu0 %v6538
        %6564 = vmatprep.subr.bf16.mxu0 0
        %6565 = vmatpush1.bf16.msra.mxu0 %v6537
        %6566 = vmatprep.subr.bf16.mxu0 0
        %6567 = vmatpush1.bf16.msra.mxu0 %v6536
        %6568 = vmatprep.subr.bf16.mxu0 0
        %6569 = vmatpush2.bf16.msra.mxu0 0
        %6570 = vmatprep.subr.bf16.mxu0 0
        %6571 = vmatpush2.bf16.msra.mxu0 0
        %6572 = vmatprep.subr.bf16.mxu0 0
        %6573 = vmatpush2.bf16.msra.mxu0 0
        %6574 = vmatprep.subr.bf16.mxu0 0
        %6575 = vmatpush2.bf16.msra.mxu0 0
        %6576 = vmatprep.subr.bf16.mxu0 0
        %6577 = vmatpush2.bf16.msra.mxu0 0
        %6578 = vmatprep.subr.bf16.mxu0 0
        %6579 = vmatpush2.bf16.msra.mxu0 0
        %6580 = vmatprep.subr.bf16.mxu0 0
        %6581 = vmatpush2.bf16.msra.mxu0 0
        %6582 = vmatprep.subr.bf16.mxu0 0
        %6583 = vmatpush2.bf16.msra.mxu0 0
        %6584 = vmatprep.mubr.bf16.mxu0 0
        %6585 = vmatmul.mubr.bf16.gmra.mxu0 %v6480
        %v6586 = vpop.f32.mrf.mxu0
        %v6587 = vadd.f32 0.0, %v6586
        %v6588 = vpop.f32.mrf.mxu0
        %v6589 = vpop.f32.mrf.mxu0
        %v6590 = vadd.f32 0.0, %v6589
        %v6591 = vpop.f32.mrf.mxu0
        %6592 = vmatprep.mubr.bf16.mxu0 0
        %6593 = vmatmul.mubr.bf16.gmra.mxu0 %v6481
        %v6594 = vpop.f32.mrf.mxu0
        %v6595 = vadd.f32 0.0, %v6594
        %v6596 = vpop.f32.mrf.mxu0
        %v6597 = vpop.f32.mrf.mxu0
        %v6598 = vadd.f32 0.0, %v6597
        %v6599 = vpop.f32.mrf.mxu0
        %6600 = vmatprep.mubr.bf16.mxu0 0
        %6601 = vmatmul.mubr.bf16.gmra.mxu0 %v6482
        %v6602 = vpop.f32.mrf.mxu0
        %v6603 = vadd.f32 0.0, %v6602
        %v6604 = vpop.f32.mrf.mxu0
        %v6605 = vpop.f32.mrf.mxu0
        %v6606 = vadd.f32 0.0, %v6605
        %v6607 = vpop.f32.mrf.mxu0
        %6608 = vmatprep.mubr.bf16.mxu0 0
        %6609 = vmatmul.mubr.bf16.gmra.mxu0 %v6483
        %v6610 = vpop.f32.mrf.mxu0
        %v6611 = vadd.f32 0.0, %v6610
        %v6612 = vpop.f32.mrf.mxu0
        %v6613 = vpop.f32.mrf.mxu0
        %v6614 = vadd.f32 0.0, %v6613
        %v6615 = vpop.f32.mrf.mxu0
        %6616 = vmatprep.mubr.bf16.mxu0 0
        %6617 = vmatmul.mubr.bf16.gmra.mxu0 %v6484
        %v6618 = vpop.f32.mrf.mxu0
        %v6619 = vadd.f32 0.0, %v6618
        %v6620 = vpop.f32.mrf.mxu0
        %v6621 = vpop.f32.mrf.mxu0
        %v6622 = vadd.f32 0.0, %v6621
        %v6623 = vpop.f32.mrf.mxu0
        %6624 = vmatprep.mubr.bf16.mxu0 0
        %6625 = vmatmul.mubr.bf16.gmra.mxu0 %v6485
        %v6626 = vpop.f32.mrf.mxu0
        %v6627 = vadd.f32 0.0, %v6626
        %v6628 = vpop.f32.mrf.mxu0
        %v6629 = vpop.f32.mrf.mxu0
        %v6630 = vadd.f32 0.0, %v6629
        %v6631 = vpop.f32.mrf.mxu0
        %6632 = vmatprep.mubr.bf16.mxu0 0
        %6633 = vmatmul.mubr.bf16.gmra.mxu0 %v6486
        %v6634 = vpop.f32.mrf.mxu0
        %v6635 = vadd.f32 0.0, %v6634
        %v6636 = vpop.f32.mrf.mxu0
        %v6637 = vpop.f32.mrf.mxu0
        %v6638 = vadd.f32 0.0, %v6637
        %v6639 = vpop.f32.mrf.mxu0
        %6640 = vmatprep.mubr.bf16.mxu0 0
        %6641 = vmatmul.mubr.bf16.gmra.mxu0 %v6487
        %v6642 = vpop.f32.mrf.mxu0
        %v6643 = vadd.f32 0.0, %v6642
        %v6644 = vpop.f32.mrf.mxu0
        %v6645 = vpop.f32.mrf.mxu0
        %v6646 = vadd.f32 0.0, %v6645
        %v6647 = vpop.f32.mrf.mxu0
        %6648 = vmatprep.mubr.bf16.mxu0 0
        %6649 = vmatmul.mubr.bf16.gmra.mxu0 %v6488
        %v6650 = vpop.f32.mrf.mxu0
        %v6651 = vadd.f32 0.0, %v6650
        %v6652 = vpop.f32.mrf.mxu0
        %v6653 = vpop.f32.mrf.mxu0
        %v6654 = vadd.f32 0.0, %v6653
        %v6655 = vpop.f32.mrf.mxu0
        %6656 = vmatprep.mubr.bf16.mxu0 0
        %6657 = vmatmul.mubr.bf16.gmra.mxu0 %v6489
        %v6658 = vpop.f32.mrf.mxu0
        %v6659 = vadd.f32 0.0, %v6658
        %v6660 = vpop.f32.mrf.mxu0
        %v6661 = vpop.f32.mrf.mxu0
        %v6662 = vadd.f32 0.0, %v6661
        %v6663 = vpop.f32.mrf.mxu0
        %6664 = vmatprep.mubr.bf16.mxu0 0
        %6665 = vmatmul.mubr.bf16.gmra.mxu0 %v6490
        %v6666 = vpop.f32.mrf.mxu0
        %v6667 = vadd.f32 0.0, %v6666
        %v6668 = vpop.f32.mrf.mxu0
        %v6669 = vpop.f32.mrf.mxu0
        %v6670 = vadd.f32 0.0, %v6669
        %v6671 = vpop.f32.mrf.mxu0
        %6672 = vmatprep.mubr.bf16.mxu0 0
        %6673 = vmatmul.mubr.bf16.gmra.mxu0 %v6491
        %v6674 = vpop.f32.mrf.mxu0
        %v6675 = vadd.f32 0.0, %v6674
        %v6676 = vpop.f32.mrf.mxu0
        %v6677 = vpop.f32.mrf.mxu0
        %v6678 = vadd.f32 0.0, %v6677
        %v6679 = vpop.f32.mrf.mxu0
        %6680 = vdwg.mxu0
        %v6681 = vadd.f32 %v6439, %v6587
        %v6682 = vadd.f32 %v6440, %v6590
        %v6683 = vadd.f32 %v6441, %v6595
        %v6684 = vadd.f32 %v6442, %v6598
        %v6685 = vadd.f32 %v6443, %v6603
        %v6686 = vadd.f32 %v6444, %v6606
        %v6687 = vadd.f32 %v6445, %v6611
        %v6688 = vadd.f32 %v6446, %v6614
        %v6689 = vadd.f32 %v6447, %v6619
        %v6690 = vadd.f32 %v6448, %v6622
        %v6691 = vadd.f32 %v6449, %v6627
        %v6692 = vadd.f32 %v6450, %v6630
        %v6693 = vadd.f32 %v6451, %v6635
        %v6694 = vadd.f32 %v6452, %v6638
        %v6695 = vadd.f32 %v6453, %v6643
        %v6696 = vadd.f32 %v6454, %v6646
        %v6697 = vadd.f32 %v6455, %v6651
        %v6698 = vadd.f32 %v6456, %v6654
        %v6699 = vadd.f32 %v6457, %v6659
        %v6700 = vadd.f32 %v6458, %v6662
        %v6701 = vadd.f32 %v6459, %v6667
        %v6702 = vadd.f32 %v6460, %v6670
        %v6703 = vadd.f32 %v6461, %v6675
        %v6704 = vadd.f32 %v6462, %v6678
        %s6705 = scalar_lea.vmem %s4, 512
        %v6706 = vld [vmem:[%s6705] sm:$0xf]
        %v6707 = vld [vmem:[%s6705 + $0x4] sm:$0xf]
        %v6708 = vld [vmem:[%s6705 + $0x8] sm:$0xf]
        %v6709 = vld [vmem:[%s6705 + $0xc] sm:$0xf]
        %v6710 = vld [vmem:[%s6705 + $0x10] sm:$0xf]
        %v6711 = vld [vmem:[%s6705 + $0x14] sm:$0xf]
        %v6712 = vld [vmem:[%s6705 + $0x18] sm:$0xf]
        %v6713 = vld [vmem:[%s6705 + $0x1c] sm:$0xf]
        %v6714 = vld [vmem:[%s6705 + $0x20] sm:$0xf]
        %v6715 = vld [vmem:[%s6705 + $0x24] sm:$0xf]
        %v6716 = vld [vmem:[%s6705 + $0x28] sm:$0xf]
        %v6717 = vld [vmem:[%s6705 + $0x2c] sm:$0xf]
        %v6718 = vld [vmem:[%s6705 + $0x30] sm:$0xf]
        %v6719 = vld [vmem:[%s6705 + $0x34] sm:$0xf]
        %v6720 = vld [vmem:[%s6705 + $0x38] sm:$0xf]
        %v6721 = vld [vmem:[%s6705 + $0x3c] sm:$0xf]
        %v6723 = vunpack.c.l.b16 %v6053
        %v6724 = vpack.c.b16 %v6723, %v6723
        %v6726 = vshrl.u32 %v6480, 16
        %v6728 = vshll.u32 %v6480, 16
        %v6730 = vrot.slane %v6728, 1
        %v6731 = vor.u32 %v6726, %v6730
        %v6733 = vshll.u32 %v6481, 16
        %v6735 = vrot.slane %v6733, 1
        %v6736 = vsel %vm4694, %v6731, %v6735
        %v6737 = vshrl.u32 %v6481, 16
        %v6739 = vor.u32 %v6737, %v6735
        %v6741 = vshll.u32 %v6482, 16
        %v6743 = vrot.slane %v6741, 1
        %v6744 = vsel %vm4694, %v6739, %v6743
        %v6745 = vshrl.u32 %v6482, 16
        %v6747 = vor.u32 %v6745, %v6743
        %v6749 = vshll.u32 %v6483, 16
        %v6751 = vrot.slane %v6749, 1
        %v6752 = vsel %vm4694, %v6747, %v6751
        %v6753 = vshrl.u32 %v6483, 16
        %v6755 = vor.u32 %v6753, %v6751
        %v6757 = vshll.u32 %v6484, 16
        %v6759 = vrot.slane %v6757, 1
        %v6760 = vsel %vm4694, %v6755, %v6759
        %v6761 = vshrl.u32 %v6484, 16
        %v6763 = vor.u32 %v6761, %v6759
        %v6765 = vshll.u32 %v6485, 16
        %v6767 = vrot.slane %v6765, 1
        %v6768 = vsel %vm4694, %v6763, %v6767
        %v6769 = vshrl.u32 %v6485, 16
        %v6771 = vor.u32 %v6769, %v6767
        %v6773 = vshll.u32 %v6486, 16
        %v6775 = vrot.slane %v6773, 1
        %v6776 = vsel %vm4694, %v6771, %v6775
        %v6777 = vshrl.u32 %v6486, 16
        %v6779 = vor.u32 %v6777, %v6775
        %v6781 = vshll.u32 %v6487, 16
        %v6783 = vrot.slane %v6781, 1
        %v6784 = vsel %vm4694, %v6779, %v6783
        %v6785 = vshrl.u32 %v6487, 16
        %v6787 = vor.u32 %v6785, %v6783
        %v6789 = vshll.u32 %v6488, 16
        %v6791 = vrot.slane %v6789, 1
        %v6792 = vsel %vm4694, %v6787, %v6791
        %v6793 = vshrl.u32 %v6488, 16
        %v6795 = vor.u32 %v6793, %v6791
        %v6797 = vshll.u32 %v6489, 16
        %v6799 = vrot.slane %v6797, 1
        %v6800 = vsel %vm4694, %v6795, %v6799
        %v6801 = vshrl.u32 %v6489, 16
        %v6803 = vor.u32 %v6801, %v6799
        %v6805 = vshll.u32 %v6490, 16
        %v6807 = vrot.slane %v6805, 1
        %v6808 = vsel %vm4694, %v6803, %v6807
        %v6809 = vshrl.u32 %v6490, 16
        %v6811 = vor.u32 %v6809, %v6807
        %v6813 = vshll.u32 %v6491, 16
        %v6815 = vrot.slane %v6813, 1
        %v6816 = vsel %vm4694, %v6811, %v6815
        %v6817 = vshrl.u32 %v6491, 16
        %v6819 = vor.u32 %v6817, %v6815
        %v6821 = vshll.u32 %v6724, 16
        %v6823 = vrot.slane %v6821, 1
        %v6824 = vsel %vm4694, %v6819, %v6823
        %v6853 = vunpack.c.l.b16 %v6706
        %v6854 = vunpack.c.l.b16 %v6707
        %v6855 = vunpack.c.l.b16 %v6708
        %v6856 = vunpack.c.l.b16 %v6709
        %v6857 = vunpack.c.l.b16 %v6710
        %v6858 = vunpack.c.l.b16 %v6711
        %v6859 = vunpack.c.l.b16 %v6712
        %v6860 = vunpack.c.l.b16 %v6713
        %v6861 = vunpack.c.l.b16 %v6714
        %v6862 = vunpack.c.l.b16 %v6715
        %v6863 = vunpack.c.l.b16 %v6716
        %v6864 = vunpack.c.l.b16 %v6717
        %v6865 = vunpack.c.l.b16 %v6718
        %v6866 = vunpack.c.l.b16 %v6719
        %v6867 = vunpack.c.l.b16 %v6720
        %v6868 = vunpack.c.l.b16 %v6721
        %v6869 = vpack.c.b16 %v6854, %v6853
        %v6870 = vpack.c.b16 %v6856, %v6855
        %v6871 = vpack.c.b16 %v6858, %v6857
        %v6872 = vpack.c.b16 %v6860, %v6859
        %v6873 = vpack.c.b16 %v6862, %v6861
        %v6874 = vpack.c.b16 %v6864, %v6863
        %v6875 = vpack.c.b16 %v6866, %v6865
        %v6876 = vpack.c.b16 %v6868, %v6867
        %6885 = vmatprep.subr.bf16.mxu0 0
        %6886 = vmatpush1.bf16.msra.mxu0 %v6876
        %6887 = vmatprep.subr.bf16.mxu0 0
        %6888 = vmatpush1.bf16.msra.mxu0 %v6875
        %6889 = vmatprep.subr.bf16.mxu0 0
        %6890 = vmatpush1.bf16.msra.mxu0 %v6874
        %6891 = vmatprep.subr.bf16.mxu0 0
        %6892 = vmatpush1.bf16.msra.mxu0 %v6873
        %6893 = vmatprep.subr.bf16.mxu0 0
        %6894 = vmatpush1.bf16.msra.mxu0 %v6872
        %6895 = vmatprep.subr.bf16.mxu0 0
        %6896 = vmatpush1.bf16.msra.mxu0 %v6871
        %6897 = vmatprep.subr.bf16.mxu0 0
        %6898 = vmatpush1.bf16.msra.mxu0 %v6870
        %6899 = vmatprep.subr.bf16.mxu0 0
        %6900 = vmatpush1.bf16.msra.mxu0 %v6869
        %6901 = vmatprep.subr.bf16.mxu0 0
        %6902 = vmatpush2.bf16.msra.mxu0 0
        %6903 = vmatprep.subr.bf16.mxu0 0
        %6904 = vmatpush2.bf16.msra.mxu0 0
        %6905 = vmatprep.subr.bf16.mxu0 0
        %6906 = vmatpush2.bf16.msra.mxu0 0
        %6907 = vmatprep.subr.bf16.mxu0 0
        %6908 = vmatpush2.bf16.msra.mxu0 0
        %6909 = vmatprep.subr.bf16.mxu0 0
        %6910 = vmatpush2.bf16.msra.mxu0 0
        %6911 = vmatprep.subr.bf16.mxu0 0
        %6912 = vmatpush2.bf16.msra.mxu0 0
        %6913 = vmatprep.subr.bf16.mxu0 0
        %6914 = vmatpush2.bf16.msra.mxu0 0
        %6915 = vmatprep.subr.bf16.mxu0 0
        %6916 = vmatpush2.bf16.msra.mxu0 0
        %6917 = vmatprep.mubr.bf16.mxu0 0
        %6918 = vmatmul.mubr.bf16.gmra.mxu0 %v6736
        %v6919 = vpop.f32.mrf.mxu0
        %v6920 = vadd.f32 0.0, %v6919
        %v6921 = vpop.f32.mrf.mxu0
        %v6922 = vpop.f32.mrf.mxu0
        %v6923 = vadd.f32 0.0, %v6922
        %v6924 = vpop.f32.mrf.mxu0
        %6925 = vmatprep.mubr.bf16.mxu0 0
        %6926 = vmatmul.mubr.bf16.gmra.mxu0 %v6744
        %v6927 = vpop.f32.mrf.mxu0
        %v6928 = vadd.f32 0.0, %v6927
        %v6929 = vpop.f32.mrf.mxu0
        %v6930 = vpop.f32.mrf.mxu0
        %v6931 = vadd.f32 0.0, %v6930
        %v6932 = vpop.f32.mrf.mxu0
        %6933 = vmatprep.mubr.bf16.mxu0 0
        %6934 = vmatmul.mubr.bf16.gmra.mxu0 %v6752
        %v6935 = vpop.f32.mrf.mxu0
        %v6936 = vadd.f32 0.0, %v6935
        %v6937 = vpop.f32.mrf.mxu0
        %v6938 = vpop.f32.mrf.mxu0
        %v6939 = vadd.f32 0.0, %v6938
        %v6940 = vpop.f32.mrf.mxu0
        %6941 = vmatprep.mubr.bf16.mxu0 0
        %6942 = vmatmul.mubr.bf16.gmra.mxu0 %v6760
        %v6943 = vpop.f32.mrf.mxu0
        %v6944 = vadd.f32 0.0, %v6943
        %v6945 = vpop.f32.mrf.mxu0
        %v6946 = vpop.f32.mrf.mxu0
        %v6947 = vadd.f32 0.0, %v6946
        %v6948 = vpop.f32.mrf.mxu0
        %6949 = vmatprep.mubr.bf16.mxu0 0
        %6950 = vmatmul.mubr.bf16.gmra.mxu0 %v6768
        %v6951 = vpop.f32.mrf.mxu0
        %v6952 = vadd.f32 0.0, %v6951
        %v6953 = vpop.f32.mrf.mxu0
        %v6954 = vpop.f32.mrf.mxu0
        %v6955 = vadd.f32 0.0, %v6954
        %v6956 = vpop.f32.mrf.mxu0
        %6957 = vmatprep.mubr.bf16.mxu0 0
        %6958 = vmatmul.mubr.bf16.gmra.mxu0 %v6776
        %v6959 = vpop.f32.mrf.mxu0
        %v6960 = vadd.f32 0.0, %v6959
        %v6961 = vpop.f32.mrf.mxu0
        %v6962 = vpop.f32.mrf.mxu0
        %v6963 = vadd.f32 0.0, %v6962
        %v6964 = vpop.f32.mrf.mxu0
        %6965 = vmatprep.mubr.bf16.mxu0 0
        %6966 = vmatmul.mubr.bf16.gmra.mxu0 %v6784
        %v6967 = vpop.f32.mrf.mxu0
        %v6968 = vadd.f32 0.0, %v6967
        %v6969 = vpop.f32.mrf.mxu0
        %v6970 = vpop.f32.mrf.mxu0
        %v6971 = vadd.f32 0.0, %v6970
        %v6972 = vpop.f32.mrf.mxu0
        %6973 = vmatprep.mubr.bf16.mxu0 0
        %6974 = vmatmul.mubr.bf16.gmra.mxu0 %v6792
        %v6975 = vpop.f32.mrf.mxu0
        %v6976 = vadd.f32 0.0, %v6975
        %v6977 = vpop.f32.mrf.mxu0
        %v6978 = vpop.f32.mrf.mxu0
        %v6979 = vadd.f32 0.0, %v6978
        %v6980 = vpop.f32.mrf.mxu0
        %6981 = vmatprep.mubr.bf16.mxu0 0
        %6982 = vmatmul.mubr.bf16.gmra.mxu0 %v6800
        %v6983 = vpop.f32.mrf.mxu0
        %v6984 = vadd.f32 0.0, %v6983
        %v6985 = vpop.f32.mrf.mxu0
        %v6986 = vpop.f32.mrf.mxu0
        %v6987 = vadd.f32 0.0, %v6986
        %v6988 = vpop.f32.mrf.mxu0
        %6989 = vmatprep.mubr.bf16.mxu0 0
        %6990 = vmatmul.mubr.bf16.gmra.mxu0 %v6808
        %v6991 = vpop.f32.mrf.mxu0
        %v6992 = vadd.f32 0.0, %v6991
        %v6993 = vpop.f32.mrf.mxu0
        %v6994 = vpop.f32.mrf.mxu0
        %v6995 = vadd.f32 0.0, %v6994
        %v6996 = vpop.f32.mrf.mxu0
        %6997 = vmatprep.mubr.bf16.mxu0 0
        %6998 = vmatmul.mubr.bf16.gmra.mxu0 %v6816
        %v6999 = vpop.f32.mrf.mxu0
        %v7000 = vadd.f32 0.0, %v6999
        %v7001 = vpop.f32.mrf.mxu0
        %v7002 = vpop.f32.mrf.mxu0
        %v7003 = vadd.f32 0.0, %v7002
        %v7004 = vpop.f32.mrf.mxu0
        %7005 = vmatprep.mubr.bf16.mxu0 0
        %7006 = vmatmul.mubr.bf16.gmra.mxu0 %v6824
        %v7007 = vpop.f32.mrf.mxu0
        %v7008 = vadd.f32 0.0, %v7007
        %v7009 = vpop.f32.mrf.mxu0
        %v7010 = vpop.f32.mrf.mxu0
        %v7011 = vadd.f32 0.0, %v7010
        %v7012 = vpop.f32.mrf.mxu0
        %7013 = vdwg.mxu0
        %v7014 = vadd.f32 %v6681, %v6920
        %v7015 = vadd.f32 %v6682, %v6923
        %v7016 = vadd.f32 %v6683, %v6928
        %v7017 = vadd.f32 %v6684, %v6931
        %v7018 = vadd.f32 %v6685, %v6936
        %v7019 = vadd.f32 %v6686, %v6939
        %v7020 = vadd.f32 %v6687, %v6944
        %v7021 = vadd.f32 %v6688, %v6947
        %v7022 = vadd.f32 %v6689, %v6952
        %v7023 = vadd.f32 %v6690, %v6955
        %v7024 = vadd.f32 %v6691, %v6960
        %v7025 = vadd.f32 %v6692, %v6963
        %v7026 = vadd.f32 %v6693, %v6968
        %v7027 = vadd.f32 %v6694, %v6971
        %v7028 = vadd.f32 %v6695, %v6976
        %v7029 = vadd.f32 %v6696, %v6979
        %v7030 = vadd.f32 %v6697, %v6984
        %v7031 = vadd.f32 %v6698, %v6987
        %v7032 = vadd.f32 %v6699, %v6992
        %v7033 = vadd.f32 %v6700, %v6995
        %v7034 = vadd.f32 %v6701, %v7000
        %v7035 = vadd.f32 %v6702, %v7003
        %v7036 = vadd.f32 %v6703, %v7008
        %v7037 = vadd.f32 %v6704, %v7011
        %v7038 = vmax.f32 %v7014, 0.0
        %v7039 = vmax.f32 %v7015, 0.0
        %v7040 = vmax.f32 %v7016, 0.0
        %v7041 = vmax.f32 %v7017, 0.0
        %v7042 = vmax.f32 %v7018, 0.0
        %v7043 = vmax.f32 %v7019, 0.0
        %v7044 = vmax.f32 %v7020, 0.0
        %v7045 = vmax.f32 %v7021, 0.0
        %v7046 = vmax.f32 %v7022, 0.0
        %v7047 = vmax.f32 %v7023, 0.0
        %v7048 = vmax.f32 %v7024, 0.0
        %v7049 = vmax.f32 %v7025, 0.0
        %v7050 = vmax.f32 %v7026, 0.0
        %v7051 = vmax.f32 %v7027, 0.0
        %v7052 = vmax.f32 %v7028, 0.0
        %v7053 = vmax.f32 %v7029, 0.0
        %v7054 = vmax.f32 %v7030, 0.0
        %v7055 = vmax.f32 %v7031, 0.0
        %v7056 = vmax.f32 %v7032, 0.0
        %v7057 = vmax.f32 %v7033, 0.0
        %v7058 = vmax.f32 %v7034, 0.0
        %v7059 = vmax.f32 %v7035, 0.0
        %v7060 = vmax.f32 %v7036, 0.0
        %v7061 = vmax.f32 %v7037, 0.0
        %v7062 = vpack.c.bf16 %v7039, %v7038
        %v7063 = vpack.c.bf16 %v7041, %v7040
        %v7064 = vpack.c.bf16 %v7043, %v7042
        %v7065 = vpack.c.bf16 %v7045, %v7044
        %v7066 = vpack.c.bf16 %v7047, %v7046
        %v7067 = vpack.c.bf16 %v7049, %v7048
        %v7068 = vpack.c.bf16 %v7051, %v7050
        %v7069 = vpack.c.bf16 %v7053, %v7052
        %v7070 = vpack.c.bf16 %v7055, %v7054
        %v7071 = vpack.c.bf16 %v7057, %v7056
        %v7072 = vpack.c.bf16 %v7059, %v7058
        %v7073 = vpack.c.bf16 %v7061, %v7060
        %v7075 = vlaneseq
        %v7076 = vshrl.u32 %v7075, 7
        %v7077 = vsub.s32 0, %v7076
        %v7078 = vrot.slane %v3985, %v7077
        %v7096 = vunpack.c.l.b16 %v3969
        %v7097 = vunpack.c.l.b16 %v3970
        %v7098 = vunpack.c.l.b16 %v3971
        %v7099 = vunpack.c.l.b16 %v3972
        %v7100 = vunpack.c.l.b16 %v3973
        %v7101 = vunpack.c.l.b16 %v3974
        %v7102 = vunpack.c.l.b16 %v3975
        %v7103 = vunpack.c.l.b16 %v3976
        %v7104 = vunpack.c.l.b16 %v3977
        %v7105 = vunpack.c.l.b16 %v3978
        %v7106 = vunpack.c.l.b16 %v3979
        %v7107 = vunpack.c.l.b16 %v3980
        %v7108 = vunpack.c.l.b16 %v3981
        %v7109 = vunpack.c.l.b16 %v3982
        %v7110 = vunpack.c.l.b16 %v3983
        %v7111 = vunpack.c.l.b16 %v3984
        %v7112 = vpack.c.b16 %v7097, %v7096
        %v7113 = vpack.c.b16 %v7099, %v7098
        %v7114 = vpack.c.b16 %v7101, %v7100
        %v7115 = vpack.c.b16 %v7103, %v7102
        %v7116 = vpack.c.b16 %v7105, %v7104
        %v7117 = vpack.c.b16 %v7107, %v7106
        %v7118 = vpack.c.b16 %v7109, %v7108
        %v7119 = vpack.c.b16 %v7111, %v7110
        %7128 = vmatprep.subr.bf16.mxu0 0
        %7129 = vmatpush1.bf16.msra.mxu0 %v7119
        %7130 = vmatprep.subr.bf16.mxu0 0
        %7131 = vmatpush1.bf16.msra.mxu0 %v7118
        %7132 = vmatprep.subr.bf16.mxu0 0
        %7133 = vmatpush1.bf16.msra.mxu0 %v7117
        %7134 = vmatprep.subr.bf16.mxu0 0
        %7135 = vmatpush1.bf16.msra.mxu0 %v7116
        %7136 = vmatprep.subr.bf16.mxu0 0
        %7137 = vmatpush1.bf16.msra.mxu0 %v7115
        %7138 = vmatprep.subr.bf16.mxu0 0
        %7139 = vmatpush1.bf16.msra.mxu0 %v7114
        %7140 = vmatprep.subr.bf16.mxu0 0
        %7141 = vmatpush1.bf16.msra.mxu0 %v7113
        %7142 = vmatprep.subr.bf16.mxu0 0
        %7143 = vmatpush1.bf16.msra.mxu0 %v7112
        %7144 = vmatprep.subr.bf16.mxu0 0
        %7145 = vmatpush2.bf16.msra.mxu0 0
        %7146 = vmatprep.subr.bf16.mxu0 0
        %7147 = vmatpush2.bf16.msra.mxu0 0
        %7148 = vmatprep.subr.bf16.mxu0 0
        %7149 = vmatpush2.bf16.msra.mxu0 0
        %7150 = vmatprep.subr.bf16.mxu0 0
        %7151 = vmatpush2.bf16.msra.mxu0 0
        %7152 = vmatprep.subr.bf16.mxu0 0
        %7153 = vmatpush2.bf16.msra.mxu0 0
        %7154 = vmatprep.subr.bf16.mxu0 0
        %7155 = vmatpush2.bf16.msra.mxu0 0
        %7156 = vmatprep.subr.bf16.mxu0 0
        %7157 = vmatpush2.bf16.msra.mxu0 0
        %7158 = vmatprep.subr.bf16.mxu0 0
        %7159 = vmatpush2.bf16.msra.mxu0 0
        %7160 = vmatprep.mubr.bf16.mxu0 0
        %7161 = vmatmul.mubr.bf16.gmra.mxu0 %v7062
        %v7162 = vpop.f32.mrf.mxu0
        %v7163 = vadd.f32 %v7078, %v7162
        %v7164 = vpop.f32.mrf.mxu0
        %v7165 = vpop.f32.mrf.mxu0
        %v7166 = vadd.f32 %v7078, %v7165
        %v7167 = vpop.f32.mrf.mxu0
        %7168 = vmatprep.mubr.bf16.mxu0 0
        %7169 = vmatmul.mubr.bf16.gmra.mxu0 %v7063
        %v7170 = vpop.f32.mrf.mxu0
        %v7171 = vadd.f32 %v7078, %v7170
        %v7172 = vpop.f32.mrf.mxu0
        %v7173 = vpop.f32.mrf.mxu0
        %v7174 = vadd.f32 %v7078, %v7173
        %v7175 = vpop.f32.mrf.mxu0
        %7176 = vmatprep.mubr.bf16.mxu0 0
        %7177 = vmatmul.mubr.bf16.gmra.mxu0 %v7064
        %v7178 = vpop.f32.mrf.mxu0
        %v7179 = vadd.f32 %v7078, %v7178
        %v7180 = vpop.f32.mrf.mxu0
        %v7181 = vpop.f32.mrf.mxu0
        %v7182 = vadd.f32 %v7078, %v7181
        %v7183 = vpop.f32.mrf.mxu0
        %7184 = vmatprep.mubr.bf16.mxu0 0
        %7185 = vmatmul.mubr.bf16.gmra.mxu0 %v7065
        %v7186 = vpop.f32.mrf.mxu0
        %v7187 = vadd.f32 %v7078, %v7186
        %v7188 = vpop.f32.mrf.mxu0
        %v7189 = vpop.f32.mrf.mxu0
        %v7190 = vadd.f32 %v7078, %v7189
        %v7191 = vpop.f32.mrf.mxu0
        %7192 = vmatprep.mubr.bf16.mxu0 0
        %7193 = vmatmul.mubr.bf16.gmra.mxu0 %v7066
        %v7194 = vpop.f32.mrf.mxu0
        %v7195 = vadd.f32 %v7078, %v7194
        %v7196 = vpop.f32.mrf.mxu0
        %v7197 = vpop.f32.mrf.mxu0
        %v7198 = vadd.f32 %v7078, %v7197
        %v7199 = vpop.f32.mrf.mxu0
        %7200 = vmatprep.mubr.bf16.mxu0 0
        %7201 = vmatmul.mubr.bf16.gmra.mxu0 %v7067
        %v7202 = vpop.f32.mrf.mxu0
        %v7203 = vadd.f32 %v7078, %v7202
        %v7204 = vpop.f32.mrf.mxu0
        %v7205 = vpop.f32.mrf.mxu0
        %v7206 = vadd.f32 %v7078, %v7205
        %v7207 = vpop.f32.mrf.mxu0
        %7208 = vmatprep.mubr.bf16.mxu0 0
        %7209 = vmatmul.mubr.bf16.gmra.mxu0 %v7068
        %v7210 = vpop.f32.mrf.mxu0
        %v7211 = vadd.f32 %v7078, %v7210
        %v7212 = vpop.f32.mrf.mxu0
        %v7213 = vpop.f32.mrf.mxu0
        %v7214 = vadd.f32 %v7078, %v7213
        %v7215 = vpop.f32.mrf.mxu0
        %7216 = vmatprep.mubr.bf16.mxu0 0
        %7217 = vmatmul.mubr.bf16.gmra.mxu0 %v7069
        %v7218 = vpop.f32.mrf.mxu0
        %v7219 = vadd.f32 %v7078, %v7218
        %v7220 = vpop.f32.mrf.mxu0
        %v7221 = vpop.f32.mrf.mxu0
        %v7222 = vadd.f32 %v7078, %v7221
        %v7223 = vpop.f32.mrf.mxu0
        %7224 = vmatprep.mubr.bf16.mxu0 0
        %7225 = vmatmul.mubr.bf16.gmra.mxu0 %v7070
        %v7226 = vpop.f32.mrf.mxu0
        %v7227 = vadd.f32 %v7078, %v7226
        %v7228 = vpop.f32.mrf.mxu0
        %v7229 = vpop.f32.mrf.mxu0
        %v7230 = vadd.f32 %v7078, %v7229
        %v7231 = vpop.f32.mrf.mxu0
        %7232 = vmatprep.mubr.bf16.mxu0 0
        %7233 = vmatmul.mubr.bf16.gmra.mxu0 %v7071
        %v7234 = vpop.f32.mrf.mxu0
        %v7235 = vadd.f32 %v7078, %v7234
        %v7236 = vpop.f32.mrf.mxu0
        %v7237 = vpop.f32.mrf.mxu0
        %v7238 = vadd.f32 %v7078, %v7237
        %v7239 = vpop.f32.mrf.mxu0
        %7240 = vmatprep.mubr.bf16.mxu0 0
        %7241 = vmatmul.mubr.bf16.gmra.mxu0 %v7072
        %v7242 = vpop.f32.mrf.mxu0
        %v7243 = vadd.f32 %v7078, %v7242
        %v7244 = vpop.f32.mrf.mxu0
        %v7245 = vpop.f32.mrf.mxu0
        %v7246 = vadd.f32 %v7078, %v7245
        %v7247 = vpop.f32.mrf.mxu0
        %7248 = vmatprep.mubr.bf16.mxu0 0
        %7249 = vmatmul.mubr.bf16.gmra.mxu0 %v7073
        %v7250 = vpop.f32.mrf.mxu0
        %v7251 = vadd.f32 %v7078, %v7250
        %v7252 = vpop.f32.mrf.mxu0
        %v7253 = vpop.f32.mrf.mxu0
        %v7254 = vadd.f32 %v7078, %v7253
        %v7255 = vpop.f32.mrf.mxu0
        %7256 = vdwg.mxu0
        %v7257 = vpack.c.bf16 %v7166, %v7163
        %v7258 = vpack.c.bf16 %v7174, %v7171
        %v7259 = vpack.c.bf16 %v7182, %v7179
        %v7260 = vpack.c.bf16 %v7190, %v7187
        %v7261 = vpack.c.bf16 %v7198, %v7195
        %v7262 = vpack.c.bf16 %v7206, %v7203
        %v7263 = vpack.c.bf16 %v7214, %v7211
        %v7264 = vpack.c.bf16 %v7222, %v7219
        %v7265 = vpack.c.bf16 %v7230, %v7227
        %v7266 = vpack.c.bf16 %v7238, %v7235
        %v7267 = vpack.c.bf16 %v7246, %v7243
        %v7268 = vpack.c.bf16 %v7254, %v7251
        %v7281 = vunpack.c.l.b16 %v7257
        %v7282 = vunpack.c.h.b16 %v7257
        %v7283 = vunpack.c.l.b16 %v7258
        %v7284 = vunpack.c.h.b16 %v7258
        %v7285 = vunpack.c.l.b16 %v7259
        %v7286 = vunpack.c.h.b16 %v7259
        %v7287 = vunpack.c.l.b16 %v7260
        %v7288 = vunpack.c.h.b16 %v7260
        %v7289 = vunpack.c.l.b16 %v7261
        %v7290 = vunpack.c.h.b16 %v7261
        %v7291 = vunpack.c.l.b16 %v7262
        %v7292 = vunpack.c.h.b16 %v7262
        %v7293 = vunpack.c.l.b16 %v7263
        %v7294 = vunpack.c.h.b16 %v7263
        %v7295 = vunpack.c.l.b16 %v7264
        %v7296 = vunpack.c.h.b16 %v7264
        %v7297 = vunpack.c.l.b16 %v7265
        %v7298 = vunpack.c.h.b16 %v7265
        %v7299 = vunpack.c.l.b16 %v7266
        %v7300 = vunpack.c.h.b16 %v7266
        %v7301 = vunpack.c.l.b16 %v7267
        %v7302 = vunpack.c.h.b16 %v7267
        %v7303 = vunpack.c.l.b16 %v7268
        %v7304 = vunpack.c.h.b16 %v7268
        %v7305 = vpack.c.b16 %v7281, %v7281
        %v7306 = vpack.c.b16 %v7282, %v7282
        %v7307 = vpack.c.b16 %v7283, %v7283
        %v7308 = vpack.c.b16 %v7284, %v7284
        %v7309 = vpack.c.b16 %v7285, %v7285
        %v7310 = vpack.c.b16 %v7286, %v7286
        %v7311 = vpack.c.b16 %v7287, %v7287
        %v7312 = vpack.c.b16 %v7288, %v7288
        %v7313 = vpack.c.b16 %v7289, %v7289
        %v7314 = vpack.c.b16 %v7290, %v7290
        %v7315 = vpack.c.b16 %v7291, %v7291
        %v7316 = vpack.c.b16 %v7292, %v7292
        %v7317 = vpack.c.b16 %v7293, %v7293
        %v7318 = vpack.c.b16 %v7294, %v7294
        %v7319 = vpack.c.b16 %v7295, %v7295
        %v7320 = vpack.c.b16 %v7296, %v7296
        %v7321 = vpack.c.b16 %v7297, %v7297
        %v7322 = vpack.c.b16 %v7298, %v7298
        %v7323 = vpack.c.b16 %v7299, %v7299
        %v7324 = vpack.c.b16 %v7300, %v7300
        %v7325 = vpack.c.b16 %v7301, %v7301
        %v7326 = vpack.c.b16 %v7302, %v7302
        %v7327 = vpack.c.b16 %v7303, %v7303
        %v7328 = vpack.c.b16 %v7304, %v7304
        %s7353 = sshra.s32 %s3992, 3
        %s7354 = sand.u32 %s3992, 7
        %s7355 = smul.addr %s7353, 4
        %s7356 = scalar_lea.vmem %s305, %s7355
        %7357 = vst [vmem:[%s7356] sm:$0xf] %v7305
        %7358 = vst [vmem:[%s7356 + $0x4] sm:$0xf] %v7306
        %7359 = vst [vmem:[%s7356 + $0x8] sm:$0xf] %v7307
        %7360 = vst [vmem:[%s7356 + $0xc] sm:$0xf] %v7308
        %7361 = vst [vmem:[%s7356 + $0x10] sm:$0xf] %v7309
        %7362 = vst [vmem:[%s7356 + $0x14] sm:$0xf] %v7310
        %7363 = vst [vmem:[%s7356 + $0x18] sm:$0xf] %v7311
        %7364 = vst [vmem:[%s7356 + $0x1c] sm:$0xf] %v7312
        %7365 = vst [vmem:[%s7356 + $0x20] sm:$0xf] %v7313
        %7366 = vst [vmem:[%s7356 + $0x24] sm:$0xf] %v7314
        %7367 = vst [vmem:[%s7356 + $0x28] sm:$0xf] %v7315
        %7368 = vst [vmem:[%s7356 + $0x2c] sm:$0xf] %v7316
        %7369 = vst [vmem:[%s7356 + $0x30] sm:$0xf] %v7317
        %7370 = vst [vmem:[%s7356 + $0x34] sm:$0xf] %v7318
        %7371 = vst [vmem:[%s7356 + $0x38] sm:$0xf] %v7319
        %7372 = vst [vmem:[%s7356 + $0x3c] sm:$0xf] %v7320
        %7373 = vst [vmem:[%s7356 + $0x40] sm:$0xf] %v7321
        %7374 = vst [vmem:[%s7356 + $0x44] sm:$0xf] %v7322
        %7375 = vst [vmem:[%s7356 + $0x48] sm:$0xf] %v7323
        %7376 = vst [vmem:[%s7356 + $0x4c] sm:$0xf] %v7324
        %7377 = vst [vmem:[%s7356 + $0x50] sm:$0xf] %v7325
        %7378 = vst [vmem:[%s7356 + $0x54] sm:$0xf] %v7326
        %7379 = vst [vmem:[%s7356 + $0x58] sm:$0xf] %v7327
        %7380 = vst [vmem:[%s7356 + $0x5c] sm:$0xf] %v7328
      $region71: #{mask_branch_forward.1} parent=51 // loop_footer
        %s3991 = sadd.s32 1, %s3987
      $region72: #{mask_branch_forward.1} parent=51 // loop_footer_branch
        %3986 = sbr.rel target = $region68
      $region73: #{mask_branch_forward.1} parent=51 // loop_exit
        _
      %p7381 = scmp.lt.s32.totalorder %s19, 1
      %s7382 = scalar_select %p7381, %s19, 1
      %s7383 = smul.addr %s7382, 48
      %s7384 = smul.addr %s7383, 4
      %s7385 = scalar_lea.vmem %s8, %s7384
      // Predicated region
      $region74: #{mask_branch_forward.1} parent=51 // pred_check
        %p7386 = pneg %p210
      $region75: #{mask_branch_forward.1} parent=51 // pred_check_branch
        %7388 = sbr.rel (%p7386) target = $region77
      $region76: #{mask_branch_forward.1} parent=51 // pred_region
        _
      $region77: #{mask_branch_forward.1} parent=51 // pred_fallthru
        _
    $region52: #{mask_branch_forward.1} parent=5 // pred_fallthru
      _
    %p7389 = scmp.le.s32.totalorder 2, %s14
    // Predicated region
    $region78: #{mask_branch_forward.1} parent=5 // pred_check
      %p7390 = pneg %p7389
    $region79: #{mask_branch_forward.1} parent=5 // pred_check_branch
      %7392 = sbr.rel (%p7390) target = $region81
    $region80: #{mask_branch_forward.1} parent=5 // pred_region
      %s7393 = ssub.s32 %s14, 2
      // Predicated region
      $region82: #{mask_branch_forward.1} parent=80 // pred_check
        %p7394 = pneg %p216
      $region83: #{mask_branch_forward.1} parent=80 // pred_check_branch
        %7396 = sbr.rel (%p7394) target = $region85
      $region84: #{mask_branch_forward.1} parent=80 // pred_region
        %p7397 = scmp.lt.s32.totalorder %s20, 1
        %s7398 = scalar_select %p7397, %s20, 1
        %s7399 = smul.addr %s7398, 48
        %s7400 = smul.addr %s7399, 4
        %s7401 = scalar_lea.vmem %s8, %s7400
      $region85: #{mask_branch_forward.1} parent=80 // pred_fallthru
        _
    $region81: #{mask_branch_forward.1} parent=5 // pred_fallthru
      _
  $region6: #{mask_branch_forward.1} parent=0 // loop_footer
    %s18 = sadd.s32 1, %s14
  $region7: #{mask_branch_forward.1} parent=0 // loop_footer_branch
    %13 = sbr.rel target = $region3
  $region8: #{mask_branch_forward.1} parent=0 // loop_exit
    _

</llo_original>
